<compile_context>
chip_gen: v7x
topology: tpu7x:2x2x1
jax: 0.10.0
libtpu: 0.0.40
codegen_flags: <defaults>
</compile_context>

<pallas_src>
import functools

import jax
import jax.numpy as jnp
from jax import lax
from jax.experimental import pallas as pl
from jax.experimental.pallas import tpu as pltpu


# ----------------------------------------------------------------------------
# Kernels
# ----------------------------------------------------------------------------
def _conv1_relu_kernel(x_ref, w_ref, b_ref, o_ref):
    """conv1 (1->20ch padded to 128, 5x5 valid) + bias + relu for ONE image.

    x_ref: (1, 28, 28, 1) f32   w_ref: (25, 1, 128) f32   b_ref: (1, 128) f32
    o_ref: (1, 24, 24, 128) f32
    Cin == 1, so each (i, j) tap is a lane-broadcast multiply-accumulate (VPU);
    this stays f32 (v5e has no bf16 VPU) and never builds an im2col matrix.
    """
    def row_step(i, acc):
        for j in range(5):                                   # static inner unroll
            patch = x_ref[:, pl.ds(i, 24), j:j + 24, :]      # (1, 24, 24, 1)
            wk = w_ref[i * 5 + j]                            # (1, 128)
            acc = acc + patch * wk.reshape(1, 1, 1, 128)
        return acc

    acc = lax.fori_loop(0, 5, row_step,
                        jnp.zeros((1, 24, 24, 128), jnp.float32))
    y = acc + b_ref[...].reshape(1, 1, 1, 128)
    o_ref[...] = jnp.maximum(y, 0.0)


def _conv2_relu_kernel(x_ref, w_ref, b_ref, o_ref):
    """conv2 (128-padded in -> 128-padded out, 5x5 valid) + bias + relu, 1 image.

    x_ref: (1, 12, 12, 128) f32   w_ref: (25, 128, 128) bf16   b_ref: (1, 128) f32
    o_ref: (64, 128) f32   (rows = oh*8 + ow)
    25 shifted windows -> 25 bf16 MXU matmuls accumulated in f32.
    """
    acc = jnp.zeros((64, 128), jnp.float32)
    for idx in range(25):                                    # static unroll
        i, j = idx // 5, idx % 5
        patch = x_ref[0, i:i + 8, j:j + 8, :]                # (8, 8, 128) f32
        p2 = patch.reshape(64, 128).astype(jnp.bfloat16)     # lane-dense lhs
        acc = acc + jnp.dot(p2, w_ref[idx],
                            preferred_element_type=jnp.float32)
    o_ref[...] = jnp.maximum(acc + b_ref[...], 0.0)


def _mlp_head_kernel(x_ref, w1_ref, b1_ref, w2_ref, b2_ref, o_ref, *, n_classes):
    """Fused fc1(2048->512) + relu + fc2(512->128) + masked log_softmax.

    x_ref: (bm, 2048) bf16; weights bf16, biases f32; o_ref: (bm, 128) f32.
    Columns >= n_classes of the logits are padding and are masked out.
    """
    h = jnp.dot(x_ref[...], w1_ref[...], preferred_element_type=jnp.float32)
    h = jnp.maximum(h + b1_ref[...], 0.0)
    y = jnp.dot(h.astype(jnp.bfloat16), w2_ref[...],
                preferred_element_type=jnp.float32)
    y = y + b2_ref[...]
    col = lax.broadcasted_iota(jnp.int32, y.shape, 1)
    y = jnp.where(col < n_classes, y, -1e30)                 # mask padded logits
    m = jnp.max(y, axis=-1, keepdims=True)
    z = y - m
    lse = jnp.log(jnp.sum(jnp.exp(z), axis=-1, keepdims=True))
    o_ref[...] = (z - lse).astype(o_ref.dtype)


# ----------------------------------------------------------------------------
# pallas_call wrappers
# ----------------------------------------------------------------------------
_PARALLEL1 = pltpu.CompilerParams(dimension_semantics=("parallel",))


def pallas_conv1_relu(x_nhwc, w1p, b1p):
    B = x_nhwc.shape[0]
    return pl.pallas_call(
        _conv1_relu_kernel,
        out_shape=jax.ShapeDtypeStruct((B, 24, 24, 128), jnp.float32),
        grid=(B,),
        in_specs=[
            pl.BlockSpec((1, 28, 28, 1), lambda b: (b, 0, 0, 0)),
            pl.BlockSpec((25, 1, 128), lambda b: (0, 0, 0)),
            pl.BlockSpec((1, 128), lambda b: (0, 0)),
        ],
        out_specs=pl.BlockSpec((1, 24, 24, 128), lambda b: (b, 0, 0, 0)),
        compiler_params=_PARALLEL1,
    )(x_nhwc, w1p, b1p)


def pallas_conv2_relu(x_nhwc, w2p, b2p):
    B = x_nhwc.shape[0]
    out = pl.pallas_call(
        _conv2_relu_kernel,
        out_shape=jax.ShapeDtypeStruct((B * 64, 128), jnp.float32),
        grid=(B,),
        in_specs=[
            pl.BlockSpec((1, 12, 12, 128), lambda b: (b, 0, 0, 0)),
            pl.BlockSpec((25, 128, 128), lambda b: (0, 0, 0)),
            pl.BlockSpec((1, 128), lambda b: (0, 0)),
        ],
        out_specs=pl.BlockSpec((64, 128), lambda b: (b, 0)),
        compiler_params=_PARALLEL1,
    )(x_nhwc, w2p, b2p)
    return out.reshape(B, 8, 8, 128)


def pallas_mlp_head(flat_bf16, w1p, b1p, w2p, b2p, n_classes=10):
    B, K = flat_bf16.shape
    bm = B if B <= 256 else 256                              # M tile (rows)
    out = pl.pallas_call(
        functools.partial(_mlp_head_kernel, n_classes=n_classes),
        out_shape=jax.ShapeDtypeStruct((B, 128), jnp.float32),
        grid=(pl.cdiv(B, bm),),
        in_specs=[
            pl.BlockSpec((bm, K), lambda m: (m, 0)),
            pl.BlockSpec((K, 512), lambda m: (0, 0)),
            pl.BlockSpec((1, 512), lambda m: (0, 0)),
            pl.BlockSpec((512, 128), lambda m: (0, 0)),
            pl.BlockSpec((1, 128), lambda m: (0, 0)),
        ],
        out_specs=pl.BlockSpec((bm, 128), lambda m: (m, 0)),
        compiler_params=_PARALLEL1,
    )(flat_bf16, w1p, b1p, w2p, b2p)
    return out[:, :n_classes]


# ----------------------------------------------------------------------------
# XLA glue (reviewer-approved): 2x2 max-pool and pure reshapes
# ----------------------------------------------------------------------------
def _maxpool2x2(x):                                          # NHWC
    B, H, W, C = x.shape
    return jnp.max(x.reshape(B, H // 2, 2, W // 2, 2, C), axis=(2, 4))


# ----------------------------------------------------------------------------
# One-time parameter prep: transpose / permute / pad to lane-dense layouts
# ----------------------------------------------------------------------------
def prepare_params(params):
    f32, bf16 = jnp.float32, jnp.bfloat16
    # conv1: (20, 1, 5, 5) -> (25, 1, 128) f32  ([k=i*5+j, 0, cout])
    w1 = jnp.transpose(params["conv1_w"].astype(f32), (2, 3, 1, 0)).reshape(25, 1, 20)
    w1 = jnp.pad(w1, ((0, 0), (0, 0), (0, 108)))
    b1 = jnp.pad(params["conv1_b"].astype(f32), (0, 108)).reshape(1, 128)
    # conv2: (50, 20, 5, 5) -> (25, 128, 128) bf16  (cin 20->128, cout 50->128)
    w2 = jnp.transpose(params["conv2_w"].astype(f32), (2, 3, 1, 0))        # (5,5,20,50)
    w2 = jnp.pad(w2, ((0, 0), (0, 0), (0, 108), (0, 78)))
    w2 = w2.reshape(25, 128, 128).astype(bf16)
    b2 = jnp.pad(params["conv2_b"].astype(f32), (0, 78)).reshape(1, 128)
    # fc1: (500, 800 = c*16+h*4+w)  ->  rows in NHWC(128-padded) flatten order
    # p = h*512 + w*128 + c, cols padded 500->512.
    fw1 = params["fc1_w"].astype(f32).reshape(500, 50, 4, 4)               # (n,c,h,w)
    fw1 = jnp.transpose(fw1, (2, 3, 1, 0))                                 # (h,w,c,n)
    fw1 = jnp.pad(fw1, ((0, 0), (0, 0), (0, 78), (0, 12)))                 # (4,4,128,512)
    fw1 = fw1.reshape(4 * 4 * 128, 512).astype(bf16)
    fb1 = jnp.pad(params["fc1_b"].astype(f32), (0, 12)).reshape(1, 512)
    # fc2: (10, 500) -> (512, 128) bf16, bias -> (1, 128)
    fw2 = jnp.pad(params["fc2_w"].astype(f32).T, ((0, 12), (0, 118))).astype(bf16)
    fb2 = jnp.pad(params["fc2_b"].astype(f32), (0, 118)).reshape(1, 128)
    return {"w1": w1, "b1": b1, "w2": w2, "b2": b2,
            "fc1_w": fw1, "fc1_b": fb1, "fc2_w": fw2, "fc2_b": fb2}


# ----------------------------------------------------------------------------
# Forward pass
# ----------------------------------------------------------------------------
def cnn_mnist_forward(x_nchw, prep):
    B = x_nchw.shape[0]
    # NCHW with C==1 -> NHWC is a pure reshape (no transpose needed).
    x = x_nchw.astype(jnp.float32).reshape(B, 28, 28, 1)
    y = pallas_conv1_relu(x, prep["w1"], prep["b1"])         # (B, 24, 24, 128)
    y = _maxpool2x2(y)                                       # (B, 12, 12, 128)
    y = pallas_conv2_relu(y, prep["w2"], prep["b2"])         # (B,  8,  8, 128)
    y = _maxpool2x2(y)                                       # (B,  4,  4, 128)
    flat = y.reshape(B, 4 * 4 * 128).astype(jnp.bfloat16)    # NHWC flatten (fc1 rows pre-permuted)
    return pallas_mlp_head(flat, prep["fc1_w"], prep["fc1_b"],
                           prep["fc2_w"], prep["fc2_b"])      # (B, 10)


# ----------------------------------------------------------------------------
# Pure-JAX reference (independent check of the whole pipeline)
# ----------------------------------------------------------------------------
def reference_forward(x_nchw, params):
    x = x_nchw.astype(jnp.float32)
    y = lax.conv_general_dilated(x, params["conv1_w"], (1, 1), "VALID",
                                 dimension_numbers=("NCHW", "OIHW", "NCHW"))
    y = jax.nn.relu(y + params["conv1_b"][None, :, None, None])
    y = lax.reduce_window(y, -jnp.inf, lax.max, (1, 1, 2, 2), (1, 1, 2, 2), "VALID")
    y = lax.conv_general_dilated(y, params["conv2_w"], (1, 1), "VALID",
                                 dimension_numbers=("NCHW", "OIHW", "NCHW"))
    y = jax.nn.relu(y + params["conv2_b"][None, :, None, None])
    y = lax.reduce_window(y, -jnp.inf, lax.max, (1, 1, 2, 2), (1, 1, 2, 2), "VALID")
    y = y.reshape(y.shape[0], -1)                            # NCHW flatten = torch .view
    y = jax.nn.relu(y @ params["fc1_w"].T + params["fc1_b"])
    y = y @ params["fc2_w"].T + params["fc2_b"]
    return jax.nn.log_softmax(y, axis=-1)


# ----------------------------------------------------------------------------
# Deterministic synthetic parameters (shapes from CNN_MNIST.__init__)
# ----------------------------------------------------------------------------
def init_params(key):
    ks = jax.random.split(key, 8)
    s = 0.05
    return {
        "conv1_w": s * jax.random.normal(ks[0], (20, 1, 5, 5), jnp.float32),
        "conv1_b": s * jax.random.normal(ks[1], (20,), jnp.float32),
        "conv2_w": s * jax.random.normal(ks[2], (50, 20, 5, 5), jnp.float32),
        "conv2_b": s * jax.random.normal(ks[3], (50,), jnp.float32),
        "fc1_w":   s * jax.random.normal(ks[4], (500, 800), jnp.float32),
        "fc1_b":   s * jax.random.normal(ks[5], (500,), jnp.float32),
        "fc2_w":   s * jax.random.normal(ks[6], (10, 500), jnp.float32),
        "fc2_b":   s * jax.random.normal(ks[7], (10,), jnp.float32),
    }


if __name__ == "__main__":
    key = jax.random.PRNGKey(0)
    k_param, k_input = jax.random.split(key)
    params = init_params(k_param)
    prep = prepare_params(params)

    batch = 2
    x = jax.random.normal(k_input, (batch, 1, 28, 28), jnp.float32)

    fwd = jax.jit(cnn_mnist_forward)
    out = jax.block_until_ready(fwd(x, prep))

    assert out.shape == (batch, 10), out.shape
    assert bool(jnp.all(jnp.isfinite(out)))
    row_sums = jnp.sum(jnp.exp(out), axis=1)
    assert bool(jnp.all(jnp.abs(row_sums - 1.0) < 1e-3)), row_sums

    ref = jax.jit(reference_forward)(x, params)
    err = float(jnp.max(jnp.abs(out - ref)))
    assert err < 0.1, f"max |pallas - reference| = {err}"

    print("KERNEL_OK")
</pallas_src>

<mosaic_0001>
module attributes {stable_mosaic.version = 11 : i64} {
  func.func @_conv1_relu_kernel(%arg0: i32, %arg1: memref<1x28x28x1xf32, #tpu.memory_space<vmem>>, %arg2: memref<25x1x128xf32, #tpu.memory_space<vmem>>, %arg3: memref<1x128xf32, #tpu.memory_space<vmem>>, %arg4: memref<1x24x24x128xf32, #tpu.memory_space<vmem>>) attributes {dimension_semantics = [#tpu.dimension_semantics<parallel>], iteration_bounds = array<i64: 2>, scalar_prefetch = 0 : i64, scratch_operands = 0 : i64, tpu.core_type = #tpu.core_type<tc>, window_params = [{transform_indices = @transform_0, window_bounds = array<i64: 1, 28, 28, 1>}, {pipeline_mode = #tpu.pipeline_mode<synchronous>, transform_indices = @transform_1, window_bounds = array<i64: 25, 1, 128>}, {pipeline_mode = #tpu.pipeline_mode<synchronous>, transform_indices = @transform_2, window_bounds = array<i64: 1, 128>}, {transform_indices = @transform_3, window_bounds = array<i64: 1, 24, 24, 128>}]} {
    %cst = arith.constant 0.000000e+00 : f32
    %0 = vector.broadcast %cst : f32 to vector<1x24x24x128xf32>
    %c0_i32 = arith.constant 0 : i32
    %c5_i32 = arith.constant 5 : i32
    %1 = arith.addi %c0_i32, %c5_i32 : i32
    %c1_i32 = arith.constant 1 : i32
    %2 = scf.for %arg5 = %c0_i32 to %1 step %c1_i32 iter_args(%arg6 = %0) -> (vector<1x24x24x128xf32>)  : i32 {
      %c0_7 = arith.constant 0 : index
      %10 = arith.index_cast %arg5 : i32 to index
      %c0_8 = arith.constant 0 : index
      %c0_9 = arith.constant 0 : index
      %11 = vector.load %arg1[%c0_7, %10, %c0_8, %c0_9] : memref<1x28x28x1xf32, #tpu.memory_space<vmem>>, vector<1x24x24x1xf32>
      %c5_i32_10 = arith.constant 5 : i32
      %12 = arith.muli %arg5, %c5_i32_10 : i32
      %c0_i32_11 = arith.constant 0 : i32
      %13 = arith.addi %12, %c0_i32_11 : i32
      %14 = arith.index_cast %13 : i32 to index
      %c0_12 = arith.constant 0 : index
      %c0_13 = arith.constant 0 : index
      %15 = vector.load %arg2[%14, %c0_12, %c0_13] : memref<25x1x128xf32, #tpu.memory_space<vmem>>, vector<1x1x128xf32>
      %16 = vector.shape_cast %15 : vector<1x1x128xf32> to vector<1x128xf32>
      %17 = vector.shape_cast %16 : vector<1x128xf32> to vector<1x1x1x128xf32>
      %18 = vector.broadcast %11 : vector<1x24x24x1xf32> to vector<1x24x24x128xf32>
      %19 = vector.broadcast %17 : vector<1x1x1x128xf32> to vector<1x24x24x128xf32>
      %20 = arith.mulf %18, %19 : vector<1x24x24x128xf32>
      %21 = arith.addf %arg6, %20 : vector<1x24x24x128xf32>
      %c0_14 = arith.constant 0 : index
      %22 = arith.index_cast %arg5 : i32 to index
      %c1 = arith.constant 1 : index
      %c0_15 = arith.constant 0 : index
      %23 = vector.load %arg1[%c0_14, %22, %c1, %c0_15] : memref<1x28x28x1xf32, #tpu.memory_space<vmem>>, vector<1x24x24x1xf32>
      %c5_i32_16 = arith.constant 5 : i32
      %24 = arith.muli %arg5, %c5_i32_16 : i32
      %c1_i32_17 = arith.constant 1 : i32
      %25 = arith.addi %24, %c1_i32_17 : i32
      %26 = arith.index_cast %25 : i32 to index
      %c0_18 = arith.constant 0 : index
      %c0_19 = arith.constant 0 : index
      %27 = vector.load %arg2[%26, %c0_18, %c0_19] : memref<25x1x128xf32, #tpu.memory_space<vmem>>, vector<1x1x128xf32>
      %28 = vector.shape_cast %27 : vector<1x1x128xf32> to vector<1x128xf32>
      %29 = vector.shape_cast %28 : vector<1x128xf32> to vector<1x1x1x128xf32>
      %30 = vector.broadcast %23 : vector<1x24x24x1xf32> to vector<1x24x24x128xf32>
      %31 = vector.broadcast %29 : vector<1x1x1x128xf32> to vector<1x24x24x128xf32>
      %32 = arith.mulf %30, %31 : vector<1x24x24x128xf32>
      %33 = arith.addf %21, %32 : vector<1x24x24x128xf32>
      %c0_20 = arith.constant 0 : index
      %34 = arith.index_cast %arg5 : i32 to index
      %c2 = arith.constant 2 : index
      %c0_21 = arith.constant 0 : index
      %35 = vector.load %arg1[%c0_20, %34, %c2, %c0_21] : memref<1x28x28x1xf32, #tpu.memory_space<vmem>>, vector<1x24x24x1xf32>
      %c5_i32_22 = arith.constant 5 : i32
      %36 = arith.muli %arg5, %c5_i32_22 : i32
      %c2_i32 = arith.constant 2 : i32
      %37 = arith.addi %36, %c2_i32 : i32
      %38 = arith.index_cast %37 : i32 to index
      %c0_23 = arith.constant 0 : index
      %c0_24 = arith.constant 0 : index
      %39 = vector.load %arg2[%38, %c0_23, %c0_24] : memref<25x1x128xf32, #tpu.memory_space<vmem>>, vector<1x1x128xf32>
      %40 = vector.shape_cast %39 : vector<1x1x128xf32> to vector<1x128xf32>
      %41 = vector.shape_cast %40 : vector<1x128xf32> to vector<1x1x1x128xf32>
      %42 = vector.broadcast %35 : vector<1x24x24x1xf32> to vector<1x24x24x128xf32>
      %43 = vector.broadcast %41 : vector<1x1x1x128xf32> to vector<1x24x24x128xf32>
      %44 = arith.mulf %42, %43 : vector<1x24x24x128xf32>
      %45 = arith.addf %33, %44 : vector<1x24x24x128xf32>
      %c0_25 = arith.constant 0 : index
      %46 = arith.index_cast %arg5 : i32 to index
      %c3 = arith.constant 3 : index
      %c0_26 = arith.constant 0 : index
      %47 = vector.load %arg1[%c0_25, %46, %c3, %c0_26] : memref<1x28x28x1xf32, #tpu.memory_space<vmem>>, vector<1x24x24x1xf32>
      %c5_i32_27 = arith.constant 5 : i32
      %48 = arith.muli %arg5, %c5_i32_27 : i32
      %c3_i32 = arith.constant 3 : i32
      %49 = arith.addi %48, %c3_i32 : i32
      %50 = arith.index_cast %49 : i32 to index
      %c0_28 = arith.constant 0 : index
      %c0_29 = arith.constant 0 : index
      %51 = vector.load %arg2[%50, %c0_28, %c0_29] : memref<25x1x128xf32, #tpu.memory_space<vmem>>, vector<1x1x128xf32>
      %52 = vector.shape_cast %51 : vector<1x1x128xf32> to vector<1x128xf32>
      %53 = vector.shape_cast %52 : vector<1x128xf32> to vector<1x1x1x128xf32>
      %54 = vector.broadcast %47 : vector<1x24x24x1xf32> to vector<1x24x24x128xf32>
      %55 = vector.broadcast %53 : vector<1x1x1x128xf32> to vector<1x24x24x128xf32>
      %56 = arith.mulf %54, %55 : vector<1x24x24x128xf32>
      %57 = arith.addf %45, %56 : vector<1x24x24x128xf32>
      %c0_30 = arith.constant 0 : index
      %58 = arith.index_cast %arg5 : i32 to index
      %c4 = arith.constant 4 : index
      %c0_31 = arith.constant 0 : index
      %59 = vector.load %arg1[%c0_30, %58, %c4, %c0_31] : memref<1x28x28x1xf32, #tpu.memory_space<vmem>>, vector<1x24x24x1xf32>
      %c5_i32_32 = arith.constant 5 : i32
      %60 = arith.muli %arg5, %c5_i32_32 : i32
      %c4_i32 = arith.constant 4 : i32
      %61 = arith.addi %60, %c4_i32 : i32
      %62 = arith.index_cast %61 : i32 to index
      %c0_33 = arith.constant 0 : index
      %c0_34 = arith.constant 0 : index
      %63 = vector.load %arg2[%62, %c0_33, %c0_34] : memref<25x1x128xf32, #tpu.memory_space<vmem>>, vector<1x1x128xf32>
      %64 = vector.shape_cast %63 : vector<1x1x128xf32> to vector<1x128xf32>
      %65 = vector.shape_cast %64 : vector<1x128xf32> to vector<1x1x1x128xf32>
      %66 = vector.broadcast %59 : vector<1x24x24x1xf32> to vector<1x24x24x128xf32>
      %67 = vector.broadcast %65 : vector<1x1x1x128xf32> to vector<1x24x24x128xf32>
      %68 = arith.mulf %66, %67 : vector<1x24x24x128xf32>
      %69 = arith.addf %57, %68 : vector<1x24x24x128xf32>
      scf.yield %69 : vector<1x24x24x128xf32>
    }
    %c5_i32_0 = arith.constant 5 : i32
    %c0 = arith.constant 0 : index
    %c0_1 = arith.constant 0 : index
    %3 = vector.load %arg3[%c0, %c0_1] : memref<1x128xf32, #tpu.memory_space<vmem>>, vector<1x128xf32>
    %4 = vector.shape_cast %3 : vector<1x128xf32> to vector<1x1x1x128xf32>
    %5 = vector.broadcast %4 : vector<1x1x1x128xf32> to vector<1x24x24x128xf32>
    %6 = arith.addf %2, %5 : vector<1x24x24x128xf32>
    %cst_2 = arith.constant 0.000000e+00 : f32
    %7 = vector.broadcast %cst_2 : f32 to vector<1x24x24x128xf32>
    %8 = arith.maximumf %6, %7 : vector<1x24x24x128xf32>
    %c0_3 = arith.constant 0 : index
    %c0_4 = arith.constant 0 : index
    %c0_5 = arith.constant 0 : index
    %c0_6 = arith.constant 0 : index
    %9 = vector.load %arg4[%c0_3, %c0_4, %c0_5, %c0_6] : memref<1x24x24x128xf32, #tpu.memory_space<vmem>>, vector<1x24x24x128xf32>
    tpu.vector_store %arg4[%c0_3, %c0_4, %c0_5, %c0_6], %8 {strides = array<i32>} : memref<1x24x24x128xf32, #tpu.memory_space<vmem>>, vector<1x24x24x128xf32>,
    return
  }
  func.func @transform_0(%arg0: i32) -> (i32, i32, i32, i32) {
    %c0_i32 = arith.constant 0 : i32
    %c0_i32_0 = arith.constant 0 : i32
    %c0_i32_1 = arith.constant 0 : i32
    %c0_i32_2 = arith.constant 0 : i32
    return %arg0, %c0_i32, %c0_i32_0, %c0_i32_1 : i32, i32, i32, i32
  }
  func.func @transform_1(%arg0: i32) -> (i32, i32, i32) {
    %c0_i32 = arith.constant 0 : i32
    %c0_i32_0 = arith.constant 0 : i32
    %c0_i32_1 = arith.constant 0 : i32
    %c0_i32_2 = arith.constant 0 : i32
    return %c0_i32, %c0_i32_0, %c0_i32_1 : i32, i32, i32
  }
  func.func @transform_2(%arg0: i32) -> (i32, i32) {
    %c0_i32 = arith.constant 0 : i32
    %c0_i32_0 = arith.constant 0 : i32
    %c0_i32_1 = arith.constant 0 : i32
    return %c0_i32, %c0_i32_0 : i32, i32
  }
  func.func @transform_3(%arg0: i32) -> (i32, i32, i32, i32) {
    %c0_i32 = arith.constant 0 : i32
    %c0_i32_0 = arith.constant 0 : i32
    %c0_i32_1 = arith.constant 0 : i32
    %c0_i32_2 = arith.constant 0 : i32
    return %arg0, %c0_i32, %c0_i32_0, %c0_i32_1 : i32, i32, i32, i32
  }
}

module attributes {stable_mosaic.version = 11 : i64} {
  func.func @_conv2_relu_kernel(%arg0: i32, %arg1: memref<1x12x12x128xf32, #tpu.memory_space<vmem>>, %arg2: memref<25x128x128xbf16, #tpu.memory_space<vmem>>, %arg3: memref<1x128xf32, #tpu.memory_space<vmem>>, %arg4: memref<64x128xf32, #tpu.memory_space<vmem>>) attributes {dimension_semantics = [#tpu.dimension_semantics<parallel>], iteration_bounds = array<i64: 2>, scalar_prefetch = 0 : i64, scratch_operands = 0 : i64, tpu.core_type = #tpu.core_type<tc>, window_params = [{transform_indices = @transform_0, window_bounds = array<i64: 1, 12, 12, 128>}, {pipeline_mode = #tpu.pipeline_mode<synchronous>, transform_indices = @transform_1, window_bounds = array<i64: 25, 128, 128>}, {pipeline_mode = #tpu.pipeline_mode<synchronous>, transform_indices = @transform_2, window_bounds = array<i64: 1, 128>}, {transform_indices = @transform_3, window_bounds = array<i64: 64, 128>}]} {
    %cst = arith.constant 0.000000e+00 : f32
    %0 = vector.broadcast %cst : f32 to vector<64x128xf32>
    %c0 = arith.constant 0 : index
    %c0_0 = arith.constant 0 : index
    %c0_1 = arith.constant 0 : index
    %c0_2 = arith.constant 0 : index
    %1 = vector.load %arg1[%c0, %c0_0, %c0_1, %c0_2] : memref<1x12x12x128xf32, #tpu.memory_space<vmem>>, vector<1x8x8x128xf32>
    %2 = vector.shape_cast %1 : vector<1x8x8x128xf32> to vector<8x8x128xf32>
    %3 = vector.shape_cast %2 : vector<8x8x128xf32> to vector<64x128xf32>
    %4 = arith.truncf %3 : vector<64x128xf32> to vector<64x128xbf16>
    %c0_3 = arith.constant 0 : index
    %c0_4 = arith.constant 0 : index
    %c0_5 = arith.constant 0 : index
    %5 = vector.load %arg2[%c0_3, %c0_4, %c0_5] : memref<25x128x128xbf16, #tpu.memory_space<vmem>>, vector<1x128x128xbf16>
    %6 = vector.shape_cast %5 : vector<1x128x128xbf16> to vector<128x128xbf16>
    %cst_6 = arith.constant dense<0.000000e+00> : vector<64x128xf32>
    %7 = tpu.matmul %4, %6, %cst_6 {dimension_numbers = #tpu.dot_dimension_numbers<[1], [0], [0], [1], [0, 0, 1, 1], [], []>} : vector<64x128xbf16>, vector<128x128xbf16>, vector<64x128xf32> -> vector<64x128xf32>
    %8 = arith.addf %0, %7 : vector<64x128xf32>
    %c0_7 = arith.constant 0 : index
    %c0_8 = arith.constant 0 : index
    %c1 = arith.constant 1 : index
    %c0_9 = arith.constant 0 : index
    %9 = vector.load %arg1[%c0_7, %c0_8, %c1, %c0_9] : memref<1x12x12x128xf32, #tpu.memory_space<vmem>>, vector<1x8x8x128xf32>
    %10 = vector.shape_cast %9 : vector<1x8x8x128xf32> to vector<8x8x128xf32>
    %11 = vector.shape_cast %10 : vector<8x8x128xf32> to vector<64x128xf32>
    %12 = arith.truncf %11 : vector<64x128xf32> to vector<64x128xbf16>
    %c1_10 = arith.constant 1 : index
    %c0_11 = arith.constant 0 : index
    %c0_12 = arith.constant 0 : index
    %13 = vector.load %arg2[%c1_10, %c0_11, %c0_12] : memref<25x128x128xbf16, #tpu.memory_space<vmem>>, vector<1x128x128xbf16>
    %14 = vector.shape_cast %13 : vector<1x128x128xbf16> to vector<128x128xbf16>
    %cst_13 = arith.constant dense<0.000000e+00> : vector<64x128xf32>
    %15 = tpu.matmul %12, %14, %cst_13 {dimension_numbers = #tpu.dot_dimension_numbers<[1], [0], [0], [1], [0, 0, 1, 1], [], []>} : vector<64x128xbf16>, vector<128x128xbf16>, vector<64x128xf32> -> vector<64x128xf32>
    %16 = arith.addf %8, %15 : vector<64x128xf32>
    %c0_14 = arith.constant 0 : index
    %c0_15 = arith.constant 0 : index
    %c2 = arith.constant 2 : index
    %c0_16 = arith.constant 0 : index
    %17 = vector.load %arg1[%c0_14, %c0_15, %c2, %c0_16] : memref<1x12x12x128xf32, #tpu.memory_space<vmem>>, vector<1x8x8x128xf32>
    %18 = vector.shape_cast %17 : vector<1x8x8x128xf32> to vector<8x8x128xf32>
    %19 = vector.shape_cast %18 : vector<8x8x128xf32> to vector<64x128xf32>
    %20 = arith.truncf %19 : vector<64x128xf32> to vector<64x128xbf16>
    %c2_17 = arith.constant 2 : index
    %c0_18 = arith.constant 0 : index
    %c0_19 = arith.constant 0 : index
    %21 = vector.load %arg2[%c2_17, %c0_18, %c0_19] : memref<25x128x128xbf16, #tpu.memory_space<vmem>>, vector<1x128x128xbf16>
    %22 = vector.shape_cast %21 : vector<1x128x128xbf16> to vector<128x128xbf16>
    %cst_20 = arith.constant dense<0.000000e+00> : vector<64x128xf32>
    %23 = tpu.matmul %20, %22, %cst_20 {dimension_numbers = #tpu.dot_dimension_numbers<[1], [0], [0], [1], [0, 0, 1, 1], [], []>} : vector<64x128xbf16>, vector<128x128xbf16>, vector<64x128xf32> -> vector<64x128xf32>
    %24 = arith.addf %16, %23 : vector<64x128xf32>
    %c0_21 = arith.constant 0 : index
    %c0_22 = arith.constant 0 : index
    %c3 = arith.constant 3 : index
    %c0_23 = arith.constant 0 : index
    %25 = vector.load %arg1[%c0_21, %c0_22, %c3, %c0_23] : memref<1x12x12x128xf32, #tpu.memory_space<vmem>>, vector<1x8x8x128xf32>
    %26 = vector.shape_cast %25 : vector<1x8x8x128xf32> to vector<8x8x128xf32>
    %27 = vector.shape_cast %26 : vector<8x8x128xf32> to vector<64x128xf32>
    %28 = arith.truncf %27 : vector<64x128xf32> to vector<64x128xbf16>
    %c3_24 = arith.constant 3 : index
    %c0_25 = arith.constant 0 : index
    %c0_26 = arith.constant 0 : index
    %29 = vector.load %arg2[%c3_24, %c0_25, %c0_26] : memref<25x128x128xbf16, #tpu.memory_space<vmem>>, vector<1x128x128xbf16>
    %30 = vector.shape_cast %29 : vector<1x128x128xbf16> to vector<128x128xbf16>
    %cst_27 = arith.constant dense<0.000000e+00> : vector<64x128xf32>
    %31 = tpu.matmul %28, %30, %cst_27 {dimension_numbers = #tpu.dot_dimension_numbers<[1], [0], [0], [1], [0, 0, 1, 1], [], []>} : vector<64x128xbf16>, vector<128x128xbf16>, vector<64x128xf32> -> vector<64x128xf32>
    %32 = arith.addf %24, %31 : vector<64x128xf32>
    %c0_28 = arith.constant 0 : index
    %c0_29 = arith.constant 0 : index
    %c4 = arith.constant 4 : index
    %c0_30 = arith.constant 0 : index
    %33 = vector.load %arg1[%c0_28, %c0_29, %c4, %c0_30] : memref<1x12x12x128xf32, #tpu.memory_space<vmem>>, vector<1x8x8x128xf32>
    %34 = vector.shape_cast %33 : vector<1x8x8x128xf32> to vector<8x8x128xf32>
    %35 = vector.shape_cast %34 : vector<8x8x128xf32> to vector<64x128xf32>
    %36 = arith.truncf %35 : vector<64x128xf32> to vector<64x128xbf16>
    %c4_31 = arith.constant 4 : index
    %c0_32 = arith.constant 0 : index
    %c0_33 = arith.constant 0 : index
    %37 = vector.load %arg2[%c4_31, %c0_32, %c0_33] : memref<25x128x128xbf16, #tpu.memory_space<vmem>>, vector<1x128x128xbf16>
    %38 = vector.shape_cast %37 : vector<1x128x128xbf16> to vector<128x128xbf16>
    %cst_34 = arith.constant dense<0.000000e+00> : vector<64x128xf32>
    %39 = tpu.matmul %36, %38, %cst_34 {dimension_numbers = #tpu.dot_dimension_numbers<[1], [0], [0], [1], [0, 0, 1, 1], [], []>} : vector<64x128xbf16>, vector<128x128xbf16>, vector<64x128xf32> -> vector<64x128xf32>
    %40 = arith.addf %32, %39 : vector<64x128xf32>
    %c0_35 = arith.constant 0 : index
    %c1_36 = arith.constant 1 : index
    %c0_37 = arith.constant 0 : index
    %c0_38 = arith.constant 0 : index
    %41 = vector.load %arg1[%c0_35, %c1_36, %c0_37, %c0_38] : memref<1x12x12x128xf32, #tpu.memory_space<vmem>>, vector<1x8x8x128xf32>
    %42 = vector.shape_cast %41 : vector<1x8x8x128xf32> to vector<8x8x128xf32>
    %43 = vector.shape_cast %42 : vector<8x8x128xf32> to vector<64x128xf32>
    %44 = arith.truncf %43 : vector<64x128xf32> to vector<64x128xbf16>
    %c5 = arith.constant 5 : index
    %c0_39 = arith.constant 0 : index
    %c0_40 = arith.constant 0 : index
    %45 = vector.load %arg2[%c5, %c0_39, %c0_40] : memref<25x128x128xbf16, #tpu.memory_space<vmem>>, vector<1x128x128xbf16>
    %46 = vector.shape_cast %45 : vector<1x128x128xbf16> to vector<128x128xbf16>
    %cst_41 = arith.constant dense<0.000000e+00> : vector<64x128xf32>
    %47 = tpu.matmul %44, %46, %cst_41 {dimension_numbers = #tpu.dot_dimension_numbers<[1], [0], [0], [1], [0, 0, 1, 1], [], []>} : vector<64x128xbf16>, vector<128x128xbf16>, vector<64x128xf32> -> vector<64x128xf32>
    %48 = arith.addf %40, %47 : vector<64x128xf32>
    %c0_42 = arith.constant 0 : index
    %c1_43 = arith.constant 1 : index
    %c1_44 = arith.constant 1 : index
    %c0_45 = arith.constant 0 : index
    %49 = vector.load %arg1[%c0_42, %c1_43, %c1_44, %c0_45] : memref<1x12x12x128xf32, #tpu.memory_space<vmem>>, vector<1x8x8x128xf32>
    %50 = vector.shape_cast %49 : vector<1x8x8x128xf32> to vector<8x8x128xf32>
    %51 = vector.shape_cast %50 : vector<8x8x128xf32> to vector<64x128xf32>
    %52 = arith.truncf %51 : vector<64x128xf32> to vector<64x128xbf16>
    %c6 = arith.constant 6 : index
    %c0_46 = arith.constant 0 : index
    %c0_47 = arith.constant 0 : index
    %53 = vector.load %arg2[%c6, %c0_46, %c0_47] : memref<25x128x128xbf16, #tpu.memory_space<vmem>>, vector<1x128x128xbf16>
    %54 = vector.shape_cast %53 : vector<1x128x128xbf16> to vector<128x128xbf16>
    %cst_48 = arith.constant dense<0.000000e+00> : vector<64x128xf32>
    %55 = tpu.matmul %52, %54, %cst_48 {dimension_numbers = #tpu.dot_dimension_numbers<[1], [0], [0], [1], [0, 0, 1, 1], [], []>} : vector<64x128xbf16>, vector<128x128xbf16>, vector<64x128xf32> -> vector<64x128xf32>
    %56 = arith.addf %48, %55 : vector<64x128xf32>
    %c0_49 = arith.constant 0 : index
    %c1_50 = arith.constant 1 : index
    %c2_51 = arith.constant 2 : index
    %c0_52 = arith.constant 0 : index
    %57 = vector.load %arg1[%c0_49, %c1_50, %c2_51, %c0_52] : memref<1x12x12x128xf32, #tpu.memory_space<vmem>>, vector<1x8x8x128xf32>
    %58 = vector.shape_cast %57 : vector<1x8x8x128xf32> to vector<8x8x128xf32>
    %59 = vector.shape_cast %58 : vector<8x8x128xf32> to vector<64x128xf32>
    %60 = arith.truncf %59 : vector<64x128xf32> to vector<64x128xbf16>
    %c7 = arith.constant 7 : index
    %c0_53 = arith.constant 0 : index
    %c0_54 = arith.constant 0 : index
    %61 = vector.load %arg2[%c7, %c0_53, %c0_54] : memref<25x128x128xbf16, #tpu.memory_space<vmem>>, vector<1x128x128xbf16>
    %62 = vector.shape_cast %61 : vector<1x128x128xbf16> to vector<128x128xbf16>
    %cst_55 = arith.constant dense<0.000000e+00> : vector<64x128xf32>
    %63 = tpu.matmul %60, %62, %cst_55 {dimension_numbers = #tpu.dot_dimension_numbers<[1], [0], [0], [1], [0, 0, 1, 1], [], []>} : vector<64x128xbf16>, vector<128x128xbf16>, vector<64x128xf32> -> vector<64x128xf32>
    %64 = arith.addf %56, %63 : vector<64x128xf32>
    %c0_56 = arith.constant 0 : index
    %c1_57 = arith.constant 1 : index
    %c3_58 = arith.constant 3 : index
    %c0_59 = arith.constant 0 : index
    %65 = vector.load %arg1[%c0_56, %c1_57, %c3_58, %c0_59] : memref<1x12x12x128xf32, #tpu.memory_space<vmem>>, vector<1x8x8x128xf32>
    %66 = vector.shape_cast %65 : vector<1x8x8x128xf32> to vector<8x8x128xf32>
    %67 = vector.shape_cast %66 : vector<8x8x128xf32> to vector<64x128xf32>
    %68 = arith.truncf %67 : vector<64x128xf32> to vector<64x128xbf16>
    %c8 = arith.constant 8 : index
    %c0_60 = arith.constant 0 : index
    %c0_61 = arith.constant 0 : index
    %69 = vector.load %arg2[%c8, %c0_60, %c0_61] : memref<25x128x128xbf16, #tpu.memory_space<vmem>>, vector<1x128x128xbf16>
    %70 = vector.shape_cast %69 : vector<1x128x128xbf16> to vector<128x128xbf16>
    %cst_62 = arith.constant dense<0.000000e+00> : vector<64x128xf32>
    %71 = tpu.matmul %68, %70, %cst_62 {dimension_numbers = #tpu.dot_dimension_numbers<[1], [0], [0], [1], [0, 0, 1, 1], [], []>} : vector<64x128xbf16>, vector<128x128xbf16>, vector<64x128xf32> -> vector<64x128xf32>
    %72 = arith.addf %64, %71 : vector<64x128xf32>
    %c0_63 = arith.constant 0 : index
    %c1_64 = arith.constant 1 : index
    %c4_65 = arith.constant 4 : index
    %c0_66 = arith.constant 0 : index
    %73 = vector.load %arg1[%c0_63, %c1_64, %c4_65, %c0_66] : memref<1x12x12x128xf32, #tpu.memory_space<vmem>>, vector<1x8x8x128xf32>
    %74 = vector.shape_cast %73 : vector<1x8x8x128xf32> to vector<8x8x128xf32>
    %75 = vector.shape_cast %74 : vector<8x8x128xf32> to vector<64x128xf32>
    %76 = arith.truncf %75 : vector<64x128xf32> to vector<64x128xbf16>
    %c9 = arith.constant 9 : index
    %c0_67 = arith.constant 0 : index
    %c0_68 = arith.constant 0 : index
    %77 = vector.load %arg2[%c9, %c0_67, %c0_68] : memref<25x128x128xbf16, #tpu.memory_space<vmem>>, vector<1x128x128xbf16>
    %78 = vector.shape_cast %77 : vector<1x128x128xbf16> to vector<128x128xbf16>
    %cst_69 = arith.constant dense<0.000000e+00> : vector<64x128xf32>
    %79 = tpu.matmul %76, %78, %cst_69 {dimension_numbers = #tpu.dot_dimension_numbers<[1], [0], [0], [1], [0, 0, 1, 1], [], []>} : vector<64x128xbf16>, vector<128x128xbf16>, vector<64x128xf32> -> vector<64x128xf32>
    %80 = arith.addf %72, %79 : vector<64x128xf32>
    %c0_70 = arith.constant 0 : index
    %c2_71 = arith.constant 2 : index
    %c0_72 = arith.constant 0 : index
    %c0_73 = arith.constant 0 : index
    %81 = vector.load %arg1[%c0_70, %c2_71, %c0_72, %c0_73] : memref<1x12x12x128xf32, #tpu.memory_space<vmem>>, vector<1x8x8x128xf32>
    %82 = vector.shape_cast %81 : vector<1x8x8x128xf32> to vector<8x8x128xf32>
    %83 = vector.shape_cast %82 : vector<8x8x128xf32> to vector<64x128xf32>
    %84 = arith.truncf %83 : vector<64x128xf32> to vector<64x128xbf16>
    %c10 = arith.constant 10 : index
    %c0_74 = arith.constant 0 : index
    %c0_75 = arith.constant 0 : index
    %85 = vector.load %arg2[%c10, %c0_74, %c0_75] : memref<25x128x128xbf16, #tpu.memory_space<vmem>>, vector<1x128x128xbf16>
    %86 = vector.shape_cast %85 : vector<1x128x128xbf16> to vector<128x128xbf16>
    %cst_76 = arith.constant dense<0.000000e+00> : vector<64x128xf32>
    %87 = tpu.matmul %84, %86, %cst_76 {dimension_numbers = #tpu.dot_dimension_numbers<[1], [0], [0], [1], [0, 0, 1, 1], [], []>} : vector<64x128xbf16>, vector<128x128xbf16>, vector<64x128xf32> -> vector<64x128xf32>
    %88 = arith.addf %80, %87 : vector<64x128xf32>
    %c0_77 = arith.constant 0 : index
    %c2_78 = arith.constant 2 : index
    %c1_79 = arith.constant 1 : index
    %c0_80 = arith.constant 0 : index
    %89 = vector.load %arg1[%c0_77, %c2_78, %c1_79, %c0_80] : memref<1x12x12x128xf32, #tpu.memory_space<vmem>>, vector<1x8x8x128xf32>
    %90 = vector.shape_cast %89 : vector<1x8x8x128xf32> to vector<8x8x128xf32>
    %91 = vector.shape_cast %90 : vector<8x8x128xf32> to vector<64x128xf32>
    %92 = arith.truncf %91 : vector<64x128xf32> to vector<64x128xbf16>
    %c11 = arith.constant 11 : index
    %c0_81 = arith.constant 0 : index
    %c0_82 = arith.constant 0 : index
    %93 = vector.load %arg2[%c11, %c0_81, %c0_82] : memref<25x128x128xbf16, #tpu.memory_space<vmem>>, vector<1x128x128xbf16>
    %94 = vector.shape_cast %93 : vector<1x128x128xbf16> to vector<128x128xbf16>
    %cst_83 = arith.constant dense<0.000000e+00> : vector<64x128xf32>
    %95 = tpu.matmul %92, %94, %cst_83 {dimension_numbers = #tpu.dot_dimension_numbers<[1], [0], [0], [1], [0, 0, 1, 1], [], []>} : vector<64x128xbf16>, vector<128x128xbf16>, vector<64x128xf32> -> vector<64x128xf32>
    %96 = arith.addf %88, %95 : vector<64x128xf32>
    %c0_84 = arith.constant 0 : index
    %c2_85 = arith.constant 2 : index
    %c2_86 = arith.constant 2 : index
    %c0_87 = arith.constant 0 : index
    %97 = vector.load %arg1[%c0_84, %c2_85, %c2_86, %c0_87] : memref<1x12x12x128xf32, #tpu.memory_space<vmem>>, vector<1x8x8x128xf32>
    %98 = vector.shape_cast %97 : vector<1x8x8x128xf32> to vector<8x8x128xf32>
    %99 = vector.shape_cast %98 : vector<8x8x128xf32> to vector<64x128xf32>
    %100 = arith.truncf %99 : vector<64x128xf32> to vector<64x128xbf16>
    %c12 = arith.constant 12 : index
    %c0_88 = arith.constant 0 : index
    %c0_89 = arith.constant 0 : index
    %101 = vector.load %arg2[%c12, %c0_88, %c0_89] : memref<25x128x128xbf16, #tpu.memory_space<vmem>>, vector<1x128x128xbf16>
    %102 = vector.shape_cast %101 : vector<1x128x128xbf16> to vector<128x128xbf16>
    %cst_90 = arith.constant dense<0.000000e+00> : vector<64x128xf32>
    %103 = tpu.matmul %100, %102, %cst_90 {dimension_numbers = #tpu.dot_dimension_numbers<[1], [0], [0], [1], [0, 0, 1, 1], [], []>} : vector<64x128xbf16>, vector<128x128xbf16>, vector<64x128xf32> -> vector<64x128xf32>
    %104 = arith.addf %96, %103 : vector<64x128xf32>
    %c0_91 = arith.constant 0 : index
    %c2_92 = arith.constant 2 : index
    %c3_93 = arith.constant 3 : index
    %c0_94 = arith.constant 0 : index
    %105 = vector.load %arg1[%c0_91, %c2_92, %c3_93, %c0_94] : memref<1x12x12x128xf32, #tpu.memory_space<vmem>>, vector<1x8x8x128xf32>
    %106 = vector.shape_cast %105 : vector<1x8x8x128xf32> to vector<8x8x128xf32>
    %107 = vector.shape_cast %106 : vector<8x8x128xf32> to vector<64x128xf32>
    %108 = arith.truncf %107 : vector<64x128xf32> to vector<64x128xbf16>
    %c13 = arith.constant 13 : index
    %c0_95 = arith.constant 0 : index
    %c0_96 = arith.constant 0 : index
    %109 = vector.load %arg2[%c13, %c0_95, %c0_96] : memref<25x128x128xbf16, #tpu.memory_space<vmem>>, vector<1x128x128xbf16>
    %110 = vector.shape_cast %109 : vector<1x128x128xbf16> to vector<128x128xbf16>
    %cst_97 = arith.constant dense<0.000000e+00> : vector<64x128xf32>
    %111 = tpu.matmul %108, %110, %cst_97 {dimension_numbers = #tpu.dot_dimension_numbers<[1], [0], [0], [1], [0, 0, 1, 1], [], []>} : vector<64x128xbf16>, vector<128x128xbf16>, vector<64x128xf32> -> vector<64x128xf32>
    %112 = arith.addf %104, %111 : vector<64x128xf32>
    %c0_98 = arith.constant 0 : index
    %c2_99 = arith.constant 2 : index
    %c4_100 = arith.constant 4 : index
    %c0_101 = arith.constant 0 : index
    %113 = vector.load %arg1[%c0_98, %c2_99, %c4_100, %c0_101] : memref<1x12x12x128xf32, #tpu.memory_space<vmem>>, vector<1x8x8x128xf32>
    %114 = vector.shape_cast %113 : vector<1x8x8x128xf32> to vector<8x8x128xf32>
    %115 = vector.shape_cast %114 : vector<8x8x128xf32> to vector<64x128xf32>
    %116 = arith.truncf %115 : vector<64x128xf32> to vector<64x128xbf16>
    %c14 = arith.constant 14 : index
    %c0_102 = arith.constant 0 : index
    %c0_103 = arith.constant 0 : index
    %117 = vector.load %arg2[%c14, %c0_102, %c0_103] : memref<25x128x128xbf16, #tpu.memory_space<vmem>>, vector<1x128x128xbf16>
    %118 = vector.shape_cast %117 : vector<1x128x128xbf16> to vector<128x128xbf16>
    %cst_104 = arith.constant dense<0.000000e+00> : vector<64x128xf32>
    %119 = tpu.matmul %116, %118, %cst_104 {dimension_numbers = #tpu.dot_dimension_numbers<[1], [0], [0], [1], [0, 0, 1, 1], [], []>} : vector<64x128xbf16>, vector<128x128xbf16>, vector<64x128xf32> -> vector<64x128xf32>
    %120 = arith.addf %112, %119 : vector<64x128xf32>
    %c0_105 = arith.constant 0 : index
    %c3_106 = arith.constant 3 : index
    %c0_107 = arith.constant 0 : index
    %c0_108 = arith.constant 0 : index
    %121 = vector.load %arg1[%c0_105, %c3_106, %c0_107, %c0_108] : memref<1x12x12x128xf32, #tpu.memory_space<vmem>>, vector<1x8x8x128xf32>
    %122 = vector.shape_cast %121 : vector<1x8x8x128xf32> to vector<8x8x128xf32>
    %123 = vector.shape_cast %122 : vector<8x8x128xf32> to vector<64x128xf32>
    %124 = arith.truncf %123 : vector<64x128xf32> to vector<64x128xbf16>
    %c15 = arith.constant 15 : index
    %c0_109 = arith.constant 0 : index
    %c0_110 = arith.constant 0 : index
    %125 = vector.load %arg2[%c15, %c0_109, %c0_110] : memref<25x128x128xbf16, #tpu.memory_space<vmem>>, vector<1x128x128xbf16>
    %126 = vector.shape_cast %125 : vector<1x128x128xbf16> to vector<128x128xbf16>
    %cst_111 = arith.constant dense<0.000000e+00> : vector<64x128xf32>
    %127 = tpu.matmul %124, %126, %cst_111 {dimension_numbers = #tpu.dot_dimension_numbers<[1], [0], [0], [1], [0, 0, 1, 1], [], []>} : vector<64x128xbf16>, vector<128x128xbf16>, vector<64x128xf32> -> vector<64x128xf32>
    %128 = arith.addf %120, %127 : vector<64x128xf32>
    %c0_112 = arith.constant 0 : index
    %c3_113 = arith.constant 3 : index
    %c1_114 = arith.constant 1 : index
    %c0_115 = arith.constant 0 : index
    %129 = vector.load %arg1[%c0_112, %c3_113, %c1_114, %c0_115] : memref<1x12x12x128xf32, #tpu.memory_space<vmem>>, vector<1x8x8x128xf32>
    %130 = vector.shape_cast %129 : vector<1x8x8x128xf32> to vector<8x8x128xf32>
    %131 = vector.shape_cast %130 : vector<8x8x128xf32> to vector<64x128xf32>
    %132 = arith.truncf %131 : vector<64x128xf32> to vector<64x128xbf16>
    %c16 = arith.constant 16 : index
    %c0_116 = arith.constant 0 : index
    %c0_117 = arith.constant 0 : index
    %133 = vector.load %arg2[%c16, %c0_116, %c0_117] : memref<25x128x128xbf16, #tpu.memory_space<vmem>>, vector<1x128x128xbf16>
    %134 = vector.shape_cast %133 : vector<1x128x128xbf16> to vector<128x128xbf16>
    %cst_118 = arith.constant dense<0.000000e+00> : vector<64x128xf32>
    %135 = tpu.matmul %132, %134, %cst_118 {dimension_numbers = #tpu.dot_dimension_numbers<[1], [0], [0], [1], [0, 0, 1, 1], [], []>} : vector<64x128xbf16>, vector<128x128xbf16>, vector<64x128xf32> -> vector<64x128xf32>
    %136 = arith.addf %128, %135 : vector<64x128xf32>
    %c0_119 = arith.constant 0 : index
    %c3_120 = arith.constant 3 : index
    %c2_121 = arith.constant 2 : index
    %c0_122 = arith.constant 0 : index
    %137 = vector.load %arg1[%c0_119, %c3_120, %c2_121, %c0_122] : memref<1x12x12x128xf32, #tpu.memory_space<vmem>>, vector<1x8x8x128xf32>
    %138 = vector.shape_cast %137 : vector<1x8x8x128xf32> to vector<8x8x128xf32>
    %139 = vector.shape_cast %138 : vector<8x8x128xf32> to vector<64x128xf32>
    %140 = arith.truncf %139 : vector<64x128xf32> to vector<64x128xbf16>
    %c17 = arith.constant 17 : index
    %c0_123 = arith.constant 0 : index
    %c0_124 = arith.constant 0 : index
    %141 = vector.load %arg2[%c17, %c0_123, %c0_124] : memref<25x128x128xbf16, #tpu.memory_space<vmem>>, vector<1x128x128xbf16>
    %142 = vector.shape_cast %141 : vector<1x128x128xbf16> to vector<128x128xbf16>
    %cst_125 = arith.constant dense<0.000000e+00> : vector<64x128xf32>
    %143 = tpu.matmul %140, %142, %cst_125 {dimension_numbers = #tpu.dot_dimension_numbers<[1], [0], [0], [1], [0, 0, 1, 1], [], []>} : vector<64x128xbf16>, vector<128x128xbf16>, vector<64x128xf32> -> vector<64x128xf32>
    %144 = arith.addf %136, %143 : vector<64x128xf32>
    %c0_126 = arith.constant 0 : index
    %c3_127 = arith.constant 3 : index
    %c3_128 = arith.constant 3 : index
    %c0_129 = arith.constant 0 : index
    %145 = vector.load %arg1[%c0_126, %c3_127, %c3_128, %c0_129] : memref<1x12x12x128xf32, #tpu.memory_space<vmem>>, vector<1x8x8x128xf32>
    %146 = vector.shape_cast %145 : vector<1x8x8x128xf32> to vector<8x8x128xf32>
    %147 = vector.shape_cast %146 : vector<8x8x128xf32> to vector<64x128xf32>
    %148 = arith.truncf %147 : vector<64x128xf32> to vector<64x128xbf16>
    %c18 = arith.constant 18 : index
    %c0_130 = arith.constant 0 : index
    %c0_131 = arith.constant 0 : index
    %149 = vector.load %arg2[%c18, %c0_130, %c0_131] : memref<25x128x128xbf16, #tpu.memory_space<vmem>>, vector<1x128x128xbf16>
    %150 = vector.shape_cast %149 : vector<1x128x128xbf16> to vector<128x128xbf16>
    %cst_132 = arith.constant dense<0.000000e+00> : vector<64x128xf32>
    %151 = tpu.matmul %148, %150, %cst_132 {dimension_numbers = #tpu.dot_dimension_numbers<[1], [0], [0], [1], [0, 0, 1, 1], [], []>} : vector<64x128xbf16>, vector<128x128xbf16>, vector<64x128xf32> -> vector<64x128xf32>
    %152 = arith.addf %144, %151 : vector<64x128xf32>
    %c0_133 = arith.constant 0 : index
    %c3_134 = arith.constant 3 : index
    %c4_135 = arith.constant 4 : index
    %c0_136 = arith.constant 0 : index
    %153 = vector.load %arg1[%c0_133, %c3_134, %c4_135, %c0_136] : memref<1x12x12x128xf32, #tpu.memory_space<vmem>>, vector<1x8x8x128xf32>
    %154 = vector.shape_cast %153 : vector<1x8x8x128xf32> to vector<8x8x128xf32>
    %155 = vector.shape_cast %154 : vector<8x8x128xf32> to vector<64x128xf32>
    %156 = arith.truncf %155 : vector<64x128xf32> to vector<64x128xbf16>
    %c19 = arith.constant 19 : index
    %c0_137 = arith.constant 0 : index
    %c0_138 = arith.constant 0 : index
    %157 = vector.load %arg2[%c19, %c0_137, %c0_138] : memref<25x128x128xbf16, #tpu.memory_space<vmem>>, vector<1x128x128xbf16>
    %158 = vector.shape_cast %157 : vector<1x128x128xbf16> to vector<128x128xbf16>
    %cst_139 = arith.constant dense<0.000000e+00> : vector<64x128xf32>
    %159 = tpu.matmul %156, %158, %cst_139 {dimension_numbers = #tpu.dot_dimension_numbers<[1], [0], [0], [1], [0, 0, 1, 1], [], []>} : vector<64x128xbf16>, vector<128x128xbf16>, vector<64x128xf32> -> vector<64x128xf32>
    %160 = arith.addf %152, %159 : vector<64x128xf32>
    %c0_140 = arith.constant 0 : index
    %c4_141 = arith.constant 4 : index
    %c0_142 = arith.constant 0 : index
    %c0_143 = arith.constant 0 : index
    %161 = vector.load %arg1[%c0_140, %c4_141, %c0_142, %c0_143] : memref<1x12x12x128xf32, #tpu.memory_space<vmem>>, vector<1x8x8x128xf32>
    %162 = vector.shape_cast %161 : vector<1x8x8x128xf32> to vector<8x8x128xf32>
    %163 = vector.shape_cast %162 : vector<8x8x128xf32> to vector<64x128xf32>
    %164 = arith.truncf %163 : vector<64x128xf32> to vector<64x128xbf16>
    %c20 = arith.constant 20 : index
    %c0_144 = arith.constant 0 : index
    %c0_145 = arith.constant 0 : index
    %165 = vector.load %arg2[%c20, %c0_144, %c0_145] : memref<25x128x128xbf16, #tpu.memory_space<vmem>>, vector<1x128x128xbf16>
    %166 = vector.shape_cast %165 : vector<1x128x128xbf16> to vector<128x128xbf16>
    %cst_146 = arith.constant dense<0.000000e+00> : vector<64x128xf32>
    %167 = tpu.matmul %164, %166, %cst_146 {dimension_numbers = #tpu.dot_dimension_numbers<[1], [0], [0], [1], [0, 0, 1, 1], [], []>} : vector<64x128xbf16>, vector<128x128xbf16>, vector<64x128xf32> -> vector<64x128xf32>
    %168 = arith.addf %160, %167 : vector<64x128xf32>
    %c0_147 = arith.constant 0 : index
    %c4_148 = arith.constant 4 : index
    %c1_149 = arith.constant 1 : index
    %c0_150 = arith.constant 0 : index
    %169 = vector.load %arg1[%c0_147, %c4_148, %c1_149, %c0_150] : memref<1x12x12x128xf32, #tpu.memory_space<vmem>>, vector<1x8x8x128xf32>
    %170 = vector.shape_cast %169 : vector<1x8x8x128xf32> to vector<8x8x128xf32>
    %171 = vector.shape_cast %170 : vector<8x8x128xf32> to vector<64x128xf32>
    %172 = arith.truncf %171 : vector<64x128xf32> to vector<64x128xbf16>
    %c21 = arith.constant 21 : index
    %c0_151 = arith.constant 0 : index
    %c0_152 = arith.constant 0 : index
    %173 = vector.load %arg2[%c21, %c0_151, %c0_152] : memref<25x128x128xbf16, #tpu.memory_space<vmem>>, vector<1x128x128xbf16>
    %174 = vector.shape_cast %173 : vector<1x128x128xbf16> to vector<128x128xbf16>
    %cst_153 = arith.constant dense<0.000000e+00> : vector<64x128xf32>
    %175 = tpu.matmul %172, %174, %cst_153 {dimension_numbers = #tpu.dot_dimension_numbers<[1], [0], [0], [1], [0, 0, 1, 1], [], []>} : vector<64x128xbf16>, vector<128x128xbf16>, vector<64x128xf32> -> vector<64x128xf32>
    %176 = arith.addf %168, %175 : vector<64x128xf32>
    %c0_154 = arith.constant 0 : index
    %c4_155 = arith.constant 4 : index
    %c2_156 = arith.constant 2 : index
    %c0_157 = arith.constant 0 : index
    %177 = vector.load %arg1[%c0_154, %c4_155, %c2_156, %c0_157] : memref<1x12x12x128xf32, #tpu.memory_space<vmem>>, vector<1x8x8x128xf32>
    %178 = vector.shape_cast %177 : vector<1x8x8x128xf32> to vector<8x8x128xf32>
    %179 = vector.shape_cast %178 : vector<8x8x128xf32> to vector<64x128xf32>
    %180 = arith.truncf %179 : vector<64x128xf32> to vector<64x128xbf16>
    %c22 = arith.constant 22 : index
    %c0_158 = arith.constant 0 : index
    %c0_159 = arith.constant 0 : index
    %181 = vector.load %arg2[%c22, %c0_158, %c0_159] : memref<25x128x128xbf16, #tpu.memory_space<vmem>>, vector<1x128x128xbf16>
    %182 = vector.shape_cast %181 : vector<1x128x128xbf16> to vector<128x128xbf16>
    %cst_160 = arith.constant dense<0.000000e+00> : vector<64x128xf32>
    %183 = tpu.matmul %180, %182, %cst_160 {dimension_numbers = #tpu.dot_dimension_numbers<[1], [0], [0], [1], [0, 0, 1, 1], [], []>} : vector<64x128xbf16>, vector<128x128xbf16>, vector<64x128xf32> -> vector<64x128xf32>
    %184 = arith.addf %176, %183 : vector<64x128xf32>
    %c0_161 = arith.constant 0 : index
    %c4_162 = arith.constant 4 : index
    %c3_163 = arith.constant 3 : index
    %c0_164 = arith.constant 0 : index
    %185 = vector.load %arg1[%c0_161, %c4_162, %c3_163, %c0_164] : memref<1x12x12x128xf32, #tpu.memory_space<vmem>>, vector<1x8x8x128xf32>
    %186 = vector.shape_cast %185 : vector<1x8x8x128xf32> to vector<8x8x128xf32>
    %187 = vector.shape_cast %186 : vector<8x8x128xf32> to vector<64x128xf32>
    %188 = arith.truncf %187 : vector<64x128xf32> to vector<64x128xbf16>
    %c23 = arith.constant 23 : index
    %c0_165 = arith.constant 0 : index
    %c0_166 = arith.constant 0 : index
    %189 = vector.load %arg2[%c23, %c0_165, %c0_166] : memref<25x128x128xbf16, #tpu.memory_space<vmem>>, vector<1x128x128xbf16>
    %190 = vector.shape_cast %189 : vector<1x128x128xbf16> to vector<128x128xbf16>
    %cst_167 = arith.constant dense<0.000000e+00> : vector<64x128xf32>
    %191 = tpu.matmul %188, %190, %cst_167 {dimension_numbers = #tpu.dot_dimension_numbers<[1], [0], [0], [1], [0, 0, 1, 1], [], []>} : vector<64x128xbf16>, vector<128x128xbf16>, vector<64x128xf32> -> vector<64x128xf32>
    %192 = arith.addf %184, %191 : vector<64x128xf32>
    %c0_168 = arith.constant 0 : index
    %c4_169 = arith.constant 4 : index
    %c4_170 = arith.constant 4 : index
    %c0_171 = arith.constant 0 : index
    %193 = vector.load %arg1[%c0_168, %c4_169, %c4_170, %c0_171] : memref<1x12x12x128xf32, #tpu.memory_space<vmem>>, vector<1x8x8x128xf32>
    %194 = vector.shape_cast %193 : vector<1x8x8x128xf32> to vector<8x8x128xf32>
    %195 = vector.shape_cast %194 : vector<8x8x128xf32> to vector<64x128xf32>
    %196 = arith.truncf %195 : vector<64x128xf32> to vector<64x128xbf16>
    %c24 = arith.constant 24 : index
    %c0_172 = arith.constant 0 : index
    %c0_173 = arith.constant 0 : index
    %197 = vector.load %arg2[%c24, %c0_172, %c0_173] : memref<25x128x128xbf16, #tpu.memory_space<vmem>>, vector<1x128x128xbf16>
    %198 = vector.shape_cast %197 : vector<1x128x128xbf16> to vector<128x128xbf16>
    %cst_174 = arith.constant dense<0.000000e+00> : vector<64x128xf32>
    %199 = tpu.matmul %196, %198, %cst_174 {dimension_numbers = #tpu.dot_dimension_numbers<[1], [0], [0], [1], [0, 0, 1, 1], [], []>} : vector<64x128xbf16>, vector<128x128xbf16>, vector<64x128xf32> -> vector<64x128xf32>
    %200 = arith.addf %192, %199 : vector<64x128xf32>
    %c0_175 = arith.constant 0 : index
    %c0_176 = arith.constant 0 : index
    %201 = vector.load %arg3[%c0_175, %c0_176] : memref<1x128xf32, #tpu.memory_space<vmem>>, vector<1x128xf32>
    %202 = vector.broadcast %201 : vector<1x128xf32> to vector<64x128xf32>
    %203 = arith.addf %200, %202 : vector<64x128xf32>
    %cst_177 = arith.constant 0.000000e+00 : f32
    %204 = vector.broadcast %cst_177 : f32 to vector<64x128xf32>
    %205 = arith.maximumf %203, %204 : vector<64x128xf32>
    %c0_178 = arith.constant 0 : index
    %c0_179 = arith.constant 0 : index
    %206 = vector.load %arg4[%c0_178, %c0_179] : memref<64x128xf32, #tpu.memory_space<vmem>>, vector<64x128xf32>
    tpu.vector_store %arg4[%c0_178, %c0_179], %205 {strides = array<i32>} : memref<64x128xf32, #tpu.memory_space<vmem>>, vector<64x128xf32>,
    return
  }
  func.func @transform_0(%arg0: i32) -> (i32, i32, i32, i32) {
    %c0_i32 = arith.constant 0 : i32
    %c0_i32_0 = arith.constant 0 : i32
    %c0_i32_1 = arith.constant 0 : i32
    %c0_i32_2 = arith.constant 0 : i32
    return %arg0, %c0_i32, %c0_i32_0, %c0_i32_1 : i32, i32, i32, i32
  }
  func.func @transform_1(%arg0: i32) -> (i32, i32, i32) {
    %c0_i32 = arith.constant 0 : i32
    %c0_i32_0 = arith.constant 0 : i32
    %c0_i32_1 = arith.constant 0 : i32
    %c0_i32_2 = arith.constant 0 : i32
    return %c0_i32, %c0_i32_0, %c0_i32_1 : i32, i32, i32
  }
  func.func @transform_2(%arg0: i32) -> (i32, i32) {
    %c0_i32 = arith.constant 0 : i32
    %c0_i32_0 = arith.constant 0 : i32
    %c0_i32_1 = arith.constant 0 : i32
    return %c0_i32, %c0_i32_0 : i32, i32
  }
  func.func @transform_3(%arg0: i32) -> (i32, i32) {
    %c0_i32 = arith.constant 0 : i32
    %c0_i32_0 = arith.constant 0 : i32
    return %arg0, %c0_i32 : i32, i32
  }
}

module attributes {stable_mosaic.version = 11 : i64} {
  func.func @_mlp_head_kernel(%arg0: i32, %arg1: memref<2x2048xbf16, #tpu.memory_space<vmem>>, %arg2: memref<2048x512xbf16, #tpu.memory_space<vmem>>, %arg3: memref<1x512xf32, #tpu.memory_space<vmem>>, %arg4: memref<512x128xbf16, #tpu.memory_space<vmem>>, %arg5: memref<1x128xf32, #tpu.memory_space<vmem>>, %arg6: memref<2x128xf32, #tpu.memory_space<vmem>>) attributes {dimension_semantics = [#tpu.dimension_semantics<parallel>], iteration_bounds = array<i64: 1>, scalar_prefetch = 0 : i64, scratch_operands = 0 : i64, tpu.core_type = #tpu.core_type<tc>, window_params = [{transform_indices = @transform_0, window_bounds = array<i64: 2, 2048>}, {pipeline_mode = #tpu.pipeline_mode<synchronous>, transform_indices = @transform_1, window_bounds = array<i64: 2048, 512>}, {pipeline_mode = #tpu.pipeline_mode<synchronous>, transform_indices = @transform_2, window_bounds = array<i64: 1, 512>}, {pipeline_mode = #tpu.pipeline_mode<synchronous>, transform_indices = @transform_3, window_bounds = array<i64: 512, 128>}, {pipeline_mode = #tpu.pipeline_mode<synchronous>, transform_indices = @transform_4, window_bounds = array<i64: 1, 128>}, {transform_indices = @transform_5, window_bounds = array<i64: 2, 128>}]} {
    %c0 = arith.constant 0 : index
    %c0_0 = arith.constant 0 : index
    %0 = vector.load %arg1[%c0, %c0_0] : memref<2x2048xbf16, #tpu.memory_space<vmem>>, vector<2x2048xbf16>
    %c0_1 = arith.constant 0 : index
    %c0_2 = arith.constant 0 : index
    %1 = vector.load %arg2[%c0_1, %c0_2] : memref<2048x512xbf16, #tpu.memory_space<vmem>>, vector<2048x512xbf16>
    %cst = arith.constant dense<0.000000e+00> : vector<2x512xf32>
    %2 = tpu.matmul %0, %1, %cst {dimension_numbers = #tpu.dot_dimension_numbers<[1], [0], [0], [1], [0, 0, 1, 1], [], []>} : vector<2x2048xbf16>, vector<2048x512xbf16>, vector<2x512xf32> -> vector<2x512xf32>
    %c0_3 = arith.constant 0 : index
    %c0_4 = arith.constant 0 : index
    %3 = vector.load %arg3[%c0_3, %c0_4] : memref<1x512xf32, #tpu.memory_space<vmem>>, vector<1x512xf32>
    %4 = vector.broadcast %3 : vector<1x512xf32> to vector<2x512xf32>
    %5 = arith.addf %2, %4 : vector<2x512xf32>
    %cst_5 = arith.constant 0.000000e+00 : f32
    %6 = vector.broadcast %cst_5 : f32 to vector<2x512xf32>
    %7 = arith.maximumf %5, %6 : vector<2x512xf32>
    %8 = arith.truncf %7 : vector<2x512xf32> to vector<2x512xbf16>
    %c0_6 = arith.constant 0 : index
    %c0_7 = arith.constant 0 : index
    %9 = vector.load %arg4[%c0_6, %c0_7] : memref<512x128xbf16, #tpu.memory_space<vmem>>, vector<512x128xbf16>
    %cst_8 = arith.constant dense<0.000000e+00> : vector<2x128xf32>
    %10 = tpu.matmul %8, %9, %cst_8 {dimension_numbers = #tpu.dot_dimension_numbers<[1], [0], [0], [1], [0, 0, 1, 1], [], []>} : vector<2x512xbf16>, vector<512x128xbf16>, vector<2x128xf32> -> vector<2x128xf32>
    %c0_9 = arith.constant 0 : index
    %c0_10 = arith.constant 0 : index
    %11 = vector.load %arg5[%c0_9, %c0_10] : memref<1x128xf32, #tpu.memory_space<vmem>>, vector<1x128xf32>
    %12 = vector.broadcast %11 : vector<1x128xf32> to vector<2x128xf32>
    %13 = arith.addf %10, %12 : vector<2x128xf32>
    %14 = tpu.iota {dimensions = array<i32: 1>} : vector<2x128xi32>
    %c10_i32 = arith.constant 10 : i32
    %15 = vector.broadcast %c10_i32 : i32 to vector<2x128xi32>
    %16 = arith.cmpi slt, %14, %15 : vector<2x128xi32>
    %cst_11 = arith.constant -1.000000e+30 : f32
    %17 = vector.broadcast %cst_11 : f32 to vector<2x128xf32>
    %18 = arith.select %16, %13, %17 : vector<2x128xi1>, vector<2x128xf32>
    %cst_12 = arith.constant dense<0xFF800000> : vector<2xf32>
    %19 = vector.multi_reduction <maximumf>, %18, %cst_12 [1] : vector<2x128xf32> to vector<2xf32>
    %20 = vector.shape_cast %19 : vector<2xf32> to vector<2x1xf32>
    %21 = vector.broadcast %20 : vector<2x1xf32> to vector<2x128xf32>
    %22 = arith.subf %18, %21 : vector<2x128xf32>
    %23 = math.exp %22 : vector<2x128xf32>
    %cst_13 = arith.constant dense<0.000000e+00> : vector<2xf32>
    %24 = vector.multi_reduction <add>, %23, %cst_13 [1] : vector<2x128xf32> to vector<2xf32>
    %25 = vector.shape_cast %24 : vector<2xf32> to vector<2x1xf32>
    %26 = math.log %25 : vector<2x1xf32>
    %27 = vector.broadcast %26 : vector<2x1xf32> to vector<2x128xf32>
    %28 = arith.subf %22, %27 : vector<2x128xf32>
    %c0_14 = arith.constant 0 : index
    %c0_15 = arith.constant 0 : index
    %29 = vector.load %arg6[%c0_14, %c0_15] : memref<2x128xf32, #tpu.memory_space<vmem>>, vector<2x128xf32>
    tpu.vector_store %arg6[%c0_14, %c0_15], %28 {strides = array<i32>} : memref<2x128xf32, #tpu.memory_space<vmem>>, vector<2x128xf32>,
    return
  }
  func.func @transform_0(%arg0: i32) -> (i32, i32) {
    %c0_i32 = arith.constant 0 : i32
    %c0_i32_0 = arith.constant 0 : i32
    return %arg0, %c0_i32 : i32, i32
  }
  func.func @transform_1(%arg0: i32) -> (i32, i32) {
    %c0_i32 = arith.constant 0 : i32
    %c0_i32_0 = arith.constant 0 : i32
    %c0_i32_1 = arith.constant 0 : i32
    return %c0_i32, %c0_i32_0 : i32, i32
  }
  func.func @transform_2(%arg0: i32) -> (i32, i32) {
    %c0_i32 = arith.constant 0 : i32
    %c0_i32_0 = arith.constant 0 : i32
    %c0_i32_1 = arith.constant 0 : i32
    return %c0_i32, %c0_i32_0 : i32, i32
  }
  func.func @transform_3(%arg0: i32) -> (i32, i32) {
    %c0_i32 = arith.constant 0 : i32
    %c0_i32_0 = arith.constant 0 : i32
    %c0_i32_1 = arith.constant 0 : i32
    return %c0_i32, %c0_i32_0 : i32, i32
  }
  func.func @transform_4(%arg0: i32) -> (i32, i32) {
    %c0_i32 = arith.constant 0 : i32
    %c0_i32_0 = arith.constant 0 : i32
    %c0_i32_1 = arith.constant 0 : i32
    return %c0_i32, %c0_i32_0 : i32, i32
  }
  func.func @transform_5(%arg0: i32) -> (i32, i32) {
    %c0_i32 = arith.constant 0 : i32
    %c0_i32_0 = arith.constant 0 : i32
    return %arg0, %c0_i32 : i32, i32
  }
}

</mosaic_0001>

<llo_original>
// kernel: cnn_mnist_forward.3
$region0: #{cnn_mnist_forward.3}
  #allocation0 [shape = 'u32[]', space=smem, size = 0x4, offset = 0x4, fixed_abs, tag = 'smem constant byte address 0x4 - core index']
  #allocation1 [shape = 'u32[144,128]{1,0:T(1,128)}', space=vmem, size = 0x12000, scoped, tag = 'internal scratch']
  %s0 = inlined_call_operand.vmem [shape: f32[2,28,28,1], index: 0, kind: input, shape index: {}]
  %s1 = inlined_call_operand.hbm [shape: f32[25,1,128], index: 1, kind: input, shape index: {}]
  %s2 = inlined_call_operand.hbm [shape: f32[1,128], index: 2, kind: input, shape index: {}]
  %s3 = inlined_call_operand.vmem [shape: f32[2,24,24,128], index: 3, kind: output, shape index: {}]
  %s4 = sld [smem:[#allocation0]]
  $region60: #{cnn_mnist_forward.3} parent=0
    _
  %s6 = ssub.s32 1, %s4
  %s7 = scalar_select 0, %s6, %s4
  $region1: #{cnn_mnist_forward.3} parent=0
    #allocation2 [shape = 'u8[12800]{0}', space=vmem, size = 0x3400, scoped, tag = 'input window, operand 1, single buffered']
    #allocation3 [shape = 's32[2]{0}', space=sflag, size = 0x8, scoped, tag = 'scoped memory for cnn_mnist_forward.3']
    #allocation4 [shape = 'u8[512]{0}', space=vmem, size = 0x400, scoped, tag = 'input window, operand 2, single buffered']
    #allocation5 [shape = 's32[1]{0}', space=sflag, size = 0x4, scoped, tag = 'scoped memory for cnn_mnist_forward.3']
    %8 = vsyncpa [#allocation3], 0
    %9 = vsyncpa [#allocation5], 0
    loop: start=0, step=1, limit=4
    $region2: #{cnn_mnist_forward.3} parent=1 // loop_pre_header
      _
    $region3: #{cnn_mnist_forward.3} parent=1 // loop_header
      %s11 = sphi 0, %s15
      %p12 = scmp.ge.s32.totalorder %s11, 4
      %s21 = sphi 0, %s23
      %s24 = sphi 0, %s21
      %s25 = sphi 0, %s24
      %s41 = sphi 0, %s25
      %s45 = sphi 0, %s45
      %s47 = sphi 0, %s45
      %s48 = sphi 0, %s47
      %s62 = sphi 0, %s48
      %s66 = sphi 0, %s66
      %s68 = sphi 0, %s66
      %s69 = sphi 0, %s68
      %s83 = sphi 0, %s69
      %s89 = sphi 0, %s91
      %s92 = sphi 0, %s89
      %s93 = sphi 0, %s92
      %s109 = sphi 0, %s93
    $region4: #{cnn_mnist_forward.3} parent=1 // loop_header_branch
      %14 = sbr.rel (%p12) target = $region8
    $region5: #{cnn_mnist_forward.3} parent=1 // loop_body
      %s16 = ssub.s32 %s11, 1
      %s17 = ssub.s32 %s11, 2
      %s18 = sadd.s32 %s11, 1
      %s19 = ssub.s32 %s11, %s18
      %p20 = scmp.eq.s32.totalorder %s19, 0
      %s22 = sadd.s32 %s21, 1
      %s23 = scalar_select %p20, %s21, %s22
      %p26 = pneg %p20
      %p27 = scmp.eq.s32.totalorder %s11, 1
      %p28 = por %p26, %p27
      %p29 = scmp.ne.s32.totalorder %s21, %s24
      %p30 = scmp.eq.s32.totalorder %s11, 0
      %p31 = por %p29, %p30
      %p32 = scmp.ne.s32.totalorder %s21, %s24
      %p33 = scmp.eq.s32.totalorder %s16, 1
      %p34 = por %p32, %p33
      %p35 = scmp.ne.s32.totalorder %s24, %s25
      %p36 = scmp.eq.s32.totalorder %s16, 0
      %p37 = por %p35, %p36
      %p38 = scmp.ne.s32.totalorder %s24, %s25
      %p39 = scmp.eq.s32.totalorder %s17, 1
      %p40 = por %p38, %p39
      %p42 = scmp.ne.s32.totalorder %s25, %s41
      %p43 = scmp.eq.s32.totalorder %s17, 0
      %p44 = por %p42, %p43
      %s46 = sadd.s32 %s45, 1
      %p49 = scmp.eq.s32.totalorder %s11, 1
      %p50 = scmp.ne.s32.totalorder %s45, %s47
      %p51 = scmp.eq.s32.totalorder %s11, 0
      %p52 = por %p50, %p51
      %p53 = scmp.ne.s32.totalorder %s45, %s47
      %p54 = scmp.eq.s32.totalorder %s16, 1
      %p55 = por %p53, %p54
      %p56 = scmp.ne.s32.totalorder %s47, %s48
      %p57 = scmp.eq.s32.totalorder %s16, 0
      %p58 = por %p56, %p57
      %p59 = scmp.ne.s32.totalorder %s47, %s48
      %p60 = scmp.eq.s32.totalorder %s17, 1
      %p61 = por %p59, %p60
      %p63 = scmp.ne.s32.totalorder %s48, %s62
      %p64 = scmp.eq.s32.totalorder %s17, 0
      %p65 = por %p63, %p64
      %s67 = sadd.s32 %s66, 1
      %p70 = scmp.eq.s32.totalorder %s11, 1
      %p71 = scmp.ne.s32.totalorder %s66, %s68
      %p72 = scmp.eq.s32.totalorder %s11, 0
      %p73 = por %p71, %p72
      %p74 = scmp.ne.s32.totalorder %s66, %s68
      %p75 = scmp.eq.s32.totalorder %s16, 1
      %p76 = por %p74, %p75
      %p77 = scmp.ne.s32.totalorder %s68, %s69
      %p78 = scmp.eq.s32.totalorder %s16, 0
      %p79 = por %p77, %p78
      %p80 = scmp.ne.s32.totalorder %s68, %s69
      %p81 = scmp.eq.s32.totalorder %s17, 1
      %p82 = por %p80, %p81
      %p84 = scmp.ne.s32.totalorder %s69, %s83
      %p85 = scmp.eq.s32.totalorder %s17, 0
      %p86 = por %p84, %p85
      %s87 = ssub.s32 %s11, %s18
      %p88 = scmp.eq.s32.totalorder %s87, 0
      %s90 = sadd.s32 %s89, 1
      %s91 = scalar_select %p88, %s89, %s90
      %p94 = pneg %p88
      %p95 = scmp.eq.s32.totalorder %s11, 1
      %p96 = por %p94, %p95
      %p97 = scmp.ne.s32.totalorder %s89, %s92
      %p98 = scmp.eq.s32.totalorder %s11, 0
      %p99 = por %p97, %p98
      %p100 = scmp.ne.s32.totalorder %s89, %s92
      %p101 = scmp.eq.s32.totalorder %s16, 1
      %p102 = por %p100, %p101
      %p103 = scmp.ne.s32.totalorder %s92, %s93
      %p104 = scmp.eq.s32.totalorder %s16, 0
      %p105 = por %p103, %p104
      %p106 = scmp.ne.s32.totalorder %s92, %s93
      %p107 = scmp.eq.s32.totalorder %s17, 1
      %p108 = por %p106, %p107
      %p110 = scmp.ne.s32.totalorder %s93, %s109
      %p111 = scmp.eq.s32.totalorder %s17, 0
      %p112 = por %p110, %p111
      %p113 = scmp.le.s32.totalorder 1, %s11
      %p114 = scmp.lt.s32.totalorder %s11, 3
      %p115 = pnand %p113, %p114
      %p116 = pneg %p115
      // Predicated region
      $region9: #{cnn_mnist_forward.3} parent=5 // pred_check
        _
      $region10: #{cnn_mnist_forward.3} parent=5 // pred_check_branch
        %118 = sbr.rel (%p115) target = $region12
      $region11: #{cnn_mnist_forward.3} parent=5 // pred_region
        %s119 = ssub.s32 %s11, 1
        // Predicated region
        $region13: #{cnn_mnist_forward.3} parent=11 // pred_check
          %p120 = pneg %p58
        $region14: #{cnn_mnist_forward.3} parent=11 // pred_check_branch
          %122 = sbr.rel (%p120) target = $region16
        $region15: #{cnn_mnist_forward.3} parent=11 // pred_region
          %s124 = ssub.s32 400, 400
          %125 = vsyncadd [#allocation3], %s124
          %s126 = sshll.u32 [#allocation2], 4
          %s127 = int_to_ptr.vmem [resolvable:$true] %s126
          %132 = dma.hbm_to_vmem [thread:$0]  %s1, 400, %s127, [#allocation3], 16, 16, 1
        $region16: #{cnn_mnist_forward.3} parent=11 // pred_fallthru
          _
        // Predicated region
        $region17: #{cnn_mnist_forward.3} parent=11 // pred_check
          %p133 = pneg %p79
        $region18: #{cnn_mnist_forward.3} parent=11 // pred_check_branch
          %135 = sbr.rel (%p133) target = $region20
        $region19: #{cnn_mnist_forward.3} parent=11 // pred_region
          %s137 = ssub.s32 16, 16
          %138 = vsyncadd [#allocation5], %s137
          %s140 = sshll.u32 [#allocation4], 4
          %s141 = int_to_ptr.vmem [resolvable:$true] %s140
          %143 = dma.hbm_to_vmem [thread:$0]  %s2, 16, %s141, [#allocation5]
        $region20: #{cnn_mnist_forward.3} parent=11 // pred_fallthru
          _
      $region12: #{cnn_mnist_forward.3} parent=5 // pred_fallthru
        _
      %p144 = scmp.lt.s32.totalorder %s11, 2
      // Predicated region
      $region21: #{cnn_mnist_forward.3} parent=5 // pred_check
        %p145 = pneg %p144
      $region22: #{cnn_mnist_forward.3} parent=5 // pred_check_branch
        %147 = sbr.rel (%p145) target = $region24
      $region23: #{cnn_mnist_forward.3} parent=5 // pred_region
        // Predicated region
        $region25: #{cnn_mnist_forward.3} parent=23 // pred_check
          %p148 = pneg %p31
        $region26: #{cnn_mnist_forward.3} parent=23 // pred_check_branch
          %150 = sbr.rel (%p148) target = $region28
        $region27: #{cnn_mnist_forward.3} parent=23 // pred_region
          %p151 = scmp.lt.s32.totalorder %s11, 1
          %s152 = scalar_select %p151, %s11, 1
          %s153 = smul.addr %s152, 112
          %s154 = smul.addr %s153, 8
          %s155 = scalar_lea.vmem %s0, %s154
        $region28: #{cnn_mnist_forward.3} parent=23 // pred_fallthru
          _
      $region24: #{cnn_mnist_forward.3} parent=5 // pred_fallthru
        _
      %p156 = scmp.le.s32.totalorder 1, %s11
      %p157 = scmp.lt.s32.totalorder %s11, 3
      %p158 = pnand %p156, %p157
      %p159 = pneg %p158
      // Predicated region
      $region29: #{cnn_mnist_forward.3} parent=5 // pred_check
        _
      $region30: #{cnn_mnist_forward.3} parent=5 // pred_check_branch
        %161 = sbr.rel (%p158) target = $region32
      $region31: #{cnn_mnist_forward.3} parent=5 // pred_region
        %s162 = ssub.s32 %s11, 1
        // Predicated region
        $region33: #{cnn_mnist_forward.3} parent=31 // pred_check
          %p163 = pneg %p58
        $region34: #{cnn_mnist_forward.3} parent=31 // pred_check_branch
          %165 = sbr.rel (%p163) target = $region36
        $region35: #{cnn_mnist_forward.3} parent=31 // pred_region
          %166 = dma.done [#allocation3], 400
        $region36: #{cnn_mnist_forward.3} parent=31 // pred_fallthru
          _
        // Predicated region
        $region37: #{cnn_mnist_forward.3} parent=31 // pred_check
          %p167 = pneg %p79
        $region38: #{cnn_mnist_forward.3} parent=31 // pred_check_branch
          %169 = sbr.rel (%p167) target = $region40
        $region39: #{cnn_mnist_forward.3} parent=31 // pred_region
          %170 = dma.done [#allocation5], 16
        $region40: #{cnn_mnist_forward.3} parent=31 // pred_fallthru
          _
        %p171 = scmp.lt.s32.totalorder %s16, 1
        %s172 = scalar_select %p171, %s16, 1
        %s173 = smul.addr %s172, 112
        %s174 = smul.addr %s173, 8
        %s175 = scalar_lea.vmem %s0, %s174
        %p176 = pneg %p37
        %p177 = pneg %p34
        %p178 = pneg %p58
        %p179 = pneg %p55
        %p180 = pneg %p79
        %p181 = pneg %p76
        %p182 = pneg %p105
        %p183 = pneg %p102
        %p184 = scmp.lt.s32.totalorder %s16, 1
        %s185 = scalar_select %p184, %s16, 1
        %s186 = smul.addr %s185, 72
        %s187 = smul.addr %s186, 8
        %s188 = scalar_lea.vmem %s3, %s187
        %p189 = scmp.lt.s32.totalorder %s16, 1
        %s190 = scalar_select %p189, %s16, 1
        %s191 = smul.addr %s190, 112
        %s192 = smul.addr %s191, 8
        %s193 = scalar_lea.vmem %s0, %s192
        %p194 = scmp.lt.s32.totalorder %s16, 1
        %s195 = scalar_select %p194, %s16, 1
        %s196 = smul.addr %s195, 72
        %s197 = smul.addr %s196, 8
        %s198 = scalar_lea.vmem %s3, %s197
        loop: start=0, step=1, limit=5
        $region41: #{cnn_mnist_forward.3} parent=31 // loop_pre_header
          _
        $region42: #{cnn_mnist_forward.3} parent=31 // loop_header
          %s200 = sphi 0, %s204
          %p201 = scmp.ge.s32.totalorder %s200, 5
          %v205 = vphi 0.0, %v3132
          %v206 = vphi 0.0, %v3133
          %v207 = vphi 0.0, %v3134
          %v208 = vphi 0.0, %v3135
          %v209 = vphi 0.0, %v3136
          %v210 = vphi 0.0, %v3137
          %v211 = vphi 0.0, %v3138
          %v212 = vphi 0.0, %v3139
          %v213 = vphi 0.0, %v3140
          %v214 = vphi 0.0, %v3141
          %v215 = vphi 0.0, %v3142
          %v216 = vphi 0.0, %v3143
          %v217 = vphi 0.0, %v3144
          %v218 = vphi 0.0, %v3145
          %v219 = vphi 0.0, %v3146
          %v220 = vphi 0.0, %v3147
          %v221 = vphi 0.0, %v3148
          %v222 = vphi 0.0, %v3149
          %v223 = vphi 0.0, %v3150
          %v224 = vphi 0.0, %v3151
          %v225 = vphi 0.0, %v3152
          %v226 = vphi 0.0, %v3153
          %v227 = vphi 0.0, %v3154
          %v228 = vphi 0.0, %v3155
          %v229 = vphi 0.0, %v3156
          %v230 = vphi 0.0, %v3157
          %v231 = vphi 0.0, %v3158
          %v232 = vphi 0.0, %v3159
          %v233 = vphi 0.0, %v3160
          %v234 = vphi 0.0, %v3161
          %v235 = vphi 0.0, %v3162
          %v236 = vphi 0.0, %v3163
          %v237 = vphi 0.0, %v3164
          %v238 = vphi 0.0, %v3165
          %v239 = vphi 0.0, %v3166
          %v240 = vphi 0.0, %v3167
          %v241 = vphi 0.0, %v3168
          %v242 = vphi 0.0, %v3169
          %v243 = vphi 0.0, %v3170
          %v244 = vphi 0.0, %v3171
          %v245 = vphi 0.0, %v3172
          %v246 = vphi 0.0, %v3173
          %v247 = vphi 0.0, %v3174
          %v248 = vphi 0.0, %v3175
          %v249 = vphi 0.0, %v3176
          %v250 = vphi 0.0, %v3177
          %v251 = vphi 0.0, %v3178
          %v252 = vphi 0.0, %v3179
          %v253 = vphi 0.0, %v3180
          %v254 = vphi 0.0, %v3181
          %v255 = vphi 0.0, %v3182
          %v256 = vphi 0.0, %v3183
          %v257 = vphi 0.0, %v3184
          %v258 = vphi 0.0, %v3185
          %v259 = vphi 0.0, %v3186
          %v260 = vphi 0.0, %v3187
          %v261 = vphi 0.0, %v3188
          %v262 = vphi 0.0, %v3189
          %v263 = vphi 0.0, %v3190
          %v264 = vphi 0.0, %v3191
          %v265 = vphi 0.0, %v3192
          %v266 = vphi 0.0, %v3193
          %v267 = vphi 0.0, %v3194
          %v268 = vphi 0.0, %v3195
          %v269 = vphi 0.0, %v3196
          %v270 = vphi 0.0, %v3197
          %v271 = vphi 0.0, %v3198
          %v272 = vphi 0.0, %v3199
          %v273 = vphi 0.0, %v3200
          %v274 = vphi 0.0, %v3201
          %v275 = vphi 0.0, %v3202
          %v276 = vphi 0.0, %v3203
        $region43: #{cnn_mnist_forward.3} parent=31 // loop_header_branch
          %203 = sbr.rel (%p201) target = $region47
        $region44: #{cnn_mnist_forward.3} parent=31 // loop_body
          %s277 = smul.u32 %s200, 32
          %s278 = scalar_lea.vmem %s193, %s277
          %v279 = vld [vmem:[%s278] sm:$0xff]
          %v280 = vld [vmem:[%s278 + $0x8] sm:$0xff]
          %v281 = vld [vmem:[%s278 + $0x10] sm:$0xff]
          %v282 = vld [vmem:[%s278 + $0x20] sm:$0xff]
          %v283 = vld [vmem:[%s278 + $0x28] sm:$0xff]
          %v284 = vld [vmem:[%s278 + $0x30] sm:$0xff]
          %v285 = vld [vmem:[%s278 + $0x40] sm:$0xff]
          %v286 = vld [vmem:[%s278 + $0x48] sm:$0xff]
          %v287 = vld [vmem:[%s278 + $0x50] sm:$0xff]
          %v288 = vld [vmem:[%s278 + $0x60] sm:$0xff]
          %v289 = vld [vmem:[%s278 + $0x68] sm:$0xff]
          %v290 = vld [vmem:[%s278 + $0x70] sm:$0xff]
          %v291 = vld [vmem:[%s278 + $0x80] sm:$0xff]
          %v292 = vld [vmem:[%s278 + $0x88] sm:$0xff]
          %v293 = vld [vmem:[%s278 + $0x90] sm:$0xff]
          %v294 = vld [vmem:[%s278 + $0xa0] sm:$0xff]
          %v295 = vld [vmem:[%s278 + $0xa8] sm:$0xff]
          %v296 = vld [vmem:[%s278 + $0xb0] sm:$0xff]
          %v297 = vld [vmem:[%s278 + $0xc0] sm:$0xff]
          %v298 = vld [vmem:[%s278 + $0xc8] sm:$0xff]
          %v299 = vld [vmem:[%s278 + $0xd0] sm:$0xff]
          %v300 = vld [vmem:[%s278 + $0xe0] sm:$0xff]
          %v301 = vld [vmem:[%s278 + $0xe8] sm:$0xff]
          %v302 = vld [vmem:[%s278 + $0xf0] sm:$0xff]
          %v303 = vld [vmem:[%s278 + $0x100] sm:$0xff]
          %v304 = vld [vmem:[%s278 + $0x108] sm:$0xff]
          %v305 = vld [vmem:[%s278 + $0x110] sm:$0xff]
          %v306 = vld [vmem:[%s278 + $0x120] sm:$0xff]
          %v307 = vld [vmem:[%s278 + $0x128] sm:$0xff]
          %v308 = vld [vmem:[%s278 + $0x130] sm:$0xff]
          %v309 = vld [vmem:[%s278 + $0x140] sm:$0xff]
          %v310 = vld [vmem:[%s278 + $0x148] sm:$0xff]
          %v311 = vld [vmem:[%s278 + $0x150] sm:$0xff]
          %v312 = vld [vmem:[%s278 + $0x160] sm:$0xff]
          %v313 = vld [vmem:[%s278 + $0x168] sm:$0xff]
          %v314 = vld [vmem:[%s278 + $0x170] sm:$0xff]
          %v315 = vld [vmem:[%s278 + $0x180] sm:$0xff]
          %v316 = vld [vmem:[%s278 + $0x188] sm:$0xff]
          %v317 = vld [vmem:[%s278 + $0x190] sm:$0xff]
          %v318 = vld [vmem:[%s278 + $0x1a0] sm:$0xff]
          %v319 = vld [vmem:[%s278 + $0x1a8] sm:$0xff]
          %v320 = vld [vmem:[%s278 + $0x1b0] sm:$0xff]
          %v321 = vld [vmem:[%s278 + $0x1c0] sm:$0xff]
          %v322 = vld [vmem:[%s278 + $0x1c8] sm:$0xff]
          %v323 = vld [vmem:[%s278 + $0x1d0] sm:$0xff]
          %v324 = vld [vmem:[%s278 + $0x1e0] sm:$0xff]
          %v325 = vld [vmem:[%s278 + $0x1e8] sm:$0xff]
          %v326 = vld [vmem:[%s278 + $0x1f0] sm:$0xff]
          %v327 = vld [vmem:[%s278 + $0x200] sm:$0xff]
          %v328 = vld [vmem:[%s278 + $0x208] sm:$0xff]
          %v329 = vld [vmem:[%s278 + $0x210] sm:$0xff]
          %v330 = vld [vmem:[%s278 + $0x220] sm:$0xff]
          %v331 = vld [vmem:[%s278 + $0x228] sm:$0xff]
          %v332 = vld [vmem:[%s278 + $0x230] sm:$0xff]
          %v333 = vld [vmem:[%s278 + $0x240] sm:$0xff]
          %v334 = vld [vmem:[%s278 + $0x248] sm:$0xff]
          %v335 = vld [vmem:[%s278 + $0x250] sm:$0xff]
          %v336 = vld [vmem:[%s278 + $0x260] sm:$0xff]
          %v337 = vld [vmem:[%s278 + $0x268] sm:$0xff]
          %v338 = vld [vmem:[%s278 + $0x270] sm:$0xff]
          %v339 = vld [vmem:[%s278 + $0x280] sm:$0xff]
          %v340 = vld [vmem:[%s278 + $0x288] sm:$0xff]
          %v341 = vld [vmem:[%s278 + $0x290] sm:$0xff]
          %v342 = vld [vmem:[%s278 + $0x2a0] sm:$0xff]
          %v343 = vld [vmem:[%s278 + $0x2a8] sm:$0xff]
          %v344 = vld [vmem:[%s278 + $0x2b0] sm:$0xff]
          %v345 = vld [vmem:[%s278 + $0x2c0] sm:$0xff]
          %v346 = vld [vmem:[%s278 + $0x2c8] sm:$0xff]
          %v347 = vld [vmem:[%s278 + $0x2d0] sm:$0xff]
          %v348 = vld [vmem:[%s278 + $0x2e0] sm:$0xff]
          %v349 = vld [vmem:[%s278 + $0x2e8] sm:$0xff]
          %v350 = vld [vmem:[%s278 + $0x2f0] sm:$0xff]
          %s351 = smul.u32 %s200, 5
          %s352 = scalar_lea.vmem [#allocation2], %s351
          %v353 = vld [vmem:[%s352] sm:$0x1]
          %355 = vset.pattern.permute.xlu0 0
          %356 = vperm.xlu0 %355, %v279
          %v357 = vpop.permute.xlu0 %356
          %360 = vset.pattern.permute.xlu0 0
          %361 = vperm.xlu0 %360, %v280
          %v362 = vpop.permute.xlu0 %361
          %365 = vset.pattern.permute.xlu0 0
          %366 = vperm.xlu0 %365, %v281
          %v367 = vpop.permute.xlu0 %366
          %370 = vset.pattern.permute.xlu0 0
          %371 = vperm.xlu0 %370, %v282
          %v372 = vpop.permute.xlu0 %371
          %375 = vset.pattern.permute.xlu0 0
          %376 = vperm.xlu0 %375, %v283
          %v377 = vpop.permute.xlu0 %376
          %380 = vset.pattern.permute.xlu0 0
          %381 = vperm.xlu0 %380, %v284
          %v382 = vpop.permute.xlu0 %381
          %385 = vset.pattern.permute.xlu0 0
          %386 = vperm.xlu0 %385, %v285
          %v387 = vpop.permute.xlu0 %386
          %390 = vset.pattern.permute.xlu0 0
          %391 = vperm.xlu0 %390, %v286
          %v392 = vpop.permute.xlu0 %391
          %395 = vset.pattern.permute.xlu0 0
          %396 = vperm.xlu0 %395, %v287
          %v397 = vpop.permute.xlu0 %396
          %400 = vset.pattern.permute.xlu0 0
          %401 = vperm.xlu0 %400, %v288
          %v402 = vpop.permute.xlu0 %401
          %405 = vset.pattern.permute.xlu0 0
          %406 = vperm.xlu0 %405, %v289
          %v407 = vpop.permute.xlu0 %406
          %410 = vset.pattern.permute.xlu0 0
          %411 = vperm.xlu0 %410, %v290
          %v412 = vpop.permute.xlu0 %411
          %415 = vset.pattern.permute.xlu0 0
          %416 = vperm.xlu0 %415, %v291
          %v417 = vpop.permute.xlu0 %416
          %420 = vset.pattern.permute.xlu0 0
          %421 = vperm.xlu0 %420, %v292
          %v422 = vpop.permute.xlu0 %421
          %425 = vset.pattern.permute.xlu0 0
          %426 = vperm.xlu0 %425, %v293
          %v427 = vpop.permute.xlu0 %426
          %430 = vset.pattern.permute.xlu0 0
          %431 = vperm.xlu0 %430, %v294
          %v432 = vpop.permute.xlu0 %431
          %435 = vset.pattern.permute.xlu0 0
          %436 = vperm.xlu0 %435, %v295
          %v437 = vpop.permute.xlu0 %436
          %440 = vset.pattern.permute.xlu0 0
          %441 = vperm.xlu0 %440, %v296
          %v442 = vpop.permute.xlu0 %441
          %445 = vset.pattern.permute.xlu0 0
          %446 = vperm.xlu0 %445, %v297
          %v447 = vpop.permute.xlu0 %446
          %450 = vset.pattern.permute.xlu0 0
          %451 = vperm.xlu0 %450, %v298
          %v452 = vpop.permute.xlu0 %451
          %455 = vset.pattern.permute.xlu0 0
          %456 = vperm.xlu0 %455, %v299
          %v457 = vpop.permute.xlu0 %456
          %460 = vset.pattern.permute.xlu0 0
          %461 = vperm.xlu0 %460, %v300
          %v462 = vpop.permute.xlu0 %461
          %465 = vset.pattern.permute.xlu0 0
          %466 = vperm.xlu0 %465, %v301
          %v467 = vpop.permute.xlu0 %466
          %470 = vset.pattern.permute.xlu0 0
          %471 = vperm.xlu0 %470, %v302
          %v472 = vpop.permute.xlu0 %471
          %475 = vset.pattern.permute.xlu0 0
          %476 = vperm.xlu0 %475, %v303
          %v477 = vpop.permute.xlu0 %476
          %480 = vset.pattern.permute.xlu0 0
          %481 = vperm.xlu0 %480, %v304
          %v482 = vpop.permute.xlu0 %481
          %485 = vset.pattern.permute.xlu0 0
          %486 = vperm.xlu0 %485, %v305
          %v487 = vpop.permute.xlu0 %486
          %490 = vset.pattern.permute.xlu0 0
          %491 = vperm.xlu0 %490, %v306
          %v492 = vpop.permute.xlu0 %491
          %495 = vset.pattern.permute.xlu0 0
          %496 = vperm.xlu0 %495, %v307
          %v497 = vpop.permute.xlu0 %496
          %500 = vset.pattern.permute.xlu0 0
          %501 = vperm.xlu0 %500, %v308
          %v502 = vpop.permute.xlu0 %501
          %505 = vset.pattern.permute.xlu0 0
          %506 = vperm.xlu0 %505, %v309
          %v507 = vpop.permute.xlu0 %506
          %510 = vset.pattern.permute.xlu0 0
          %511 = vperm.xlu0 %510, %v310
          %v512 = vpop.permute.xlu0 %511
          %515 = vset.pattern.permute.xlu0 0
          %516 = vperm.xlu0 %515, %v311
          %v517 = vpop.permute.xlu0 %516
          %520 = vset.pattern.permute.xlu0 0
          %521 = vperm.xlu0 %520, %v312
          %v522 = vpop.permute.xlu0 %521
          %525 = vset.pattern.permute.xlu0 0
          %526 = vperm.xlu0 %525, %v313
          %v527 = vpop.permute.xlu0 %526
          %530 = vset.pattern.permute.xlu0 0
          %531 = vperm.xlu0 %530, %v314
          %v532 = vpop.permute.xlu0 %531
          %535 = vset.pattern.permute.xlu0 0
          %536 = vperm.xlu0 %535, %v315
          %v537 = vpop.permute.xlu0 %536
          %540 = vset.pattern.permute.xlu0 0
          %541 = vperm.xlu0 %540, %v316
          %v542 = vpop.permute.xlu0 %541
          %545 = vset.pattern.permute.xlu0 0
          %546 = vperm.xlu0 %545, %v317
          %v547 = vpop.permute.xlu0 %546
          %550 = vset.pattern.permute.xlu0 0
          %551 = vperm.xlu0 %550, %v318
          %v552 = vpop.permute.xlu0 %551
          %555 = vset.pattern.permute.xlu0 0
          %556 = vperm.xlu0 %555, %v319
          %v557 = vpop.permute.xlu0 %556
          %560 = vset.pattern.permute.xlu0 0
          %561 = vperm.xlu0 %560, %v320
          %v562 = vpop.permute.xlu0 %561
          %565 = vset.pattern.permute.xlu0 0
          %566 = vperm.xlu0 %565, %v321
          %v567 = vpop.permute.xlu0 %566
          %570 = vset.pattern.permute.xlu0 0
          %571 = vperm.xlu0 %570, %v322
          %v572 = vpop.permute.xlu0 %571
          %575 = vset.pattern.permute.xlu0 0
          %576 = vperm.xlu0 %575, %v323
          %v577 = vpop.permute.xlu0 %576
          %580 = vset.pattern.permute.xlu0 0
          %581 = vperm.xlu0 %580, %v324
          %v582 = vpop.permute.xlu0 %581
          %585 = vset.pattern.permute.xlu0 0
          %586 = vperm.xlu0 %585, %v325
          %v587 = vpop.permute.xlu0 %586
          %590 = vset.pattern.permute.xlu0 0
          %591 = vperm.xlu0 %590, %v326
          %v592 = vpop.permute.xlu0 %591
          %595 = vset.pattern.permute.xlu0 0
          %596 = vperm.xlu0 %595, %v327
          %v597 = vpop.permute.xlu0 %596
          %600 = vset.pattern.permute.xlu0 0
          %601 = vperm.xlu0 %600, %v328
          %v602 = vpop.permute.xlu0 %601
          %605 = vset.pattern.permute.xlu0 0
          %606 = vperm.xlu0 %605, %v329
          %v607 = vpop.permute.xlu0 %606
          %610 = vset.pattern.permute.xlu0 0
          %611 = vperm.xlu0 %610, %v330
          %v612 = vpop.permute.xlu0 %611
          %615 = vset.pattern.permute.xlu0 0
          %616 = vperm.xlu0 %615, %v331
          %v617 = vpop.permute.xlu0 %616
          %620 = vset.pattern.permute.xlu0 0
          %621 = vperm.xlu0 %620, %v332
          %v622 = vpop.permute.xlu0 %621
          %625 = vset.pattern.permute.xlu0 0
          %626 = vperm.xlu0 %625, %v333
          %v627 = vpop.permute.xlu0 %626
          %630 = vset.pattern.permute.xlu0 0
          %631 = vperm.xlu0 %630, %v334
          %v632 = vpop.permute.xlu0 %631
          %635 = vset.pattern.permute.xlu0 0
          %636 = vperm.xlu0 %635, %v335
          %v637 = vpop.permute.xlu0 %636
          %640 = vset.pattern.permute.xlu0 0
          %641 = vperm.xlu0 %640, %v336
          %v642 = vpop.permute.xlu0 %641
          %645 = vset.pattern.permute.xlu0 0
          %646 = vperm.xlu0 %645, %v337
          %v647 = vpop.permute.xlu0 %646
          %650 = vset.pattern.permute.xlu0 0
          %651 = vperm.xlu0 %650, %v338
          %v652 = vpop.permute.xlu0 %651
          %655 = vset.pattern.permute.xlu0 0
          %656 = vperm.xlu0 %655, %v339
          %v657 = vpop.permute.xlu0 %656
          %660 = vset.pattern.permute.xlu0 0
          %661 = vperm.xlu0 %660, %v340
          %v662 = vpop.permute.xlu0 %661
          %665 = vset.pattern.permute.xlu0 0
          %666 = vperm.xlu0 %665, %v341
          %v667 = vpop.permute.xlu0 %666
          %670 = vset.pattern.permute.xlu0 0
          %671 = vperm.xlu0 %670, %v342
          %v672 = vpop.permute.xlu0 %671
          %675 = vset.pattern.permute.xlu0 0
          %676 = vperm.xlu0 %675, %v343
          %v677 = vpop.permute.xlu0 %676
          %680 = vset.pattern.permute.xlu0 0
          %681 = vperm.xlu0 %680, %v344
          %v682 = vpop.permute.xlu0 %681
          %685 = vset.pattern.permute.xlu0 0
          %686 = vperm.xlu0 %685, %v345
          %v687 = vpop.permute.xlu0 %686
          %690 = vset.pattern.permute.xlu0 0
          %691 = vperm.xlu0 %690, %v346
          %v692 = vpop.permute.xlu0 %691
          %695 = vset.pattern.permute.xlu0 0
          %696 = vperm.xlu0 %695, %v347
          %v697 = vpop.permute.xlu0 %696
          %700 = vset.pattern.permute.xlu0 0
          %701 = vperm.xlu0 %700, %v348
          %v702 = vpop.permute.xlu0 %701
          %705 = vset.pattern.permute.xlu0 0
          %706 = vperm.xlu0 %705, %v349
          %v707 = vpop.permute.xlu0 %706
          %710 = vset.pattern.permute.xlu0 0
          %711 = vperm.xlu0 %710, %v350
          %v712 = vpop.permute.xlu0 %711
          %v715 = vlaneseq
          %v716 = vshrl.u32 %v715, 7
          %v717 = vsub.s32 0, %v716
          %v718 = vrot.slane %v353, %v717
          %v720 = vmul.f32 %v357, %v718
          %v721 = vmul.f32 %v362, %v718
          %v722 = vmul.f32 %v367, %v718
          %v723 = vmul.f32 %v372, %v718
          %v724 = vmul.f32 %v377, %v718
          %v725 = vmul.f32 %v382, %v718
          %v726 = vmul.f32 %v387, %v718
          %v727 = vmul.f32 %v392, %v718
          %v728 = vmul.f32 %v397, %v718
          %v729 = vmul.f32 %v402, %v718
          %v730 = vmul.f32 %v407, %v718
          %v731 = vmul.f32 %v412, %v718
          %v732 = vmul.f32 %v417, %v718
          %v733 = vmul.f32 %v422, %v718
          %v734 = vmul.f32 %v427, %v718
          %v735 = vmul.f32 %v432, %v718
          %v736 = vmul.f32 %v437, %v718
          %v737 = vmul.f32 %v442, %v718
          %v738 = vmul.f32 %v447, %v718
          %v739 = vmul.f32 %v452, %v718
          %v740 = vmul.f32 %v457, %v718
          %v741 = vmul.f32 %v462, %v718
          %v742 = vmul.f32 %v467, %v718
          %v743 = vmul.f32 %v472, %v718
          %v744 = vmul.f32 %v477, %v718
          %v745 = vmul.f32 %v482, %v718
          %v746 = vmul.f32 %v487, %v718
          %v747 = vmul.f32 %v492, %v718
          %v748 = vmul.f32 %v497, %v718
          %v749 = vmul.f32 %v502, %v718
          %v750 = vmul.f32 %v507, %v718
          %v751 = vmul.f32 %v512, %v718
          %v752 = vmul.f32 %v517, %v718
          %v753 = vmul.f32 %v522, %v718
          %v754 = vmul.f32 %v527, %v718
          %v755 = vmul.f32 %v532, %v718
          %v756 = vmul.f32 %v537, %v718
          %v757 = vmul.f32 %v542, %v718
          %v758 = vmul.f32 %v547, %v718
          %v759 = vmul.f32 %v552, %v718
          %v760 = vmul.f32 %v557, %v718
          %v761 = vmul.f32 %v562, %v718
          %v762 = vmul.f32 %v567, %v718
          %v763 = vmul.f32 %v572, %v718
          %v764 = vmul.f32 %v577, %v718
          %v765 = vmul.f32 %v582, %v718
          %v766 = vmul.f32 %v587, %v718
          %v767 = vmul.f32 %v592, %v718
          %v768 = vmul.f32 %v597, %v718
          %v769 = vmul.f32 %v602, %v718
          %v770 = vmul.f32 %v607, %v718
          %v771 = vmul.f32 %v612, %v718
          %v772 = vmul.f32 %v617, %v718
          %v773 = vmul.f32 %v622, %v718
          %v774 = vmul.f32 %v627, %v718
          %v775 = vmul.f32 %v632, %v718
          %v776 = vmul.f32 %v637, %v718
          %v777 = vmul.f32 %v642, %v718
          %v778 = vmul.f32 %v647, %v718
          %v779 = vmul.f32 %v652, %v718
          %v780 = vmul.f32 %v657, %v718
          %v781 = vmul.f32 %v662, %v718
          %v782 = vmul.f32 %v667, %v718
          %v783 = vmul.f32 %v672, %v718
          %v784 = vmul.f32 %v677, %v718
          %v785 = vmul.f32 %v682, %v718
          %v786 = vmul.f32 %v687, %v718
          %v787 = vmul.f32 %v692, %v718
          %v788 = vmul.f32 %v697, %v718
          %v789 = vmul.f32 %v702, %v718
          %v790 = vmul.f32 %v707, %v718
          %v791 = vmul.f32 %v712, %v718
          %v792 = vadd.f32 %v205, %v720
          %v793 = vadd.f32 %v206, %v721
          %v794 = vadd.f32 %v207, %v722
          %v795 = vadd.f32 %v208, %v723
          %v796 = vadd.f32 %v209, %v724
          %v797 = vadd.f32 %v210, %v725
          %v798 = vadd.f32 %v211, %v726
          %v799 = vadd.f32 %v212, %v727
          %v800 = vadd.f32 %v213, %v728
          %v801 = vadd.f32 %v214, %v729
          %v802 = vadd.f32 %v215, %v730
          %v803 = vadd.f32 %v216, %v731
          %v804 = vadd.f32 %v217, %v732
          %v805 = vadd.f32 %v218, %v733
          %v806 = vadd.f32 %v219, %v734
          %v807 = vadd.f32 %v220, %v735
          %v808 = vadd.f32 %v221, %v736
          %v809 = vadd.f32 %v222, %v737
          %v810 = vadd.f32 %v223, %v738
          %v811 = vadd.f32 %v224, %v739
          %v812 = vadd.f32 %v225, %v740
          %v813 = vadd.f32 %v226, %v741
          %v814 = vadd.f32 %v227, %v742
          %v815 = vadd.f32 %v228, %v743
          %v816 = vadd.f32 %v229, %v744
          %v817 = vadd.f32 %v230, %v745
          %v818 = vadd.f32 %v231, %v746
          %v819 = vadd.f32 %v232, %v747
          %v820 = vadd.f32 %v233, %v748
          %v821 = vadd.f32 %v234, %v749
          %v822 = vadd.f32 %v235, %v750
          %v823 = vadd.f32 %v236, %v751
          %v824 = vadd.f32 %v237, %v752
          %v825 = vadd.f32 %v238, %v753
          %v826 = vadd.f32 %v239, %v754
          %v827 = vadd.f32 %v240, %v755
          %v828 = vadd.f32 %v241, %v756
          %v829 = vadd.f32 %v242, %v757
          %v830 = vadd.f32 %v243, %v758
          %v831 = vadd.f32 %v244, %v759
          %v832 = vadd.f32 %v245, %v760
          %v833 = vadd.f32 %v246, %v761
          %v834 = vadd.f32 %v247, %v762
          %v835 = vadd.f32 %v248, %v763
          %v836 = vadd.f32 %v249, %v764
          %v837 = vadd.f32 %v250, %v765
          %v838 = vadd.f32 %v251, %v766
          %v839 = vadd.f32 %v252, %v767
          %v840 = vadd.f32 %v253, %v768
          %v841 = vadd.f32 %v254, %v769
          %v842 = vadd.f32 %v255, %v770
          %v843 = vadd.f32 %v256, %v771
          %v844 = vadd.f32 %v257, %v772
          %v845 = vadd.f32 %v258, %v773
          %v846 = vadd.f32 %v259, %v774
          %v847 = vadd.f32 %v260, %v775
          %v848 = vadd.f32 %v261, %v776
          %v849 = vadd.f32 %v262, %v777
          %v850 = vadd.f32 %v263, %v778
          %v851 = vadd.f32 %v264, %v779
          %v852 = vadd.f32 %v265, %v780
          %v853 = vadd.f32 %v266, %v781
          %v854 = vadd.f32 %v267, %v782
          %v855 = vadd.f32 %v268, %v783
          %v856 = vadd.f32 %v269, %v784
          %v857 = vadd.f32 %v270, %v785
          %v858 = vadd.f32 %v271, %v786
          %v859 = vadd.f32 %v272, %v787
          %v860 = vadd.f32 %v273, %v788
          %v861 = vadd.f32 %v274, %v789
          %v862 = vadd.f32 %v275, %v790
          %v863 = vadd.f32 %v276, %v791
          %v864 = vld [vmem:[%s278 + $0x1] sm:$0xff]
          %v865 = vld [vmem:[%s278 + $0x9] sm:$0xff]
          %v866 = vld [vmem:[%s278 + $0x11] sm:$0xff]
          %v867 = vld [vmem:[%s278 + $0x21] sm:$0xff]
          %v868 = vld [vmem:[%s278 + $0x29] sm:$0xff]
          %v869 = vld [vmem:[%s278 + $0x31] sm:$0xff]
          %v870 = vld [vmem:[%s278 + $0x41] sm:$0xff]
          %v871 = vld [vmem:[%s278 + $0x49] sm:$0xff]
          %v872 = vld [vmem:[%s278 + $0x51] sm:$0xff]
          %v873 = vld [vmem:[%s278 + $0x61] sm:$0xff]
          %v874 = vld [vmem:[%s278 + $0x69] sm:$0xff]
          %v875 = vld [vmem:[%s278 + $0x71] sm:$0xff]
          %v876 = vld [vmem:[%s278 + $0x81] sm:$0xff]
          %v877 = vld [vmem:[%s278 + $0x89] sm:$0xff]
          %v878 = vld [vmem:[%s278 + $0x91] sm:$0xff]
          %v879 = vld [vmem:[%s278 + $0xa1] sm:$0xff]
          %v880 = vld [vmem:[%s278 + $0xa9] sm:$0xff]
          %v881 = vld [vmem:[%s278 + $0xb1] sm:$0xff]
          %v882 = vld [vmem:[%s278 + $0xc1] sm:$0xff]
          %v883 = vld [vmem:[%s278 + $0xc9] sm:$0xff]
          %v884 = vld [vmem:[%s278 + $0xd1] sm:$0xff]
          %v885 = vld [vmem:[%s278 + $0xe1] sm:$0xff]
          %v886 = vld [vmem:[%s278 + $0xe9] sm:$0xff]
          %v887 = vld [vmem:[%s278 + $0xf1] sm:$0xff]
          %v888 = vld [vmem:[%s278 + $0x101] sm:$0xff]
          %v889 = vld [vmem:[%s278 + $0x109] sm:$0xff]
          %v890 = vld [vmem:[%s278 + $0x111] sm:$0xff]
          %v891 = vld [vmem:[%s278 + $0x121] sm:$0xff]
          %v892 = vld [vmem:[%s278 + $0x129] sm:$0xff]
          %v893 = vld [vmem:[%s278 + $0x131] sm:$0xff]
          %v894 = vld [vmem:[%s278 + $0x141] sm:$0xff]
          %v895 = vld [vmem:[%s278 + $0x149] sm:$0xff]
          %v896 = vld [vmem:[%s278 + $0x151] sm:$0xff]
          %v897 = vld [vmem:[%s278 + $0x161] sm:$0xff]
          %v898 = vld [vmem:[%s278 + $0x169] sm:$0xff]
          %v899 = vld [vmem:[%s278 + $0x171] sm:$0xff]
          %v900 = vld [vmem:[%s278 + $0x181] sm:$0xff]
          %v901 = vld [vmem:[%s278 + $0x189] sm:$0xff]
          %v902 = vld [vmem:[%s278 + $0x191] sm:$0xff]
          %v903 = vld [vmem:[%s278 + $0x1a1] sm:$0xff]
          %v904 = vld [vmem:[%s278 + $0x1a9] sm:$0xff]
          %v905 = vld [vmem:[%s278 + $0x1b1] sm:$0xff]
          %v906 = vld [vmem:[%s278 + $0x1c1] sm:$0xff]
          %v907 = vld [vmem:[%s278 + $0x1c9] sm:$0xff]
          %v908 = vld [vmem:[%s278 + $0x1d1] sm:$0xff]
          %v909 = vld [vmem:[%s278 + $0x1e1] sm:$0xff]
          %v910 = vld [vmem:[%s278 + $0x1e9] sm:$0xff]
          %v911 = vld [vmem:[%s278 + $0x1f1] sm:$0xff]
          %v912 = vld [vmem:[%s278 + $0x201] sm:$0xff]
          %v913 = vld [vmem:[%s278 + $0x209] sm:$0xff]
          %v914 = vld [vmem:[%s278 + $0x211] sm:$0xff]
          %v915 = vld [vmem:[%s278 + $0x221] sm:$0xff]
          %v916 = vld [vmem:[%s278 + $0x229] sm:$0xff]
          %v917 = vld [vmem:[%s278 + $0x231] sm:$0xff]
          %v918 = vld [vmem:[%s278 + $0x241] sm:$0xff]
          %v919 = vld [vmem:[%s278 + $0x249] sm:$0xff]
          %v920 = vld [vmem:[%s278 + $0x251] sm:$0xff]
          %v921 = vld [vmem:[%s278 + $0x261] sm:$0xff]
          %v922 = vld [vmem:[%s278 + $0x269] sm:$0xff]
          %v923 = vld [vmem:[%s278 + $0x271] sm:$0xff]
          %v924 = vld [vmem:[%s278 + $0x281] sm:$0xff]
          %v925 = vld [vmem:[%s278 + $0x289] sm:$0xff]
          %v926 = vld [vmem:[%s278 + $0x291] sm:$0xff]
          %v927 = vld [vmem:[%s278 + $0x2a1] sm:$0xff]
          %v928 = vld [vmem:[%s278 + $0x2a9] sm:$0xff]
          %v929 = vld [vmem:[%s278 + $0x2b1] sm:$0xff]
          %v930 = vld [vmem:[%s278 + $0x2c1] sm:$0xff]
          %v931 = vld [vmem:[%s278 + $0x2c9] sm:$0xff]
          %v932 = vld [vmem:[%s278 + $0x2d1] sm:$0xff]
          %v933 = vld [vmem:[%s278 + $0x2e1] sm:$0xff]
          %v934 = vld [vmem:[%s278 + $0x2e9] sm:$0xff]
          %v935 = vld [vmem:[%s278 + $0x2f1] sm:$0xff]
          %s936 = sadd.s32 %s351, 1
          %s937 = scalar_lea.vmem [#allocation2], %s936
          %v938 = vld [vmem:[%s937] sm:$0x1]
          %940 = vset.pattern.permute.xlu0 0
          %941 = vperm.xlu0 %940, %v864
          %v942 = vpop.permute.xlu0 %941
          %945 = vset.pattern.permute.xlu0 0
          %946 = vperm.xlu0 %945, %v865
          %v947 = vpop.permute.xlu0 %946
          %950 = vset.pattern.permute.xlu0 0
          %951 = vperm.xlu0 %950, %v866
          %v952 = vpop.permute.xlu0 %951
          %955 = vset.pattern.permute.xlu0 0
          %956 = vperm.xlu0 %955, %v867
          %v957 = vpop.permute.xlu0 %956
          %960 = vset.pattern.permute.xlu0 0
          %961 = vperm.xlu0 %960, %v868
          %v962 = vpop.permute.xlu0 %961
          %965 = vset.pattern.permute.xlu0 0
          %966 = vperm.xlu0 %965, %v869
          %v967 = vpop.permute.xlu0 %966
          %970 = vset.pattern.permute.xlu0 0
          %971 = vperm.xlu0 %970, %v870
          %v972 = vpop.permute.xlu0 %971
          %975 = vset.pattern.permute.xlu0 0
          %976 = vperm.xlu0 %975, %v871
          %v977 = vpop.permute.xlu0 %976
          %980 = vset.pattern.permute.xlu0 0
          %981 = vperm.xlu0 %980, %v872
          %v982 = vpop.permute.xlu0 %981
          %985 = vset.pattern.permute.xlu0 0
          %986 = vperm.xlu0 %985, %v873
          %v987 = vpop.permute.xlu0 %986
          %990 = vset.pattern.permute.xlu0 0
          %991 = vperm.xlu0 %990, %v874
          %v992 = vpop.permute.xlu0 %991
          %995 = vset.pattern.permute.xlu0 0
          %996 = vperm.xlu0 %995, %v875
          %v997 = vpop.permute.xlu0 %996
          %1000 = vset.pattern.permute.xlu0 0
          %1001 = vperm.xlu0 %1000, %v876
          %v1002 = vpop.permute.xlu0 %1001
          %1005 = vset.pattern.permute.xlu0 0
          %1006 = vperm.xlu0 %1005, %v877
          %v1007 = vpop.permute.xlu0 %1006
          %1010 = vset.pattern.permute.xlu0 0
          %1011 = vperm.xlu0 %1010, %v878
          %v1012 = vpop.permute.xlu0 %1011
          %1015 = vset.pattern.permute.xlu0 0
          %1016 = vperm.xlu0 %1015, %v879
          %v1017 = vpop.permute.xlu0 %1016
          %1020 = vset.pattern.permute.xlu0 0
          %1021 = vperm.xlu0 %1020, %v880
          %v1022 = vpop.permute.xlu0 %1021
          %1025 = vset.pattern.permute.xlu0 0
          %1026 = vperm.xlu0 %1025, %v881
          %v1027 = vpop.permute.xlu0 %1026
          %1030 = vset.pattern.permute.xlu0 0
          %1031 = vperm.xlu0 %1030, %v882
          %v1032 = vpop.permute.xlu0 %1031
          %1035 = vset.pattern.permute.xlu0 0
          %1036 = vperm.xlu0 %1035, %v883
          %v1037 = vpop.permute.xlu0 %1036
          %1040 = vset.pattern.permute.xlu0 0
          %1041 = vperm.xlu0 %1040, %v884
          %v1042 = vpop.permute.xlu0 %1041
          %1045 = vset.pattern.permute.xlu0 0
          %1046 = vperm.xlu0 %1045, %v885
          %v1047 = vpop.permute.xlu0 %1046
          %1050 = vset.pattern.permute.xlu0 0
          %1051 = vperm.xlu0 %1050, %v886
          %v1052 = vpop.permute.xlu0 %1051
          %1055 = vset.pattern.permute.xlu0 0
          %1056 = vperm.xlu0 %1055, %v887
          %v1057 = vpop.permute.xlu0 %1056
          %1060 = vset.pattern.permute.xlu0 0
          %1061 = vperm.xlu0 %1060, %v888
          %v1062 = vpop.permute.xlu0 %1061
          %1065 = vset.pattern.permute.xlu0 0
          %1066 = vperm.xlu0 %1065, %v889
          %v1067 = vpop.permute.xlu0 %1066
          %1070 = vset.pattern.permute.xlu0 0
          %1071 = vperm.xlu0 %1070, %v890
          %v1072 = vpop.permute.xlu0 %1071
          %1075 = vset.pattern.permute.xlu0 0
          %1076 = vperm.xlu0 %1075, %v891
          %v1077 = vpop.permute.xlu0 %1076
          %1080 = vset.pattern.permute.xlu0 0
          %1081 = vperm.xlu0 %1080, %v892
          %v1082 = vpop.permute.xlu0 %1081
          %1085 = vset.pattern.permute.xlu0 0
          %1086 = vperm.xlu0 %1085, %v893
          %v1087 = vpop.permute.xlu0 %1086
          %1090 = vset.pattern.permute.xlu0 0
          %1091 = vperm.xlu0 %1090, %v894
          %v1092 = vpop.permute.xlu0 %1091
          %1095 = vset.pattern.permute.xlu0 0
          %1096 = vperm.xlu0 %1095, %v895
          %v1097 = vpop.permute.xlu0 %1096
          %1100 = vset.pattern.permute.xlu0 0
          %1101 = vperm.xlu0 %1100, %v896
          %v1102 = vpop.permute.xlu0 %1101
          %1105 = vset.pattern.permute.xlu0 0
          %1106 = vperm.xlu0 %1105, %v897
          %v1107 = vpop.permute.xlu0 %1106
          %1110 = vset.pattern.permute.xlu0 0
          %1111 = vperm.xlu0 %1110, %v898
          %v1112 = vpop.permute.xlu0 %1111
          %1115 = vset.pattern.permute.xlu0 0
          %1116 = vperm.xlu0 %1115, %v899
          %v1117 = vpop.permute.xlu0 %1116
          %1120 = vset.pattern.permute.xlu0 0
          %1121 = vperm.xlu0 %1120, %v900
          %v1122 = vpop.permute.xlu0 %1121
          %1125 = vset.pattern.permute.xlu0 0
          %1126 = vperm.xlu0 %1125, %v901
          %v1127 = vpop.permute.xlu0 %1126
          %1130 = vset.pattern.permute.xlu0 0
          %1131 = vperm.xlu0 %1130, %v902
          %v1132 = vpop.permute.xlu0 %1131
          %1135 = vset.pattern.permute.xlu0 0
          %1136 = vperm.xlu0 %1135, %v903
          %v1137 = vpop.permute.xlu0 %1136
          %1140 = vset.pattern.permute.xlu0 0
          %1141 = vperm.xlu0 %1140, %v904
          %v1142 = vpop.permute.xlu0 %1141
          %1145 = vset.pattern.permute.xlu0 0
          %1146 = vperm.xlu0 %1145, %v905
          %v1147 = vpop.permute.xlu0 %1146
          %1150 = vset.pattern.permute.xlu0 0
          %1151 = vperm.xlu0 %1150, %v906
          %v1152 = vpop.permute.xlu0 %1151
          %1155 = vset.pattern.permute.xlu0 0
          %1156 = vperm.xlu0 %1155, %v907
          %v1157 = vpop.permute.xlu0 %1156
          %1160 = vset.pattern.permute.xlu0 0
          %1161 = vperm.xlu0 %1160, %v908
          %v1162 = vpop.permute.xlu0 %1161
          %1165 = vset.pattern.permute.xlu0 0
          %1166 = vperm.xlu0 %1165, %v909
          %v1167 = vpop.permute.xlu0 %1166
          %1170 = vset.pattern.permute.xlu0 0
          %1171 = vperm.xlu0 %1170, %v910
          %v1172 = vpop.permute.xlu0 %1171
          %1175 = vset.pattern.permute.xlu0 0
          %1176 = vperm.xlu0 %1175, %v911
          %v1177 = vpop.permute.xlu0 %1176
          %1180 = vset.pattern.permute.xlu0 0
          %1181 = vperm.xlu0 %1180, %v912
          %v1182 = vpop.permute.xlu0 %1181
          %1185 = vset.pattern.permute.xlu0 0
          %1186 = vperm.xlu0 %1185, %v913
          %v1187 = vpop.permute.xlu0 %1186
          %1190 = vset.pattern.permute.xlu0 0
          %1191 = vperm.xlu0 %1190, %v914
          %v1192 = vpop.permute.xlu0 %1191
          %1195 = vset.pattern.permute.xlu0 0
          %1196 = vperm.xlu0 %1195, %v915
          %v1197 = vpop.permute.xlu0 %1196
          %1200 = vset.pattern.permute.xlu0 0
          %1201 = vperm.xlu0 %1200, %v916
          %v1202 = vpop.permute.xlu0 %1201
          %1205 = vset.pattern.permute.xlu0 0
          %1206 = vperm.xlu0 %1205, %v917
          %v1207 = vpop.permute.xlu0 %1206
          %1210 = vset.pattern.permute.xlu0 0
          %1211 = vperm.xlu0 %1210, %v918
          %v1212 = vpop.permute.xlu0 %1211
          %1215 = vset.pattern.permute.xlu0 0
          %1216 = vperm.xlu0 %1215, %v919
          %v1217 = vpop.permute.xlu0 %1216
          %1220 = vset.pattern.permute.xlu0 0
          %1221 = vperm.xlu0 %1220, %v920
          %v1222 = vpop.permute.xlu0 %1221
          %1225 = vset.pattern.permute.xlu0 0
          %1226 = vperm.xlu0 %1225, %v921
          %v1227 = vpop.permute.xlu0 %1226
          %1230 = vset.pattern.permute.xlu0 0
          %1231 = vperm.xlu0 %1230, %v922
          %v1232 = vpop.permute.xlu0 %1231
          %1235 = vset.pattern.permute.xlu0 0
          %1236 = vperm.xlu0 %1235, %v923
          %v1237 = vpop.permute.xlu0 %1236
          %1240 = vset.pattern.permute.xlu0 0
          %1241 = vperm.xlu0 %1240, %v924
          %v1242 = vpop.permute.xlu0 %1241
          %1245 = vset.pattern.permute.xlu0 0
          %1246 = vperm.xlu0 %1245, %v925
          %v1247 = vpop.permute.xlu0 %1246
          %1250 = vset.pattern.permute.xlu0 0
          %1251 = vperm.xlu0 %1250, %v926
          %v1252 = vpop.permute.xlu0 %1251
          %1255 = vset.pattern.permute.xlu0 0
          %1256 = vperm.xlu0 %1255, %v927
          %v1257 = vpop.permute.xlu0 %1256
          %1260 = vset.pattern.permute.xlu0 0
          %1261 = vperm.xlu0 %1260, %v928
          %v1262 = vpop.permute.xlu0 %1261
          %1265 = vset.pattern.permute.xlu0 0
          %1266 = vperm.xlu0 %1265, %v929
          %v1267 = vpop.permute.xlu0 %1266
          %1270 = vset.pattern.permute.xlu0 0
          %1271 = vperm.xlu0 %1270, %v930
          %v1272 = vpop.permute.xlu0 %1271
          %1275 = vset.pattern.permute.xlu0 0
          %1276 = vperm.xlu0 %1275, %v931
          %v1277 = vpop.permute.xlu0 %1276
          %1280 = vset.pattern.permute.xlu0 0
          %1281 = vperm.xlu0 %1280, %v932
          %v1282 = vpop.permute.xlu0 %1281
          %1285 = vset.pattern.permute.xlu0 0
          %1286 = vperm.xlu0 %1285, %v933
          %v1287 = vpop.permute.xlu0 %1286
          %1290 = vset.pattern.permute.xlu0 0
          %1291 = vperm.xlu0 %1290, %v934
          %v1292 = vpop.permute.xlu0 %1291
          %1295 = vset.pattern.permute.xlu0 0
          %1296 = vperm.xlu0 %1295, %v935
          %v1297 = vpop.permute.xlu0 %1296
          %v1300 = vlaneseq
          %v1301 = vshrl.u32 %v1300, 7
          %v1302 = vsub.s32 0, %v1301
          %v1303 = vrot.slane %v938, %v1302
          %v1305 = vmul.f32 %v942, %v1303
          %v1306 = vmul.f32 %v947, %v1303
          %v1307 = vmul.f32 %v952, %v1303
          %v1308 = vmul.f32 %v957, %v1303
          %v1309 = vmul.f32 %v962, %v1303
          %v1310 = vmul.f32 %v967, %v1303
          %v1311 = vmul.f32 %v972, %v1303
          %v1312 = vmul.f32 %v977, %v1303
          %v1313 = vmul.f32 %v982, %v1303
          %v1314 = vmul.f32 %v987, %v1303
          %v1315 = vmul.f32 %v992, %v1303
          %v1316 = vmul.f32 %v997, %v1303
          %v1317 = vmul.f32 %v1002, %v1303
          %v1318 = vmul.f32 %v1007, %v1303
          %v1319 = vmul.f32 %v1012, %v1303
          %v1320 = vmul.f32 %v1017, %v1303
          %v1321 = vmul.f32 %v1022, %v1303
          %v1322 = vmul.f32 %v1027, %v1303
          %v1323 = vmul.f32 %v1032, %v1303
          %v1324 = vmul.f32 %v1037, %v1303
          %v1325 = vmul.f32 %v1042, %v1303
          %v1326 = vmul.f32 %v1047, %v1303
          %v1327 = vmul.f32 %v1052, %v1303
          %v1328 = vmul.f32 %v1057, %v1303
          %v1329 = vmul.f32 %v1062, %v1303
          %v1330 = vmul.f32 %v1067, %v1303
          %v1331 = vmul.f32 %v1072, %v1303
          %v1332 = vmul.f32 %v1077, %v1303
          %v1333 = vmul.f32 %v1082, %v1303
          %v1334 = vmul.f32 %v1087, %v1303
          %v1335 = vmul.f32 %v1092, %v1303
          %v1336 = vmul.f32 %v1097, %v1303
          %v1337 = vmul.f32 %v1102, %v1303
          %v1338 = vmul.f32 %v1107, %v1303
          %v1339 = vmul.f32 %v1112, %v1303
          %v1340 = vmul.f32 %v1117, %v1303
          %v1341 = vmul.f32 %v1122, %v1303
          %v1342 = vmul.f32 %v1127, %v1303
          %v1343 = vmul.f32 %v1132, %v1303
          %v1344 = vmul.f32 %v1137, %v1303
          %v1345 = vmul.f32 %v1142, %v1303
          %v1346 = vmul.f32 %v1147, %v1303
          %v1347 = vmul.f32 %v1152, %v1303
          %v1348 = vmul.f32 %v1157, %v1303
          %v1349 = vmul.f32 %v1162, %v1303
          %v1350 = vmul.f32 %v1167, %v1303
          %v1351 = vmul.f32 %v1172, %v1303
          %v1352 = vmul.f32 %v1177, %v1303
          %v1353 = vmul.f32 %v1182, %v1303
          %v1354 = vmul.f32 %v1187, %v1303
          %v1355 = vmul.f32 %v1192, %v1303
          %v1356 = vmul.f32 %v1197, %v1303
          %v1357 = vmul.f32 %v1202, %v1303
          %v1358 = vmul.f32 %v1207, %v1303
          %v1359 = vmul.f32 %v1212, %v1303
          %v1360 = vmul.f32 %v1217, %v1303
          %v1361 = vmul.f32 %v1222, %v1303
          %v1362 = vmul.f32 %v1227, %v1303
          %v1363 = vmul.f32 %v1232, %v1303
          %v1364 = vmul.f32 %v1237, %v1303
          %v1365 = vmul.f32 %v1242, %v1303
          %v1366 = vmul.f32 %v1247, %v1303
          %v1367 = vmul.f32 %v1252, %v1303
          %v1368 = vmul.f32 %v1257, %v1303
          %v1369 = vmul.f32 %v1262, %v1303
          %v1370 = vmul.f32 %v1267, %v1303
          %v1371 = vmul.f32 %v1272, %v1303
          %v1372 = vmul.f32 %v1277, %v1303
          %v1373 = vmul.f32 %v1282, %v1303
          %v1374 = vmul.f32 %v1287, %v1303
          %v1375 = vmul.f32 %v1292, %v1303
          %v1376 = vmul.f32 %v1297, %v1303
          %v1377 = vadd.f32 %v792, %v1305
          %v1378 = vadd.f32 %v793, %v1306
          %v1379 = vadd.f32 %v794, %v1307
          %v1380 = vadd.f32 %v795, %v1308
          %v1381 = vadd.f32 %v796, %v1309
          %v1382 = vadd.f32 %v797, %v1310
          %v1383 = vadd.f32 %v798, %v1311
          %v1384 = vadd.f32 %v799, %v1312
          %v1385 = vadd.f32 %v800, %v1313
          %v1386 = vadd.f32 %v801, %v1314
          %v1387 = vadd.f32 %v802, %v1315
          %v1388 = vadd.f32 %v803, %v1316
          %v1389 = vadd.f32 %v804, %v1317
          %v1390 = vadd.f32 %v805, %v1318
          %v1391 = vadd.f32 %v806, %v1319
          %v1392 = vadd.f32 %v807, %v1320
          %v1393 = vadd.f32 %v808, %v1321
          %v1394 = vadd.f32 %v809, %v1322
          %v1395 = vadd.f32 %v810, %v1323
          %v1396 = vadd.f32 %v811, %v1324
          %v1397 = vadd.f32 %v812, %v1325
          %v1398 = vadd.f32 %v813, %v1326
          %v1399 = vadd.f32 %v814, %v1327
          %v1400 = vadd.f32 %v815, %v1328
          %v1401 = vadd.f32 %v816, %v1329
          %v1402 = vadd.f32 %v817, %v1330
          %v1403 = vadd.f32 %v818, %v1331
          %v1404 = vadd.f32 %v819, %v1332
          %v1405 = vadd.f32 %v820, %v1333
          %v1406 = vadd.f32 %v821, %v1334
          %v1407 = vadd.f32 %v822, %v1335
          %v1408 = vadd.f32 %v823, %v1336
          %v1409 = vadd.f32 %v824, %v1337
          %v1410 = vadd.f32 %v825, %v1338
          %v1411 = vadd.f32 %v826, %v1339
          %v1412 = vadd.f32 %v827, %v1340
          %v1413 = vadd.f32 %v828, %v1341
          %v1414 = vadd.f32 %v829, %v1342
          %v1415 = vadd.f32 %v830, %v1343
          %v1416 = vadd.f32 %v831, %v1344
          %v1417 = vadd.f32 %v832, %v1345
          %v1418 = vadd.f32 %v833, %v1346
          %v1419 = vadd.f32 %v834, %v1347
          %v1420 = vadd.f32 %v835, %v1348
          %v1421 = vadd.f32 %v836, %v1349
          %v1422 = vadd.f32 %v837, %v1350
          %v1423 = vadd.f32 %v838, %v1351
          %v1424 = vadd.f32 %v839, %v1352
          %v1425 = vadd.f32 %v840, %v1353
          %v1426 = vadd.f32 %v841, %v1354
          %v1427 = vadd.f32 %v842, %v1355
          %v1428 = vadd.f32 %v843, %v1356
          %v1429 = vadd.f32 %v844, %v1357
          %v1430 = vadd.f32 %v845, %v1358
          %v1431 = vadd.f32 %v846, %v1359
          %v1432 = vadd.f32 %v847, %v1360
          %v1433 = vadd.f32 %v848, %v1361
          %v1434 = vadd.f32 %v849, %v1362
          %v1435 = vadd.f32 %v850, %v1363
          %v1436 = vadd.f32 %v851, %v1364
          %v1437 = vadd.f32 %v852, %v1365
          %v1438 = vadd.f32 %v853, %v1366
          %v1439 = vadd.f32 %v854, %v1367
          %v1440 = vadd.f32 %v855, %v1368
          %v1441 = vadd.f32 %v856, %v1369
          %v1442 = vadd.f32 %v857, %v1370
          %v1443 = vadd.f32 %v858, %v1371
          %v1444 = vadd.f32 %v859, %v1372
          %v1445 = vadd.f32 %v860, %v1373
          %v1446 = vadd.f32 %v861, %v1374
          %v1447 = vadd.f32 %v862, %v1375
          %v1448 = vadd.f32 %v863, %v1376
          %v1449 = vld [vmem:[%s278 + $0x2] sm:$0xff]
          %v1450 = vld [vmem:[%s278 + $0xa] sm:$0xff]
          %v1451 = vld [vmem:[%s278 + $0x12] sm:$0xff]
          %v1452 = vld [vmem:[%s278 + $0x22] sm:$0xff]
          %v1453 = vld [vmem:[%s278 + $0x2a] sm:$0xff]
          %v1454 = vld [vmem:[%s278 + $0x32] sm:$0xff]
          %v1455 = vld [vmem:[%s278 + $0x42] sm:$0xff]
          %v1456 = vld [vmem:[%s278 + $0x4a] sm:$0xff]
          %v1457 = vld [vmem:[%s278 + $0x52] sm:$0xff]
          %v1458 = vld [vmem:[%s278 + $0x62] sm:$0xff]
          %v1459 = vld [vmem:[%s278 + $0x6a] sm:$0xff]
          %v1460 = vld [vmem:[%s278 + $0x72] sm:$0xff]
          %v1461 = vld [vmem:[%s278 + $0x82] sm:$0xff]
          %v1462 = vld [vmem:[%s278 + $0x8a] sm:$0xff]
          %v1463 = vld [vmem:[%s278 + $0x92] sm:$0xff]
          %v1464 = vld [vmem:[%s278 + $0xa2] sm:$0xff]
          %v1465 = vld [vmem:[%s278 + $0xaa] sm:$0xff]
          %v1466 = vld [vmem:[%s278 + $0xb2] sm:$0xff]
          %v1467 = vld [vmem:[%s278 + $0xc2] sm:$0xff]
          %v1468 = vld [vmem:[%s278 + $0xca] sm:$0xff]
          %v1469 = vld [vmem:[%s278 + $0xd2] sm:$0xff]
          %v1470 = vld [vmem:[%s278 + $0xe2] sm:$0xff]
          %v1471 = vld [vmem:[%s278 + $0xea] sm:$0xff]
          %v1472 = vld [vmem:[%s278 + $0xf2] sm:$0xff]
          %v1473 = vld [vmem:[%s278 + $0x102] sm:$0xff]
          %v1474 = vld [vmem:[%s278 + $0x10a] sm:$0xff]
          %v1475 = vld [vmem:[%s278 + $0x112] sm:$0xff]
          %v1476 = vld [vmem:[%s278 + $0x122] sm:$0xff]
          %v1477 = vld [vmem:[%s278 + $0x12a] sm:$0xff]
          %v1478 = vld [vmem:[%s278 + $0x132] sm:$0xff]
          %v1479 = vld [vmem:[%s278 + $0x142] sm:$0xff]
          %v1480 = vld [vmem:[%s278 + $0x14a] sm:$0xff]
          %v1481 = vld [vmem:[%s278 + $0x152] sm:$0xff]
          %v1482 = vld [vmem:[%s278 + $0x162] sm:$0xff]
          %v1483 = vld [vmem:[%s278 + $0x16a] sm:$0xff]
          %v1484 = vld [vmem:[%s278 + $0x172] sm:$0xff]
          %v1485 = vld [vmem:[%s278 + $0x182] sm:$0xff]
          %v1486 = vld [vmem:[%s278 + $0x18a] sm:$0xff]
          %v1487 = vld [vmem:[%s278 + $0x192] sm:$0xff]
          %v1488 = vld [vmem:[%s278 + $0x1a2] sm:$0xff]
          %v1489 = vld [vmem:[%s278 + $0x1aa] sm:$0xff]
          %v1490 = vld [vmem:[%s278 + $0x1b2] sm:$0xff]
          %v1491 = vld [vmem:[%s278 + $0x1c2] sm:$0xff]
          %v1492 = vld [vmem:[%s278 + $0x1ca] sm:$0xff]
          %v1493 = vld [vmem:[%s278 + $0x1d2] sm:$0xff]
          %v1494 = vld [vmem:[%s278 + $0x1e2] sm:$0xff]
          %v1495 = vld [vmem:[%s278 + $0x1ea] sm:$0xff]
          %v1496 = vld [vmem:[%s278 + $0x1f2] sm:$0xff]
          %v1497 = vld [vmem:[%s278 + $0x202] sm:$0xff]
          %v1498 = vld [vmem:[%s278 + $0x20a] sm:$0xff]
          %v1499 = vld [vmem:[%s278 + $0x212] sm:$0xff]
          %v1500 = vld [vmem:[%s278 + $0x222] sm:$0xff]
          %v1501 = vld [vmem:[%s278 + $0x22a] sm:$0xff]
          %v1502 = vld [vmem:[%s278 + $0x232] sm:$0xff]
          %v1503 = vld [vmem:[%s278 + $0x242] sm:$0xff]
          %v1504 = vld [vmem:[%s278 + $0x24a] sm:$0xff]
          %v1505 = vld [vmem:[%s278 + $0x252] sm:$0xff]
          %v1506 = vld [vmem:[%s278 + $0x262] sm:$0xff]
          %v1507 = vld [vmem:[%s278 + $0x26a] sm:$0xff]
          %v1508 = vld [vmem:[%s278 + $0x272] sm:$0xff]
          %v1509 = vld [vmem:[%s278 + $0x282] sm:$0xff]
          %v1510 = vld [vmem:[%s278 + $0x28a] sm:$0xff]
          %v1511 = vld [vmem:[%s278 + $0x292] sm:$0xff]
          %v1512 = vld [vmem:[%s278 + $0x2a2] sm:$0xff]
          %v1513 = vld [vmem:[%s278 + $0x2aa] sm:$0xff]
          %v1514 = vld [vmem:[%s278 + $0x2b2] sm:$0xff]
          %v1515 = vld [vmem:[%s278 + $0x2c2] sm:$0xff]
          %v1516 = vld [vmem:[%s278 + $0x2ca] sm:$0xff]
          %v1517 = vld [vmem:[%s278 + $0x2d2] sm:$0xff]
          %v1518 = vld [vmem:[%s278 + $0x2e2] sm:$0xff]
          %v1519 = vld [vmem:[%s278 + $0x2ea] sm:$0xff]
          %v1520 = vld [vmem:[%s278 + $0x2f2] sm:$0xff]
          %s1521 = sadd.s32 %s351, 2
          %s1522 = scalar_lea.vmem [#allocation2], %s1521
          %v1523 = vld [vmem:[%s1522] sm:$0x1]
          %1525 = vset.pattern.permute.xlu0 0
          %1526 = vperm.xlu0 %1525, %v1449
          %v1527 = vpop.permute.xlu0 %1526
          %1530 = vset.pattern.permute.xlu0 0
          %1531 = vperm.xlu0 %1530, %v1450
          %v1532 = vpop.permute.xlu0 %1531
          %1535 = vset.pattern.permute.xlu0 0
          %1536 = vperm.xlu0 %1535, %v1451
          %v1537 = vpop.permute.xlu0 %1536
          %1540 = vset.pattern.permute.xlu0 0
          %1541 = vperm.xlu0 %1540, %v1452
          %v1542 = vpop.permute.xlu0 %1541
          %1545 = vset.pattern.permute.xlu0 0
          %1546 = vperm.xlu0 %1545, %v1453
          %v1547 = vpop.permute.xlu0 %1546
          %1550 = vset.pattern.permute.xlu0 0
          %1551 = vperm.xlu0 %1550, %v1454
          %v1552 = vpop.permute.xlu0 %1551
          %1555 = vset.pattern.permute.xlu0 0
          %1556 = vperm.xlu0 %1555, %v1455
          %v1557 = vpop.permute.xlu0 %1556
          %1560 = vset.pattern.permute.xlu0 0
          %1561 = vperm.xlu0 %1560, %v1456
          %v1562 = vpop.permute.xlu0 %1561
          %1565 = vset.pattern.permute.xlu0 0
          %1566 = vperm.xlu0 %1565, %v1457
          %v1567 = vpop.permute.xlu0 %1566
          %1570 = vset.pattern.permute.xlu0 0
          %1571 = vperm.xlu0 %1570, %v1458
          %v1572 = vpop.permute.xlu0 %1571
          %1575 = vset.pattern.permute.xlu0 0
          %1576 = vperm.xlu0 %1575, %v1459
          %v1577 = vpop.permute.xlu0 %1576
          %1580 = vset.pattern.permute.xlu0 0
          %1581 = vperm.xlu0 %1580, %v1460
          %v1582 = vpop.permute.xlu0 %1581
          %1585 = vset.pattern.permute.xlu0 0
          %1586 = vperm.xlu0 %1585, %v1461
          %v1587 = vpop.permute.xlu0 %1586
          %1590 = vset.pattern.permute.xlu0 0
          %1591 = vperm.xlu0 %1590, %v1462
          %v1592 = vpop.permute.xlu0 %1591
          %1595 = vset.pattern.permute.xlu0 0
          %1596 = vperm.xlu0 %1595, %v1463
          %v1597 = vpop.permute.xlu0 %1596
          %1600 = vset.pattern.permute.xlu0 0
          %1601 = vperm.xlu0 %1600, %v1464
          %v1602 = vpop.permute.xlu0 %1601
          %1605 = vset.pattern.permute.xlu0 0
          %1606 = vperm.xlu0 %1605, %v1465
          %v1607 = vpop.permute.xlu0 %1606
          %1610 = vset.pattern.permute.xlu0 0
          %1611 = vperm.xlu0 %1610, %v1466
          %v1612 = vpop.permute.xlu0 %1611
          %1615 = vset.pattern.permute.xlu0 0
          %1616 = vperm.xlu0 %1615, %v1467
          %v1617 = vpop.permute.xlu0 %1616
          %1620 = vset.pattern.permute.xlu0 0
          %1621 = vperm.xlu0 %1620, %v1468
          %v1622 = vpop.permute.xlu0 %1621
          %1625 = vset.pattern.permute.xlu0 0
          %1626 = vperm.xlu0 %1625, %v1469
          %v1627 = vpop.permute.xlu0 %1626
          %1630 = vset.pattern.permute.xlu0 0
          %1631 = vperm.xlu0 %1630, %v1470
          %v1632 = vpop.permute.xlu0 %1631
          %1635 = vset.pattern.permute.xlu0 0
          %1636 = vperm.xlu0 %1635, %v1471
          %v1637 = vpop.permute.xlu0 %1636
          %1640 = vset.pattern.permute.xlu0 0
          %1641 = vperm.xlu0 %1640, %v1472
          %v1642 = vpop.permute.xlu0 %1641
          %1645 = vset.pattern.permute.xlu0 0
          %1646 = vperm.xlu0 %1645, %v1473
          %v1647 = vpop.permute.xlu0 %1646
          %1650 = vset.pattern.permute.xlu0 0
          %1651 = vperm.xlu0 %1650, %v1474
          %v1652 = vpop.permute.xlu0 %1651
          %1655 = vset.pattern.permute.xlu0 0
          %1656 = vperm.xlu0 %1655, %v1475
          %v1657 = vpop.permute.xlu0 %1656
          %1660 = vset.pattern.permute.xlu0 0
          %1661 = vperm.xlu0 %1660, %v1476
          %v1662 = vpop.permute.xlu0 %1661
          %1665 = vset.pattern.permute.xlu0 0
          %1666 = vperm.xlu0 %1665, %v1477
          %v1667 = vpop.permute.xlu0 %1666
          %1670 = vset.pattern.permute.xlu0 0
          %1671 = vperm.xlu0 %1670, %v1478
          %v1672 = vpop.permute.xlu0 %1671
          %1675 = vset.pattern.permute.xlu0 0
          %1676 = vperm.xlu0 %1675, %v1479
          %v1677 = vpop.permute.xlu0 %1676
          %1680 = vset.pattern.permute.xlu0 0
          %1681 = vperm.xlu0 %1680, %v1480
          %v1682 = vpop.permute.xlu0 %1681
          %1685 = vset.pattern.permute.xlu0 0
          %1686 = vperm.xlu0 %1685, %v1481
          %v1687 = vpop.permute.xlu0 %1686
          %1690 = vset.pattern.permute.xlu0 0
          %1691 = vperm.xlu0 %1690, %v1482
          %v1692 = vpop.permute.xlu0 %1691
          %1695 = vset.pattern.permute.xlu0 0
          %1696 = vperm.xlu0 %1695, %v1483
          %v1697 = vpop.permute.xlu0 %1696
          %1700 = vset.pattern.permute.xlu0 0
          %1701 = vperm.xlu0 %1700, %v1484
          %v1702 = vpop.permute.xlu0 %1701
          %1705 = vset.pattern.permute.xlu0 0
          %1706 = vperm.xlu0 %1705, %v1485
          %v1707 = vpop.permute.xlu0 %1706
          %1710 = vset.pattern.permute.xlu0 0
          %1711 = vperm.xlu0 %1710, %v1486
          %v1712 = vpop.permute.xlu0 %1711
          %1715 = vset.pattern.permute.xlu0 0
          %1716 = vperm.xlu0 %1715, %v1487
          %v1717 = vpop.permute.xlu0 %1716
          %1720 = vset.pattern.permute.xlu0 0
          %1721 = vperm.xlu0 %1720, %v1488
          %v1722 = vpop.permute.xlu0 %1721
          %1725 = vset.pattern.permute.xlu0 0
          %1726 = vperm.xlu0 %1725, %v1489
          %v1727 = vpop.permute.xlu0 %1726
          %1730 = vset.pattern.permute.xlu0 0
          %1731 = vperm.xlu0 %1730, %v1490
          %v1732 = vpop.permute.xlu0 %1731
          %1735 = vset.pattern.permute.xlu0 0
          %1736 = vperm.xlu0 %1735, %v1491
          %v1737 = vpop.permute.xlu0 %1736
          %1740 = vset.pattern.permute.xlu0 0
          %1741 = vperm.xlu0 %1740, %v1492
          %v1742 = vpop.permute.xlu0 %1741
          %1745 = vset.pattern.permute.xlu0 0
          %1746 = vperm.xlu0 %1745, %v1493
          %v1747 = vpop.permute.xlu0 %1746
          %1750 = vset.pattern.permute.xlu0 0
          %1751 = vperm.xlu0 %1750, %v1494
          %v1752 = vpop.permute.xlu0 %1751
          %1755 = vset.pattern.permute.xlu0 0
          %1756 = vperm.xlu0 %1755, %v1495
          %v1757 = vpop.permute.xlu0 %1756
          %1760 = vset.pattern.permute.xlu0 0
          %1761 = vperm.xlu0 %1760, %v1496
          %v1762 = vpop.permute.xlu0 %1761
          %1765 = vset.pattern.permute.xlu0 0
          %1766 = vperm.xlu0 %1765, %v1497
          %v1767 = vpop.permute.xlu0 %1766
          %1770 = vset.pattern.permute.xlu0 0
          %1771 = vperm.xlu0 %1770, %v1498
          %v1772 = vpop.permute.xlu0 %1771
          %1775 = vset.pattern.permute.xlu0 0
          %1776 = vperm.xlu0 %1775, %v1499
          %v1777 = vpop.permute.xlu0 %1776
          %1780 = vset.pattern.permute.xlu0 0
          %1781 = vperm.xlu0 %1780, %v1500
          %v1782 = vpop.permute.xlu0 %1781
          %1785 = vset.pattern.permute.xlu0 0
          %1786 = vperm.xlu0 %1785, %v1501
          %v1787 = vpop.permute.xlu0 %1786
          %1790 = vset.pattern.permute.xlu0 0
          %1791 = vperm.xlu0 %1790, %v1502
          %v1792 = vpop.permute.xlu0 %1791
          %1795 = vset.pattern.permute.xlu0 0
          %1796 = vperm.xlu0 %1795, %v1503
          %v1797 = vpop.permute.xlu0 %1796
          %1800 = vset.pattern.permute.xlu0 0
          %1801 = vperm.xlu0 %1800, %v1504
          %v1802 = vpop.permute.xlu0 %1801
          %1805 = vset.pattern.permute.xlu0 0
          %1806 = vperm.xlu0 %1805, %v1505
          %v1807 = vpop.permute.xlu0 %1806
          %1810 = vset.pattern.permute.xlu0 0
          %1811 = vperm.xlu0 %1810, %v1506
          %v1812 = vpop.permute.xlu0 %1811
          %1815 = vset.pattern.permute.xlu0 0
          %1816 = vperm.xlu0 %1815, %v1507
          %v1817 = vpop.permute.xlu0 %1816
          %1820 = vset.pattern.permute.xlu0 0
          %1821 = vperm.xlu0 %1820, %v1508
          %v1822 = vpop.permute.xlu0 %1821
          %1825 = vset.pattern.permute.xlu0 0
          %1826 = vperm.xlu0 %1825, %v1509
          %v1827 = vpop.permute.xlu0 %1826
          %1830 = vset.pattern.permute.xlu0 0
          %1831 = vperm.xlu0 %1830, %v1510
          %v1832 = vpop.permute.xlu0 %1831
          %1835 = vset.pattern.permute.xlu0 0
          %1836 = vperm.xlu0 %1835, %v1511
          %v1837 = vpop.permute.xlu0 %1836
          %1840 = vset.pattern.permute.xlu0 0
          %1841 = vperm.xlu0 %1840, %v1512
          %v1842 = vpop.permute.xlu0 %1841
          %1845 = vset.pattern.permute.xlu0 0
          %1846 = vperm.xlu0 %1845, %v1513
          %v1847 = vpop.permute.xlu0 %1846
          %1850 = vset.pattern.permute.xlu0 0
          %1851 = vperm.xlu0 %1850, %v1514
          %v1852 = vpop.permute.xlu0 %1851
          %1855 = vset.pattern.permute.xlu0 0
          %1856 = vperm.xlu0 %1855, %v1515
          %v1857 = vpop.permute.xlu0 %1856
          %1860 = vset.pattern.permute.xlu0 0
          %1861 = vperm.xlu0 %1860, %v1516
          %v1862 = vpop.permute.xlu0 %1861
          %1865 = vset.pattern.permute.xlu0 0
          %1866 = vperm.xlu0 %1865, %v1517
          %v1867 = vpop.permute.xlu0 %1866
          %1870 = vset.pattern.permute.xlu0 0
          %1871 = vperm.xlu0 %1870, %v1518
          %v1872 = vpop.permute.xlu0 %1871
          %1875 = vset.pattern.permute.xlu0 0
          %1876 = vperm.xlu0 %1875, %v1519
          %v1877 = vpop.permute.xlu0 %1876
          %1880 = vset.pattern.permute.xlu0 0
          %1881 = vperm.xlu0 %1880, %v1520
          %v1882 = vpop.permute.xlu0 %1881
          %v1885 = vlaneseq
          %v1886 = vshrl.u32 %v1885, 7
          %v1887 = vsub.s32 0, %v1886
          %v1888 = vrot.slane %v1523, %v1887
          %v1890 = vmul.f32 %v1527, %v1888
          %v1891 = vmul.f32 %v1532, %v1888
          %v1892 = vmul.f32 %v1537, %v1888
          %v1893 = vmul.f32 %v1542, %v1888
          %v1894 = vmul.f32 %v1547, %v1888
          %v1895 = vmul.f32 %v1552, %v1888
          %v1896 = vmul.f32 %v1557, %v1888
          %v1897 = vmul.f32 %v1562, %v1888
          %v1898 = vmul.f32 %v1567, %v1888
          %v1899 = vmul.f32 %v1572, %v1888
          %v1900 = vmul.f32 %v1577, %v1888
          %v1901 = vmul.f32 %v1582, %v1888
          %v1902 = vmul.f32 %v1587, %v1888
          %v1903 = vmul.f32 %v1592, %v1888
          %v1904 = vmul.f32 %v1597, %v1888
          %v1905 = vmul.f32 %v1602, %v1888
          %v1906 = vmul.f32 %v1607, %v1888
          %v1907 = vmul.f32 %v1612, %v1888
          %v1908 = vmul.f32 %v1617, %v1888
          %v1909 = vmul.f32 %v1622, %v1888
          %v1910 = vmul.f32 %v1627, %v1888
          %v1911 = vmul.f32 %v1632, %v1888
          %v1912 = vmul.f32 %v1637, %v1888
          %v1913 = vmul.f32 %v1642, %v1888
          %v1914 = vmul.f32 %v1647, %v1888
          %v1915 = vmul.f32 %v1652, %v1888
          %v1916 = vmul.f32 %v1657, %v1888
          %v1917 = vmul.f32 %v1662, %v1888
          %v1918 = vmul.f32 %v1667, %v1888
          %v1919 = vmul.f32 %v1672, %v1888
          %v1920 = vmul.f32 %v1677, %v1888
          %v1921 = vmul.f32 %v1682, %v1888
          %v1922 = vmul.f32 %v1687, %v1888
          %v1923 = vmul.f32 %v1692, %v1888
          %v1924 = vmul.f32 %v1697, %v1888
          %v1925 = vmul.f32 %v1702, %v1888
          %v1926 = vmul.f32 %v1707, %v1888
          %v1927 = vmul.f32 %v1712, %v1888
          %v1928 = vmul.f32 %v1717, %v1888
          %v1929 = vmul.f32 %v1722, %v1888
          %v1930 = vmul.f32 %v1727, %v1888
          %v1931 = vmul.f32 %v1732, %v1888
          %v1932 = vmul.f32 %v1737, %v1888
          %v1933 = vmul.f32 %v1742, %v1888
          %v1934 = vmul.f32 %v1747, %v1888
          %v1935 = vmul.f32 %v1752, %v1888
          %v1936 = vmul.f32 %v1757, %v1888
          %v1937 = vmul.f32 %v1762, %v1888
          %v1938 = vmul.f32 %v1767, %v1888
          %v1939 = vmul.f32 %v1772, %v1888
          %v1940 = vmul.f32 %v1777, %v1888
          %v1941 = vmul.f32 %v1782, %v1888
          %v1942 = vmul.f32 %v1787, %v1888
          %v1943 = vmul.f32 %v1792, %v1888
          %v1944 = vmul.f32 %v1797, %v1888
          %v1945 = vmul.f32 %v1802, %v1888
          %v1946 = vmul.f32 %v1807, %v1888
          %v1947 = vmul.f32 %v1812, %v1888
          %v1948 = vmul.f32 %v1817, %v1888
          %v1949 = vmul.f32 %v1822, %v1888
          %v1950 = vmul.f32 %v1827, %v1888
          %v1951 = vmul.f32 %v1832, %v1888
          %v1952 = vmul.f32 %v1837, %v1888
          %v1953 = vmul.f32 %v1842, %v1888
          %v1954 = vmul.f32 %v1847, %v1888
          %v1955 = vmul.f32 %v1852, %v1888
          %v1956 = vmul.f32 %v1857, %v1888
          %v1957 = vmul.f32 %v1862, %v1888
          %v1958 = vmul.f32 %v1867, %v1888
          %v1959 = vmul.f32 %v1872, %v1888
          %v1960 = vmul.f32 %v1877, %v1888
          %v1961 = vmul.f32 %v1882, %v1888
          %v1962 = vadd.f32 %v1377, %v1890
          %v1963 = vadd.f32 %v1378, %v1891
          %v1964 = vadd.f32 %v1379, %v1892
          %v1965 = vadd.f32 %v1380, %v1893
          %v1966 = vadd.f32 %v1381, %v1894
          %v1967 = vadd.f32 %v1382, %v1895
          %v1968 = vadd.f32 %v1383, %v1896
          %v1969 = vadd.f32 %v1384, %v1897
          %v1970 = vadd.f32 %v1385, %v1898
          %v1971 = vadd.f32 %v1386, %v1899
          %v1972 = vadd.f32 %v1387, %v1900
          %v1973 = vadd.f32 %v1388, %v1901
          %v1974 = vadd.f32 %v1389, %v1902
          %v1975 = vadd.f32 %v1390, %v1903
          %v1976 = vadd.f32 %v1391, %v1904
          %v1977 = vadd.f32 %v1392, %v1905
          %v1978 = vadd.f32 %v1393, %v1906
          %v1979 = vadd.f32 %v1394, %v1907
          %v1980 = vadd.f32 %v1395, %v1908
          %v1981 = vadd.f32 %v1396, %v1909
          %v1982 = vadd.f32 %v1397, %v1910
          %v1983 = vadd.f32 %v1398, %v1911
          %v1984 = vadd.f32 %v1399, %v1912
          %v1985 = vadd.f32 %v1400, %v1913
          %v1986 = vadd.f32 %v1401, %v1914
          %v1987 = vadd.f32 %v1402, %v1915
          %v1988 = vadd.f32 %v1403, %v1916
          %v1989 = vadd.f32 %v1404, %v1917
          %v1990 = vadd.f32 %v1405, %v1918
          %v1991 = vadd.f32 %v1406, %v1919
          %v1992 = vadd.f32 %v1407, %v1920
          %v1993 = vadd.f32 %v1408, %v1921
          %v1994 = vadd.f32 %v1409, %v1922
          %v1995 = vadd.f32 %v1410, %v1923
          %v1996 = vadd.f32 %v1411, %v1924
          %v1997 = vadd.f32 %v1412, %v1925
          %v1998 = vadd.f32 %v1413, %v1926
          %v1999 = vadd.f32 %v1414, %v1927
          %v2000 = vadd.f32 %v1415, %v1928
          %v2001 = vadd.f32 %v1416, %v1929
          %v2002 = vadd.f32 %v1417, %v1930
          %v2003 = vadd.f32 %v1418, %v1931
          %v2004 = vadd.f32 %v1419, %v1932
          %v2005 = vadd.f32 %v1420, %v1933
          %v2006 = vadd.f32 %v1421, %v1934
          %v2007 = vadd.f32 %v1422, %v1935
          %v2008 = vadd.f32 %v1423, %v1936
          %v2009 = vadd.f32 %v1424, %v1937
          %v2010 = vadd.f32 %v1425, %v1938
          %v2011 = vadd.f32 %v1426, %v1939
          %v2012 = vadd.f32 %v1427, %v1940
          %v2013 = vadd.f32 %v1428, %v1941
          %v2014 = vadd.f32 %v1429, %v1942
          %v2015 = vadd.f32 %v1430, %v1943
          %v2016 = vadd.f32 %v1431, %v1944
          %v2017 = vadd.f32 %v1432, %v1945
          %v2018 = vadd.f32 %v1433, %v1946
          %v2019 = vadd.f32 %v1434, %v1947
          %v2020 = vadd.f32 %v1435, %v1948
          %v2021 = vadd.f32 %v1436, %v1949
          %v2022 = vadd.f32 %v1437, %v1950
          %v2023 = vadd.f32 %v1438, %v1951
          %v2024 = vadd.f32 %v1439, %v1952
          %v2025 = vadd.f32 %v1440, %v1953
          %v2026 = vadd.f32 %v1441, %v1954
          %v2027 = vadd.f32 %v1442, %v1955
          %v2028 = vadd.f32 %v1443, %v1956
          %v2029 = vadd.f32 %v1444, %v1957
          %v2030 = vadd.f32 %v1445, %v1958
          %v2031 = vadd.f32 %v1446, %v1959
          %v2032 = vadd.f32 %v1447, %v1960
          %v2033 = vadd.f32 %v1448, %v1961
          %v2034 = vld [vmem:[%s278 + $0x3] sm:$0xff]
          %v2035 = vld [vmem:[%s278 + $0xb] sm:$0xff]
          %v2036 = vld [vmem:[%s278 + $0x13] sm:$0xff]
          %v2037 = vld [vmem:[%s278 + $0x23] sm:$0xff]
          %v2038 = vld [vmem:[%s278 + $0x2b] sm:$0xff]
          %v2039 = vld [vmem:[%s278 + $0x33] sm:$0xff]
          %v2040 = vld [vmem:[%s278 + $0x43] sm:$0xff]
          %v2041 = vld [vmem:[%s278 + $0x4b] sm:$0xff]
          %v2042 = vld [vmem:[%s278 + $0x53] sm:$0xff]
          %v2043 = vld [vmem:[%s278 + $0x63] sm:$0xff]
          %v2044 = vld [vmem:[%s278 + $0x6b] sm:$0xff]
          %v2045 = vld [vmem:[%s278 + $0x73] sm:$0xff]
          %v2046 = vld [vmem:[%s278 + $0x83] sm:$0xff]
          %v2047 = vld [vmem:[%s278 + $0x8b] sm:$0xff]
          %v2048 = vld [vmem:[%s278 + $0x93] sm:$0xff]
          %v2049 = vld [vmem:[%s278 + $0xa3] sm:$0xff]
          %v2050 = vld [vmem:[%s278 + $0xab] sm:$0xff]
          %v2051 = vld [vmem:[%s278 + $0xb3] sm:$0xff]
          %v2052 = vld [vmem:[%s278 + $0xc3] sm:$0xff]
          %v2053 = vld [vmem:[%s278 + $0xcb] sm:$0xff]
          %v2054 = vld [vmem:[%s278 + $0xd3] sm:$0xff]
          %v2055 = vld [vmem:[%s278 + $0xe3] sm:$0xff]
          %v2056 = vld [vmem:[%s278 + $0xeb] sm:$0xff]
          %v2057 = vld [vmem:[%s278 + $0xf3] sm:$0xff]
          %v2058 = vld [vmem:[%s278 + $0x103] sm:$0xff]
          %v2059 = vld [vmem:[%s278 + $0x10b] sm:$0xff]
          %v2060 = vld [vmem:[%s278 + $0x113] sm:$0xff]
          %v2061 = vld [vmem:[%s278 + $0x123] sm:$0xff]
          %v2062 = vld [vmem:[%s278 + $0x12b] sm:$0xff]
          %v2063 = vld [vmem:[%s278 + $0x133] sm:$0xff]
          %v2064 = vld [vmem:[%s278 + $0x143] sm:$0xff]
          %v2065 = vld [vmem:[%s278 + $0x14b] sm:$0xff]
          %v2066 = vld [vmem:[%s278 + $0x153] sm:$0xff]
          %v2067 = vld [vmem:[%s278 + $0x163] sm:$0xff]
          %v2068 = vld [vmem:[%s278 + $0x16b] sm:$0xff]
          %v2069 = vld [vmem:[%s278 + $0x173] sm:$0xff]
          %v2070 = vld [vmem:[%s278 + $0x183] sm:$0xff]
          %v2071 = vld [vmem:[%s278 + $0x18b] sm:$0xff]
          %v2072 = vld [vmem:[%s278 + $0x193] sm:$0xff]
          %v2073 = vld [vmem:[%s278 + $0x1a3] sm:$0xff]
          %v2074 = vld [vmem:[%s278 + $0x1ab] sm:$0xff]
          %v2075 = vld [vmem:[%s278 + $0x1b3] sm:$0xff]
          %v2076 = vld [vmem:[%s278 + $0x1c3] sm:$0xff]
          %v2077 = vld [vmem:[%s278 + $0x1cb] sm:$0xff]
          %v2078 = vld [vmem:[%s278 + $0x1d3] sm:$0xff]
          %v2079 = vld [vmem:[%s278 + $0x1e3] sm:$0xff]
          %v2080 = vld [vmem:[%s278 + $0x1eb] sm:$0xff]
          %v2081 = vld [vmem:[%s278 + $0x1f3] sm:$0xff]
          %v2082 = vld [vmem:[%s278 + $0x203] sm:$0xff]
          %v2083 = vld [vmem:[%s278 + $0x20b] sm:$0xff]
          %v2084 = vld [vmem:[%s278 + $0x213] sm:$0xff]
          %v2085 = vld [vmem:[%s278 + $0x223] sm:$0xff]
          %v2086 = vld [vmem:[%s278 + $0x22b] sm:$0xff]
          %v2087 = vld [vmem:[%s278 + $0x233] sm:$0xff]
          %v2088 = vld [vmem:[%s278 + $0x243] sm:$0xff]
          %v2089 = vld [vmem:[%s278 + $0x24b] sm:$0xff]
          %v2090 = vld [vmem:[%s278 + $0x253] sm:$0xff]
          %v2091 = vld [vmem:[%s278 + $0x263] sm:$0xff]
          %v2092 = vld [vmem:[%s278 + $0x26b] sm:$0xff]
          %v2093 = vld [vmem:[%s278 + $0x273] sm:$0xff]
          %v2094 = vld [vmem:[%s278 + $0x283] sm:$0xff]
          %v2095 = vld [vmem:[%s278 + $0x28b] sm:$0xff]
          %v2096 = vld [vmem:[%s278 + $0x293] sm:$0xff]
          %v2097 = vld [vmem:[%s278 + $0x2a3] sm:$0xff]
          %v2098 = vld [vmem:[%s278 + $0x2ab] sm:$0xff]
          %v2099 = vld [vmem:[%s278 + $0x2b3] sm:$0xff]
          %v2100 = vld [vmem:[%s278 + $0x2c3] sm:$0xff]
          %v2101 = vld [vmem:[%s278 + $0x2cb] sm:$0xff]
          %v2102 = vld [vmem:[%s278 + $0x2d3] sm:$0xff]
          %v2103 = vld [vmem:[%s278 + $0x2e3] sm:$0xff]
          %v2104 = vld [vmem:[%s278 + $0x2eb] sm:$0xff]
          %v2105 = vld [vmem:[%s278 + $0x2f3] sm:$0xff]
          %s2106 = sadd.s32 %s351, 3
          %s2107 = scalar_lea.vmem [#allocation2], %s2106
          %v2108 = vld [vmem:[%s2107] sm:$0x1]
          %2110 = vset.pattern.permute.xlu0 0
          %2111 = vperm.xlu0 %2110, %v2034
          %v2112 = vpop.permute.xlu0 %2111
          %2115 = vset.pattern.permute.xlu0 0
          %2116 = vperm.xlu0 %2115, %v2035
          %v2117 = vpop.permute.xlu0 %2116
          %2120 = vset.pattern.permute.xlu0 0
          %2121 = vperm.xlu0 %2120, %v2036
          %v2122 = vpop.permute.xlu0 %2121
          %2125 = vset.pattern.permute.xlu0 0
          %2126 = vperm.xlu0 %2125, %v2037
          %v2127 = vpop.permute.xlu0 %2126
          %2130 = vset.pattern.permute.xlu0 0
          %2131 = vperm.xlu0 %2130, %v2038
          %v2132 = vpop.permute.xlu0 %2131
          %2135 = vset.pattern.permute.xlu0 0
          %2136 = vperm.xlu0 %2135, %v2039
          %v2137 = vpop.permute.xlu0 %2136
          %2140 = vset.pattern.permute.xlu0 0
          %2141 = vperm.xlu0 %2140, %v2040
          %v2142 = vpop.permute.xlu0 %2141
          %2145 = vset.pattern.permute.xlu0 0
          %2146 = vperm.xlu0 %2145, %v2041
          %v2147 = vpop.permute.xlu0 %2146
          %2150 = vset.pattern.permute.xlu0 0
          %2151 = vperm.xlu0 %2150, %v2042
          %v2152 = vpop.permute.xlu0 %2151
          %2155 = vset.pattern.permute.xlu0 0
          %2156 = vperm.xlu0 %2155, %v2043
          %v2157 = vpop.permute.xlu0 %2156
          %2160 = vset.pattern.permute.xlu0 0
          %2161 = vperm.xlu0 %2160, %v2044
          %v2162 = vpop.permute.xlu0 %2161
          %2165 = vset.pattern.permute.xlu0 0
          %2166 = vperm.xlu0 %2165, %v2045
          %v2167 = vpop.permute.xlu0 %2166
          %2170 = vset.pattern.permute.xlu0 0
          %2171 = vperm.xlu0 %2170, %v2046
          %v2172 = vpop.permute.xlu0 %2171
          %2175 = vset.pattern.permute.xlu0 0
          %2176 = vperm.xlu0 %2175, %v2047
          %v2177 = vpop.permute.xlu0 %2176
          %2180 = vset.pattern.permute.xlu0 0
          %2181 = vperm.xlu0 %2180, %v2048
          %v2182 = vpop.permute.xlu0 %2181
          %2185 = vset.pattern.permute.xlu0 0
          %2186 = vperm.xlu0 %2185, %v2049
          %v2187 = vpop.permute.xlu0 %2186
          %2190 = vset.pattern.permute.xlu0 0
          %2191 = vperm.xlu0 %2190, %v2050
          %v2192 = vpop.permute.xlu0 %2191
          %2195 = vset.pattern.permute.xlu0 0
          %2196 = vperm.xlu0 %2195, %v2051
          %v2197 = vpop.permute.xlu0 %2196
          %2200 = vset.pattern.permute.xlu0 0
          %2201 = vperm.xlu0 %2200, %v2052
          %v2202 = vpop.permute.xlu0 %2201
          %2205 = vset.pattern.permute.xlu0 0
          %2206 = vperm.xlu0 %2205, %v2053
          %v2207 = vpop.permute.xlu0 %2206
          %2210 = vset.pattern.permute.xlu0 0
          %2211 = vperm.xlu0 %2210, %v2054
          %v2212 = vpop.permute.xlu0 %2211
          %2215 = vset.pattern.permute.xlu0 0
          %2216 = vperm.xlu0 %2215, %v2055
          %v2217 = vpop.permute.xlu0 %2216
          %2220 = vset.pattern.permute.xlu0 0
          %2221 = vperm.xlu0 %2220, %v2056
          %v2222 = vpop.permute.xlu0 %2221
          %2225 = vset.pattern.permute.xlu0 0
          %2226 = vperm.xlu0 %2225, %v2057
          %v2227 = vpop.permute.xlu0 %2226
          %2230 = vset.pattern.permute.xlu0 0
          %2231 = vperm.xlu0 %2230, %v2058
          %v2232 = vpop.permute.xlu0 %2231
          %2235 = vset.pattern.permute.xlu0 0
          %2236 = vperm.xlu0 %2235, %v2059
          %v2237 = vpop.permute.xlu0 %2236
          %2240 = vset.pattern.permute.xlu0 0
          %2241 = vperm.xlu0 %2240, %v2060
          %v2242 = vpop.permute.xlu0 %2241
          %2245 = vset.pattern.permute.xlu0 0
          %2246 = vperm.xlu0 %2245, %v2061
          %v2247 = vpop.permute.xlu0 %2246
          %2250 = vset.pattern.permute.xlu0 0
          %2251 = vperm.xlu0 %2250, %v2062
          %v2252 = vpop.permute.xlu0 %2251
          %2255 = vset.pattern.permute.xlu0 0
          %2256 = vperm.xlu0 %2255, %v2063
          %v2257 = vpop.permute.xlu0 %2256
          %2260 = vset.pattern.permute.xlu0 0
          %2261 = vperm.xlu0 %2260, %v2064
          %v2262 = vpop.permute.xlu0 %2261
          %2265 = vset.pattern.permute.xlu0 0
          %2266 = vperm.xlu0 %2265, %v2065
          %v2267 = vpop.permute.xlu0 %2266
          %2270 = vset.pattern.permute.xlu0 0
          %2271 = vperm.xlu0 %2270, %v2066
          %v2272 = vpop.permute.xlu0 %2271
          %2275 = vset.pattern.permute.xlu0 0
          %2276 = vperm.xlu0 %2275, %v2067
          %v2277 = vpop.permute.xlu0 %2276
          %2280 = vset.pattern.permute.xlu0 0
          %2281 = vperm.xlu0 %2280, %v2068
          %v2282 = vpop.permute.xlu0 %2281
          %2285 = vset.pattern.permute.xlu0 0
          %2286 = vperm.xlu0 %2285, %v2069
          %v2287 = vpop.permute.xlu0 %2286
          %2290 = vset.pattern.permute.xlu0 0
          %2291 = vperm.xlu0 %2290, %v2070
          %v2292 = vpop.permute.xlu0 %2291
          %2295 = vset.pattern.permute.xlu0 0
          %2296 = vperm.xlu0 %2295, %v2071
          %v2297 = vpop.permute.xlu0 %2296
          %2300 = vset.pattern.permute.xlu0 0
          %2301 = vperm.xlu0 %2300, %v2072
          %v2302 = vpop.permute.xlu0 %2301
          %2305 = vset.pattern.permute.xlu0 0
          %2306 = vperm.xlu0 %2305, %v2073
          %v2307 = vpop.permute.xlu0 %2306
          %2310 = vset.pattern.permute.xlu0 0
          %2311 = vperm.xlu0 %2310, %v2074
          %v2312 = vpop.permute.xlu0 %2311
          %2315 = vset.pattern.permute.xlu0 0
          %2316 = vperm.xlu0 %2315, %v2075
          %v2317 = vpop.permute.xlu0 %2316
          %2320 = vset.pattern.permute.xlu0 0
          %2321 = vperm.xlu0 %2320, %v2076
          %v2322 = vpop.permute.xlu0 %2321
          %2325 = vset.pattern.permute.xlu0 0
          %2326 = vperm.xlu0 %2325, %v2077
          %v2327 = vpop.permute.xlu0 %2326
          %2330 = vset.pattern.permute.xlu0 0
          %2331 = vperm.xlu0 %2330, %v2078
          %v2332 = vpop.permute.xlu0 %2331
          %2335 = vset.pattern.permute.xlu0 0
          %2336 = vperm.xlu0 %2335, %v2079
          %v2337 = vpop.permute.xlu0 %2336
          %2340 = vset.pattern.permute.xlu0 0
          %2341 = vperm.xlu0 %2340, %v2080
          %v2342 = vpop.permute.xlu0 %2341
          %2345 = vset.pattern.permute.xlu0 0
          %2346 = vperm.xlu0 %2345, %v2081
          %v2347 = vpop.permute.xlu0 %2346
          %2350 = vset.pattern.permute.xlu0 0
          %2351 = vperm.xlu0 %2350, %v2082
          %v2352 = vpop.permute.xlu0 %2351
          %2355 = vset.pattern.permute.xlu0 0
          %2356 = vperm.xlu0 %2355, %v2083
          %v2357 = vpop.permute.xlu0 %2356
          %2360 = vset.pattern.permute.xlu0 0
          %2361 = vperm.xlu0 %2360, %v2084
          %v2362 = vpop.permute.xlu0 %2361
          %2365 = vset.pattern.permute.xlu0 0
          %2366 = vperm.xlu0 %2365, %v2085
          %v2367 = vpop.permute.xlu0 %2366
          %2370 = vset.pattern.permute.xlu0 0
          %2371 = vperm.xlu0 %2370, %v2086
          %v2372 = vpop.permute.xlu0 %2371
          %2375 = vset.pattern.permute.xlu0 0
          %2376 = vperm.xlu0 %2375, %v2087
          %v2377 = vpop.permute.xlu0 %2376
          %2380 = vset.pattern.permute.xlu0 0
          %2381 = vperm.xlu0 %2380, %v2088
          %v2382 = vpop.permute.xlu0 %2381
          %2385 = vset.pattern.permute.xlu0 0
          %2386 = vperm.xlu0 %2385, %v2089
          %v2387 = vpop.permute.xlu0 %2386
          %2390 = vset.pattern.permute.xlu0 0
          %2391 = vperm.xlu0 %2390, %v2090
          %v2392 = vpop.permute.xlu0 %2391
          %2395 = vset.pattern.permute.xlu0 0
          %2396 = vperm.xlu0 %2395, %v2091
          %v2397 = vpop.permute.xlu0 %2396
          %2400 = vset.pattern.permute.xlu0 0
          %2401 = vperm.xlu0 %2400, %v2092
          %v2402 = vpop.permute.xlu0 %2401
          %2405 = vset.pattern.permute.xlu0 0
          %2406 = vperm.xlu0 %2405, %v2093
          %v2407 = vpop.permute.xlu0 %2406
          %2410 = vset.pattern.permute.xlu0 0
          %2411 = vperm.xlu0 %2410, %v2094
          %v2412 = vpop.permute.xlu0 %2411
          %2415 = vset.pattern.permute.xlu0 0
          %2416 = vperm.xlu0 %2415, %v2095
          %v2417 = vpop.permute.xlu0 %2416
          %2420 = vset.pattern.permute.xlu0 0
          %2421 = vperm.xlu0 %2420, %v2096
          %v2422 = vpop.permute.xlu0 %2421
          %2425 = vset.pattern.permute.xlu0 0
          %2426 = vperm.xlu0 %2425, %v2097
          %v2427 = vpop.permute.xlu0 %2426
          %2430 = vset.pattern.permute.xlu0 0
          %2431 = vperm.xlu0 %2430, %v2098
          %v2432 = vpop.permute.xlu0 %2431
          %2435 = vset.pattern.permute.xlu0 0
          %2436 = vperm.xlu0 %2435, %v2099
          %v2437 = vpop.permute.xlu0 %2436
          %2440 = vset.pattern.permute.xlu0 0
          %2441 = vperm.xlu0 %2440, %v2100
          %v2442 = vpop.permute.xlu0 %2441
          %2445 = vset.pattern.permute.xlu0 0
          %2446 = vperm.xlu0 %2445, %v2101
          %v2447 = vpop.permute.xlu0 %2446
          %2450 = vset.pattern.permute.xlu0 0
          %2451 = vperm.xlu0 %2450, %v2102
          %v2452 = vpop.permute.xlu0 %2451
          %2455 = vset.pattern.permute.xlu0 0
          %2456 = vperm.xlu0 %2455, %v2103
          %v2457 = vpop.permute.xlu0 %2456
          %2460 = vset.pattern.permute.xlu0 0
          %2461 = vperm.xlu0 %2460, %v2104
          %v2462 = vpop.permute.xlu0 %2461
          %2465 = vset.pattern.permute.xlu0 0
          %2466 = vperm.xlu0 %2465, %v2105
          %v2467 = vpop.permute.xlu0 %2466
          %v2470 = vlaneseq
          %v2471 = vshrl.u32 %v2470, 7
          %v2472 = vsub.s32 0, %v2471
          %v2473 = vrot.slane %v2108, %v2472
          %v2475 = vmul.f32 %v2112, %v2473
          %v2476 = vmul.f32 %v2117, %v2473
          %v2477 = vmul.f32 %v2122, %v2473
          %v2478 = vmul.f32 %v2127, %v2473
          %v2479 = vmul.f32 %v2132, %v2473
          %v2480 = vmul.f32 %v2137, %v2473
          %v2481 = vmul.f32 %v2142, %v2473
          %v2482 = vmul.f32 %v2147, %v2473
          %v2483 = vmul.f32 %v2152, %v2473
          %v2484 = vmul.f32 %v2157, %v2473
          %v2485 = vmul.f32 %v2162, %v2473
          %v2486 = vmul.f32 %v2167, %v2473
          %v2487 = vmul.f32 %v2172, %v2473
          %v2488 = vmul.f32 %v2177, %v2473
          %v2489 = vmul.f32 %v2182, %v2473
          %v2490 = vmul.f32 %v2187, %v2473
          %v2491 = vmul.f32 %v2192, %v2473
          %v2492 = vmul.f32 %v2197, %v2473
          %v2493 = vmul.f32 %v2202, %v2473
          %v2494 = vmul.f32 %v2207, %v2473
          %v2495 = vmul.f32 %v2212, %v2473
          %v2496 = vmul.f32 %v2217, %v2473
          %v2497 = vmul.f32 %v2222, %v2473
          %v2498 = vmul.f32 %v2227, %v2473
          %v2499 = vmul.f32 %v2232, %v2473
          %v2500 = vmul.f32 %v2237, %v2473
          %v2501 = vmul.f32 %v2242, %v2473
          %v2502 = vmul.f32 %v2247, %v2473
          %v2503 = vmul.f32 %v2252, %v2473
          %v2504 = vmul.f32 %v2257, %v2473
          %v2505 = vmul.f32 %v2262, %v2473
          %v2506 = vmul.f32 %v2267, %v2473
          %v2507 = vmul.f32 %v2272, %v2473
          %v2508 = vmul.f32 %v2277, %v2473
          %v2509 = vmul.f32 %v2282, %v2473
          %v2510 = vmul.f32 %v2287, %v2473
          %v2511 = vmul.f32 %v2292, %v2473
          %v2512 = vmul.f32 %v2297, %v2473
          %v2513 = vmul.f32 %v2302, %v2473
          %v2514 = vmul.f32 %v2307, %v2473
          %v2515 = vmul.f32 %v2312, %v2473
          %v2516 = vmul.f32 %v2317, %v2473
          %v2517 = vmul.f32 %v2322, %v2473
          %v2518 = vmul.f32 %v2327, %v2473
          %v2519 = vmul.f32 %v2332, %v2473
          %v2520 = vmul.f32 %v2337, %v2473
          %v2521 = vmul.f32 %v2342, %v2473
          %v2522 = vmul.f32 %v2347, %v2473
          %v2523 = vmul.f32 %v2352, %v2473
          %v2524 = vmul.f32 %v2357, %v2473
          %v2525 = vmul.f32 %v2362, %v2473
          %v2526 = vmul.f32 %v2367, %v2473
          %v2527 = vmul.f32 %v2372, %v2473
          %v2528 = vmul.f32 %v2377, %v2473
          %v2529 = vmul.f32 %v2382, %v2473
          %v2530 = vmul.f32 %v2387, %v2473
          %v2531 = vmul.f32 %v2392, %v2473
          %v2532 = vmul.f32 %v2397, %v2473
          %v2533 = vmul.f32 %v2402, %v2473
          %v2534 = vmul.f32 %v2407, %v2473
          %v2535 = vmul.f32 %v2412, %v2473
          %v2536 = vmul.f32 %v2417, %v2473
          %v2537 = vmul.f32 %v2422, %v2473
          %v2538 = vmul.f32 %v2427, %v2473
          %v2539 = vmul.f32 %v2432, %v2473
          %v2540 = vmul.f32 %v2437, %v2473
          %v2541 = vmul.f32 %v2442, %v2473
          %v2542 = vmul.f32 %v2447, %v2473
          %v2543 = vmul.f32 %v2452, %v2473
          %v2544 = vmul.f32 %v2457, %v2473
          %v2545 = vmul.f32 %v2462, %v2473
          %v2546 = vmul.f32 %v2467, %v2473
          %v2547 = vadd.f32 %v1962, %v2475
          %v2548 = vadd.f32 %v1963, %v2476
          %v2549 = vadd.f32 %v1964, %v2477
          %v2550 = vadd.f32 %v1965, %v2478
          %v2551 = vadd.f32 %v1966, %v2479
          %v2552 = vadd.f32 %v1967, %v2480
          %v2553 = vadd.f32 %v1968, %v2481
          %v2554 = vadd.f32 %v1969, %v2482
          %v2555 = vadd.f32 %v1970, %v2483
          %v2556 = vadd.f32 %v1971, %v2484
          %v2557 = vadd.f32 %v1972, %v2485
          %v2558 = vadd.f32 %v1973, %v2486
          %v2559 = vadd.f32 %v1974, %v2487
          %v2560 = vadd.f32 %v1975, %v2488
          %v2561 = vadd.f32 %v1976, %v2489
          %v2562 = vadd.f32 %v1977, %v2490
          %v2563 = vadd.f32 %v1978, %v2491
          %v2564 = vadd.f32 %v1979, %v2492
          %v2565 = vadd.f32 %v1980, %v2493
          %v2566 = vadd.f32 %v1981, %v2494
          %v2567 = vadd.f32 %v1982, %v2495
          %v2568 = vadd.f32 %v1983, %v2496
          %v2569 = vadd.f32 %v1984, %v2497
          %v2570 = vadd.f32 %v1985, %v2498
          %v2571 = vadd.f32 %v1986, %v2499
          %v2572 = vadd.f32 %v1987, %v2500
          %v2573 = vadd.f32 %v1988, %v2501
          %v2574 = vadd.f32 %v1989, %v2502
          %v2575 = vadd.f32 %v1990, %v2503
          %v2576 = vadd.f32 %v1991, %v2504
          %v2577 = vadd.f32 %v1992, %v2505
          %v2578 = vadd.f32 %v1993, %v2506
          %v2579 = vadd.f32 %v1994, %v2507
          %v2580 = vadd.f32 %v1995, %v2508
          %v2581 = vadd.f32 %v1996, %v2509
          %v2582 = vadd.f32 %v1997, %v2510
          %v2583 = vadd.f32 %v1998, %v2511
          %v2584 = vadd.f32 %v1999, %v2512
          %v2585 = vadd.f32 %v2000, %v2513
          %v2586 = vadd.f32 %v2001, %v2514
          %v2587 = vadd.f32 %v2002, %v2515
          %v2588 = vadd.f32 %v2003, %v2516
          %v2589 = vadd.f32 %v2004, %v2517
          %v2590 = vadd.f32 %v2005, %v2518
          %v2591 = vadd.f32 %v2006, %v2519
          %v2592 = vadd.f32 %v2007, %v2520
          %v2593 = vadd.f32 %v2008, %v2521
          %v2594 = vadd.f32 %v2009, %v2522
          %v2595 = vadd.f32 %v2010, %v2523
          %v2596 = vadd.f32 %v2011, %v2524
          %v2597 = vadd.f32 %v2012, %v2525
          %v2598 = vadd.f32 %v2013, %v2526
          %v2599 = vadd.f32 %v2014, %v2527
          %v2600 = vadd.f32 %v2015, %v2528
          %v2601 = vadd.f32 %v2016, %v2529
          %v2602 = vadd.f32 %v2017, %v2530
          %v2603 = vadd.f32 %v2018, %v2531
          %v2604 = vadd.f32 %v2019, %v2532
          %v2605 = vadd.f32 %v2020, %v2533
          %v2606 = vadd.f32 %v2021, %v2534
          %v2607 = vadd.f32 %v2022, %v2535
          %v2608 = vadd.f32 %v2023, %v2536
          %v2609 = vadd.f32 %v2024, %v2537
          %v2610 = vadd.f32 %v2025, %v2538
          %v2611 = vadd.f32 %v2026, %v2539
          %v2612 = vadd.f32 %v2027, %v2540
          %v2613 = vadd.f32 %v2028, %v2541
          %v2614 = vadd.f32 %v2029, %v2542
          %v2615 = vadd.f32 %v2030, %v2543
          %v2616 = vadd.f32 %v2031, %v2544
          %v2617 = vadd.f32 %v2032, %v2545
          %v2618 = vadd.f32 %v2033, %v2546
          %v2619 = vld [vmem:[%s278 + $0x4] sm:$0xff]
          %v2620 = vld [vmem:[%s278 + $0xc] sm:$0xff]
          %v2621 = vld [vmem:[%s278 + $0x14] sm:$0xff]
          %v2622 = vld [vmem:[%s278 + $0x24] sm:$0xff]
          %v2623 = vld [vmem:[%s278 + $0x2c] sm:$0xff]
          %v2624 = vld [vmem:[%s278 + $0x34] sm:$0xff]
          %v2625 = vld [vmem:[%s278 + $0x44] sm:$0xff]
          %v2626 = vld [vmem:[%s278 + $0x4c] sm:$0xff]
          %v2627 = vld [vmem:[%s278 + $0x54] sm:$0xff]
          %v2628 = vld [vmem:[%s278 + $0x64] sm:$0xff]
          %v2629 = vld [vmem:[%s278 + $0x6c] sm:$0xff]
          %v2630 = vld [vmem:[%s278 + $0x74] sm:$0xff]
          %v2631 = vld [vmem:[%s278 + $0x84] sm:$0xff]
          %v2632 = vld [vmem:[%s278 + $0x8c] sm:$0xff]
          %v2633 = vld [vmem:[%s278 + $0x94] sm:$0xff]
          %v2634 = vld [vmem:[%s278 + $0xa4] sm:$0xff]
          %v2635 = vld [vmem:[%s278 + $0xac] sm:$0xff]
          %v2636 = vld [vmem:[%s278 + $0xb4] sm:$0xff]
          %v2637 = vld [vmem:[%s278 + $0xc4] sm:$0xff]
          %v2638 = vld [vmem:[%s278 + $0xcc] sm:$0xff]
          %v2639 = vld [vmem:[%s278 + $0xd4] sm:$0xff]
          %v2640 = vld [vmem:[%s278 + $0xe4] sm:$0xff]
          %v2641 = vld [vmem:[%s278 + $0xec] sm:$0xff]
          %v2642 = vld [vmem:[%s278 + $0xf4] sm:$0xff]
          %v2643 = vld [vmem:[%s278 + $0x104] sm:$0xff]
          %v2644 = vld [vmem:[%s278 + $0x10c] sm:$0xff]
          %v2645 = vld [vmem:[%s278 + $0x114] sm:$0xff]
          %v2646 = vld [vmem:[%s278 + $0x124] sm:$0xff]
          %v2647 = vld [vmem:[%s278 + $0x12c] sm:$0xff]
          %v2648 = vld [vmem:[%s278 + $0x134] sm:$0xff]
          %v2649 = vld [vmem:[%s278 + $0x144] sm:$0xff]
          %v2650 = vld [vmem:[%s278 + $0x14c] sm:$0xff]
          %v2651 = vld [vmem:[%s278 + $0x154] sm:$0xff]
          %v2652 = vld [vmem:[%s278 + $0x164] sm:$0xff]
          %v2653 = vld [vmem:[%s278 + $0x16c] sm:$0xff]
          %v2654 = vld [vmem:[%s278 + $0x174] sm:$0xff]
          %v2655 = vld [vmem:[%s278 + $0x184] sm:$0xff]
          %v2656 = vld [vmem:[%s278 + $0x18c] sm:$0xff]
          %v2657 = vld [vmem:[%s278 + $0x194] sm:$0xff]
          %v2658 = vld [vmem:[%s278 + $0x1a4] sm:$0xff]
          %v2659 = vld [vmem:[%s278 + $0x1ac] sm:$0xff]
          %v2660 = vld [vmem:[%s278 + $0x1b4] sm:$0xff]
          %v2661 = vld [vmem:[%s278 + $0x1c4] sm:$0xff]
          %v2662 = vld [vmem:[%s278 + $0x1cc] sm:$0xff]
          %v2663 = vld [vmem:[%s278 + $0x1d4] sm:$0xff]
          %v2664 = vld [vmem:[%s278 + $0x1e4] sm:$0xff]
          %v2665 = vld [vmem:[%s278 + $0x1ec] sm:$0xff]
          %v2666 = vld [vmem:[%s278 + $0x1f4] sm:$0xff]
          %v2667 = vld [vmem:[%s278 + $0x204] sm:$0xff]
          %v2668 = vld [vmem:[%s278 + $0x20c] sm:$0xff]
          %v2669 = vld [vmem:[%s278 + $0x214] sm:$0xff]
          %v2670 = vld [vmem:[%s278 + $0x224] sm:$0xff]
          %v2671 = vld [vmem:[%s278 + $0x22c] sm:$0xff]
          %v2672 = vld [vmem:[%s278 + $0x234] sm:$0xff]
          %v2673 = vld [vmem:[%s278 + $0x244] sm:$0xff]
          %v2674 = vld [vmem:[%s278 + $0x24c] sm:$0xff]
          %v2675 = vld [vmem:[%s278 + $0x254] sm:$0xff]
          %v2676 = vld [vmem:[%s278 + $0x264] sm:$0xff]
          %v2677 = vld [vmem:[%s278 + $0x26c] sm:$0xff]
          %v2678 = vld [vmem:[%s278 + $0x274] sm:$0xff]
          %v2679 = vld [vmem:[%s278 + $0x284] sm:$0xff]
          %v2680 = vld [vmem:[%s278 + $0x28c] sm:$0xff]
          %v2681 = vld [vmem:[%s278 + $0x294] sm:$0xff]
          %v2682 = vld [vmem:[%s278 + $0x2a4] sm:$0xff]
          %v2683 = vld [vmem:[%s278 + $0x2ac] sm:$0xff]
          %v2684 = vld [vmem:[%s278 + $0x2b4] sm:$0xff]
          %v2685 = vld [vmem:[%s278 + $0x2c4] sm:$0xff]
          %v2686 = vld [vmem:[%s278 + $0x2cc] sm:$0xff]
          %v2687 = vld [vmem:[%s278 + $0x2d4] sm:$0xff]
          %v2688 = vld [vmem:[%s278 + $0x2e4] sm:$0xff]
          %v2689 = vld [vmem:[%s278 + $0x2ec] sm:$0xff]
          %v2690 = vld [vmem:[%s278 + $0x2f4] sm:$0xff]
          %s2691 = sadd.s32 %s351, 4
          %s2692 = scalar_lea.vmem [#allocation2], %s2691
          %v2693 = vld [vmem:[%s2692] sm:$0x1]
          %2695 = vset.pattern.permute.xlu0 0
          %2696 = vperm.xlu0 %2695, %v2619
          %v2697 = vpop.permute.xlu0 %2696
          %2700 = vset.pattern.permute.xlu0 0
          %2701 = vperm.xlu0 %2700, %v2620
          %v2702 = vpop.permute.xlu0 %2701
          %2705 = vset.pattern.permute.xlu0 0
          %2706 = vperm.xlu0 %2705, %v2621
          %v2707 = vpop.permute.xlu0 %2706
          %2710 = vset.pattern.permute.xlu0 0
          %2711 = vperm.xlu0 %2710, %v2622
          %v2712 = vpop.permute.xlu0 %2711
          %2715 = vset.pattern.permute.xlu0 0
          %2716 = vperm.xlu0 %2715, %v2623
          %v2717 = vpop.permute.xlu0 %2716
          %2720 = vset.pattern.permute.xlu0 0
          %2721 = vperm.xlu0 %2720, %v2624
          %v2722 = vpop.permute.xlu0 %2721
          %2725 = vset.pattern.permute.xlu0 0
          %2726 = vperm.xlu0 %2725, %v2625
          %v2727 = vpop.permute.xlu0 %2726
          %2730 = vset.pattern.permute.xlu0 0
          %2731 = vperm.xlu0 %2730, %v2626
          %v2732 = vpop.permute.xlu0 %2731
          %2735 = vset.pattern.permute.xlu0 0
          %2736 = vperm.xlu0 %2735, %v2627
          %v2737 = vpop.permute.xlu0 %2736
          %2740 = vset.pattern.permute.xlu0 0
          %2741 = vperm.xlu0 %2740, %v2628
          %v2742 = vpop.permute.xlu0 %2741
          %2745 = vset.pattern.permute.xlu0 0
          %2746 = vperm.xlu0 %2745, %v2629
          %v2747 = vpop.permute.xlu0 %2746
          %2750 = vset.pattern.permute.xlu0 0
          %2751 = vperm.xlu0 %2750, %v2630
          %v2752 = vpop.permute.xlu0 %2751
          %2755 = vset.pattern.permute.xlu0 0
          %2756 = vperm.xlu0 %2755, %v2631
          %v2757 = vpop.permute.xlu0 %2756
          %2760 = vset.pattern.permute.xlu0 0
          %2761 = vperm.xlu0 %2760, %v2632
          %v2762 = vpop.permute.xlu0 %2761
          %2765 = vset.pattern.permute.xlu0 0
          %2766 = vperm.xlu0 %2765, %v2633
          %v2767 = vpop.permute.xlu0 %2766
          %2770 = vset.pattern.permute.xlu0 0
          %2771 = vperm.xlu0 %2770, %v2634
          %v2772 = vpop.permute.xlu0 %2771
          %2775 = vset.pattern.permute.xlu0 0
          %2776 = vperm.xlu0 %2775, %v2635
          %v2777 = vpop.permute.xlu0 %2776
          %2780 = vset.pattern.permute.xlu0 0
          %2781 = vperm.xlu0 %2780, %v2636
          %v2782 = vpop.permute.xlu0 %2781
          %2785 = vset.pattern.permute.xlu0 0
          %2786 = vperm.xlu0 %2785, %v2637
          %v2787 = vpop.permute.xlu0 %2786
          %2790 = vset.pattern.permute.xlu0 0
          %2791 = vperm.xlu0 %2790, %v2638
          %v2792 = vpop.permute.xlu0 %2791
          %2795 = vset.pattern.permute.xlu0 0
          %2796 = vperm.xlu0 %2795, %v2639
          %v2797 = vpop.permute.xlu0 %2796
          %2800 = vset.pattern.permute.xlu0 0
          %2801 = vperm.xlu0 %2800, %v2640
          %v2802 = vpop.permute.xlu0 %2801
          %2805 = vset.pattern.permute.xlu0 0
          %2806 = vperm.xlu0 %2805, %v2641
          %v2807 = vpop.permute.xlu0 %2806
          %2810 = vset.pattern.permute.xlu0 0
          %2811 = vperm.xlu0 %2810, %v2642
          %v2812 = vpop.permute.xlu0 %2811
          %2815 = vset.pattern.permute.xlu0 0
          %2816 = vperm.xlu0 %2815, %v2643
          %v2817 = vpop.permute.xlu0 %2816
          %2820 = vset.pattern.permute.xlu0 0
          %2821 = vperm.xlu0 %2820, %v2644
          %v2822 = vpop.permute.xlu0 %2821
          %2825 = vset.pattern.permute.xlu0 0
          %2826 = vperm.xlu0 %2825, %v2645
          %v2827 = vpop.permute.xlu0 %2826
          %2830 = vset.pattern.permute.xlu0 0
          %2831 = vperm.xlu0 %2830, %v2646
          %v2832 = vpop.permute.xlu0 %2831
          %2835 = vset.pattern.permute.xlu0 0
          %2836 = vperm.xlu0 %2835, %v2647
          %v2837 = vpop.permute.xlu0 %2836
          %2840 = vset.pattern.permute.xlu0 0
          %2841 = vperm.xlu0 %2840, %v2648
          %v2842 = vpop.permute.xlu0 %2841
          %2845 = vset.pattern.permute.xlu0 0
          %2846 = vperm.xlu0 %2845, %v2649
          %v2847 = vpop.permute.xlu0 %2846
          %2850 = vset.pattern.permute.xlu0 0
          %2851 = vperm.xlu0 %2850, %v2650
          %v2852 = vpop.permute.xlu0 %2851
          %2855 = vset.pattern.permute.xlu0 0
          %2856 = vperm.xlu0 %2855, %v2651
          %v2857 = vpop.permute.xlu0 %2856
          %2860 = vset.pattern.permute.xlu0 0
          %2861 = vperm.xlu0 %2860, %v2652
          %v2862 = vpop.permute.xlu0 %2861
          %2865 = vset.pattern.permute.xlu0 0
          %2866 = vperm.xlu0 %2865, %v2653
          %v2867 = vpop.permute.xlu0 %2866
          %2870 = vset.pattern.permute.xlu0 0
          %2871 = vperm.xlu0 %2870, %v2654
          %v2872 = vpop.permute.xlu0 %2871
          %2875 = vset.pattern.permute.xlu0 0
          %2876 = vperm.xlu0 %2875, %v2655
          %v2877 = vpop.permute.xlu0 %2876
          %2880 = vset.pattern.permute.xlu0 0
          %2881 = vperm.xlu0 %2880, %v2656
          %v2882 = vpop.permute.xlu0 %2881
          %2885 = vset.pattern.permute.xlu0 0
          %2886 = vperm.xlu0 %2885, %v2657
          %v2887 = vpop.permute.xlu0 %2886
          %2890 = vset.pattern.permute.xlu0 0
          %2891 = vperm.xlu0 %2890, %v2658
          %v2892 = vpop.permute.xlu0 %2891
          %2895 = vset.pattern.permute.xlu0 0
          %2896 = vperm.xlu0 %2895, %v2659
          %v2897 = vpop.permute.xlu0 %2896
          %2900 = vset.pattern.permute.xlu0 0
          %2901 = vperm.xlu0 %2900, %v2660
          %v2902 = vpop.permute.xlu0 %2901
          %2905 = vset.pattern.permute.xlu0 0
          %2906 = vperm.xlu0 %2905, %v2661
          %v2907 = vpop.permute.xlu0 %2906
          %2910 = vset.pattern.permute.xlu0 0
          %2911 = vperm.xlu0 %2910, %v2662
          %v2912 = vpop.permute.xlu0 %2911
          %2915 = vset.pattern.permute.xlu0 0
          %2916 = vperm.xlu0 %2915, %v2663
          %v2917 = vpop.permute.xlu0 %2916
          %2920 = vset.pattern.permute.xlu0 0
          %2921 = vperm.xlu0 %2920, %v2664
          %v2922 = vpop.permute.xlu0 %2921
          %2925 = vset.pattern.permute.xlu0 0
          %2926 = vperm.xlu0 %2925, %v2665
          %v2927 = vpop.permute.xlu0 %2926
          %2930 = vset.pattern.permute.xlu0 0
          %2931 = vperm.xlu0 %2930, %v2666
          %v2932 = vpop.permute.xlu0 %2931
          %2935 = vset.pattern.permute.xlu0 0
          %2936 = vperm.xlu0 %2935, %v2667
          %v2937 = vpop.permute.xlu0 %2936
          %2940 = vset.pattern.permute.xlu0 0
          %2941 = vperm.xlu0 %2940, %v2668
          %v2942 = vpop.permute.xlu0 %2941
          %2945 = vset.pattern.permute.xlu0 0
          %2946 = vperm.xlu0 %2945, %v2669
          %v2947 = vpop.permute.xlu0 %2946
          %2950 = vset.pattern.permute.xlu0 0
          %2951 = vperm.xlu0 %2950, %v2670
          %v2952 = vpop.permute.xlu0 %2951
          %2955 = vset.pattern.permute.xlu0 0
          %2956 = vperm.xlu0 %2955, %v2671
          %v2957 = vpop.permute.xlu0 %2956
          %2960 = vset.pattern.permute.xlu0 0
          %2961 = vperm.xlu0 %2960, %v2672
          %v2962 = vpop.permute.xlu0 %2961
          %2965 = vset.pattern.permute.xlu0 0
          %2966 = vperm.xlu0 %2965, %v2673
          %v2967 = vpop.permute.xlu0 %2966
          %2970 = vset.pattern.permute.xlu0 0
          %2971 = vperm.xlu0 %2970, %v2674
          %v2972 = vpop.permute.xlu0 %2971
          %2975 = vset.pattern.permute.xlu0 0
          %2976 = vperm.xlu0 %2975, %v2675
          %v2977 = vpop.permute.xlu0 %2976
          %2980 = vset.pattern.permute.xlu0 0
          %2981 = vperm.xlu0 %2980, %v2676
          %v2982 = vpop.permute.xlu0 %2981
          %2985 = vset.pattern.permute.xlu0 0
          %2986 = vperm.xlu0 %2985, %v2677
          %v2987 = vpop.permute.xlu0 %2986
          %2990 = vset.pattern.permute.xlu0 0
          %2991 = vperm.xlu0 %2990, %v2678
          %v2992 = vpop.permute.xlu0 %2991
          %2995 = vset.pattern.permute.xlu0 0
          %2996 = vperm.xlu0 %2995, %v2679
          %v2997 = vpop.permute.xlu0 %2996
          %3000 = vset.pattern.permute.xlu0 0
          %3001 = vperm.xlu0 %3000, %v2680
          %v3002 = vpop.permute.xlu0 %3001
          %3005 = vset.pattern.permute.xlu0 0
          %3006 = vperm.xlu0 %3005, %v2681
          %v3007 = vpop.permute.xlu0 %3006
          %3010 = vset.pattern.permute.xlu0 0
          %3011 = vperm.xlu0 %3010, %v2682
          %v3012 = vpop.permute.xlu0 %3011
          %3015 = vset.pattern.permute.xlu0 0
          %3016 = vperm.xlu0 %3015, %v2683
          %v3017 = vpop.permute.xlu0 %3016
          %3020 = vset.pattern.permute.xlu0 0
          %3021 = vperm.xlu0 %3020, %v2684
          %v3022 = vpop.permute.xlu0 %3021
          %3025 = vset.pattern.permute.xlu0 0
          %3026 = vperm.xlu0 %3025, %v2685
          %v3027 = vpop.permute.xlu0 %3026
          %3030 = vset.pattern.permute.xlu0 0
          %3031 = vperm.xlu0 %3030, %v2686
          %v3032 = vpop.permute.xlu0 %3031
          %3035 = vset.pattern.permute.xlu0 0
          %3036 = vperm.xlu0 %3035, %v2687
          %v3037 = vpop.permute.xlu0 %3036
          %3040 = vset.pattern.permute.xlu0 0
          %3041 = vperm.xlu0 %3040, %v2688
          %v3042 = vpop.permute.xlu0 %3041
          %3045 = vset.pattern.permute.xlu0 0
          %3046 = vperm.xlu0 %3045, %v2689
          %v3047 = vpop.permute.xlu0 %3046
          %3050 = vset.pattern.permute.xlu0 0
          %3051 = vperm.xlu0 %3050, %v2690
          %v3052 = vpop.permute.xlu0 %3051
          %v3055 = vlaneseq
          %v3056 = vshrl.u32 %v3055, 7
          %v3057 = vsub.s32 0, %v3056
          %v3058 = vrot.slane %v2693, %v3057
          %v3060 = vmul.f32 %v2697, %v3058
          %v3061 = vmul.f32 %v2702, %v3058
          %v3062 = vmul.f32 %v2707, %v3058
          %v3063 = vmul.f32 %v2712, %v3058
          %v3064 = vmul.f32 %v2717, %v3058
          %v3065 = vmul.f32 %v2722, %v3058
          %v3066 = vmul.f32 %v2727, %v3058
          %v3067 = vmul.f32 %v2732, %v3058
          %v3068 = vmul.f32 %v2737, %v3058
          %v3069 = vmul.f32 %v2742, %v3058
          %v3070 = vmul.f32 %v2747, %v3058
          %v3071 = vmul.f32 %v2752, %v3058
          %v3072 = vmul.f32 %v2757, %v3058
          %v3073 = vmul.f32 %v2762, %v3058
          %v3074 = vmul.f32 %v2767, %v3058
          %v3075 = vmul.f32 %v2772, %v3058
          %v3076 = vmul.f32 %v2777, %v3058
          %v3077 = vmul.f32 %v2782, %v3058
          %v3078 = vmul.f32 %v2787, %v3058
          %v3079 = vmul.f32 %v2792, %v3058
          %v3080 = vmul.f32 %v2797, %v3058
          %v3081 = vmul.f32 %v2802, %v3058
          %v3082 = vmul.f32 %v2807, %v3058
          %v3083 = vmul.f32 %v2812, %v3058
          %v3084 = vmul.f32 %v2817, %v3058
          %v3085 = vmul.f32 %v2822, %v3058
          %v3086 = vmul.f32 %v2827, %v3058
          %v3087 = vmul.f32 %v2832, %v3058
          %v3088 = vmul.f32 %v2837, %v3058
          %v3089 = vmul.f32 %v2842, %v3058
          %v3090 = vmul.f32 %v2847, %v3058
          %v3091 = vmul.f32 %v2852, %v3058
          %v3092 = vmul.f32 %v2857, %v3058
          %v3093 = vmul.f32 %v2862, %v3058
          %v3094 = vmul.f32 %v2867, %v3058
          %v3095 = vmul.f32 %v2872, %v3058
          %v3096 = vmul.f32 %v2877, %v3058
          %v3097 = vmul.f32 %v2882, %v3058
          %v3098 = vmul.f32 %v2887, %v3058
          %v3099 = vmul.f32 %v2892, %v3058
          %v3100 = vmul.f32 %v2897, %v3058
          %v3101 = vmul.f32 %v2902, %v3058
          %v3102 = vmul.f32 %v2907, %v3058
          %v3103 = vmul.f32 %v2912, %v3058
          %v3104 = vmul.f32 %v2917, %v3058
          %v3105 = vmul.f32 %v2922, %v3058
          %v3106 = vmul.f32 %v2927, %v3058
          %v3107 = vmul.f32 %v2932, %v3058
          %v3108 = vmul.f32 %v2937, %v3058
          %v3109 = vmul.f32 %v2942, %v3058
          %v3110 = vmul.f32 %v2947, %v3058
          %v3111 = vmul.f32 %v2952, %v3058
          %v3112 = vmul.f32 %v2957, %v3058
          %v3113 = vmul.f32 %v2962, %v3058
          %v3114 = vmul.f32 %v2967, %v3058
          %v3115 = vmul.f32 %v2972, %v3058
          %v3116 = vmul.f32 %v2977, %v3058
          %v3117 = vmul.f32 %v2982, %v3058
          %v3118 = vmul.f32 %v2987, %v3058
          %v3119 = vmul.f32 %v2992, %v3058
          %v3120 = vmul.f32 %v2997, %v3058
          %v3121 = vmul.f32 %v3002, %v3058
          %v3122 = vmul.f32 %v3007, %v3058
          %v3123 = vmul.f32 %v3012, %v3058
          %v3124 = vmul.f32 %v3017, %v3058
          %v3125 = vmul.f32 %v3022, %v3058
          %v3126 = vmul.f32 %v3027, %v3058
          %v3127 = vmul.f32 %v3032, %v3058
          %v3128 = vmul.f32 %v3037, %v3058
          %v3129 = vmul.f32 %v3042, %v3058
          %v3130 = vmul.f32 %v3047, %v3058
          %v3131 = vmul.f32 %v3052, %v3058
          %v3132 = vadd.f32 %v2547, %v3060
          %v3133 = vadd.f32 %v2548, %v3061
          %v3134 = vadd.f32 %v2549, %v3062
          %v3135 = vadd.f32 %v2550, %v3063
          %v3136 = vadd.f32 %v2551, %v3064
          %v3137 = vadd.f32 %v2552, %v3065
          %v3138 = vadd.f32 %v2553, %v3066
          %v3139 = vadd.f32 %v2554, %v3067
          %v3140 = vadd.f32 %v2555, %v3068
          %v3141 = vadd.f32 %v2556, %v3069
          %v3142 = vadd.f32 %v2557, %v3070
          %v3143 = vadd.f32 %v2558, %v3071
          %v3144 = vadd.f32 %v2559, %v3072
          %v3145 = vadd.f32 %v2560, %v3073
          %v3146 = vadd.f32 %v2561, %v3074
          %v3147 = vadd.f32 %v2562, %v3075
          %v3148 = vadd.f32 %v2563, %v3076
          %v3149 = vadd.f32 %v2564, %v3077
          %v3150 = vadd.f32 %v2565, %v3078
          %v3151 = vadd.f32 %v2566, %v3079
          %v3152 = vadd.f32 %v2567, %v3080
          %v3153 = vadd.f32 %v2568, %v3081
          %v3154 = vadd.f32 %v2569, %v3082
          %v3155 = vadd.f32 %v2570, %v3083
          %v3156 = vadd.f32 %v2571, %v3084
          %v3157 = vadd.f32 %v2572, %v3085
          %v3158 = vadd.f32 %v2573, %v3086
          %v3159 = vadd.f32 %v2574, %v3087
          %v3160 = vadd.f32 %v2575, %v3088
          %v3161 = vadd.f32 %v2576, %v3089
          %v3162 = vadd.f32 %v2577, %v3090
          %v3163 = vadd.f32 %v2578, %v3091
          %v3164 = vadd.f32 %v2579, %v3092
          %v3165 = vadd.f32 %v2580, %v3093
          %v3166 = vadd.f32 %v2581, %v3094
          %v3167 = vadd.f32 %v2582, %v3095
          %v3168 = vadd.f32 %v2583, %v3096
          %v3169 = vadd.f32 %v2584, %v3097
          %v3170 = vadd.f32 %v2585, %v3098
          %v3171 = vadd.f32 %v2586, %v3099
          %v3172 = vadd.f32 %v2587, %v3100
          %v3173 = vadd.f32 %v2588, %v3101
          %v3174 = vadd.f32 %v2589, %v3102
          %v3175 = vadd.f32 %v2590, %v3103
          %v3176 = vadd.f32 %v2591, %v3104
          %v3177 = vadd.f32 %v2592, %v3105
          %v3178 = vadd.f32 %v2593, %v3106
          %v3179 = vadd.f32 %v2594, %v3107
          %v3180 = vadd.f32 %v2595, %v3108
          %v3181 = vadd.f32 %v2596, %v3109
          %v3182 = vadd.f32 %v2597, %v3110
          %v3183 = vadd.f32 %v2598, %v3111
          %v3184 = vadd.f32 %v2599, %v3112
          %v3185 = vadd.f32 %v2600, %v3113
          %v3186 = vadd.f32 %v2601, %v3114
          %v3187 = vadd.f32 %v2602, %v3115
          %v3188 = vadd.f32 %v2603, %v3116
          %v3189 = vadd.f32 %v2604, %v3117
          %v3190 = vadd.f32 %v2605, %v3118
          %v3191 = vadd.f32 %v2606, %v3119
          %v3192 = vadd.f32 %v2607, %v3120
          %v3193 = vadd.f32 %v2608, %v3121
          %v3194 = vadd.f32 %v2609, %v3122
          %v3195 = vadd.f32 %v2610, %v3123
          %v3196 = vadd.f32 %v2611, %v3124
          %v3197 = vadd.f32 %v2612, %v3125
          %v3198 = vadd.f32 %v2613, %v3126
          %v3199 = vadd.f32 %v2614, %v3127
          %v3200 = vadd.f32 %v2615, %v3128
          %v3201 = vadd.f32 %v2616, %v3129
          %v3202 = vadd.f32 %v2617, %v3130
          %v3203 = vadd.f32 %v2618, %v3131
        $region45: #{cnn_mnist_forward.3} parent=31 // loop_footer
          %s204 = sadd.s32 1, %s200
        $region46: #{cnn_mnist_forward.3} parent=31 // loop_footer_branch
          %199 = sbr.rel target = $region42
        $region47: #{cnn_mnist_forward.3} parent=31 // loop_exit
          _
        %v3204 = vld [vmem:[#allocation4] sm:$0x1]
        %v3206 = vlaneseq
        %v3207 = vshrl.u32 %v3206, 7
        %v3208 = vsub.s32 0, %v3207
        %v3209 = vrot.slane %v3204, %v3208
        %v3211 = vadd.f32 %v205, %v3209
        %v3212 = vadd.f32 %v206, %v3209
        %v3213 = vadd.f32 %v207, %v3209
        %v3214 = vadd.f32 %v208, %v3209
        %v3215 = vadd.f32 %v209, %v3209
        %v3216 = vadd.f32 %v210, %v3209
        %v3217 = vadd.f32 %v211, %v3209
        %v3218 = vadd.f32 %v212, %v3209
        %v3219 = vadd.f32 %v213, %v3209
        %v3220 = vadd.f32 %v214, %v3209
        %v3221 = vadd.f32 %v215, %v3209
        %v3222 = vadd.f32 %v216, %v3209
        %v3223 = vadd.f32 %v217, %v3209
        %v3224 = vadd.f32 %v218, %v3209
        %v3225 = vadd.f32 %v219, %v3209
        %v3226 = vadd.f32 %v220, %v3209
        %v3227 = vadd.f32 %v221, %v3209
        %v3228 = vadd.f32 %v222, %v3209
        %v3229 = vadd.f32 %v223, %v3209
        %v3230 = vadd.f32 %v224, %v3209
        %v3231 = vadd.f32 %v225, %v3209
        %v3232 = vadd.f32 %v226, %v3209
        %v3233 = vadd.f32 %v227, %v3209
        %v3234 = vadd.f32 %v228, %v3209
        %v3235 = vadd.f32 %v229, %v3209
        %v3236 = vadd.f32 %v230, %v3209
        %v3237 = vadd.f32 %v231, %v3209
        %v3238 = vadd.f32 %v232, %v3209
        %v3239 = vadd.f32 %v233, %v3209
        %v3240 = vadd.f32 %v234, %v3209
        %v3241 = vadd.f32 %v235, %v3209
        %v3242 = vadd.f32 %v236, %v3209
        %v3243 = vadd.f32 %v237, %v3209
        %v3244 = vadd.f32 %v238, %v3209
        %v3245 = vadd.f32 %v239, %v3209
        %v3246 = vadd.f32 %v240, %v3209
        %v3247 = vadd.f32 %v241, %v3209
        %v3248 = vadd.f32 %v242, %v3209
        %v3249 = vadd.f32 %v243, %v3209
        %v3250 = vadd.f32 %v244, %v3209
        %v3251 = vadd.f32 %v245, %v3209
        %v3252 = vadd.f32 %v246, %v3209
        %v3253 = vadd.f32 %v247, %v3209
        %v3254 = vadd.f32 %v248, %v3209
        %v3255 = vadd.f32 %v249, %v3209
        %v3256 = vadd.f32 %v250, %v3209
        %v3257 = vadd.f32 %v251, %v3209
        %v3258 = vadd.f32 %v252, %v3209
        %v3259 = vadd.f32 %v253, %v3209
        %v3260 = vadd.f32 %v254, %v3209
        %v3261 = vadd.f32 %v255, %v3209
        %v3262 = vadd.f32 %v256, %v3209
        %v3263 = vadd.f32 %v257, %v3209
        %v3264 = vadd.f32 %v258, %v3209
        %v3265 = vadd.f32 %v259, %v3209
        %v3266 = vadd.f32 %v260, %v3209
        %v3267 = vadd.f32 %v261, %v3209
        %v3268 = vadd.f32 %v262, %v3209
        %v3269 = vadd.f32 %v263, %v3209
        %v3270 = vadd.f32 %v264, %v3209
        %v3271 = vadd.f32 %v265, %v3209
        %v3272 = vadd.f32 %v266, %v3209
        %v3273 = vadd.f32 %v267, %v3209
        %v3274 = vadd.f32 %v268, %v3209
        %v3275 = vadd.f32 %v269, %v3209
        %v3276 = vadd.f32 %v270, %v3209
        %v3277 = vadd.f32 %v271, %v3209
        %v3278 = vadd.f32 %v272, %v3209
        %v3279 = vadd.f32 %v273, %v3209
        %v3280 = vadd.f32 %v274, %v3209
        %v3281 = vadd.f32 %v275, %v3209
        %v3282 = vadd.f32 %v276, %v3209
        %v3283 = vmax.f32 %v3211, 0.0
        %v3284 = vmax.f32 %v3212, 0.0
        %v3285 = vmax.f32 %v3213, 0.0
        %v3286 = vmax.f32 %v3214, 0.0
        %v3287 = vmax.f32 %v3215, 0.0
        %v3288 = vmax.f32 %v3216, 0.0
        %v3289 = vmax.f32 %v3217, 0.0
        %v3290 = vmax.f32 %v3218, 0.0
        %v3291 = vmax.f32 %v3219, 0.0
        %v3292 = vmax.f32 %v3220, 0.0
        %v3293 = vmax.f32 %v3221, 0.0
        %v3294 = vmax.f32 %v3222, 0.0
        %v3295 = vmax.f32 %v3223, 0.0
        %v3296 = vmax.f32 %v3224, 0.0
        %v3297 = vmax.f32 %v3225, 0.0
        %v3298 = vmax.f32 %v3226, 0.0
        %v3299 = vmax.f32 %v3227, 0.0
        %v3300 = vmax.f32 %v3228, 0.0
        %v3301 = vmax.f32 %v3229, 0.0
        %v3302 = vmax.f32 %v3230, 0.0
        %v3303 = vmax.f32 %v3231, 0.0
        %v3304 = vmax.f32 %v3232, 0.0
        %v3305 = vmax.f32 %v3233, 0.0
        %v3306 = vmax.f32 %v3234, 0.0
        %v3307 = vmax.f32 %v3235, 0.0
        %v3308 = vmax.f32 %v3236, 0.0
        %v3309 = vmax.f32 %v3237, 0.0
        %v3310 = vmax.f32 %v3238, 0.0
        %v3311 = vmax.f32 %v3239, 0.0
        %v3312 = vmax.f32 %v3240, 0.0
        %v3313 = vmax.f32 %v3241, 0.0
        %v3314 = vmax.f32 %v3242, 0.0
        %v3315 = vmax.f32 %v3243, 0.0
        %v3316 = vmax.f32 %v3244, 0.0
        %v3317 = vmax.f32 %v3245, 0.0
        %v3318 = vmax.f32 %v3246, 0.0
        %v3319 = vmax.f32 %v3247, 0.0
        %v3320 = vmax.f32 %v3248, 0.0
        %v3321 = vmax.f32 %v3249, 0.0
        %v3322 = vmax.f32 %v3250, 0.0
        %v3323 = vmax.f32 %v3251, 0.0
        %v3324 = vmax.f32 %v3252, 0.0
        %v3325 = vmax.f32 %v3253, 0.0
        %v3326 = vmax.f32 %v3254, 0.0
        %v3327 = vmax.f32 %v3255, 0.0
        %v3328 = vmax.f32 %v3256, 0.0
        %v3329 = vmax.f32 %v3257, 0.0
        %v3330 = vmax.f32 %v3258, 0.0
        %v3331 = vmax.f32 %v3259, 0.0
        %v3332 = vmax.f32 %v3260, 0.0
        %v3333 = vmax.f32 %v3261, 0.0
        %v3334 = vmax.f32 %v3262, 0.0
        %v3335 = vmax.f32 %v3263, 0.0
        %v3336 = vmax.f32 %v3264, 0.0
        %v3337 = vmax.f32 %v3265, 0.0
        %v3338 = vmax.f32 %v3266, 0.0
        %v3339 = vmax.f32 %v3267, 0.0
        %v3340 = vmax.f32 %v3268, 0.0
        %v3341 = vmax.f32 %v3269, 0.0
        %v3342 = vmax.f32 %v3270, 0.0
        %v3343 = vmax.f32 %v3271, 0.0
        %v3344 = vmax.f32 %v3272, 0.0
        %v3345 = vmax.f32 %v3273, 0.0
        %v3346 = vmax.f32 %v3274, 0.0
        %v3347 = vmax.f32 %v3275, 0.0
        %v3348 = vmax.f32 %v3276, 0.0
        %v3349 = vmax.f32 %v3277, 0.0
        %v3350 = vmax.f32 %v3278, 0.0
        %v3351 = vmax.f32 %v3279, 0.0
        %v3352 = vmax.f32 %v3280, 0.0
        %v3353 = vmax.f32 %v3281, 0.0
        %v3354 = vmax.f32 %v3282, 0.0
        %3355 = vst [vmem:[%s198] sm:$0xff] %v3283
        %3356 = vst [vmem:[%s198 + $0x8] sm:$0xff] %v3284
        %3357 = vst [vmem:[%s198 + $0x10] sm:$0xff] %v3285
        %3358 = vst [vmem:[%s198 + $0x18] sm:$0xff] %v3286
        %3359 = vst [vmem:[%s198 + $0x20] sm:$0xff] %v3287
        %3360 = vst [vmem:[%s198 + $0x28] sm:$0xff] %v3288
        %3361 = vst [vmem:[%s198 + $0x30] sm:$0xff] %v3289
        %3362 = vst [vmem:[%s198 + $0x38] sm:$0xff] %v3290
        %3363 = vst [vmem:[%s198 + $0x40] sm:$0xff] %v3291
        %3364 = vst [vmem:[%s198 + $0x48] sm:$0xff] %v3292
        %3365 = vst [vmem:[%s198 + $0x50] sm:$0xff] %v3293
        %3366 = vst [vmem:[%s198 + $0x58] sm:$0xff] %v3294
        %3367 = vst [vmem:[%s198 + $0x60] sm:$0xff] %v3295
        %3368 = vst [vmem:[%s198 + $0x68] sm:$0xff] %v3296
        %3369 = vst [vmem:[%s198 + $0x70] sm:$0xff] %v3297
        %3370 = vst [vmem:[%s198 + $0x78] sm:$0xff] %v3298
        %3371 = vst [vmem:[%s198 + $0x80] sm:$0xff] %v3299
        %3372 = vst [vmem:[%s198 + $0x88] sm:$0xff] %v3300
        %3373 = vst [vmem:[%s198 + $0x90] sm:$0xff] %v3301
        %3374 = vst [vmem:[%s198 + $0x98] sm:$0xff] %v3302
        %3375 = vst [vmem:[%s198 + $0xa0] sm:$0xff] %v3303
        %3376 = vst [vmem:[%s198 + $0xa8] sm:$0xff] %v3304
        %3377 = vst [vmem:[%s198 + $0xb0] sm:$0xff] %v3305
        %3378 = vst [vmem:[%s198 + $0xb8] sm:$0xff] %v3306
        %3379 = vst [vmem:[%s198 + $0xc0] sm:$0xff] %v3307
        %3380 = vst [vmem:[%s198 + $0xc8] sm:$0xff] %v3308
        %3381 = vst [vmem:[%s198 + $0xd0] sm:$0xff] %v3309
        %3382 = vst [vmem:[%s198 + $0xd8] sm:$0xff] %v3310
        %3383 = vst [vmem:[%s198 + $0xe0] sm:$0xff] %v3311
        %3384 = vst [vmem:[%s198 + $0xe8] sm:$0xff] %v3312
        %3385 = vst [vmem:[%s198 + $0xf0] sm:$0xff] %v3313
        %3386 = vst [vmem:[%s198 + $0xf8] sm:$0xff] %v3314
        %3387 = vst [vmem:[%s198 + $0x100] sm:$0xff] %v3315
        %3388 = vst [vmem:[%s198 + $0x108] sm:$0xff] %v3316
        %3389 = vst [vmem:[%s198 + $0x110] sm:$0xff] %v3317
        %3390 = vst [vmem:[%s198 + $0x118] sm:$0xff] %v3318
        %3391 = vst [vmem:[%s198 + $0x120] sm:$0xff] %v3319
        %3392 = vst [vmem:[%s198 + $0x128] sm:$0xff] %v3320
        %3393 = vst [vmem:[%s198 + $0x130] sm:$0xff] %v3321
        %3394 = vst [vmem:[%s198 + $0x138] sm:$0xff] %v3322
        %3395 = vst [vmem:[%s198 + $0x140] sm:$0xff] %v3323
        %3396 = vst [vmem:[%s198 + $0x148] sm:$0xff] %v3324
        %3397 = vst [vmem:[%s198 + $0x150] sm:$0xff] %v3325
        %3398 = vst [vmem:[%s198 + $0x158] sm:$0xff] %v3326
        %3399 = vst [vmem:[%s198 + $0x160] sm:$0xff] %v3327
        %3400 = vst [vmem:[%s198 + $0x168] sm:$0xff] %v3328
        %3401 = vst [vmem:[%s198 + $0x170] sm:$0xff] %v3329
        %3402 = vst [vmem:[%s198 + $0x178] sm:$0xff] %v3330
        %3403 = vst [vmem:[%s198 + $0x180] sm:$0xff] %v3331
        %3404 = vst [vmem:[%s198 + $0x188] sm:$0xff] %v3332
        %3405 = vst [vmem:[%s198 + $0x190] sm:$0xff] %v3333
        %3406 = vst [vmem:[%s198 + $0x198] sm:$0xff] %v3334
        %3407 = vst [vmem:[%s198 + $0x1a0] sm:$0xff] %v3335
        %3408 = vst [vmem:[%s198 + $0x1a8] sm:$0xff] %v3336
        %3409 = vst [vmem:[%s198 + $0x1b0] sm:$0xff] %v3337
        %3410 = vst [vmem:[%s198 + $0x1b8] sm:$0xff] %v3338
        %3411 = vst [vmem:[%s198 + $0x1c0] sm:$0xff] %v3339
        %3412 = vst [vmem:[%s198 + $0x1c8] sm:$0xff] %v3340
        %3413 = vst [vmem:[%s198 + $0x1d0] sm:$0xff] %v3341
        %3414 = vst [vmem:[%s198 + $0x1d8] sm:$0xff] %v3342
        %3415 = vst [vmem:[%s198 + $0x1e0] sm:$0xff] %v3343
        %3416 = vst [vmem:[%s198 + $0x1e8] sm:$0xff] %v3344
        %3417 = vst [vmem:[%s198 + $0x1f0] sm:$0xff] %v3345
        %3418 = vst [vmem:[%s198 + $0x1f8] sm:$0xff] %v3346
        %3419 = vst [vmem:[%s198 + $0x200] sm:$0xff] %v3347
        %3420 = vst [vmem:[%s198 + $0x208] sm:$0xff] %v3348
        %3421 = vst [vmem:[%s198 + $0x210] sm:$0xff] %v3349
        %3422 = vst [vmem:[%s198 + $0x218] sm:$0xff] %v3350
        %3423 = vst [vmem:[%s198 + $0x220] sm:$0xff] %v3351
        %3424 = vst [vmem:[%s198 + $0x228] sm:$0xff] %v3352
        %3425 = vst [vmem:[%s198 + $0x230] sm:$0xff] %v3353
        %3426 = vst [vmem:[%s198 + $0x238] sm:$0xff] %v3354
        %p3427 = scmp.lt.s32.totalorder %s16, 1
        %s3428 = scalar_select %p3427, %s16, 1
        %s3429 = smul.addr %s3428, 72
        %s3430 = smul.addr %s3429, 8
        %s3431 = scalar_lea.vmem %s3, %s3430
        // Predicated region
        $region48: #{cnn_mnist_forward.3} parent=31 // pred_check
          %p3432 = pneg %p102
        $region49: #{cnn_mnist_forward.3} parent=31 // pred_check_branch
          %3434 = sbr.rel (%p3432) target = $region51
        $region50: #{cnn_mnist_forward.3} parent=31 // pred_region
          _
        $region51: #{cnn_mnist_forward.3} parent=31 // pred_fallthru
          _
      $region32: #{cnn_mnist_forward.3} parent=5 // pred_fallthru
        _
      %p3435 = scmp.le.s32.totalorder 2, %s11
      // Predicated region
      $region52: #{cnn_mnist_forward.3} parent=5 // pred_check
        %p3436 = pneg %p3435
      $region53: #{cnn_mnist_forward.3} parent=5 // pred_check_branch
        %3438 = sbr.rel (%p3436) target = $region55
      $region54: #{cnn_mnist_forward.3} parent=5 // pred_region
        %s3439 = ssub.s32 %s11, 2
        // Predicated region
        $region56: #{cnn_mnist_forward.3} parent=54 // pred_check
          %p3440 = pneg %p108
        $region57: #{cnn_mnist_forward.3} parent=54 // pred_check_branch
          %3442 = sbr.rel (%p3440) target = $region59
        $region58: #{cnn_mnist_forward.3} parent=54 // pred_region
          %p3443 = scmp.lt.s32.totalorder %s17, 1
          %s3444 = scalar_select %p3443, %s17, 1
          %s3445 = smul.addr %s3444, 72
          %s3446 = smul.addr %s3445, 8
          %s3447 = scalar_lea.vmem %s3, %s3446
        $region59: #{cnn_mnist_forward.3} parent=54 // pred_fallthru
          _
      $region55: #{cnn_mnist_forward.3} parent=5 // pred_fallthru
        _
    $region6: #{cnn_mnist_forward.3} parent=1 // loop_footer
      %s15 = sadd.s32 1, %s11
    $region7: #{cnn_mnist_forward.3} parent=1 // loop_footer_branch
      %10 = sbr.rel target = $region3
    $region8: #{cnn_mnist_forward.3} parent=1 // loop_exit
      _
    %3448 = vsyncpa [#allocation3], 1
    %s3449 = scalar_lea.sflag [#allocation3], 1
    %3450 = vsyncpa %s3449, 1
    %3451 = vsyncpa [#allocation5], 1

// kernel: cnn_mnist_forward.4
$region0: #{cnn_mnist_forward.4}
  #allocation0 [shape = 'u32[]', space=smem, size = 0x4, offset = 0x4, fixed_abs, tag = 'smem constant byte address 0x4 - core index']
  #allocation1 [shape = 'u32[144,128]{1,0:T(1,128)}', space=vmem, size = 0x12000, scoped, tag = 'internal scratch']
  %s0 = inlined_call_operand.vmem [shape: f32[2,12,12,128], index: 0, kind: input, shape index: {}]
  %s1 = inlined_call_operand.vmem [shape: bf16[25,128,128], index: 1, kind: input, shape index: {}]
  %s2 = inlined_call_operand.vmem [shape: f32[1,128], index: 2, kind: input, shape index: {}]
  %s3 = inlined_call_operand.vmem [shape: f32[128,128], index: 3, kind: output, shape index: {}]
  %s4 = sld [smem:[#allocation0]]
  $region45: #{cnn_mnist_forward.4} parent=0
    _
  %s6 = ssub.s32 1, %s4
  %s7 = scalar_select 0, %s6, %s4
  loop: start=0, step=1, limit=4
  $region2: #{cnn_mnist_forward.4} parent=0 // loop_pre_header
    _
  $region3: #{cnn_mnist_forward.4} parent=0 // loop_header
    %s9 = sphi 0, %s13
    %p10 = scmp.ge.s32.totalorder %s9, 4
    %s19 = sphi 0, %s21
    %s22 = sphi 0, %s19
    %s23 = sphi 0, %s22
    %s39 = sphi 0, %s23
    %s43 = sphi 0, %s43
    %s45 = sphi 0, %s43
    %s46 = sphi 0, %s45
    %s60 = sphi 0, %s46
    %s64 = sphi 0, %s64
    %s66 = sphi 0, %s64
    %s67 = sphi 0, %s66
    %s81 = sphi 0, %s67
    %s87 = sphi 0, %s89
    %s90 = sphi 0, %s87
    %s91 = sphi 0, %s90
    %s107 = sphi 0, %s91
  $region4: #{cnn_mnist_forward.4} parent=0 // loop_header_branch
    %12 = sbr.rel (%p10) target = $region8
  $region5: #{cnn_mnist_forward.4} parent=0 // loop_body
    %s14 = ssub.s32 %s9, 1
    %s15 = ssub.s32 %s9, 2
    %s16 = sadd.s32 %s9, 1
    %s17 = ssub.s32 %s9, %s16
    %p18 = scmp.eq.s32.totalorder %s17, 0
    %s20 = sadd.s32 %s19, 1
    %s21 = scalar_select %p18, %s19, %s20
    %p24 = pneg %p18
    %p25 = scmp.eq.s32.totalorder %s9, 1
    %p26 = por %p24, %p25
    %p27 = scmp.ne.s32.totalorder %s19, %s22
    %p28 = scmp.eq.s32.totalorder %s9, 0
    %p29 = por %p27, %p28
    %p30 = scmp.ne.s32.totalorder %s19, %s22
    %p31 = scmp.eq.s32.totalorder %s14, 1
    %p32 = por %p30, %p31
    %p33 = scmp.ne.s32.totalorder %s22, %s23
    %p34 = scmp.eq.s32.totalorder %s14, 0
    %p35 = por %p33, %p34
    %p36 = scmp.ne.s32.totalorder %s22, %s23
    %p37 = scmp.eq.s32.totalorder %s15, 1
    %p38 = por %p36, %p37
    %p40 = scmp.ne.s32.totalorder %s23, %s39
    %p41 = scmp.eq.s32.totalorder %s15, 0
    %p42 = por %p40, %p41
    %s44 = sadd.s32 %s43, 1
    %p47 = scmp.eq.s32.totalorder %s9, 1
    %p48 = scmp.ne.s32.totalorder %s43, %s45
    %p49 = scmp.eq.s32.totalorder %s9, 0
    %p50 = por %p48, %p49
    %p51 = scmp.ne.s32.totalorder %s43, %s45
    %p52 = scmp.eq.s32.totalorder %s14, 1
    %p53 = por %p51, %p52
    %p54 = scmp.ne.s32.totalorder %s45, %s46
    %p55 = scmp.eq.s32.totalorder %s14, 0
    %p56 = por %p54, %p55
    %p57 = scmp.ne.s32.totalorder %s45, %s46
    %p58 = scmp.eq.s32.totalorder %s15, 1
    %p59 = por %p57, %p58
    %p61 = scmp.ne.s32.totalorder %s46, %s60
    %p62 = scmp.eq.s32.totalorder %s15, 0
    %p63 = por %p61, %p62
    %s65 = sadd.s32 %s64, 1
    %p68 = scmp.eq.s32.totalorder %s9, 1
    %p69 = scmp.ne.s32.totalorder %s64, %s66
    %p70 = scmp.eq.s32.totalorder %s9, 0
    %p71 = por %p69, %p70
    %p72 = scmp.ne.s32.totalorder %s64, %s66
    %p73 = scmp.eq.s32.totalorder %s14, 1
    %p74 = por %p72, %p73
    %p75 = scmp.ne.s32.totalorder %s66, %s67
    %p76 = scmp.eq.s32.totalorder %s14, 0
    %p77 = por %p75, %p76
    %p78 = scmp.ne.s32.totalorder %s66, %s67
    %p79 = scmp.eq.s32.totalorder %s15, 1
    %p80 = por %p78, %p79
    %p82 = scmp.ne.s32.totalorder %s67, %s81
    %p83 = scmp.eq.s32.totalorder %s15, 0
    %p84 = por %p82, %p83
    %s85 = ssub.s32 %s9, %s16
    %p86 = scmp.eq.s32.totalorder %s85, 0
    %s88 = sadd.s32 %s87, 1
    %s89 = scalar_select %p86, %s87, %s88
    %p92 = pneg %p86
    %p93 = scmp.eq.s32.totalorder %s9, 1
    %p94 = por %p92, %p93
    %p95 = scmp.ne.s32.totalorder %s87, %s90
    %p96 = scmp.eq.s32.totalorder %s9, 0
    %p97 = por %p95, %p96
    %p98 = scmp.ne.s32.totalorder %s87, %s90
    %p99 = scmp.eq.s32.totalorder %s14, 1
    %p100 = por %p98, %p99
    %p101 = scmp.ne.s32.totalorder %s90, %s91
    %p102 = scmp.eq.s32.totalorder %s14, 0
    %p103 = por %p101, %p102
    %p104 = scmp.ne.s32.totalorder %s90, %s91
    %p105 = scmp.eq.s32.totalorder %s15, 1
    %p106 = por %p104, %p105
    %p108 = scmp.ne.s32.totalorder %s91, %s107
    %p109 = scmp.eq.s32.totalorder %s15, 0
    %p110 = por %p108, %p109
    %p111 = scmp.le.s32.totalorder 1, %s9
    %p112 = scmp.lt.s32.totalorder %s9, 3
    %p113 = pnand %p111, %p112
    %p114 = pneg %p113
    // Predicated region
    $region9: #{cnn_mnist_forward.4} parent=5 // pred_check
      _
    $region10: #{cnn_mnist_forward.4} parent=5 // pred_check_branch
      %116 = sbr.rel (%p113) target = $region12
    $region11: #{cnn_mnist_forward.4} parent=5 // pred_region
      %s117 = ssub.s32 %s9, 1
      // Predicated region
      $region13: #{cnn_mnist_forward.4} parent=11 // pred_check
        %p118 = pneg %p56
      $region14: #{cnn_mnist_forward.4} parent=11 // pred_check_branch
        %120 = sbr.rel (%p118) target = $region16
      $region15: #{cnn_mnist_forward.4} parent=11 // pred_region
        _
      $region16: #{cnn_mnist_forward.4} parent=11 // pred_fallthru
        _
      // Predicated region
      $region17: #{cnn_mnist_forward.4} parent=11 // pred_check
        %p121 = pneg %p77
      $region18: #{cnn_mnist_forward.4} parent=11 // pred_check_branch
        %123 = sbr.rel (%p121) target = $region20
      $region19: #{cnn_mnist_forward.4} parent=11 // pred_region
        _
      $region20: #{cnn_mnist_forward.4} parent=11 // pred_fallthru
        _
    $region12: #{cnn_mnist_forward.4} parent=5 // pred_fallthru
      _
    %p124 = scmp.lt.s32.totalorder %s9, 2
    // Predicated region
    $region21: #{cnn_mnist_forward.4} parent=5 // pred_check
      %p125 = pneg %p124
    $region22: #{cnn_mnist_forward.4} parent=5 // pred_check_branch
      %127 = sbr.rel (%p125) target = $region24
    $region23: #{cnn_mnist_forward.4} parent=5 // pred_region
      // Predicated region
      $region25: #{cnn_mnist_forward.4} parent=23 // pred_check
        %p128 = pneg %p29
      $region26: #{cnn_mnist_forward.4} parent=23 // pred_check_branch
        %130 = sbr.rel (%p128) target = $region28
      $region27: #{cnn_mnist_forward.4} parent=23 // pred_region
        %p131 = scmp.lt.s32.totalorder %s9, 1
        %s132 = scalar_select %p131, %s9, 1
        %s133 = smul.addr %s132, 24
        %s134 = smul.addr %s133, 8
        %s135 = scalar_lea.vmem %s0, %s134
      $region28: #{cnn_mnist_forward.4} parent=23 // pred_fallthru
        _
    $region24: #{cnn_mnist_forward.4} parent=5 // pred_fallthru
      _
    %p136 = scmp.le.s32.totalorder 1, %s9
    %p137 = scmp.lt.s32.totalorder %s9, 3
    %p138 = pnand %p136, %p137
    %p139 = pneg %p138
    // Predicated region
    $region29: #{cnn_mnist_forward.4} parent=5 // pred_check
      _
    $region30: #{cnn_mnist_forward.4} parent=5 // pred_check_branch
      %141 = sbr.rel (%p138) target = $region32
    $region31: #{cnn_mnist_forward.4} parent=5 // pred_region
      %s142 = ssub.s32 %s9, 1
      %p143 = scmp.lt.s32.totalorder %s14, 1
      %s144 = scalar_select %p143, %s14, 1
      %s145 = smul.addr %s144, 24
      %s146 = smul.addr %s145, 8
      %s147 = scalar_lea.vmem %s0, %s146
      %p148 = pneg %p35
      %p149 = pneg %p32
      %p150 = pneg %p56
      %p151 = pneg %p53
      %p152 = pneg %p77
      %p153 = pneg %p74
      %p154 = pneg %p103
      %p155 = pneg %p100
      %s156 = smul.u32 8, %s14
      %p157 = scmp.lt.s32.totalorder %s156, 15
      %s158 = scalar_select %p157, %s156, 15
      %s159 = smul.addr %s158, 8
      %s160 = scalar_lea.vmem %s3, %s159
      %p161 = scmp.lt.s32.totalorder %s14, 1
      %s162 = scalar_select %p161, %s14, 1
      %s163 = smul.addr %s162, 24
      %s164 = smul.addr %s163, 8
      %s165 = scalar_lea.vmem %s0, %s164
      %s166 = smul.u32 8, %s14
      %p167 = scmp.lt.s32.totalorder %s166, 15
      %s168 = scalar_select %p167, %s166, 15
      %s169 = smul.addr %s168, 8
      %s170 = scalar_lea.vmem %s3, %s169
      %s171 = smul.u32 8, %s14
      %v173 = vld [vmem:[%s165] sm:$0xff]
      %v174 = vld [vmem:[%s165 + $0x10] sm:$0xff]
      %v175 = vld [vmem:[%s165 + $0x20] sm:$0xff]
      %v176 = vld [vmem:[%s165 + $0x30] sm:$0xff]
      %v177 = vld [vmem:[%s165 + $0x40] sm:$0xff]
      %v178 = vld [vmem:[%s165 + $0x50] sm:$0xff]
      %v179 = vld [vmem:[%s165 + $0x60] sm:$0xff]
      %v180 = vld [vmem:[%s165 + $0x70] sm:$0xff]
      %v181 = vpack.c.bf16 %v174, %v173
      %v182 = vpack.c.bf16 %v176, %v175
      %v183 = vpack.c.bf16 %v178, %v177
      %v184 = vpack.c.bf16 %v180, %v179
      %v185 = vld [vmem:[%s1] sm:$0xf]
      %v186 = vld [vmem:[%s1 + $0x4] sm:$0xf]
      %v187 = vld [vmem:[%s1 + $0x8] sm:$0xf]
      %v188 = vld [vmem:[%s1 + $0xc] sm:$0xf]
      %v189 = vld [vmem:[%s1 + $0x10] sm:$0xf]
      %v190 = vld [vmem:[%s1 + $0x14] sm:$0xf]
      %v191 = vld [vmem:[%s1 + $0x18] sm:$0xf]
      %v192 = vld [vmem:[%s1 + $0x1c] sm:$0xf]
      %v193 = vld [vmem:[%s1 + $0x20] sm:$0xf]
      %v194 = vld [vmem:[%s1 + $0x24] sm:$0xf]
      %v195 = vld [vmem:[%s1 + $0x28] sm:$0xf]
      %v196 = vld [vmem:[%s1 + $0x2c] sm:$0xf]
      %v197 = vld [vmem:[%s1 + $0x30] sm:$0xf]
      %v198 = vld [vmem:[%s1 + $0x34] sm:$0xf]
      %v199 = vld [vmem:[%s1 + $0x38] sm:$0xf]
      %v200 = vld [vmem:[%s1 + $0x3c] sm:$0xf]
      %v201 = vld [vmem:[%s165 + $0x1] sm:$0xff]
      %v202 = vld [vmem:[%s165 + $0x11] sm:$0xff]
      %v203 = vld [vmem:[%s165 + $0x21] sm:$0xff]
      %v204 = vld [vmem:[%s165 + $0x31] sm:$0xff]
      %v205 = vld [vmem:[%s165 + $0x41] sm:$0xff]
      %v206 = vld [vmem:[%s165 + $0x51] sm:$0xff]
      %v207 = vld [vmem:[%s165 + $0x61] sm:$0xff]
      %v208 = vld [vmem:[%s165 + $0x71] sm:$0xff]
      %v209 = vpack.c.bf16 %v202, %v201
      %v210 = vpack.c.bf16 %v204, %v203
      %v211 = vpack.c.bf16 %v206, %v205
      %v212 = vpack.c.bf16 %v208, %v207
      %s213 = scalar_lea.vmem %s1, 64
      %v214 = vld [vmem:[%s213] sm:$0xf]
      %v215 = vld [vmem:[%s213 + $0x4] sm:$0xf]
      %v216 = vld [vmem:[%s213 + $0x8] sm:$0xf]
      %v217 = vld [vmem:[%s213 + $0xc] sm:$0xf]
      %v218 = vld [vmem:[%s213 + $0x10] sm:$0xf]
      %v219 = vld [vmem:[%s213 + $0x14] sm:$0xf]
      %v220 = vld [vmem:[%s213 + $0x18] sm:$0xf]
      %v221 = vld [vmem:[%s213 + $0x1c] sm:$0xf]
      %v222 = vld [vmem:[%s213 + $0x20] sm:$0xf]
      %v223 = vld [vmem:[%s213 + $0x24] sm:$0xf]
      %v224 = vld [vmem:[%s213 + $0x28] sm:$0xf]
      %v225 = vld [vmem:[%s213 + $0x2c] sm:$0xf]
      %v226 = vld [vmem:[%s213 + $0x30] sm:$0xf]
      %v227 = vld [vmem:[%s213 + $0x34] sm:$0xf]
      %v228 = vld [vmem:[%s213 + $0x38] sm:$0xf]
      %v229 = vld [vmem:[%s213 + $0x3c] sm:$0xf]
      %v246 = vunpack.c.l.b16 %v214
      %v247 = vunpack.c.l.b16 %v215
      %v248 = vunpack.c.l.b16 %v216
      %v249 = vunpack.c.l.b16 %v217
      %v250 = vunpack.c.l.b16 %v218
      %v251 = vunpack.c.l.b16 %v219
      %v252 = vunpack.c.l.b16 %v220
      %v253 = vunpack.c.l.b16 %v221
      %v254 = vunpack.c.l.b16 %v222
      %v255 = vunpack.c.l.b16 %v223
      %v256 = vunpack.c.l.b16 %v224
      %v257 = vunpack.c.l.b16 %v225
      %v258 = vunpack.c.l.b16 %v226
      %v259 = vunpack.c.l.b16 %v227
      %v260 = vunpack.c.l.b16 %v228
      %v261 = vunpack.c.l.b16 %v229
      %v262 = vpack.c.b16 %v247, %v246
      %v263 = vpack.c.b16 %v249, %v248
      %v264 = vpack.c.b16 %v251, %v250
      %v265 = vpack.c.b16 %v253, %v252
      %v266 = vpack.c.b16 %v255, %v254
      %v267 = vpack.c.b16 %v257, %v256
      %v268 = vpack.c.b16 %v259, %v258
      %v269 = vpack.c.b16 %v261, %v260
      %278 = vmatprep.subr.bf16.mxu0 0
      %279 = vmatpush1.bf16.msra.mxu0 %v262
      %280 = vmatprep.subr.bf16.mxu0 0
      %281 = vmatpush1.bf16.msra.mxu0 %v263
      %282 = vmatprep.subr.bf16.mxu0 0
      %283 = vmatpush1.bf16.msra.mxu0 %v264
      %284 = vmatprep.subr.bf16.mxu0 0
      %285 = vmatpush1.bf16.msra.mxu0 %v265
      %286 = vmatprep.subr.bf16.mxu0 0
      %287 = vmatpush1.bf16.msra.mxu0 %v266
      %288 = vmatprep.subr.bf16.mxu0 0
      %289 = vmatpush1.bf16.msra.mxu0 %v267
      %290 = vmatprep.subr.bf16.mxu0 0
      %291 = vmatpush1.bf16.msra.mxu0 %v268
      %292 = vmatprep.subr.bf16.mxu0 0
      %293 = vmatpush1.bf16.msra.mxu0 %v269
      %294 = vmatprep.subr.bf16.mxu0 0
      %295 = vmatpush1.bf16.msra.mxu0 0
      %296 = vmatprep.subr.bf16.mxu0 0
      %297 = vmatpush1.bf16.msra.mxu0 0
      %298 = vmatprep.subr.bf16.mxu0 0
      %299 = vmatpush1.bf16.msra.mxu0 0
      %300 = vmatprep.subr.bf16.mxu0 0
      %301 = vmatpush1.bf16.msra.mxu0 0
      %302 = vmatprep.subr.bf16.mxu0 0
      %303 = vmatpush1.bf16.msra.mxu0 0
      %304 = vmatprep.subr.bf16.mxu0 0
      %305 = vmatpush1.bf16.msra.mxu0 0
      %306 = vmatprep.subr.bf16.mxu0 0
      %307 = vmatpush1.bf16.msra.mxu0 0
      %308 = vmatprep.subr.bf16.mxu0 0
      %309 = vmatpush1.bf16.msra.mxu0 0
      %310 = vmatprep.mubr.bf16.mxu0 0
      %311 = vmatmul.mubr.bf16.gmra.mrb[0].mxu0 %v209
      %v312 = vpop.f32.mrb[0].mxu0
      %v313 = vadd.f32 0.0, %v312
      %v314 = vpop.f32.mrb[0].mxu0
      %v315 = vpop.f32.mrb[0].mxu0
      %v316 = vadd.f32 0.0, %v315
      %v317 = vpop.f32.mrb[0].mxu0
      %318 = vmatprep.mubr.bf16.mxu0 0
      %319 = vmatmul.mubr.bf16.gmra.mrb[0].mxu0 %v210
      %v320 = vpop.f32.mrb[0].mxu0
      %v321 = vadd.f32 0.0, %v320
      %v322 = vpop.f32.mrb[0].mxu0
      %v323 = vpop.f32.mrb[0].mxu0
      %v324 = vadd.f32 0.0, %v323
      %v325 = vpop.f32.mrb[0].mxu0
      %326 = vmatprep.mubr.bf16.mxu0 0
      %327 = vmatmul.mubr.bf16.gmra.mrb[0].mxu0 %v211
      %v328 = vpop.f32.mrb[0].mxu0
      %v329 = vadd.f32 0.0, %v328
      %v330 = vpop.f32.mrb[0].mxu0
      %v331 = vpop.f32.mrb[0].mxu0
      %v332 = vadd.f32 0.0, %v331
      %v333 = vpop.f32.mrb[0].mxu0
      %334 = vmatprep.mubr.bf16.mxu0 0
      %335 = vmatmul.mubr.bf16.gmra.mrb[0].mxu0 %v212
      %v336 = vpop.f32.mrb[0].mxu0
      %v337 = vadd.f32 0.0, %v336
      %v338 = vpop.f32.mrb[0].mxu0
      %v339 = vpop.f32.mrb[0].mxu0
      %v340 = vadd.f32 0.0, %v339
      %v341 = vpop.f32.mrb[0].mxu0
      %342 = vdwg.mxu0
      %v359 = vunpack.c.l.b16 %v185
      %v360 = vunpack.c.l.b16 %v186
      %v361 = vunpack.c.l.b16 %v187
      %v362 = vunpack.c.l.b16 %v188
      %v363 = vunpack.c.l.b16 %v189
      %v364 = vunpack.c.l.b16 %v190
      %v365 = vunpack.c.l.b16 %v191
      %v366 = vunpack.c.l.b16 %v192
      %v367 = vunpack.c.l.b16 %v193
      %v368 = vunpack.c.l.b16 %v194
      %v369 = vunpack.c.l.b16 %v195
      %v370 = vunpack.c.l.b16 %v196
      %v371 = vunpack.c.l.b16 %v197
      %v372 = vunpack.c.l.b16 %v198
      %v373 = vunpack.c.l.b16 %v199
      %v374 = vunpack.c.l.b16 %v200
      %v375 = vpack.c.b16 %v360, %v359
      %v376 = vpack.c.b16 %v362, %v361
      %v377 = vpack.c.b16 %v364, %v363
      %v378 = vpack.c.b16 %v366, %v365
      %v379 = vpack.c.b16 %v368, %v367
      %v380 = vpack.c.b16 %v370, %v369
      %v381 = vpack.c.b16 %v372, %v371
      %v382 = vpack.c.b16 %v374, %v373
      %391 = vmatprep.subr.bf16.mxu0 0
      %392 = vmatpush1.bf16.msra.mxu0 %v375
      %393 = vmatprep.subr.bf16.mxu0 0
      %394 = vmatpush1.bf16.msra.mxu0 %v376
      %395 = vmatprep.subr.bf16.mxu0 0
      %396 = vmatpush1.bf16.msra.mxu0 %v377
      %397 = vmatprep.subr.bf16.mxu0 0
      %398 = vmatpush1.bf16.msra.mxu0 %v378
      %399 = vmatprep.subr.bf16.mxu0 0
      %400 = vmatpush1.bf16.msra.mxu0 %v379
      %401 = vmatprep.subr.bf16.mxu0 0
      %402 = vmatpush1.bf16.msra.mxu0 %v380
      %403 = vmatprep.subr.bf16.mxu0 0
      %404 = vmatpush1.bf16.msra.mxu0 %v381
      %405 = vmatprep.subr.bf16.mxu0 0
      %406 = vmatpush1.bf16.msra.mxu0 %v382
      %407 = vmatprep.subr.bf16.mxu0 0
      %408 = vmatpush1.bf16.msra.mxu0 0
      %409 = vmatprep.subr.bf16.mxu0 0
      %410 = vmatpush1.bf16.msra.mxu0 0
      %411 = vmatprep.subr.bf16.mxu0 0
      %412 = vmatpush1.bf16.msra.mxu0 0
      %413 = vmatprep.subr.bf16.mxu0 0
      %414 = vmatpush1.bf16.msra.mxu0 0
      %415 = vmatprep.subr.bf16.mxu0 0
      %416 = vmatpush1.bf16.msra.mxu0 0
      %417 = vmatprep.subr.bf16.mxu0 0
      %418 = vmatpush1.bf16.msra.mxu0 0
      %419 = vmatprep.subr.bf16.mxu0 0
      %420 = vmatpush1.bf16.msra.mxu0 0
      %421 = vmatprep.subr.bf16.mxu0 0
      %422 = vmatpush1.bf16.msra.mxu0 0
      %423 = vmatprep.mubr.bf16.mxu0 0
      %424 = vmatmul.mubr.bf16.gmra.mrb[0].mxu0 %v181
      %v425 = vpop.f32.mrb[0].mxu0
      %v426 = vadd.f32 %v313, %v425
      %v427 = vpop.f32.mrb[0].mxu0
      %v428 = vpop.f32.mrb[0].mxu0
      %v429 = vadd.f32 %v316, %v428
      %v430 = vpop.f32.mrb[0].mxu0
      %431 = vmatprep.mubr.bf16.mxu0 0
      %432 = vmatmul.mubr.bf16.gmra.mrb[0].mxu0 %v182
      %v433 = vpop.f32.mrb[0].mxu0
      %v434 = vadd.f32 %v321, %v433
      %v435 = vpop.f32.mrb[0].mxu0
      %v436 = vpop.f32.mrb[0].mxu0
      %v437 = vadd.f32 %v324, %v436
      %v438 = vpop.f32.mrb[0].mxu0
      %439 = vmatprep.mubr.bf16.mxu0 0
      %440 = vmatmul.mubr.bf16.gmra.mrb[0].mxu0 %v183
      %v441 = vpop.f32.mrb[0].mxu0
      %v442 = vadd.f32 %v329, %v441
      %v443 = vpop.f32.mrb[0].mxu0
      %v444 = vpop.f32.mrb[0].mxu0
      %v445 = vadd.f32 %v332, %v444
      %v446 = vpop.f32.mrb[0].mxu0
      %447 = vmatprep.mubr.bf16.mxu0 0
      %448 = vmatmul.mubr.bf16.gmra.mrb[0].mxu0 %v184
      %v449 = vpop.f32.mrb[0].mxu0
      %v450 = vadd.f32 %v337, %v449
      %v451 = vpop.f32.mrb[0].mxu0
      %v452 = vpop.f32.mrb[0].mxu0
      %v453 = vadd.f32 %v340, %v452
      %v454 = vpop.f32.mrb[0].mxu0
      %455 = vdwg.mxu0
      %v456 = vld [vmem:[%s165 + $0x2] sm:$0xff]
      %v457 = vld [vmem:[%s165 + $0x12] sm:$0xff]
      %v458 = vld [vmem:[%s165 + $0x22] sm:$0xff]
      %v459 = vld [vmem:[%s165 + $0x32] sm:$0xff]
      %v460 = vld [vmem:[%s165 + $0x42] sm:$0xff]
      %v461 = vld [vmem:[%s165 + $0x52] sm:$0xff]
      %v462 = vld [vmem:[%s165 + $0x62] sm:$0xff]
      %v463 = vld [vmem:[%s165 + $0x72] sm:$0xff]
      %v464 = vpack.c.bf16 %v457, %v456
      %v465 = vpack.c.bf16 %v459, %v458
      %v466 = vpack.c.bf16 %v461, %v460
      %v467 = vpack.c.bf16 %v463, %v462
      %s468 = scalar_lea.vmem %s1, 128
      %v469 = vld [vmem:[%s468] sm:$0xf]
      %v470 = vld [vmem:[%s468 + $0x4] sm:$0xf]
      %v471 = vld [vmem:[%s468 + $0x8] sm:$0xf]
      %v472 = vld [vmem:[%s468 + $0xc] sm:$0xf]
      %v473 = vld [vmem:[%s468 + $0x10] sm:$0xf]
      %v474 = vld [vmem:[%s468 + $0x14] sm:$0xf]
      %v475 = vld [vmem:[%s468 + $0x18] sm:$0xf]
      %v476 = vld [vmem:[%s468 + $0x1c] sm:$0xf]
      %v477 = vld [vmem:[%s468 + $0x20] sm:$0xf]
      %v478 = vld [vmem:[%s468 + $0x24] sm:$0xf]
      %v479 = vld [vmem:[%s468 + $0x28] sm:$0xf]
      %v480 = vld [vmem:[%s468 + $0x2c] sm:$0xf]
      %v481 = vld [vmem:[%s468 + $0x30] sm:$0xf]
      %v482 = vld [vmem:[%s468 + $0x34] sm:$0xf]
      %v483 = vld [vmem:[%s468 + $0x38] sm:$0xf]
      %v484 = vld [vmem:[%s468 + $0x3c] sm:$0xf]
      %v501 = vunpack.c.l.b16 %v469
      %v502 = vunpack.c.l.b16 %v470
      %v503 = vunpack.c.l.b16 %v471
      %v504 = vunpack.c.l.b16 %v472
      %v505 = vunpack.c.l.b16 %v473
      %v506 = vunpack.c.l.b16 %v474
      %v507 = vunpack.c.l.b16 %v475
      %v508 = vunpack.c.l.b16 %v476
      %v509 = vunpack.c.l.b16 %v477
      %v510 = vunpack.c.l.b16 %v478
      %v511 = vunpack.c.l.b16 %v479
      %v512 = vunpack.c.l.b16 %v480
      %v513 = vunpack.c.l.b16 %v481
      %v514 = vunpack.c.l.b16 %v482
      %v515 = vunpack.c.l.b16 %v483
      %v516 = vunpack.c.l.b16 %v484
      %v517 = vpack.c.b16 %v502, %v501
      %v518 = vpack.c.b16 %v504, %v503
      %v519 = vpack.c.b16 %v506, %v505
      %v520 = vpack.c.b16 %v508, %v507
      %v521 = vpack.c.b16 %v510, %v509
      %v522 = vpack.c.b16 %v512, %v511
      %v523 = vpack.c.b16 %v514, %v513
      %v524 = vpack.c.b16 %v516, %v515
      %533 = vmatprep.subr.bf16.mxu0 0
      %534 = vmatpush1.bf16.msra.mxu0 %v517
      %535 = vmatprep.subr.bf16.mxu0 0
      %536 = vmatpush1.bf16.msra.mxu0 %v518
      %537 = vmatprep.subr.bf16.mxu0 0
      %538 = vmatpush1.bf16.msra.mxu0 %v519
      %539 = vmatprep.subr.bf16.mxu0 0
      %540 = vmatpush1.bf16.msra.mxu0 %v520
      %541 = vmatprep.subr.bf16.mxu0 0
      %542 = vmatpush1.bf16.msra.mxu0 %v521
      %543 = vmatprep.subr.bf16.mxu0 0
      %544 = vmatpush1.bf16.msra.mxu0 %v522
      %545 = vmatprep.subr.bf16.mxu0 0
      %546 = vmatpush1.bf16.msra.mxu0 %v523
      %547 = vmatprep.subr.bf16.mxu0 0
      %548 = vmatpush1.bf16.msra.mxu0 %v524
      %549 = vmatprep.subr.bf16.mxu0 0
      %550 = vmatpush1.bf16.msra.mxu0 0
      %551 = vmatprep.subr.bf16.mxu0 0
      %552 = vmatpush1.bf16.msra.mxu0 0
      %553 = vmatprep.subr.bf16.mxu0 0
      %554 = vmatpush1.bf16.msra.mxu0 0
      %555 = vmatprep.subr.bf16.mxu0 0
      %556 = vmatpush1.bf16.msra.mxu0 0
      %557 = vmatprep.subr.bf16.mxu0 0
      %558 = vmatpush1.bf16.msra.mxu0 0
      %559 = vmatprep.subr.bf16.mxu0 0
      %560 = vmatpush1.bf16.msra.mxu0 0
      %561 = vmatprep.subr.bf16.mxu0 0
      %562 = vmatpush1.bf16.msra.mxu0 0
      %563 = vmatprep.subr.bf16.mxu0 0
      %564 = vmatpush1.bf16.msra.mxu0 0
      %565 = vmatprep.mubr.bf16.mxu0 0
      %566 = vmatmul.mubr.bf16.gmra.mrb[0].mxu0 %v464
      %v567 = vpop.f32.mrb[0].mxu0
      %v568 = vadd.f32 0.0, %v567
      %v569 = vpop.f32.mrb[0].mxu0
      %v570 = vpop.f32.mrb[0].mxu0
      %v571 = vadd.f32 0.0, %v570
      %v572 = vpop.f32.mrb[0].mxu0
      %573 = vmatprep.mubr.bf16.mxu0 0
      %574 = vmatmul.mubr.bf16.gmra.mrb[0].mxu0 %v465
      %v575 = vpop.f32.mrb[0].mxu0
      %v576 = vadd.f32 0.0, %v575
      %v577 = vpop.f32.mrb[0].mxu0
      %v578 = vpop.f32.mrb[0].mxu0
      %v579 = vadd.f32 0.0, %v578
      %v580 = vpop.f32.mrb[0].mxu0
      %581 = vmatprep.mubr.bf16.mxu0 0
      %582 = vmatmul.mubr.bf16.gmra.mrb[0].mxu0 %v466
      %v583 = vpop.f32.mrb[0].mxu0
      %v584 = vadd.f32 0.0, %v583
      %v585 = vpop.f32.mrb[0].mxu0
      %v586 = vpop.f32.mrb[0].mxu0
      %v587 = vadd.f32 0.0, %v586
      %v588 = vpop.f32.mrb[0].mxu0
      %589 = vmatprep.mubr.bf16.mxu0 0
      %590 = vmatmul.mubr.bf16.gmra.mrb[0].mxu0 %v467
      %v591 = vpop.f32.mrb[0].mxu0
      %v592 = vadd.f32 0.0, %v591
      %v593 = vpop.f32.mrb[0].mxu0
      %v594 = vpop.f32.mrb[0].mxu0
      %v595 = vadd.f32 0.0, %v594
      %v596 = vpop.f32.mrb[0].mxu0
      %597 = vdwg.mxu0
      %v598 = vadd.f32 %v426, %v568
      %v599 = vadd.f32 %v429, %v571
      %v600 = vadd.f32 %v434, %v576
      %v601 = vadd.f32 %v437, %v579
      %v602 = vadd.f32 %v442, %v584
      %v603 = vadd.f32 %v445, %v587
      %v604 = vadd.f32 %v450, %v592
      %v605 = vadd.f32 %v453, %v595
      %v606 = vld [vmem:[%s165 + $0x3] sm:$0xff]
      %v607 = vld [vmem:[%s165 + $0x13] sm:$0xff]
      %v608 = vld [vmem:[%s165 + $0x23] sm:$0xff]
      %v609 = vld [vmem:[%s165 + $0x33] sm:$0xff]
      %v610 = vld [vmem:[%s165 + $0x43] sm:$0xff]
      %v611 = vld [vmem:[%s165 + $0x53] sm:$0xff]
      %v612 = vld [vmem:[%s165 + $0x63] sm:$0xff]
      %v613 = vld [vmem:[%s165 + $0x73] sm:$0xff]
      %v614 = vpack.c.bf16 %v607, %v606
      %v615 = vpack.c.bf16 %v609, %v608
      %v616 = vpack.c.bf16 %v611, %v610
      %v617 = vpack.c.bf16 %v613, %v612
      %s618 = scalar_lea.vmem %s1, 192
      %v619 = vld [vmem:[%s618] sm:$0xf]
      %v620 = vld [vmem:[%s618 + $0x4] sm:$0xf]
      %v621 = vld [vmem:[%s618 + $0x8] sm:$0xf]
      %v622 = vld [vmem:[%s618 + $0xc] sm:$0xf]
      %v623 = vld [vmem:[%s618 + $0x10] sm:$0xf]
      %v624 = vld [vmem:[%s618 + $0x14] sm:$0xf]
      %v625 = vld [vmem:[%s618 + $0x18] sm:$0xf]
      %v626 = vld [vmem:[%s618 + $0x1c] sm:$0xf]
      %v627 = vld [vmem:[%s618 + $0x20] sm:$0xf]
      %v628 = vld [vmem:[%s618 + $0x24] sm:$0xf]
      %v629 = vld [vmem:[%s618 + $0x28] sm:$0xf]
      %v630 = vld [vmem:[%s618 + $0x2c] sm:$0xf]
      %v631 = vld [vmem:[%s618 + $0x30] sm:$0xf]
      %v632 = vld [vmem:[%s618 + $0x34] sm:$0xf]
      %v633 = vld [vmem:[%s618 + $0x38] sm:$0xf]
      %v634 = vld [vmem:[%s618 + $0x3c] sm:$0xf]
      %v651 = vunpack.c.l.b16 %v619
      %v652 = vunpack.c.l.b16 %v620
      %v653 = vunpack.c.l.b16 %v621
      %v654 = vunpack.c.l.b16 %v622
      %v655 = vunpack.c.l.b16 %v623
      %v656 = vunpack.c.l.b16 %v624
      %v657 = vunpack.c.l.b16 %v625
      %v658 = vunpack.c.l.b16 %v626
      %v659 = vunpack.c.l.b16 %v627
      %v660 = vunpack.c.l.b16 %v628
      %v661 = vunpack.c.l.b16 %v629
      %v662 = vunpack.c.l.b16 %v630
      %v663 = vunpack.c.l.b16 %v631
      %v664 = vunpack.c.l.b16 %v632
      %v665 = vunpack.c.l.b16 %v633
      %v666 = vunpack.c.l.b16 %v634
      %v667 = vpack.c.b16 %v652, %v651
      %v668 = vpack.c.b16 %v654, %v653
      %v669 = vpack.c.b16 %v656, %v655
      %v670 = vpack.c.b16 %v658, %v657
      %v671 = vpack.c.b16 %v660, %v659
      %v672 = vpack.c.b16 %v662, %v661
      %v673 = vpack.c.b16 %v664, %v663
      %v674 = vpack.c.b16 %v666, %v665
      %683 = vmatprep.subr.bf16.mxu0 0
      %684 = vmatpush1.bf16.msra.mxu0 %v667
      %685 = vmatprep.subr.bf16.mxu0 0
      %686 = vmatpush1.bf16.msra.mxu0 %v668
      %687 = vmatprep.subr.bf16.mxu0 0
      %688 = vmatpush1.bf16.msra.mxu0 %v669
      %689 = vmatprep.subr.bf16.mxu0 0
      %690 = vmatpush1.bf16.msra.mxu0 %v670
      %691 = vmatprep.subr.bf16.mxu0 0
      %692 = vmatpush1.bf16.msra.mxu0 %v671
      %693 = vmatprep.subr.bf16.mxu0 0
      %694 = vmatpush1.bf16.msra.mxu0 %v672
      %695 = vmatprep.subr.bf16.mxu0 0
      %696 = vmatpush1.bf16.msra.mxu0 %v673
      %697 = vmatprep.subr.bf16.mxu0 0
      %698 = vmatpush1.bf16.msra.mxu0 %v674
      %699 = vmatprep.subr.bf16.mxu0 0
      %700 = vmatpush1.bf16.msra.mxu0 0
      %701 = vmatprep.subr.bf16.mxu0 0
      %702 = vmatpush1.bf16.msra.mxu0 0
      %703 = vmatprep.subr.bf16.mxu0 0
      %704 = vmatpush1.bf16.msra.mxu0 0
      %705 = vmatprep.subr.bf16.mxu0 0
      %706 = vmatpush1.bf16.msra.mxu0 0
      %707 = vmatprep.subr.bf16.mxu0 0
      %708 = vmatpush1.bf16.msra.mxu0 0
      %709 = vmatprep.subr.bf16.mxu0 0
      %710 = vmatpush1.bf16.msra.mxu0 0
      %711 = vmatprep.subr.bf16.mxu0 0
      %712 = vmatpush1.bf16.msra.mxu0 0
      %713 = vmatprep.subr.bf16.mxu0 0
      %714 = vmatpush1.bf16.msra.mxu0 0
      %715 = vmatprep.mubr.bf16.mxu0 0
      %716 = vmatmul.mubr.bf16.gmra.mrb[0].mxu0 %v614
      %v717 = vpop.f32.mrb[0].mxu0
      %v718 = vadd.f32 0.0, %v717
      %v719 = vpop.f32.mrb[0].mxu0
      %v720 = vpop.f32.mrb[0].mxu0
      %v721 = vadd.f32 0.0, %v720
      %v722 = vpop.f32.mrb[0].mxu0
      %723 = vmatprep.mubr.bf16.mxu0 0
      %724 = vmatmul.mubr.bf16.gmra.mrb[0].mxu0 %v615
      %v725 = vpop.f32.mrb[0].mxu0
      %v726 = vadd.f32 0.0, %v725
      %v727 = vpop.f32.mrb[0].mxu0
      %v728 = vpop.f32.mrb[0].mxu0
      %v729 = vadd.f32 0.0, %v728
      %v730 = vpop.f32.mrb[0].mxu0
      %731 = vmatprep.mubr.bf16.mxu0 0
      %732 = vmatmul.mubr.bf16.gmra.mrb[0].mxu0 %v616
      %v733 = vpop.f32.mrb[0].mxu0
      %v734 = vadd.f32 0.0, %v733
      %v735 = vpop.f32.mrb[0].mxu0
      %v736 = vpop.f32.mrb[0].mxu0
      %v737 = vadd.f32 0.0, %v736
      %v738 = vpop.f32.mrb[0].mxu0
      %739 = vmatprep.mubr.bf16.mxu0 0
      %740 = vmatmul.mubr.bf16.gmra.mrb[0].mxu0 %v617
      %v741 = vpop.f32.mrb[0].mxu0
      %v742 = vadd.f32 0.0, %v741
      %v743 = vpop.f32.mrb[0].mxu0
      %v744 = vpop.f32.mrb[0].mxu0
      %v745 = vadd.f32 0.0, %v744
      %v746 = vpop.f32.mrb[0].mxu0
      %747 = vdwg.mxu0
      %v748 = vadd.f32 %v598, %v718
      %v749 = vadd.f32 %v599, %v721
      %v750 = vadd.f32 %v600, %v726
      %v751 = vadd.f32 %v601, %v729
      %v752 = vadd.f32 %v602, %v734
      %v753 = vadd.f32 %v603, %v737
      %v754 = vadd.f32 %v604, %v742
      %v755 = vadd.f32 %v605, %v745
      %v756 = vld [vmem:[%s165 + $0x4] sm:$0xff]
      %v757 = vld [vmem:[%s165 + $0x14] sm:$0xff]
      %v758 = vld [vmem:[%s165 + $0x24] sm:$0xff]
      %v759 = vld [vmem:[%s165 + $0x34] sm:$0xff]
      %v760 = vld [vmem:[%s165 + $0x44] sm:$0xff]
      %v761 = vld [vmem:[%s165 + $0x54] sm:$0xff]
      %v762 = vld [vmem:[%s165 + $0x64] sm:$0xff]
      %v763 = vld [vmem:[%s165 + $0x74] sm:$0xff]
      %v764 = vpack.c.bf16 %v757, %v756
      %v765 = vpack.c.bf16 %v759, %v758
      %v766 = vpack.c.bf16 %v761, %v760
      %v767 = vpack.c.bf16 %v763, %v762
      %s768 = scalar_lea.vmem %s1, 256
      %v769 = vld [vmem:[%s768] sm:$0xf]
      %v770 = vld [vmem:[%s768 + $0x4] sm:$0xf]
      %v771 = vld [vmem:[%s768 + $0x8] sm:$0xf]
      %v772 = vld [vmem:[%s768 + $0xc] sm:$0xf]
      %v773 = vld [vmem:[%s768 + $0x10] sm:$0xf]
      %v774 = vld [vmem:[%s768 + $0x14] sm:$0xf]
      %v775 = vld [vmem:[%s768 + $0x18] sm:$0xf]
      %v776 = vld [vmem:[%s768 + $0x1c] sm:$0xf]
      %v777 = vld [vmem:[%s768 + $0x20] sm:$0xf]
      %v778 = vld [vmem:[%s768 + $0x24] sm:$0xf]
      %v779 = vld [vmem:[%s768 + $0x28] sm:$0xf]
      %v780 = vld [vmem:[%s768 + $0x2c] sm:$0xf]
      %v781 = vld [vmem:[%s768 + $0x30] sm:$0xf]
      %v782 = vld [vmem:[%s768 + $0x34] sm:$0xf]
      %v783 = vld [vmem:[%s768 + $0x38] sm:$0xf]
      %v784 = vld [vmem:[%s768 + $0x3c] sm:$0xf]
      %v801 = vunpack.c.l.b16 %v769
      %v802 = vunpack.c.l.b16 %v770
      %v803 = vunpack.c.l.b16 %v771
      %v804 = vunpack.c.l.b16 %v772
      %v805 = vunpack.c.l.b16 %v773
      %v806 = vunpack.c.l.b16 %v774
      %v807 = vunpack.c.l.b16 %v775
      %v808 = vunpack.c.l.b16 %v776
      %v809 = vunpack.c.l.b16 %v777
      %v810 = vunpack.c.l.b16 %v778
      %v811 = vunpack.c.l.b16 %v779
      %v812 = vunpack.c.l.b16 %v780
      %v813 = vunpack.c.l.b16 %v781
      %v814 = vunpack.c.l.b16 %v782
      %v815 = vunpack.c.l.b16 %v783
      %v816 = vunpack.c.l.b16 %v784
      %v817 = vpack.c.b16 %v802, %v801
      %v818 = vpack.c.b16 %v804, %v803
      %v819 = vpack.c.b16 %v806, %v805
      %v820 = vpack.c.b16 %v808, %v807
      %v821 = vpack.c.b16 %v810, %v809
      %v822 = vpack.c.b16 %v812, %v811
      %v823 = vpack.c.b16 %v814, %v813
      %v824 = vpack.c.b16 %v816, %v815
      %833 = vmatprep.subr.bf16.mxu0 0
      %834 = vmatpush1.bf16.msra.mxu0 %v817
      %835 = vmatprep.subr.bf16.mxu0 0
      %836 = vmatpush1.bf16.msra.mxu0 %v818
      %837 = vmatprep.subr.bf16.mxu0 0
      %838 = vmatpush1.bf16.msra.mxu0 %v819
      %839 = vmatprep.subr.bf16.mxu0 0
      %840 = vmatpush1.bf16.msra.mxu0 %v820
      %841 = vmatprep.subr.bf16.mxu0 0
      %842 = vmatpush1.bf16.msra.mxu0 %v821
      %843 = vmatprep.subr.bf16.mxu0 0
      %844 = vmatpush1.bf16.msra.mxu0 %v822
      %845 = vmatprep.subr.bf16.mxu0 0
      %846 = vmatpush1.bf16.msra.mxu0 %v823
      %847 = vmatprep.subr.bf16.mxu0 0
      %848 = vmatpush1.bf16.msra.mxu0 %v824
      %849 = vmatprep.subr.bf16.mxu0 0
      %850 = vmatpush1.bf16.msra.mxu0 0
      %851 = vmatprep.subr.bf16.mxu0 0
      %852 = vmatpush1.bf16.msra.mxu0 0
      %853 = vmatprep.subr.bf16.mxu0 0
      %854 = vmatpush1.bf16.msra.mxu0 0
      %855 = vmatprep.subr.bf16.mxu0 0
      %856 = vmatpush1.bf16.msra.mxu0 0
      %857 = vmatprep.subr.bf16.mxu0 0
      %858 = vmatpush1.bf16.msra.mxu0 0
      %859 = vmatprep.subr.bf16.mxu0 0
      %860 = vmatpush1.bf16.msra.mxu0 0
      %861 = vmatprep.subr.bf16.mxu0 0
      %862 = vmatpush1.bf16.msra.mxu0 0
      %863 = vmatprep.subr.bf16.mxu0 0
      %864 = vmatpush1.bf16.msra.mxu0 0
      %865 = vmatprep.mubr.bf16.mxu0 0
      %866 = vmatmul.mubr.bf16.gmra.mrb[0].mxu0 %v764
      %v867 = vpop.f32.mrb[0].mxu0
      %v868 = vadd.f32 0.0, %v867
      %v869 = vpop.f32.mrb[0].mxu0
      %v870 = vpop.f32.mrb[0].mxu0
      %v871 = vadd.f32 0.0, %v870
      %v872 = vpop.f32.mrb[0].mxu0
      %873 = vmatprep.mubr.bf16.mxu0 0
      %874 = vmatmul.mubr.bf16.gmra.mrb[0].mxu0 %v765
      %v875 = vpop.f32.mrb[0].mxu0
      %v876 = vadd.f32 0.0, %v875
      %v877 = vpop.f32.mrb[0].mxu0
      %v878 = vpop.f32.mrb[0].mxu0
      %v879 = vadd.f32 0.0, %v878
      %v880 = vpop.f32.mrb[0].mxu0
      %881 = vmatprep.mubr.bf16.mxu0 0
      %882 = vmatmul.mubr.bf16.gmra.mrb[0].mxu0 %v766
      %v883 = vpop.f32.mrb[0].mxu0
      %v884 = vadd.f32 0.0, %v883
      %v885 = vpop.f32.mrb[0].mxu0
      %v886 = vpop.f32.mrb[0].mxu0
      %v887 = vadd.f32 0.0, %v886
      %v888 = vpop.f32.mrb[0].mxu0
      %889 = vmatprep.mubr.bf16.mxu0 0
      %890 = vmatmul.mubr.bf16.gmra.mrb[0].mxu0 %v767
      %v891 = vpop.f32.mrb[0].mxu0
      %v892 = vadd.f32 0.0, %v891
      %v893 = vpop.f32.mrb[0].mxu0
      %v894 = vpop.f32.mrb[0].mxu0
      %v895 = vadd.f32 0.0, %v894
      %v896 = vpop.f32.mrb[0].mxu0
      %897 = vdwg.mxu0
      %v898 = vadd.f32 %v748, %v868
      %v899 = vadd.f32 %v749, %v871
      %v900 = vadd.f32 %v750, %v876
      %v901 = vadd.f32 %v751, %v879
      %v902 = vadd.f32 %v752, %v884
      %v903 = vadd.f32 %v753, %v887
      %v904 = vadd.f32 %v754, %v892
      %v905 = vadd.f32 %v755, %v895
      %s906 = scalar_lea.vmem %s165, 16
      %v907 = vld [vmem:[%s906] sm:$0xff]
      %v908 = vld [vmem:[%s906 + $0x10] sm:$0xff]
      %v909 = vld [vmem:[%s906 + $0x20] sm:$0xff]
      %v910 = vld [vmem:[%s906 + $0x30] sm:$0xff]
      %v911 = vld [vmem:[%s906 + $0x40] sm:$0xff]
      %v912 = vld [vmem:[%s906 + $0x50] sm:$0xff]
      %v913 = vld [vmem:[%s906 + $0x60] sm:$0xff]
      %v914 = vld [vmem:[%s906 + $0x70] sm:$0xff]
      %v915 = vpack.c.bf16 %v908, %v907
      %v916 = vpack.c.bf16 %v910, %v909
      %v917 = vpack.c.bf16 %v912, %v911
      %v918 = vpack.c.bf16 %v914, %v913
      %s919 = scalar_lea.vmem %s1, 320
      %v920 = vld [vmem:[%s919] sm:$0xf]
      %v921 = vld [vmem:[%s919 + $0x4] sm:$0xf]
      %v922 = vld [vmem:[%s919 + $0x8] sm:$0xf]
      %v923 = vld [vmem:[%s919 + $0xc] sm:$0xf]
      %v924 = vld [vmem:[%s919 + $0x10] sm:$0xf]
      %v925 = vld [vmem:[%s919 + $0x14] sm:$0xf]
      %v926 = vld [vmem:[%s919 + $0x18] sm:$0xf]
      %v927 = vld [vmem:[%s919 + $0x1c] sm:$0xf]
      %v928 = vld [vmem:[%s919 + $0x20] sm:$0xf]
      %v929 = vld [vmem:[%s919 + $0x24] sm:$0xf]
      %v930 = vld [vmem:[%s919 + $0x28] sm:$0xf]
      %v931 = vld [vmem:[%s919 + $0x2c] sm:$0xf]
      %v932 = vld [vmem:[%s919 + $0x30] sm:$0xf]
      %v933 = vld [vmem:[%s919 + $0x34] sm:$0xf]
      %v934 = vld [vmem:[%s919 + $0x38] sm:$0xf]
      %v935 = vld [vmem:[%s919 + $0x3c] sm:$0xf]
      %v952 = vunpack.c.l.b16 %v920
      %v953 = vunpack.c.l.b16 %v921
      %v954 = vunpack.c.l.b16 %v922
      %v955 = vunpack.c.l.b16 %v923
      %v956 = vunpack.c.l.b16 %v924
      %v957 = vunpack.c.l.b16 %v925
      %v958 = vunpack.c.l.b16 %v926
      %v959 = vunpack.c.l.b16 %v927
      %v960 = vunpack.c.l.b16 %v928
      %v961 = vunpack.c.l.b16 %v929
      %v962 = vunpack.c.l.b16 %v930
      %v963 = vunpack.c.l.b16 %v931
      %v964 = vunpack.c.l.b16 %v932
      %v965 = vunpack.c.l.b16 %v933
      %v966 = vunpack.c.l.b16 %v934
      %v967 = vunpack.c.l.b16 %v935
      %v968 = vpack.c.b16 %v953, %v952
      %v969 = vpack.c.b16 %v955, %v954
      %v970 = vpack.c.b16 %v957, %v956
      %v971 = vpack.c.b16 %v959, %v958
      %v972 = vpack.c.b16 %v961, %v960
      %v973 = vpack.c.b16 %v963, %v962
      %v974 = vpack.c.b16 %v965, %v964
      %v975 = vpack.c.b16 %v967, %v966
      %984 = vmatprep.subr.bf16.mxu0 0
      %985 = vmatpush1.bf16.msra.mxu0 %v968
      %986 = vmatprep.subr.bf16.mxu0 0
      %987 = vmatpush1.bf16.msra.mxu0 %v969
      %988 = vmatprep.subr.bf16.mxu0 0
      %989 = vmatpush1.bf16.msra.mxu0 %v970
      %990 = vmatprep.subr.bf16.mxu0 0
      %991 = vmatpush1.bf16.msra.mxu0 %v971
      %992 = vmatprep.subr.bf16.mxu0 0
      %993 = vmatpush1.bf16.msra.mxu0 %v972
      %994 = vmatprep.subr.bf16.mxu0 0
      %995 = vmatpush1.bf16.msra.mxu0 %v973
      %996 = vmatprep.subr.bf16.mxu0 0
      %997 = vmatpush1.bf16.msra.mxu0 %v974
      %998 = vmatprep.subr.bf16.mxu0 0
      %999 = vmatpush1.bf16.msra.mxu0 %v975
      %1000 = vmatprep.subr.bf16.mxu0 0
      %1001 = vmatpush1.bf16.msra.mxu0 0
      %1002 = vmatprep.subr.bf16.mxu0 0
      %1003 = vmatpush1.bf16.msra.mxu0 0
      %1004 = vmatprep.subr.bf16.mxu0 0
      %1005 = vmatpush1.bf16.msra.mxu0 0
      %1006 = vmatprep.subr.bf16.mxu0 0
      %1007 = vmatpush1.bf16.msra.mxu0 0
      %1008 = vmatprep.subr.bf16.mxu0 0
      %1009 = vmatpush1.bf16.msra.mxu0 0
      %1010 = vmatprep.subr.bf16.mxu0 0
      %1011 = vmatpush1.bf16.msra.mxu0 0
      %1012 = vmatprep.subr.bf16.mxu0 0
      %1013 = vmatpush1.bf16.msra.mxu0 0
      %1014 = vmatprep.subr.bf16.mxu0 0
      %1015 = vmatpush1.bf16.msra.mxu0 0
      %1016 = vmatprep.mubr.bf16.mxu0 0
      %1017 = vmatmul.mubr.bf16.gmra.mrb[0].mxu0 %v915
      %v1018 = vpop.f32.mrb[0].mxu0
      %v1019 = vadd.f32 0.0, %v1018
      %v1020 = vpop.f32.mrb[0].mxu0
      %v1021 = vpop.f32.mrb[0].mxu0
      %v1022 = vadd.f32 0.0, %v1021
      %v1023 = vpop.f32.mrb[0].mxu0
      %1024 = vmatprep.mubr.bf16.mxu0 0
      %1025 = vmatmul.mubr.bf16.gmra.mrb[0].mxu0 %v916
      %v1026 = vpop.f32.mrb[0].mxu0
      %v1027 = vadd.f32 0.0, %v1026
      %v1028 = vpop.f32.mrb[0].mxu0
      %v1029 = vpop.f32.mrb[0].mxu0
      %v1030 = vadd.f32 0.0, %v1029
      %v1031 = vpop.f32.mrb[0].mxu0
      %1032 = vmatprep.mubr.bf16.mxu0 0
      %1033 = vmatmul.mubr.bf16.gmra.mrb[0].mxu0 %v917
      %v1034 = vpop.f32.mrb[0].mxu0
      %v1035 = vadd.f32 0.0, %v1034
      %v1036 = vpop.f32.mrb[0].mxu0
      %v1037 = vpop.f32.mrb[0].mxu0
      %v1038 = vadd.f32 0.0, %v1037
      %v1039 = vpop.f32.mrb[0].mxu0
      %1040 = vmatprep.mubr.bf16.mxu0 0
      %1041 = vmatmul.mubr.bf16.gmra.mrb[0].mxu0 %v918
      %v1042 = vpop.f32.mrb[0].mxu0
      %v1043 = vadd.f32 0.0, %v1042
      %v1044 = vpop.f32.mrb[0].mxu0
      %v1045 = vpop.f32.mrb[0].mxu0
      %v1046 = vadd.f32 0.0, %v1045
      %v1047 = vpop.f32.mrb[0].mxu0
      %1048 = vdwg.mxu0
      %v1049 = vadd.f32 %v898, %v1019
      %v1050 = vadd.f32 %v899, %v1022
      %v1051 = vadd.f32 %v900, %v1027
      %v1052 = vadd.f32 %v901, %v1030
      %v1053 = vadd.f32 %v902, %v1035
      %v1054 = vadd.f32 %v903, %v1038
      %v1055 = vadd.f32 %v904, %v1043
      %v1056 = vadd.f32 %v905, %v1046
      %v1057 = vld [vmem:[%s906 + $0x1] sm:$0xff]
      %v1058 = vld [vmem:[%s906 + $0x11] sm:$0xff]
      %v1059 = vld [vmem:[%s906 + $0x21] sm:$0xff]
      %v1060 = vld [vmem:[%s906 + $0x31] sm:$0xff]
      %v1061 = vld [vmem:[%s906 + $0x41] sm:$0xff]
      %v1062 = vld [vmem:[%s906 + $0x51] sm:$0xff]
      %v1063 = vld [vmem:[%s906 + $0x61] sm:$0xff]
      %v1064 = vld [vmem:[%s906 + $0x71] sm:$0xff]
      %v1065 = vpack.c.bf16 %v1058, %v1057
      %v1066 = vpack.c.bf16 %v1060, %v1059
      %v1067 = vpack.c.bf16 %v1062, %v1061
      %v1068 = vpack.c.bf16 %v1064, %v1063
      %s1069 = scalar_lea.vmem %s1, 384
      %v1070 = vld [vmem:[%s1069] sm:$0xf]
      %v1071 = vld [vmem:[%s1069 + $0x4] sm:$0xf]
      %v1072 = vld [vmem:[%s1069 + $0x8] sm:$0xf]
      %v1073 = vld [vmem:[%s1069 + $0xc] sm:$0xf]
      %v1074 = vld [vmem:[%s1069 + $0x10] sm:$0xf]
      %v1075 = vld [vmem:[%s1069 + $0x14] sm:$0xf]
      %v1076 = vld [vmem:[%s1069 + $0x18] sm:$0xf]
      %v1077 = vld [vmem:[%s1069 + $0x1c] sm:$0xf]
      %v1078 = vld [vmem:[%s1069 + $0x20] sm:$0xf]
      %v1079 = vld [vmem:[%s1069 + $0x24] sm:$0xf]
      %v1080 = vld [vmem:[%s1069 + $0x28] sm:$0xf]
      %v1081 = vld [vmem:[%s1069 + $0x2c] sm:$0xf]
      %v1082 = vld [vmem:[%s1069 + $0x30] sm:$0xf]
      %v1083 = vld [vmem:[%s1069 + $0x34] sm:$0xf]
      %v1084 = vld [vmem:[%s1069 + $0x38] sm:$0xf]
      %v1085 = vld [vmem:[%s1069 + $0x3c] sm:$0xf]
      %v1102 = vunpack.c.l.b16 %v1070
      %v1103 = vunpack.c.l.b16 %v1071
      %v1104 = vunpack.c.l.b16 %v1072
      %v1105 = vunpack.c.l.b16 %v1073
      %v1106 = vunpack.c.l.b16 %v1074
      %v1107 = vunpack.c.l.b16 %v1075
      %v1108 = vunpack.c.l.b16 %v1076
      %v1109 = vunpack.c.l.b16 %v1077
      %v1110 = vunpack.c.l.b16 %v1078
      %v1111 = vunpack.c.l.b16 %v1079
      %v1112 = vunpack.c.l.b16 %v1080
      %v1113 = vunpack.c.l.b16 %v1081
      %v1114 = vunpack.c.l.b16 %v1082
      %v1115 = vunpack.c.l.b16 %v1083
      %v1116 = vunpack.c.l.b16 %v1084
      %v1117 = vunpack.c.l.b16 %v1085
      %v1118 = vpack.c.b16 %v1103, %v1102
      %v1119 = vpack.c.b16 %v1105, %v1104
      %v1120 = vpack.c.b16 %v1107, %v1106
      %v1121 = vpack.c.b16 %v1109, %v1108
      %v1122 = vpack.c.b16 %v1111, %v1110
      %v1123 = vpack.c.b16 %v1113, %v1112
      %v1124 = vpack.c.b16 %v1115, %v1114
      %v1125 = vpack.c.b16 %v1117, %v1116
      %1134 = vmatprep.subr.bf16.mxu0 0
      %1135 = vmatpush1.bf16.msra.mxu0 %v1118
      %1136 = vmatprep.subr.bf16.mxu0 0
      %1137 = vmatpush1.bf16.msra.mxu0 %v1119
      %1138 = vmatprep.subr.bf16.mxu0 0
      %1139 = vmatpush1.bf16.msra.mxu0 %v1120
      %1140 = vmatprep.subr.bf16.mxu0 0
      %1141 = vmatpush1.bf16.msra.mxu0 %v1121
      %1142 = vmatprep.subr.bf16.mxu0 0
      %1143 = vmatpush1.bf16.msra.mxu0 %v1122
      %1144 = vmatprep.subr.bf16.mxu0 0
      %1145 = vmatpush1.bf16.msra.mxu0 %v1123
      %1146 = vmatprep.subr.bf16.mxu0 0
      %1147 = vmatpush1.bf16.msra.mxu0 %v1124
      %1148 = vmatprep.subr.bf16.mxu0 0
      %1149 = vmatpush1.bf16.msra.mxu0 %v1125
      %1150 = vmatprep.subr.bf16.mxu0 0
      %1151 = vmatpush1.bf16.msra.mxu0 0
      %1152 = vmatprep.subr.bf16.mxu0 0
      %1153 = vmatpush1.bf16.msra.mxu0 0
      %1154 = vmatprep.subr.bf16.mxu0 0
      %1155 = vmatpush1.bf16.msra.mxu0 0
      %1156 = vmatprep.subr.bf16.mxu0 0
      %1157 = vmatpush1.bf16.msra.mxu0 0
      %1158 = vmatprep.subr.bf16.mxu0 0
      %1159 = vmatpush1.bf16.msra.mxu0 0
      %1160 = vmatprep.subr.bf16.mxu0 0
      %1161 = vmatpush1.bf16.msra.mxu0 0
      %1162 = vmatprep.subr.bf16.mxu0 0
      %1163 = vmatpush1.bf16.msra.mxu0 0
      %1164 = vmatprep.subr.bf16.mxu0 0
      %1165 = vmatpush1.bf16.msra.mxu0 0
      %1166 = vmatprep.mubr.bf16.mxu0 0
      %1167 = vmatmul.mubr.bf16.gmra.mrb[0].mxu0 %v1065
      %v1168 = vpop.f32.mrb[0].mxu0
      %v1169 = vadd.f32 0.0, %v1168
      %v1170 = vpop.f32.mrb[0].mxu0
      %v1171 = vpop.f32.mrb[0].mxu0
      %v1172 = vadd.f32 0.0, %v1171
      %v1173 = vpop.f32.mrb[0].mxu0
      %1174 = vmatprep.mubr.bf16.mxu0 0
      %1175 = vmatmul.mubr.bf16.gmra.mrb[0].mxu0 %v1066
      %v1176 = vpop.f32.mrb[0].mxu0
      %v1177 = vadd.f32 0.0, %v1176
      %v1178 = vpop.f32.mrb[0].mxu0
      %v1179 = vpop.f32.mrb[0].mxu0
      %v1180 = vadd.f32 0.0, %v1179
      %v1181 = vpop.f32.mrb[0].mxu0
      %1182 = vmatprep.mubr.bf16.mxu0 0
      %1183 = vmatmul.mubr.bf16.gmra.mrb[0].mxu0 %v1067
      %v1184 = vpop.f32.mrb[0].mxu0
      %v1185 = vadd.f32 0.0, %v1184
      %v1186 = vpop.f32.mrb[0].mxu0
      %v1187 = vpop.f32.mrb[0].mxu0
      %v1188 = vadd.f32 0.0, %v1187
      %v1189 = vpop.f32.mrb[0].mxu0
      %1190 = vmatprep.mubr.bf16.mxu0 0
      %1191 = vmatmul.mubr.bf16.gmra.mrb[0].mxu0 %v1068
      %v1192 = vpop.f32.mrb[0].mxu0
      %v1193 = vadd.f32 0.0, %v1192
      %v1194 = vpop.f32.mrb[0].mxu0
      %v1195 = vpop.f32.mrb[0].mxu0
      %v1196 = vadd.f32 0.0, %v1195
      %v1197 = vpop.f32.mrb[0].mxu0
      %1198 = vdwg.mxu0
      %v1199 = vadd.f32 %v1049, %v1169
      %v1200 = vadd.f32 %v1050, %v1172
      %v1201 = vadd.f32 %v1051, %v1177
      %v1202 = vadd.f32 %v1052, %v1180
      %v1203 = vadd.f32 %v1053, %v1185
      %v1204 = vadd.f32 %v1054, %v1188
      %v1205 = vadd.f32 %v1055, %v1193
      %v1206 = vadd.f32 %v1056, %v1196
      %v1207 = vld [vmem:[%s906 + $0x2] sm:$0xff]
      %v1208 = vld [vmem:[%s906 + $0x12] sm:$0xff]
      %v1209 = vld [vmem:[%s906 + $0x22] sm:$0xff]
      %v1210 = vld [vmem:[%s906 + $0x32] sm:$0xff]
      %v1211 = vld [vmem:[%s906 + $0x42] sm:$0xff]
      %v1212 = vld [vmem:[%s906 + $0x52] sm:$0xff]
      %v1213 = vld [vmem:[%s906 + $0x62] sm:$0xff]
      %v1214 = vld [vmem:[%s906 + $0x72] sm:$0xff]
      %v1215 = vpack.c.bf16 %v1208, %v1207
      %v1216 = vpack.c.bf16 %v1210, %v1209
      %v1217 = vpack.c.bf16 %v1212, %v1211
      %v1218 = vpack.c.bf16 %v1214, %v1213
      %s1219 = scalar_lea.vmem %s1, 448
      %v1220 = vld [vmem:[%s1219] sm:$0xf]
      %v1221 = vld [vmem:[%s1219 + $0x4] sm:$0xf]
      %v1222 = vld [vmem:[%s1219 + $0x8] sm:$0xf]
      %v1223 = vld [vmem:[%s1219 + $0xc] sm:$0xf]
      %v1224 = vld [vmem:[%s1219 + $0x10] sm:$0xf]
      %v1225 = vld [vmem:[%s1219 + $0x14] sm:$0xf]
      %v1226 = vld [vmem:[%s1219 + $0x18] sm:$0xf]
      %v1227 = vld [vmem:[%s1219 + $0x1c] sm:$0xf]
      %v1228 = vld [vmem:[%s1219 + $0x20] sm:$0xf]
      %v1229 = vld [vmem:[%s1219 + $0x24] sm:$0xf]
      %v1230 = vld [vmem:[%s1219 + $0x28] sm:$0xf]
      %v1231 = vld [vmem:[%s1219 + $0x2c] sm:$0xf]
      %v1232 = vld [vmem:[%s1219 + $0x30] sm:$0xf]
      %v1233 = vld [vmem:[%s1219 + $0x34] sm:$0xf]
      %v1234 = vld [vmem:[%s1219 + $0x38] sm:$0xf]
      %v1235 = vld [vmem:[%s1219 + $0x3c] sm:$0xf]
      %v1252 = vunpack.c.l.b16 %v1220
      %v1253 = vunpack.c.l.b16 %v1221
      %v1254 = vunpack.c.l.b16 %v1222
      %v1255 = vunpack.c.l.b16 %v1223
      %v1256 = vunpack.c.l.b16 %v1224
      %v1257 = vunpack.c.l.b16 %v1225
      %v1258 = vunpack.c.l.b16 %v1226
      %v1259 = vunpack.c.l.b16 %v1227
      %v1260 = vunpack.c.l.b16 %v1228
      %v1261 = vunpack.c.l.b16 %v1229
      %v1262 = vunpack.c.l.b16 %v1230
      %v1263 = vunpack.c.l.b16 %v1231
      %v1264 = vunpack.c.l.b16 %v1232
      %v1265 = vunpack.c.l.b16 %v1233
      %v1266 = vunpack.c.l.b16 %v1234
      %v1267 = vunpack.c.l.b16 %v1235
      %v1268 = vpack.c.b16 %v1253, %v1252
      %v1269 = vpack.c.b16 %v1255, %v1254
      %v1270 = vpack.c.b16 %v1257, %v1256
      %v1271 = vpack.c.b16 %v1259, %v1258
      %v1272 = vpack.c.b16 %v1261, %v1260
      %v1273 = vpack.c.b16 %v1263, %v1262
      %v1274 = vpack.c.b16 %v1265, %v1264
      %v1275 = vpack.c.b16 %v1267, %v1266
      %1284 = vmatprep.subr.bf16.mxu0 0
      %1285 = vmatpush1.bf16.msra.mxu0 %v1268
      %1286 = vmatprep.subr.bf16.mxu0 0
      %1287 = vmatpush1.bf16.msra.mxu0 %v1269
      %1288 = vmatprep.subr.bf16.mxu0 0
      %1289 = vmatpush1.bf16.msra.mxu0 %v1270
      %1290 = vmatprep.subr.bf16.mxu0 0
      %1291 = vmatpush1.bf16.msra.mxu0 %v1271
      %1292 = vmatprep.subr.bf16.mxu0 0
      %1293 = vmatpush1.bf16.msra.mxu0 %v1272
      %1294 = vmatprep.subr.bf16.mxu0 0
      %1295 = vmatpush1.bf16.msra.mxu0 %v1273
      %1296 = vmatprep.subr.bf16.mxu0 0
      %1297 = vmatpush1.bf16.msra.mxu0 %v1274
      %1298 = vmatprep.subr.bf16.mxu0 0
      %1299 = vmatpush1.bf16.msra.mxu0 %v1275
      %1300 = vmatprep.subr.bf16.mxu0 0
      %1301 = vmatpush1.bf16.msra.mxu0 0
      %1302 = vmatprep.subr.bf16.mxu0 0
      %1303 = vmatpush1.bf16.msra.mxu0 0
      %1304 = vmatprep.subr.bf16.mxu0 0
      %1305 = vmatpush1.bf16.msra.mxu0 0
      %1306 = vmatprep.subr.bf16.mxu0 0
      %1307 = vmatpush1.bf16.msra.mxu0 0
      %1308 = vmatprep.subr.bf16.mxu0 0
      %1309 = vmatpush1.bf16.msra.mxu0 0
      %1310 = vmatprep.subr.bf16.mxu0 0
      %1311 = vmatpush1.bf16.msra.mxu0 0
      %1312 = vmatprep.subr.bf16.mxu0 0
      %1313 = vmatpush1.bf16.msra.mxu0 0
      %1314 = vmatprep.subr.bf16.mxu0 0
      %1315 = vmatpush1.bf16.msra.mxu0 0
      %1316 = vmatprep.mubr.bf16.mxu0 0
      %1317 = vmatmul.mubr.bf16.gmra.mrb[0].mxu0 %v1215
      %v1318 = vpop.f32.mrb[0].mxu0
      %v1319 = vadd.f32 0.0, %v1318
      %v1320 = vpop.f32.mrb[0].mxu0
      %v1321 = vpop.f32.mrb[0].mxu0
      %v1322 = vadd.f32 0.0, %v1321
      %v1323 = vpop.f32.mrb[0].mxu0
      %1324 = vmatprep.mubr.bf16.mxu0 0
      %1325 = vmatmul.mubr.bf16.gmra.mrb[0].mxu0 %v1216
      %v1326 = vpop.f32.mrb[0].mxu0
      %v1327 = vadd.f32 0.0, %v1326
      %v1328 = vpop.f32.mrb[0].mxu0
      %v1329 = vpop.f32.mrb[0].mxu0
      %v1330 = vadd.f32 0.0, %v1329
      %v1331 = vpop.f32.mrb[0].mxu0
      %1332 = vmatprep.mubr.bf16.mxu0 0
      %1333 = vmatmul.mubr.bf16.gmra.mrb[0].mxu0 %v1217
      %v1334 = vpop.f32.mrb[0].mxu0
      %v1335 = vadd.f32 0.0, %v1334
      %v1336 = vpop.f32.mrb[0].mxu0
      %v1337 = vpop.f32.mrb[0].mxu0
      %v1338 = vadd.f32 0.0, %v1337
      %v1339 = vpop.f32.mrb[0].mxu0
      %1340 = vmatprep.mubr.bf16.mxu0 0
      %1341 = vmatmul.mubr.bf16.gmra.mrb[0].mxu0 %v1218
      %v1342 = vpop.f32.mrb[0].mxu0
      %v1343 = vadd.f32 0.0, %v1342
      %v1344 = vpop.f32.mrb[0].mxu0
      %v1345 = vpop.f32.mrb[0].mxu0
      %v1346 = vadd.f32 0.0, %v1345
      %v1347 = vpop.f32.mrb[0].mxu0
      %1348 = vdwg.mxu0
      %v1349 = vadd.f32 %v1199, %v1319
      %v1350 = vadd.f32 %v1200, %v1322
      %v1351 = vadd.f32 %v1201, %v1327
      %v1352 = vadd.f32 %v1202, %v1330
      %v1353 = vadd.f32 %v1203, %v1335
      %v1354 = vadd.f32 %v1204, %v1338
      %v1355 = vadd.f32 %v1205, %v1343
      %v1356 = vadd.f32 %v1206, %v1346
      %v1357 = vld [vmem:[%s906 + $0x3] sm:$0xff]
      %v1358 = vld [vmem:[%s906 + $0x13] sm:$0xff]
      %v1359 = vld [vmem:[%s906 + $0x23] sm:$0xff]
      %v1360 = vld [vmem:[%s906 + $0x33] sm:$0xff]
      %v1361 = vld [vmem:[%s906 + $0x43] sm:$0xff]
      %v1362 = vld [vmem:[%s906 + $0x53] sm:$0xff]
      %v1363 = vld [vmem:[%s906 + $0x63] sm:$0xff]
      %v1364 = vld [vmem:[%s906 + $0x73] sm:$0xff]
      %v1365 = vpack.c.bf16 %v1358, %v1357
      %v1366 = vpack.c.bf16 %v1360, %v1359
      %v1367 = vpack.c.bf16 %v1362, %v1361
      %v1368 = vpack.c.bf16 %v1364, %v1363
      %s1369 = scalar_lea.vmem %s1, 512
      %v1370 = vld [vmem:[%s1369] sm:$0xf]
      %v1371 = vld [vmem:[%s1369 + $0x4] sm:$0xf]
      %v1372 = vld [vmem:[%s1369 + $0x8] sm:$0xf]
      %v1373 = vld [vmem:[%s1369 + $0xc] sm:$0xf]
      %v1374 = vld [vmem:[%s1369 + $0x10] sm:$0xf]
      %v1375 = vld [vmem:[%s1369 + $0x14] sm:$0xf]
      %v1376 = vld [vmem:[%s1369 + $0x18] sm:$0xf]
      %v1377 = vld [vmem:[%s1369 + $0x1c] sm:$0xf]
      %v1378 = vld [vmem:[%s1369 + $0x20] sm:$0xf]
      %v1379 = vld [vmem:[%s1369 + $0x24] sm:$0xf]
      %v1380 = vld [vmem:[%s1369 + $0x28] sm:$0xf]
      %v1381 = vld [vmem:[%s1369 + $0x2c] sm:$0xf]
      %v1382 = vld [vmem:[%s1369 + $0x30] sm:$0xf]
      %v1383 = vld [vmem:[%s1369 + $0x34] sm:$0xf]
      %v1384 = vld [vmem:[%s1369 + $0x38] sm:$0xf]
      %v1385 = vld [vmem:[%s1369 + $0x3c] sm:$0xf]
      %v1402 = vunpack.c.l.b16 %v1370
      %v1403 = vunpack.c.l.b16 %v1371
      %v1404 = vunpack.c.l.b16 %v1372
      %v1405 = vunpack.c.l.b16 %v1373
      %v1406 = vunpack.c.l.b16 %v1374
      %v1407 = vunpack.c.l.b16 %v1375
      %v1408 = vunpack.c.l.b16 %v1376
      %v1409 = vunpack.c.l.b16 %v1377
      %v1410 = vunpack.c.l.b16 %v1378
      %v1411 = vunpack.c.l.b16 %v1379
      %v1412 = vunpack.c.l.b16 %v1380
      %v1413 = vunpack.c.l.b16 %v1381
      %v1414 = vunpack.c.l.b16 %v1382
      %v1415 = vunpack.c.l.b16 %v1383
      %v1416 = vunpack.c.l.b16 %v1384
      %v1417 = vunpack.c.l.b16 %v1385
      %v1418 = vpack.c.b16 %v1403, %v1402
      %v1419 = vpack.c.b16 %v1405, %v1404
      %v1420 = vpack.c.b16 %v1407, %v1406
      %v1421 = vpack.c.b16 %v1409, %v1408
      %v1422 = vpack.c.b16 %v1411, %v1410
      %v1423 = vpack.c.b16 %v1413, %v1412
      %v1424 = vpack.c.b16 %v1415, %v1414
      %v1425 = vpack.c.b16 %v1417, %v1416
      %1434 = vmatprep.subr.bf16.mxu0 0
      %1435 = vmatpush1.bf16.msra.mxu0 %v1418
      %1436 = vmatprep.subr.bf16.mxu0 0
      %1437 = vmatpush1.bf16.msra.mxu0 %v1419
      %1438 = vmatprep.subr.bf16.mxu0 0
      %1439 = vmatpush1.bf16.msra.mxu0 %v1420
      %1440 = vmatprep.subr.bf16.mxu0 0
      %1441 = vmatpush1.bf16.msra.mxu0 %v1421
      %1442 = vmatprep.subr.bf16.mxu0 0
      %1443 = vmatpush1.bf16.msra.mxu0 %v1422
      %1444 = vmatprep.subr.bf16.mxu0 0
      %1445 = vmatpush1.bf16.msra.mxu0 %v1423
      %1446 = vmatprep.subr.bf16.mxu0 0
      %1447 = vmatpush1.bf16.msra.mxu0 %v1424
      %1448 = vmatprep.subr.bf16.mxu0 0
      %1449 = vmatpush1.bf16.msra.mxu0 %v1425
      %1450 = vmatprep.subr.bf16.mxu0 0
      %1451 = vmatpush1.bf16.msra.mxu0 0
      %1452 = vmatprep.subr.bf16.mxu0 0
      %1453 = vmatpush1.bf16.msra.mxu0 0
      %1454 = vmatprep.subr.bf16.mxu0 0
      %1455 = vmatpush1.bf16.msra.mxu0 0
      %1456 = vmatprep.subr.bf16.mxu0 0
      %1457 = vmatpush1.bf16.msra.mxu0 0
      %1458 = vmatprep.subr.bf16.mxu0 0
      %1459 = vmatpush1.bf16.msra.mxu0 0
      %1460 = vmatprep.subr.bf16.mxu0 0
      %1461 = vmatpush1.bf16.msra.mxu0 0
      %1462 = vmatprep.subr.bf16.mxu0 0
      %1463 = vmatpush1.bf16.msra.mxu0 0
      %1464 = vmatprep.subr.bf16.mxu0 0
      %1465 = vmatpush1.bf16.msra.mxu0 0
      %1466 = vmatprep.mubr.bf16.mxu0 0
      %1467 = vmatmul.mubr.bf16.gmra.mrb[0].mxu0 %v1365
      %v1468 = vpop.f32.mrb[0].mxu0
      %v1469 = vadd.f32 0.0, %v1468
      %v1470 = vpop.f32.mrb[0].mxu0
      %v1471 = vpop.f32.mrb[0].mxu0
      %v1472 = vadd.f32 0.0, %v1471
      %v1473 = vpop.f32.mrb[0].mxu0
      %1474 = vmatprep.mubr.bf16.mxu0 0
      %1475 = vmatmul.mubr.bf16.gmra.mrb[0].mxu0 %v1366
      %v1476 = vpop.f32.mrb[0].mxu0
      %v1477 = vadd.f32 0.0, %v1476
      %v1478 = vpop.f32.mrb[0].mxu0
      %v1479 = vpop.f32.mrb[0].mxu0
      %v1480 = vadd.f32 0.0, %v1479
      %v1481 = vpop.f32.mrb[0].mxu0
      %1482 = vmatprep.mubr.bf16.mxu0 0
      %1483 = vmatmul.mubr.bf16.gmra.mrb[0].mxu0 %v1367
      %v1484 = vpop.f32.mrb[0].mxu0
      %v1485 = vadd.f32 0.0, %v1484
      %v1486 = vpop.f32.mrb[0].mxu0
      %v1487 = vpop.f32.mrb[0].mxu0
      %v1488 = vadd.f32 0.0, %v1487
      %v1489 = vpop.f32.mrb[0].mxu0
      %1490 = vmatprep.mubr.bf16.mxu0 0
      %1491 = vmatmul.mubr.bf16.gmra.mrb[0].mxu0 %v1368
      %v1492 = vpop.f32.mrb[0].mxu0
      %v1493 = vadd.f32 0.0, %v1492
      %v1494 = vpop.f32.mrb[0].mxu0
      %v1495 = vpop.f32.mrb[0].mxu0
      %v1496 = vadd.f32 0.0, %v1495
      %v1497 = vpop.f32.mrb[0].mxu0
      %1498 = vdwg.mxu0
      %v1499 = vadd.f32 %v1349, %v1469
      %v1500 = vadd.f32 %v1350, %v1472
      %v1501 = vadd.f32 %v1351, %v1477
      %v1502 = vadd.f32 %v1352, %v1480
      %v1503 = vadd.f32 %v1353, %v1485
      %v1504 = vadd.f32 %v1354, %v1488
      %v1505 = vadd.f32 %v1355, %v1493
      %v1506 = vadd.f32 %v1356, %v1496
      %v1507 = vld [vmem:[%s906 + $0x4] sm:$0xff]
      %v1508 = vld [vmem:[%s906 + $0x14] sm:$0xff]
      %v1509 = vld [vmem:[%s906 + $0x24] sm:$0xff]
      %v1510 = vld [vmem:[%s906 + $0x34] sm:$0xff]
      %v1511 = vld [vmem:[%s906 + $0x44] sm:$0xff]
      %v1512 = vld [vmem:[%s906 + $0x54] sm:$0xff]
      %v1513 = vld [vmem:[%s906 + $0x64] sm:$0xff]
      %v1514 = vld [vmem:[%s906 + $0x74] sm:$0xff]
      %v1515 = vpack.c.bf16 %v1508, %v1507
      %v1516 = vpack.c.bf16 %v1510, %v1509
      %v1517 = vpack.c.bf16 %v1512, %v1511
      %v1518 = vpack.c.bf16 %v1514, %v1513
      %s1519 = scalar_lea.vmem %s1, 576
      %v1520 = vld [vmem:[%s1519] sm:$0xf]
      %v1521 = vld [vmem:[%s1519 + $0x4] sm:$0xf]
      %v1522 = vld [vmem:[%s1519 + $0x8] sm:$0xf]
      %v1523 = vld [vmem:[%s1519 + $0xc] sm:$0xf]
      %v1524 = vld [vmem:[%s1519 + $0x10] sm:$0xf]
      %v1525 = vld [vmem:[%s1519 + $0x14] sm:$0xf]
      %v1526 = vld [vmem:[%s1519 + $0x18] sm:$0xf]
      %v1527 = vld [vmem:[%s1519 + $0x1c] sm:$0xf]
      %v1528 = vld [vmem:[%s1519 + $0x20] sm:$0xf]
      %v1529 = vld [vmem:[%s1519 + $0x24] sm:$0xf]
      %v1530 = vld [vmem:[%s1519 + $0x28] sm:$0xf]
      %v1531 = vld [vmem:[%s1519 + $0x2c] sm:$0xf]
      %v1532 = vld [vmem:[%s1519 + $0x30] sm:$0xf]
      %v1533 = vld [vmem:[%s1519 + $0x34] sm:$0xf]
      %v1534 = vld [vmem:[%s1519 + $0x38] sm:$0xf]
      %v1535 = vld [vmem:[%s1519 + $0x3c] sm:$0xf]
      %v1552 = vunpack.c.l.b16 %v1520
      %v1553 = vunpack.c.l.b16 %v1521
      %v1554 = vunpack.c.l.b16 %v1522
      %v1555 = vunpack.c.l.b16 %v1523
      %v1556 = vunpack.c.l.b16 %v1524
      %v1557 = vunpack.c.l.b16 %v1525
      %v1558 = vunpack.c.l.b16 %v1526
      %v1559 = vunpack.c.l.b16 %v1527
      %v1560 = vunpack.c.l.b16 %v1528
      %v1561 = vunpack.c.l.b16 %v1529
      %v1562 = vunpack.c.l.b16 %v1530
      %v1563 = vunpack.c.l.b16 %v1531
      %v1564 = vunpack.c.l.b16 %v1532
      %v1565 = vunpack.c.l.b16 %v1533
      %v1566 = vunpack.c.l.b16 %v1534
      %v1567 = vunpack.c.l.b16 %v1535
      %v1568 = vpack.c.b16 %v1553, %v1552
      %v1569 = vpack.c.b16 %v1555, %v1554
      %v1570 = vpack.c.b16 %v1557, %v1556
      %v1571 = vpack.c.b16 %v1559, %v1558
      %v1572 = vpack.c.b16 %v1561, %v1560
      %v1573 = vpack.c.b16 %v1563, %v1562
      %v1574 = vpack.c.b16 %v1565, %v1564
      %v1575 = vpack.c.b16 %v1567, %v1566
      %1584 = vmatprep.subr.bf16.mxu0 0
      %1585 = vmatpush1.bf16.msra.mxu0 %v1568
      %1586 = vmatprep.subr.bf16.mxu0 0
      %1587 = vmatpush1.bf16.msra.mxu0 %v1569
      %1588 = vmatprep.subr.bf16.mxu0 0
      %1589 = vmatpush1.bf16.msra.mxu0 %v1570
      %1590 = vmatprep.subr.bf16.mxu0 0
      %1591 = vmatpush1.bf16.msra.mxu0 %v1571
      %1592 = vmatprep.subr.bf16.mxu0 0
      %1593 = vmatpush1.bf16.msra.mxu0 %v1572
      %1594 = vmatprep.subr.bf16.mxu0 0
      %1595 = vmatpush1.bf16.msra.mxu0 %v1573
      %1596 = vmatprep.subr.bf16.mxu0 0
      %1597 = vmatpush1.bf16.msra.mxu0 %v1574
      %1598 = vmatprep.subr.bf16.mxu0 0
      %1599 = vmatpush1.bf16.msra.mxu0 %v1575
      %1600 = vmatprep.subr.bf16.mxu0 0
      %1601 = vmatpush1.bf16.msra.mxu0 0
      %1602 = vmatprep.subr.bf16.mxu0 0
      %1603 = vmatpush1.bf16.msra.mxu0 0
      %1604 = vmatprep.subr.bf16.mxu0 0
      %1605 = vmatpush1.bf16.msra.mxu0 0
      %1606 = vmatprep.subr.bf16.mxu0 0
      %1607 = vmatpush1.bf16.msra.mxu0 0
      %1608 = vmatprep.subr.bf16.mxu0 0
      %1609 = vmatpush1.bf16.msra.mxu0 0
      %1610 = vmatprep.subr.bf16.mxu0 0
      %1611 = vmatpush1.bf16.msra.mxu0 0
      %1612 = vmatprep.subr.bf16.mxu0 0
      %1613 = vmatpush1.bf16.msra.mxu0 0
      %1614 = vmatprep.subr.bf16.mxu0 0
      %1615 = vmatpush1.bf16.msra.mxu0 0
      %1616 = vmatprep.mubr.bf16.mxu0 0
      %1617 = vmatmul.mubr.bf16.gmra.mrb[0].mxu0 %v1515
      %v1618 = vpop.f32.mrb[0].mxu0
      %v1619 = vadd.f32 0.0, %v1618
      %v1620 = vpop.f32.mrb[0].mxu0
      %v1621 = vpop.f32.mrb[0].mxu0
      %v1622 = vadd.f32 0.0, %v1621
      %v1623 = vpop.f32.mrb[0].mxu0
      %1624 = vmatprep.mubr.bf16.mxu0 0
      %1625 = vmatmul.mubr.bf16.gmra.mrb[0].mxu0 %v1516
      %v1626 = vpop.f32.mrb[0].mxu0
      %v1627 = vadd.f32 0.0, %v1626
      %v1628 = vpop.f32.mrb[0].mxu0
      %v1629 = vpop.f32.mrb[0].mxu0
      %v1630 = vadd.f32 0.0, %v1629
      %v1631 = vpop.f32.mrb[0].mxu0
      %1632 = vmatprep.mubr.bf16.mxu0 0
      %1633 = vmatmul.mubr.bf16.gmra.mrb[0].mxu0 %v1517
      %v1634 = vpop.f32.mrb[0].mxu0
      %v1635 = vadd.f32 0.0, %v1634
      %v1636 = vpop.f32.mrb[0].mxu0
      %v1637 = vpop.f32.mrb[0].mxu0
      %v1638 = vadd.f32 0.0, %v1637
      %v1639 = vpop.f32.mrb[0].mxu0
      %1640 = vmatprep.mubr.bf16.mxu0 0
      %1641 = vmatmul.mubr.bf16.gmra.mrb[0].mxu0 %v1518
      %v1642 = vpop.f32.mrb[0].mxu0
      %v1643 = vadd.f32 0.0, %v1642
      %v1644 = vpop.f32.mrb[0].mxu0
      %v1645 = vpop.f32.mrb[0].mxu0
      %v1646 = vadd.f32 0.0, %v1645
      %v1647 = vpop.f32.mrb[0].mxu0
      %1648 = vdwg.mxu0
      %v1649 = vadd.f32 %v1499, %v1619
      %v1650 = vadd.f32 %v1500, %v1622
      %v1651 = vadd.f32 %v1501, %v1627
      %v1652 = vadd.f32 %v1502, %v1630
      %v1653 = vadd.f32 %v1503, %v1635
      %v1654 = vadd.f32 %v1504, %v1638
      %v1655 = vadd.f32 %v1505, %v1643
      %v1656 = vadd.f32 %v1506, %v1646
      %s1657 = scalar_lea.vmem %s165, 32
      %v1658 = vld [vmem:[%s1657] sm:$0xff]
      %v1659 = vld [vmem:[%s1657 + $0x10] sm:$0xff]
      %v1660 = vld [vmem:[%s1657 + $0x20] sm:$0xff]
      %v1661 = vld [vmem:[%s1657 + $0x30] sm:$0xff]
      %v1662 = vld [vmem:[%s1657 + $0x40] sm:$0xff]
      %v1663 = vld [vmem:[%s1657 + $0x50] sm:$0xff]
      %v1664 = vld [vmem:[%s1657 + $0x60] sm:$0xff]
      %v1665 = vld [vmem:[%s1657 + $0x70] sm:$0xff]
      %v1666 = vpack.c.bf16 %v1659, %v1658
      %v1667 = vpack.c.bf16 %v1661, %v1660
      %v1668 = vpack.c.bf16 %v1663, %v1662
      %v1669 = vpack.c.bf16 %v1665, %v1664
      %s1670 = scalar_lea.vmem %s1, 640
      %v1671 = vld [vmem:[%s1670] sm:$0xf]
      %v1672 = vld [vmem:[%s1670 + $0x4] sm:$0xf]
      %v1673 = vld [vmem:[%s1670 + $0x8] sm:$0xf]
      %v1674 = vld [vmem:[%s1670 + $0xc] sm:$0xf]
      %v1675 = vld [vmem:[%s1670 + $0x10] sm:$0xf]
      %v1676 = vld [vmem:[%s1670 + $0x14] sm:$0xf]
      %v1677 = vld [vmem:[%s1670 + $0x18] sm:$0xf]
      %v1678 = vld [vmem:[%s1670 + $0x1c] sm:$0xf]
      %v1679 = vld [vmem:[%s1670 + $0x20] sm:$0xf]
      %v1680 = vld [vmem:[%s1670 + $0x24] sm:$0xf]
      %v1681 = vld [vmem:[%s1670 + $0x28] sm:$0xf]
      %v1682 = vld [vmem:[%s1670 + $0x2c] sm:$0xf]
      %v1683 = vld [vmem:[%s1670 + $0x30] sm:$0xf]
      %v1684 = vld [vmem:[%s1670 + $0x34] sm:$0xf]
      %v1685 = vld [vmem:[%s1670 + $0x38] sm:$0xf]
      %v1686 = vld [vmem:[%s1670 + $0x3c] sm:$0xf]
      %v1703 = vunpack.c.l.b16 %v1671
      %v1704 = vunpack.c.l.b16 %v1672
      %v1705 = vunpack.c.l.b16 %v1673
      %v1706 = vunpack.c.l.b16 %v1674
      %v1707 = vunpack.c.l.b16 %v1675
      %v1708 = vunpack.c.l.b16 %v1676
      %v1709 = vunpack.c.l.b16 %v1677
      %v1710 = vunpack.c.l.b16 %v1678
      %v1711 = vunpack.c.l.b16 %v1679
      %v1712 = vunpack.c.l.b16 %v1680
      %v1713 = vunpack.c.l.b16 %v1681
      %v1714 = vunpack.c.l.b16 %v1682
      %v1715 = vunpack.c.l.b16 %v1683
      %v1716 = vunpack.c.l.b16 %v1684
      %v1717 = vunpack.c.l.b16 %v1685
      %v1718 = vunpack.c.l.b16 %v1686
      %v1719 = vpack.c.b16 %v1704, %v1703
      %v1720 = vpack.c.b16 %v1706, %v1705
      %v1721 = vpack.c.b16 %v1708, %v1707
      %v1722 = vpack.c.b16 %v1710, %v1709
      %v1723 = vpack.c.b16 %v1712, %v1711
      %v1724 = vpack.c.b16 %v1714, %v1713
      %v1725 = vpack.c.b16 %v1716, %v1715
      %v1726 = vpack.c.b16 %v1718, %v1717
      %1735 = vmatprep.subr.bf16.mxu0 0
      %1736 = vmatpush1.bf16.msra.mxu0 %v1719
      %1737 = vmatprep.subr.bf16.mxu0 0
      %1738 = vmatpush1.bf16.msra.mxu0 %v1720
      %1739 = vmatprep.subr.bf16.mxu0 0
      %1740 = vmatpush1.bf16.msra.mxu0 %v1721
      %1741 = vmatprep.subr.bf16.mxu0 0
      %1742 = vmatpush1.bf16.msra.mxu0 %v1722
      %1743 = vmatprep.subr.bf16.mxu0 0
      %1744 = vmatpush1.bf16.msra.mxu0 %v1723
      %1745 = vmatprep.subr.bf16.mxu0 0
      %1746 = vmatpush1.bf16.msra.mxu0 %v1724
      %1747 = vmatprep.subr.bf16.mxu0 0
      %1748 = vmatpush1.bf16.msra.mxu0 %v1725
      %1749 = vmatprep.subr.bf16.mxu0 0
      %1750 = vmatpush1.bf16.msra.mxu0 %v1726
      %1751 = vmatprep.subr.bf16.mxu0 0
      %1752 = vmatpush1.bf16.msra.mxu0 0
      %1753 = vmatprep.subr.bf16.mxu0 0
      %1754 = vmatpush1.bf16.msra.mxu0 0
      %1755 = vmatprep.subr.bf16.mxu0 0
      %1756 = vmatpush1.bf16.msra.mxu0 0
      %1757 = vmatprep.subr.bf16.mxu0 0
      %1758 = vmatpush1.bf16.msra.mxu0 0
      %1759 = vmatprep.subr.bf16.mxu0 0
      %1760 = vmatpush1.bf16.msra.mxu0 0
      %1761 = vmatprep.subr.bf16.mxu0 0
      %1762 = vmatpush1.bf16.msra.mxu0 0
      %1763 = vmatprep.subr.bf16.mxu0 0
      %1764 = vmatpush1.bf16.msra.mxu0 0
      %1765 = vmatprep.subr.bf16.mxu0 0
      %1766 = vmatpush1.bf16.msra.mxu0 0
      %1767 = vmatprep.mubr.bf16.mxu0 0
      %1768 = vmatmul.mubr.bf16.gmra.mrb[0].mxu0 %v1666
      %v1769 = vpop.f32.mrb[0].mxu0
      %v1770 = vadd.f32 0.0, %v1769
      %v1771 = vpop.f32.mrb[0].mxu0
      %v1772 = vpop.f32.mrb[0].mxu0
      %v1773 = vadd.f32 0.0, %v1772
      %v1774 = vpop.f32.mrb[0].mxu0
      %1775 = vmatprep.mubr.bf16.mxu0 0
      %1776 = vmatmul.mubr.bf16.gmra.mrb[0].mxu0 %v1667
      %v1777 = vpop.f32.mrb[0].mxu0
      %v1778 = vadd.f32 0.0, %v1777
      %v1779 = vpop.f32.mrb[0].mxu0
      %v1780 = vpop.f32.mrb[0].mxu0
      %v1781 = vadd.f32 0.0, %v1780
      %v1782 = vpop.f32.mrb[0].mxu0
      %1783 = vmatprep.mubr.bf16.mxu0 0
      %1784 = vmatmul.mubr.bf16.gmra.mrb[0].mxu0 %v1668
      %v1785 = vpop.f32.mrb[0].mxu0
      %v1786 = vadd.f32 0.0, %v1785
      %v1787 = vpop.f32.mrb[0].mxu0
      %v1788 = vpop.f32.mrb[0].mxu0
      %v1789 = vadd.f32 0.0, %v1788
      %v1790 = vpop.f32.mrb[0].mxu0
      %1791 = vmatprep.mubr.bf16.mxu0 0
      %1792 = vmatmul.mubr.bf16.gmra.mrb[0].mxu0 %v1669
      %v1793 = vpop.f32.mrb[0].mxu0
      %v1794 = vadd.f32 0.0, %v1793
      %v1795 = vpop.f32.mrb[0].mxu0
      %v1796 = vpop.f32.mrb[0].mxu0
      %v1797 = vadd.f32 0.0, %v1796
      %v1798 = vpop.f32.mrb[0].mxu0
      %1799 = vdwg.mxu0
      %v1800 = vadd.f32 %v1649, %v1770
      %v1801 = vadd.f32 %v1650, %v1773
      %v1802 = vadd.f32 %v1651, %v1778
      %v1803 = vadd.f32 %v1652, %v1781
      %v1804 = vadd.f32 %v1653, %v1786
      %v1805 = vadd.f32 %v1654, %v1789
      %v1806 = vadd.f32 %v1655, %v1794
      %v1807 = vadd.f32 %v1656, %v1797
      %v1808 = vld [vmem:[%s1657 + $0x1] sm:$0xff]
      %v1809 = vld [vmem:[%s1657 + $0x11] sm:$0xff]
      %v1810 = vld [vmem:[%s1657 + $0x21] sm:$0xff]
      %v1811 = vld [vmem:[%s1657 + $0x31] sm:$0xff]
      %v1812 = vld [vmem:[%s1657 + $0x41] sm:$0xff]
      %v1813 = vld [vmem:[%s1657 + $0x51] sm:$0xff]
      %v1814 = vld [vmem:[%s1657 + $0x61] sm:$0xff]
      %v1815 = vld [vmem:[%s1657 + $0x71] sm:$0xff]
      %v1816 = vpack.c.bf16 %v1809, %v1808
      %v1817 = vpack.c.bf16 %v1811, %v1810
      %v1818 = vpack.c.bf16 %v1813, %v1812
      %v1819 = vpack.c.bf16 %v1815, %v1814
      %s1820 = scalar_lea.vmem %s1, 704
      %v1821 = vld [vmem:[%s1820] sm:$0xf]
      %v1822 = vld [vmem:[%s1820 + $0x4] sm:$0xf]
      %v1823 = vld [vmem:[%s1820 + $0x8] sm:$0xf]
      %v1824 = vld [vmem:[%s1820 + $0xc] sm:$0xf]
      %v1825 = vld [vmem:[%s1820 + $0x10] sm:$0xf]
      %v1826 = vld [vmem:[%s1820 + $0x14] sm:$0xf]
      %v1827 = vld [vmem:[%s1820 + $0x18] sm:$0xf]
      %v1828 = vld [vmem:[%s1820 + $0x1c] sm:$0xf]
      %v1829 = vld [vmem:[%s1820 + $0x20] sm:$0xf]
      %v1830 = vld [vmem:[%s1820 + $0x24] sm:$0xf]
      %v1831 = vld [vmem:[%s1820 + $0x28] sm:$0xf]
      %v1832 = vld [vmem:[%s1820 + $0x2c] sm:$0xf]
      %v1833 = vld [vmem:[%s1820 + $0x30] sm:$0xf]
      %v1834 = vld [vmem:[%s1820 + $0x34] sm:$0xf]
      %v1835 = vld [vmem:[%s1820 + $0x38] sm:$0xf]
      %v1836 = vld [vmem:[%s1820 + $0x3c] sm:$0xf]
      %v1853 = vunpack.c.l.b16 %v1821
      %v1854 = vunpack.c.l.b16 %v1822
      %v1855 = vunpack.c.l.b16 %v1823
      %v1856 = vunpack.c.l.b16 %v1824
      %v1857 = vunpack.c.l.b16 %v1825
      %v1858 = vunpack.c.l.b16 %v1826
      %v1859 = vunpack.c.l.b16 %v1827
      %v1860 = vunpack.c.l.b16 %v1828
      %v1861 = vunpack.c.l.b16 %v1829
      %v1862 = vunpack.c.l.b16 %v1830
      %v1863 = vunpack.c.l.b16 %v1831
      %v1864 = vunpack.c.l.b16 %v1832
      %v1865 = vunpack.c.l.b16 %v1833
      %v1866 = vunpack.c.l.b16 %v1834
      %v1867 = vunpack.c.l.b16 %v1835
      %v1868 = vunpack.c.l.b16 %v1836
      %v1869 = vpack.c.b16 %v1854, %v1853
      %v1870 = vpack.c.b16 %v1856, %v1855
      %v1871 = vpack.c.b16 %v1858, %v1857
      %v1872 = vpack.c.b16 %v1860, %v1859
      %v1873 = vpack.c.b16 %v1862, %v1861
      %v1874 = vpack.c.b16 %v1864, %v1863
      %v1875 = vpack.c.b16 %v1866, %v1865
      %v1876 = vpack.c.b16 %v1868, %v1867
      %1885 = vmatprep.subr.bf16.mxu0 0
      %1886 = vmatpush1.bf16.msra.mxu0 %v1869
      %1887 = vmatprep.subr.bf16.mxu0 0
      %1888 = vmatpush1.bf16.msra.mxu0 %v1870
      %1889 = vmatprep.subr.bf16.mxu0 0
      %1890 = vmatpush1.bf16.msra.mxu0 %v1871
      %1891 = vmatprep.subr.bf16.mxu0 0
      %1892 = vmatpush1.bf16.msra.mxu0 %v1872
      %1893 = vmatprep.subr.bf16.mxu0 0
      %1894 = vmatpush1.bf16.msra.mxu0 %v1873
      %1895 = vmatprep.subr.bf16.mxu0 0
      %1896 = vmatpush1.bf16.msra.mxu0 %v1874
      %1897 = vmatprep.subr.bf16.mxu0 0
      %1898 = vmatpush1.bf16.msra.mxu0 %v1875
      %1899 = vmatprep.subr.bf16.mxu0 0
      %1900 = vmatpush1.bf16.msra.mxu0 %v1876
      %1901 = vmatprep.subr.bf16.mxu0 0
      %1902 = vmatpush1.bf16.msra.mxu0 0
      %1903 = vmatprep.subr.bf16.mxu0 0
      %1904 = vmatpush1.bf16.msra.mxu0 0
      %1905 = vmatprep.subr.bf16.mxu0 0
      %1906 = vmatpush1.bf16.msra.mxu0 0
      %1907 = vmatprep.subr.bf16.mxu0 0
      %1908 = vmatpush1.bf16.msra.mxu0 0
      %1909 = vmatprep.subr.bf16.mxu0 0
      %1910 = vmatpush1.bf16.msra.mxu0 0
      %1911 = vmatprep.subr.bf16.mxu0 0
      %1912 = vmatpush1.bf16.msra.mxu0 0
      %1913 = vmatprep.subr.bf16.mxu0 0
      %1914 = vmatpush1.bf16.msra.mxu0 0
      %1915 = vmatprep.subr.bf16.mxu0 0
      %1916 = vmatpush1.bf16.msra.mxu0 0
      %1917 = vmatprep.mubr.bf16.mxu0 0
      %1918 = vmatmul.mubr.bf16.gmra.mrb[0].mxu0 %v1816
      %v1919 = vpop.f32.mrb[0].mxu0
      %v1920 = vadd.f32 0.0, %v1919
      %v1921 = vpop.f32.mrb[0].mxu0
      %v1922 = vpop.f32.mrb[0].mxu0
      %v1923 = vadd.f32 0.0, %v1922
      %v1924 = vpop.f32.mrb[0].mxu0
      %1925 = vmatprep.mubr.bf16.mxu0 0
      %1926 = vmatmul.mubr.bf16.gmra.mrb[0].mxu0 %v1817
      %v1927 = vpop.f32.mrb[0].mxu0
      %v1928 = vadd.f32 0.0, %v1927
      %v1929 = vpop.f32.mrb[0].mxu0
      %v1930 = vpop.f32.mrb[0].mxu0
      %v1931 = vadd.f32 0.0, %v1930
      %v1932 = vpop.f32.mrb[0].mxu0
      %1933 = vmatprep.mubr.bf16.mxu0 0
      %1934 = vmatmul.mubr.bf16.gmra.mrb[0].mxu0 %v1818
      %v1935 = vpop.f32.mrb[0].mxu0
      %v1936 = vadd.f32 0.0, %v1935
      %v1937 = vpop.f32.mrb[0].mxu0
      %v1938 = vpop.f32.mrb[0].mxu0
      %v1939 = vadd.f32 0.0, %v1938
      %v1940 = vpop.f32.mrb[0].mxu0
      %1941 = vmatprep.mubr.bf16.mxu0 0
      %1942 = vmatmul.mubr.bf16.gmra.mrb[0].mxu0 %v1819
      %v1943 = vpop.f32.mrb[0].mxu0
      %v1944 = vadd.f32 0.0, %v1943
      %v1945 = vpop.f32.mrb[0].mxu0
      %v1946 = vpop.f32.mrb[0].mxu0
      %v1947 = vadd.f32 0.0, %v1946
      %v1948 = vpop.f32.mrb[0].mxu0
      %1949 = vdwg.mxu0
      %v1950 = vadd.f32 %v1800, %v1920
      %v1951 = vadd.f32 %v1801, %v1923
      %v1952 = vadd.f32 %v1802, %v1928
      %v1953 = vadd.f32 %v1803, %v1931
      %v1954 = vadd.f32 %v1804, %v1936
      %v1955 = vadd.f32 %v1805, %v1939
      %v1956 = vadd.f32 %v1806, %v1944
      %v1957 = vadd.f32 %v1807, %v1947
      %v1958 = vld [vmem:[%s1657 + $0x2] sm:$0xff]
      %v1959 = vld [vmem:[%s1657 + $0x12] sm:$0xff]
      %v1960 = vld [vmem:[%s1657 + $0x22] sm:$0xff]
      %v1961 = vld [vmem:[%s1657 + $0x32] sm:$0xff]
      %v1962 = vld [vmem:[%s1657 + $0x42] sm:$0xff]
      %v1963 = vld [vmem:[%s1657 + $0x52] sm:$0xff]
      %v1964 = vld [vmem:[%s1657 + $0x62] sm:$0xff]
      %v1965 = vld [vmem:[%s1657 + $0x72] sm:$0xff]
      %v1966 = vpack.c.bf16 %v1959, %v1958
      %v1967 = vpack.c.bf16 %v1961, %v1960
      %v1968 = vpack.c.bf16 %v1963, %v1962
      %v1969 = vpack.c.bf16 %v1965, %v1964
      %s1970 = scalar_lea.vmem %s1, 768
      %v1971 = vld [vmem:[%s1970] sm:$0xf]
      %v1972 = vld [vmem:[%s1970 + $0x4] sm:$0xf]
      %v1973 = vld [vmem:[%s1970 + $0x8] sm:$0xf]
      %v1974 = vld [vmem:[%s1970 + $0xc] sm:$0xf]
      %v1975 = vld [vmem:[%s1970 + $0x10] sm:$0xf]
      %v1976 = vld [vmem:[%s1970 + $0x14] sm:$0xf]
      %v1977 = vld [vmem:[%s1970 + $0x18] sm:$0xf]
      %v1978 = vld [vmem:[%s1970 + $0x1c] sm:$0xf]
      %v1979 = vld [vmem:[%s1970 + $0x20] sm:$0xf]
      %v1980 = vld [vmem:[%s1970 + $0x24] sm:$0xf]
      %v1981 = vld [vmem:[%s1970 + $0x28] sm:$0xf]
      %v1982 = vld [vmem:[%s1970 + $0x2c] sm:$0xf]
      %v1983 = vld [vmem:[%s1970 + $0x30] sm:$0xf]
      %v1984 = vld [vmem:[%s1970 + $0x34] sm:$0xf]
      %v1985 = vld [vmem:[%s1970 + $0x38] sm:$0xf]
      %v1986 = vld [vmem:[%s1970 + $0x3c] sm:$0xf]
      %v2003 = vunpack.c.l.b16 %v1971
      %v2004 = vunpack.c.l.b16 %v1972
      %v2005 = vunpack.c.l.b16 %v1973
      %v2006 = vunpack.c.l.b16 %v1974
      %v2007 = vunpack.c.l.b16 %v1975
      %v2008 = vunpack.c.l.b16 %v1976
      %v2009 = vunpack.c.l.b16 %v1977
      %v2010 = vunpack.c.l.b16 %v1978
      %v2011 = vunpack.c.l.b16 %v1979
      %v2012 = vunpack.c.l.b16 %v1980
      %v2013 = vunpack.c.l.b16 %v1981
      %v2014 = vunpack.c.l.b16 %v1982
      %v2015 = vunpack.c.l.b16 %v1983
      %v2016 = vunpack.c.l.b16 %v1984
      %v2017 = vunpack.c.l.b16 %v1985
      %v2018 = vunpack.c.l.b16 %v1986
      %v2019 = vpack.c.b16 %v2004, %v2003
      %v2020 = vpack.c.b16 %v2006, %v2005
      %v2021 = vpack.c.b16 %v2008, %v2007
      %v2022 = vpack.c.b16 %v2010, %v2009
      %v2023 = vpack.c.b16 %v2012, %v2011
      %v2024 = vpack.c.b16 %v2014, %v2013
      %v2025 = vpack.c.b16 %v2016, %v2015
      %v2026 = vpack.c.b16 %v2018, %v2017
      %2035 = vmatprep.subr.bf16.mxu0 0
      %2036 = vmatpush1.bf16.msra.mxu0 %v2019
      %2037 = vmatprep.subr.bf16.mxu0 0
      %2038 = vmatpush1.bf16.msra.mxu0 %v2020
      %2039 = vmatprep.subr.bf16.mxu0 0
      %2040 = vmatpush1.bf16.msra.mxu0 %v2021
      %2041 = vmatprep.subr.bf16.mxu0 0
      %2042 = vmatpush1.bf16.msra.mxu0 %v2022
      %2043 = vmatprep.subr.bf16.mxu0 0
      %2044 = vmatpush1.bf16.msra.mxu0 %v2023
      %2045 = vmatprep.subr.bf16.mxu0 0
      %2046 = vmatpush1.bf16.msra.mxu0 %v2024
      %2047 = vmatprep.subr.bf16.mxu0 0
      %2048 = vmatpush1.bf16.msra.mxu0 %v2025
      %2049 = vmatprep.subr.bf16.mxu0 0
      %2050 = vmatpush1.bf16.msra.mxu0 %v2026
      %2051 = vmatprep.subr.bf16.mxu0 0
      %2052 = vmatpush1.bf16.msra.mxu0 0
      %2053 = vmatprep.subr.bf16.mxu0 0
      %2054 = vmatpush1.bf16.msra.mxu0 0
      %2055 = vmatprep.subr.bf16.mxu0 0
      %2056 = vmatpush1.bf16.msra.mxu0 0
      %2057 = vmatprep.subr.bf16.mxu0 0
      %2058 = vmatpush1.bf16.msra.mxu0 0
      %2059 = vmatprep.subr.bf16.mxu0 0
      %2060 = vmatpush1.bf16.msra.mxu0 0
      %2061 = vmatprep.subr.bf16.mxu0 0
      %2062 = vmatpush1.bf16.msra.mxu0 0
      %2063 = vmatprep.subr.bf16.mxu0 0
      %2064 = vmatpush1.bf16.msra.mxu0 0
      %2065 = vmatprep.subr.bf16.mxu0 0
      %2066 = vmatpush1.bf16.msra.mxu0 0
      %2067 = vmatprep.mubr.bf16.mxu0 0
      %2068 = vmatmul.mubr.bf16.gmra.mrb[0].mxu0 %v1966
      %v2069 = vpop.f32.mrb[0].mxu0
      %v2070 = vadd.f32 0.0, %v2069
      %v2071 = vpop.f32.mrb[0].mxu0
      %v2072 = vpop.f32.mrb[0].mxu0
      %v2073 = vadd.f32 0.0, %v2072
      %v2074 = vpop.f32.mrb[0].mxu0
      %2075 = vmatprep.mubr.bf16.mxu0 0
      %2076 = vmatmul.mubr.bf16.gmra.mrb[0].mxu0 %v1967
      %v2077 = vpop.f32.mrb[0].mxu0
      %v2078 = vadd.f32 0.0, %v2077
      %v2079 = vpop.f32.mrb[0].mxu0
      %v2080 = vpop.f32.mrb[0].mxu0
      %v2081 = vadd.f32 0.0, %v2080
      %v2082 = vpop.f32.mrb[0].mxu0
      %2083 = vmatprep.mubr.bf16.mxu0 0
      %2084 = vmatmul.mubr.bf16.gmra.mrb[0].mxu0 %v1968
      %v2085 = vpop.f32.mrb[0].mxu0
      %v2086 = vadd.f32 0.0, %v2085
      %v2087 = vpop.f32.mrb[0].mxu0
      %v2088 = vpop.f32.mrb[0].mxu0
      %v2089 = vadd.f32 0.0, %v2088
      %v2090 = vpop.f32.mrb[0].mxu0
      %2091 = vmatprep.mubr.bf16.mxu0 0
      %2092 = vmatmul.mubr.bf16.gmra.mrb[0].mxu0 %v1969
      %v2093 = vpop.f32.mrb[0].mxu0
      %v2094 = vadd.f32 0.0, %v2093
      %v2095 = vpop.f32.mrb[0].mxu0
      %v2096 = vpop.f32.mrb[0].mxu0
      %v2097 = vadd.f32 0.0, %v2096
      %v2098 = vpop.f32.mrb[0].mxu0
      %2099 = vdwg.mxu0
      %v2100 = vadd.f32 %v1950, %v2070
      %v2101 = vadd.f32 %v1951, %v2073
      %v2102 = vadd.f32 %v1952, %v2078
      %v2103 = vadd.f32 %v1953, %v2081
      %v2104 = vadd.f32 %v1954, %v2086
      %v2105 = vadd.f32 %v1955, %v2089
      %v2106 = vadd.f32 %v1956, %v2094
      %v2107 = vadd.f32 %v1957, %v2097
      %v2108 = vld [vmem:[%s1657 + $0x3] sm:$0xff]
      %v2109 = vld [vmem:[%s1657 + $0x13] sm:$0xff]
      %v2110 = vld [vmem:[%s1657 + $0x23] sm:$0xff]
      %v2111 = vld [vmem:[%s1657 + $0x33] sm:$0xff]
      %v2112 = vld [vmem:[%s1657 + $0x43] sm:$0xff]
      %v2113 = vld [vmem:[%s1657 + $0x53] sm:$0xff]
      %v2114 = vld [vmem:[%s1657 + $0x63] sm:$0xff]
      %v2115 = vld [vmem:[%s1657 + $0x73] sm:$0xff]
      %v2116 = vpack.c.bf16 %v2109, %v2108
      %v2117 = vpack.c.bf16 %v2111, %v2110
      %v2118 = vpack.c.bf16 %v2113, %v2112
      %v2119 = vpack.c.bf16 %v2115, %v2114
      %s2120 = scalar_lea.vmem %s1, 832
      %v2121 = vld [vmem:[%s2120] sm:$0xf]
      %v2122 = vld [vmem:[%s2120 + $0x4] sm:$0xf]
      %v2123 = vld [vmem:[%s2120 + $0x8] sm:$0xf]
      %v2124 = vld [vmem:[%s2120 + $0xc] sm:$0xf]
      %v2125 = vld [vmem:[%s2120 + $0x10] sm:$0xf]
      %v2126 = vld [vmem:[%s2120 + $0x14] sm:$0xf]
      %v2127 = vld [vmem:[%s2120 + $0x18] sm:$0xf]
      %v2128 = vld [vmem:[%s2120 + $0x1c] sm:$0xf]
      %v2129 = vld [vmem:[%s2120 + $0x20] sm:$0xf]
      %v2130 = vld [vmem:[%s2120 + $0x24] sm:$0xf]
      %v2131 = vld [vmem:[%s2120 + $0x28] sm:$0xf]
      %v2132 = vld [vmem:[%s2120 + $0x2c] sm:$0xf]
      %v2133 = vld [vmem:[%s2120 + $0x30] sm:$0xf]
      %v2134 = vld [vmem:[%s2120 + $0x34] sm:$0xf]
      %v2135 = vld [vmem:[%s2120 + $0x38] sm:$0xf]
      %v2136 = vld [vmem:[%s2120 + $0x3c] sm:$0xf]
      %v2153 = vunpack.c.l.b16 %v2121
      %v2154 = vunpack.c.l.b16 %v2122
      %v2155 = vunpack.c.l.b16 %v2123
      %v2156 = vunpack.c.l.b16 %v2124
      %v2157 = vunpack.c.l.b16 %v2125
      %v2158 = vunpack.c.l.b16 %v2126
      %v2159 = vunpack.c.l.b16 %v2127
      %v2160 = vunpack.c.l.b16 %v2128
      %v2161 = vunpack.c.l.b16 %v2129
      %v2162 = vunpack.c.l.b16 %v2130
      %v2163 = vunpack.c.l.b16 %v2131
      %v2164 = vunpack.c.l.b16 %v2132
      %v2165 = vunpack.c.l.b16 %v2133
      %v2166 = vunpack.c.l.b16 %v2134
      %v2167 = vunpack.c.l.b16 %v2135
      %v2168 = vunpack.c.l.b16 %v2136
      %v2169 = vpack.c.b16 %v2154, %v2153
      %v2170 = vpack.c.b16 %v2156, %v2155
      %v2171 = vpack.c.b16 %v2158, %v2157
      %v2172 = vpack.c.b16 %v2160, %v2159
      %v2173 = vpack.c.b16 %v2162, %v2161
      %v2174 = vpack.c.b16 %v2164, %v2163
      %v2175 = vpack.c.b16 %v2166, %v2165
      %v2176 = vpack.c.b16 %v2168, %v2167
      %2185 = vmatprep.subr.bf16.mxu0 0
      %2186 = vmatpush1.bf16.msra.mxu0 %v2169
      %2187 = vmatprep.subr.bf16.mxu0 0
      %2188 = vmatpush1.bf16.msra.mxu0 %v2170
      %2189 = vmatprep.subr.bf16.mxu0 0
      %2190 = vmatpush1.bf16.msra.mxu0 %v2171
      %2191 = vmatprep.subr.bf16.mxu0 0
      %2192 = vmatpush1.bf16.msra.mxu0 %v2172
      %2193 = vmatprep.subr.bf16.mxu0 0
      %2194 = vmatpush1.bf16.msra.mxu0 %v2173
      %2195 = vmatprep.subr.bf16.mxu0 0
      %2196 = vmatpush1.bf16.msra.mxu0 %v2174
      %2197 = vmatprep.subr.bf16.mxu0 0
      %2198 = vmatpush1.bf16.msra.mxu0 %v2175
      %2199 = vmatprep.subr.bf16.mxu0 0
      %2200 = vmatpush1.bf16.msra.mxu0 %v2176
      %2201 = vmatprep.subr.bf16.mxu0 0
      %2202 = vmatpush1.bf16.msra.mxu0 0
      %2203 = vmatprep.subr.bf16.mxu0 0
      %2204 = vmatpush1.bf16.msra.mxu0 0
      %2205 = vmatprep.subr.bf16.mxu0 0
      %2206 = vmatpush1.bf16.msra.mxu0 0
      %2207 = vmatprep.subr.bf16.mxu0 0
      %2208 = vmatpush1.bf16.msra.mxu0 0
      %2209 = vmatprep.subr.bf16.mxu0 0
      %2210 = vmatpush1.bf16.msra.mxu0 0
      %2211 = vmatprep.subr.bf16.mxu0 0
      %2212 = vmatpush1.bf16.msra.mxu0 0
      %2213 = vmatprep.subr.bf16.mxu0 0
      %2214 = vmatpush1.bf16.msra.mxu0 0
      %2215 = vmatprep.subr.bf16.mxu0 0
      %2216 = vmatpush1.bf16.msra.mxu0 0
      %2217 = vmatprep.mubr.bf16.mxu0 0
      %2218 = vmatmul.mubr.bf16.gmra.mrb[0].mxu0 %v2116
      %v2219 = vpop.f32.mrb[0].mxu0
      %v2220 = vadd.f32 0.0, %v2219
      %v2221 = vpop.f32.mrb[0].mxu0
      %v2222 = vpop.f32.mrb[0].mxu0
      %v2223 = vadd.f32 0.0, %v2222
      %v2224 = vpop.f32.mrb[0].mxu0
      %2225 = vmatprep.mubr.bf16.mxu0 0
      %2226 = vmatmul.mubr.bf16.gmra.mrb[0].mxu0 %v2117
      %v2227 = vpop.f32.mrb[0].mxu0
      %v2228 = vadd.f32 0.0, %v2227
      %v2229 = vpop.f32.mrb[0].mxu0
      %v2230 = vpop.f32.mrb[0].mxu0
      %v2231 = vadd.f32 0.0, %v2230
      %v2232 = vpop.f32.mrb[0].mxu0
      %2233 = vmatprep.mubr.bf16.mxu0 0
      %2234 = vmatmul.mubr.bf16.gmra.mrb[0].mxu0 %v2118
      %v2235 = vpop.f32.mrb[0].mxu0
      %v2236 = vadd.f32 0.0, %v2235
      %v2237 = vpop.f32.mrb[0].mxu0
      %v2238 = vpop.f32.mrb[0].mxu0
      %v2239 = vadd.f32 0.0, %v2238
      %v2240 = vpop.f32.mrb[0].mxu0
      %2241 = vmatprep.mubr.bf16.mxu0 0
      %2242 = vmatmul.mubr.bf16.gmra.mrb[0].mxu0 %v2119
      %v2243 = vpop.f32.mrb[0].mxu0
      %v2244 = vadd.f32 0.0, %v2243
      %v2245 = vpop.f32.mrb[0].mxu0
      %v2246 = vpop.f32.mrb[0].mxu0
      %v2247 = vadd.f32 0.0, %v2246
      %v2248 = vpop.f32.mrb[0].mxu0
      %2249 = vdwg.mxu0
      %v2250 = vadd.f32 %v2100, %v2220
      %v2251 = vadd.f32 %v2101, %v2223
      %v2252 = vadd.f32 %v2102, %v2228
      %v2253 = vadd.f32 %v2103, %v2231
      %v2254 = vadd.f32 %v2104, %v2236
      %v2255 = vadd.f32 %v2105, %v2239
      %v2256 = vadd.f32 %v2106, %v2244
      %v2257 = vadd.f32 %v2107, %v2247
      %v2258 = vld [vmem:[%s1657 + $0x4] sm:$0xff]
      %v2259 = vld [vmem:[%s1657 + $0x14] sm:$0xff]
      %v2260 = vld [vmem:[%s1657 + $0x24] sm:$0xff]
      %v2261 = vld [vmem:[%s1657 + $0x34] sm:$0xff]
      %v2262 = vld [vmem:[%s1657 + $0x44] sm:$0xff]
      %v2263 = vld [vmem:[%s1657 + $0x54] sm:$0xff]
      %v2264 = vld [vmem:[%s1657 + $0x64] sm:$0xff]
      %v2265 = vld [vmem:[%s1657 + $0x74] sm:$0xff]
      %v2266 = vpack.c.bf16 %v2259, %v2258
      %v2267 = vpack.c.bf16 %v2261, %v2260
      %v2268 = vpack.c.bf16 %v2263, %v2262
      %v2269 = vpack.c.bf16 %v2265, %v2264
      %s2270 = scalar_lea.vmem %s1, 896
      %v2271 = vld [vmem:[%s2270] sm:$0xf]
      %v2272 = vld [vmem:[%s2270 + $0x4] sm:$0xf]
      %v2273 = vld [vmem:[%s2270 + $0x8] sm:$0xf]
      %v2274 = vld [vmem:[%s2270 + $0xc] sm:$0xf]
      %v2275 = vld [vmem:[%s2270 + $0x10] sm:$0xf]
      %v2276 = vld [vmem:[%s2270 + $0x14] sm:$0xf]
      %v2277 = vld [vmem:[%s2270 + $0x18] sm:$0xf]
      %v2278 = vld [vmem:[%s2270 + $0x1c] sm:$0xf]
      %v2279 = vld [vmem:[%s2270 + $0x20] sm:$0xf]
      %v2280 = vld [vmem:[%s2270 + $0x24] sm:$0xf]
      %v2281 = vld [vmem:[%s2270 + $0x28] sm:$0xf]
      %v2282 = vld [vmem:[%s2270 + $0x2c] sm:$0xf]
      %v2283 = vld [vmem:[%s2270 + $0x30] sm:$0xf]
      %v2284 = vld [vmem:[%s2270 + $0x34] sm:$0xf]
      %v2285 = vld [vmem:[%s2270 + $0x38] sm:$0xf]
      %v2286 = vld [vmem:[%s2270 + $0x3c] sm:$0xf]
      %v2303 = vunpack.c.l.b16 %v2271
      %v2304 = vunpack.c.l.b16 %v2272
      %v2305 = vunpack.c.l.b16 %v2273
      %v2306 = vunpack.c.l.b16 %v2274
      %v2307 = vunpack.c.l.b16 %v2275
      %v2308 = vunpack.c.l.b16 %v2276
      %v2309 = vunpack.c.l.b16 %v2277
      %v2310 = vunpack.c.l.b16 %v2278
      %v2311 = vunpack.c.l.b16 %v2279
      %v2312 = vunpack.c.l.b16 %v2280
      %v2313 = vunpack.c.l.b16 %v2281
      %v2314 = vunpack.c.l.b16 %v2282
      %v2315 = vunpack.c.l.b16 %v2283
      %v2316 = vunpack.c.l.b16 %v2284
      %v2317 = vunpack.c.l.b16 %v2285
      %v2318 = vunpack.c.l.b16 %v2286
      %v2319 = vpack.c.b16 %v2304, %v2303
      %v2320 = vpack.c.b16 %v2306, %v2305
      %v2321 = vpack.c.b16 %v2308, %v2307
      %v2322 = vpack.c.b16 %v2310, %v2309
      %v2323 = vpack.c.b16 %v2312, %v2311
      %v2324 = vpack.c.b16 %v2314, %v2313
      %v2325 = vpack.c.b16 %v2316, %v2315
      %v2326 = vpack.c.b16 %v2318, %v2317
      %2335 = vmatprep.subr.bf16.mxu0 0
      %2336 = vmatpush1.bf16.msra.mxu0 %v2319
      %2337 = vmatprep.subr.bf16.mxu0 0
      %2338 = vmatpush1.bf16.msra.mxu0 %v2320
      %2339 = vmatprep.subr.bf16.mxu0 0
      %2340 = vmatpush1.bf16.msra.mxu0 %v2321
      %2341 = vmatprep.subr.bf16.mxu0 0
      %2342 = vmatpush1.bf16.msra.mxu0 %v2322
      %2343 = vmatprep.subr.bf16.mxu0 0
      %2344 = vmatpush1.bf16.msra.mxu0 %v2323
      %2345 = vmatprep.subr.bf16.mxu0 0
      %2346 = vmatpush1.bf16.msra.mxu0 %v2324
      %2347 = vmatprep.subr.bf16.mxu0 0
      %2348 = vmatpush1.bf16.msra.mxu0 %v2325
      %2349 = vmatprep.subr.bf16.mxu0 0
      %2350 = vmatpush1.bf16.msra.mxu0 %v2326
      %2351 = vmatprep.subr.bf16.mxu0 0
      %2352 = vmatpush1.bf16.msra.mxu0 0
      %2353 = vmatprep.subr.bf16.mxu0 0
      %2354 = vmatpush1.bf16.msra.mxu0 0
      %2355 = vmatprep.subr.bf16.mxu0 0
      %2356 = vmatpush1.bf16.msra.mxu0 0
      %2357 = vmatprep.subr.bf16.mxu0 0
      %2358 = vmatpush1.bf16.msra.mxu0 0
      %2359 = vmatprep.subr.bf16.mxu0 0
      %2360 = vmatpush1.bf16.msra.mxu0 0
      %2361 = vmatprep.subr.bf16.mxu0 0
      %2362 = vmatpush1.bf16.msra.mxu0 0
      %2363 = vmatprep.subr.bf16.mxu0 0
      %2364 = vmatpush1.bf16.msra.mxu0 0
      %2365 = vmatprep.subr.bf16.mxu0 0
      %2366 = vmatpush1.bf16.msra.mxu0 0
      %2367 = vmatprep.mubr.bf16.mxu0 0
      %2368 = vmatmul.mubr.bf16.gmra.mrb[0].mxu0 %v2266
      %v2369 = vpop.f32.mrb[0].mxu0
      %v2370 = vadd.f32 0.0, %v2369
      %v2371 = vpop.f32.mrb[0].mxu0
      %v2372 = vpop.f32.mrb[0].mxu0
      %v2373 = vadd.f32 0.0, %v2372
      %v2374 = vpop.f32.mrb[0].mxu0
      %2375 = vmatprep.mubr.bf16.mxu0 0
      %2376 = vmatmul.mubr.bf16.gmra.mrb[0].mxu0 %v2267
      %v2377 = vpop.f32.mrb[0].mxu0
      %v2378 = vadd.f32 0.0, %v2377
      %v2379 = vpop.f32.mrb[0].mxu0
      %v2380 = vpop.f32.mrb[0].mxu0
      %v2381 = vadd.f32 0.0, %v2380
      %v2382 = vpop.f32.mrb[0].mxu0
      %2383 = vmatprep.mubr.bf16.mxu0 0
      %2384 = vmatmul.mubr.bf16.gmra.mrb[0].mxu0 %v2268
      %v2385 = vpop.f32.mrb[0].mxu0
      %v2386 = vadd.f32 0.0, %v2385
      %v2387 = vpop.f32.mrb[0].mxu0
      %v2388 = vpop.f32.mrb[0].mxu0
      %v2389 = vadd.f32 0.0, %v2388
      %v2390 = vpop.f32.mrb[0].mxu0
      %2391 = vmatprep.mubr.bf16.mxu0 0
      %2392 = vmatmul.mubr.bf16.gmra.mrb[0].mxu0 %v2269
      %v2393 = vpop.f32.mrb[0].mxu0
      %v2394 = vadd.f32 0.0, %v2393
      %v2395 = vpop.f32.mrb[0].mxu0
      %v2396 = vpop.f32.mrb[0].mxu0
      %v2397 = vadd.f32 0.0, %v2396
      %v2398 = vpop.f32.mrb[0].mxu0
      %2399 = vdwg.mxu0
      %v2400 = vadd.f32 %v2250, %v2370
      %v2401 = vadd.f32 %v2251, %v2373
      %v2402 = vadd.f32 %v2252, %v2378
      %v2403 = vadd.f32 %v2253, %v2381
      %v2404 = vadd.f32 %v2254, %v2386
      %v2405 = vadd.f32 %v2255, %v2389
      %v2406 = vadd.f32 %v2256, %v2394
      %v2407 = vadd.f32 %v2257, %v2397
      %s2408 = scalar_lea.vmem %s165, 48
      %v2409 = vld [vmem:[%s2408] sm:$0xff]
      %v2410 = vld [vmem:[%s2408 + $0x10] sm:$0xff]
      %v2411 = vld [vmem:[%s2408 + $0x20] sm:$0xff]
      %v2412 = vld [vmem:[%s2408 + $0x30] sm:$0xff]
      %v2413 = vld [vmem:[%s2408 + $0x40] sm:$0xff]
      %v2414 = vld [vmem:[%s2408 + $0x50] sm:$0xff]
      %v2415 = vld [vmem:[%s2408 + $0x60] sm:$0xff]
      %v2416 = vld [vmem:[%s2408 + $0x70] sm:$0xff]
      %v2417 = vpack.c.bf16 %v2410, %v2409
      %v2418 = vpack.c.bf16 %v2412, %v2411
      %v2419 = vpack.c.bf16 %v2414, %v2413
      %v2420 = vpack.c.bf16 %v2416, %v2415
      %s2421 = scalar_lea.vmem %s1, 960
      %v2422 = vld [vmem:[%s2421] sm:$0xf]
      %v2423 = vld [vmem:[%s2421 + $0x4] sm:$0xf]
      %v2424 = vld [vmem:[%s2421 + $0x8] sm:$0xf]
      %v2425 = vld [vmem:[%s2421 + $0xc] sm:$0xf]
      %v2426 = vld [vmem:[%s2421 + $0x10] sm:$0xf]
      %v2427 = vld [vmem:[%s2421 + $0x14] sm:$0xf]
      %v2428 = vld [vmem:[%s2421 + $0x18] sm:$0xf]
      %v2429 = vld [vmem:[%s2421 + $0x1c] sm:$0xf]
      %v2430 = vld [vmem:[%s2421 + $0x20] sm:$0xf]
      %v2431 = vld [vmem:[%s2421 + $0x24] sm:$0xf]
      %v2432 = vld [vmem:[%s2421 + $0x28] sm:$0xf]
      %v2433 = vld [vmem:[%s2421 + $0x2c] sm:$0xf]
      %v2434 = vld [vmem:[%s2421 + $0x30] sm:$0xf]
      %v2435 = vld [vmem:[%s2421 + $0x34] sm:$0xf]
      %v2436 = vld [vmem:[%s2421 + $0x38] sm:$0xf]
      %v2437 = vld [vmem:[%s2421 + $0x3c] sm:$0xf]
      %v2454 = vunpack.c.l.b16 %v2422
      %v2455 = vunpack.c.l.b16 %v2423
      %v2456 = vunpack.c.l.b16 %v2424
      %v2457 = vunpack.c.l.b16 %v2425
      %v2458 = vunpack.c.l.b16 %v2426
      %v2459 = vunpack.c.l.b16 %v2427
      %v2460 = vunpack.c.l.b16 %v2428
      %v2461 = vunpack.c.l.b16 %v2429
      %v2462 = vunpack.c.l.b16 %v2430
      %v2463 = vunpack.c.l.b16 %v2431
      %v2464 = vunpack.c.l.b16 %v2432
      %v2465 = vunpack.c.l.b16 %v2433
      %v2466 = vunpack.c.l.b16 %v2434
      %v2467 = vunpack.c.l.b16 %v2435
      %v2468 = vunpack.c.l.b16 %v2436
      %v2469 = vunpack.c.l.b16 %v2437
      %v2470 = vpack.c.b16 %v2455, %v2454
      %v2471 = vpack.c.b16 %v2457, %v2456
      %v2472 = vpack.c.b16 %v2459, %v2458
      %v2473 = vpack.c.b16 %v2461, %v2460
      %v2474 = vpack.c.b16 %v2463, %v2462
      %v2475 = vpack.c.b16 %v2465, %v2464
      %v2476 = vpack.c.b16 %v2467, %v2466
      %v2477 = vpack.c.b16 %v2469, %v2468
      %2486 = vmatprep.subr.bf16.mxu0 0
      %2487 = vmatpush1.bf16.msra.mxu0 %v2470
      %2488 = vmatprep.subr.bf16.mxu0 0
      %2489 = vmatpush1.bf16.msra.mxu0 %v2471
      %2490 = vmatprep.subr.bf16.mxu0 0
      %2491 = vmatpush1.bf16.msra.mxu0 %v2472
      %2492 = vmatprep.subr.bf16.mxu0 0
      %2493 = vmatpush1.bf16.msra.mxu0 %v2473
      %2494 = vmatprep.subr.bf16.mxu0 0
      %2495 = vmatpush1.bf16.msra.mxu0 %v2474
      %2496 = vmatprep.subr.bf16.mxu0 0
      %2497 = vmatpush1.bf16.msra.mxu0 %v2475
      %2498 = vmatprep.subr.bf16.mxu0 0
      %2499 = vmatpush1.bf16.msra.mxu0 %v2476
      %2500 = vmatprep.subr.bf16.mxu0 0
      %2501 = vmatpush1.bf16.msra.mxu0 %v2477
      %2502 = vmatprep.subr.bf16.mxu0 0
      %2503 = vmatpush1.bf16.msra.mxu0 0
      %2504 = vmatprep.subr.bf16.mxu0 0
      %2505 = vmatpush1.bf16.msra.mxu0 0
      %2506 = vmatprep.subr.bf16.mxu0 0
      %2507 = vmatpush1.bf16.msra.mxu0 0
      %2508 = vmatprep.subr.bf16.mxu0 0
      %2509 = vmatpush1.bf16.msra.mxu0 0
      %2510 = vmatprep.subr.bf16.mxu0 0
      %2511 = vmatpush1.bf16.msra.mxu0 0
      %2512 = vmatprep.subr.bf16.mxu0 0
      %2513 = vmatpush1.bf16.msra.mxu0 0
      %2514 = vmatprep.subr.bf16.mxu0 0
      %2515 = vmatpush1.bf16.msra.mxu0 0
      %2516 = vmatprep.subr.bf16.mxu0 0
      %2517 = vmatpush1.bf16.msra.mxu0 0
      %2518 = vmatprep.mubr.bf16.mxu0 0
      %2519 = vmatmul.mubr.bf16.gmra.mrb[0].mxu0 %v2417
      %v2520 = vpop.f32.mrb[0].mxu0
      %v2521 = vadd.f32 0.0, %v2520
      %v2522 = vpop.f32.mrb[0].mxu0
      %v2523 = vpop.f32.mrb[0].mxu0
      %v2524 = vadd.f32 0.0, %v2523
      %v2525 = vpop.f32.mrb[0].mxu0
      %2526 = vmatprep.mubr.bf16.mxu0 0
      %2527 = vmatmul.mubr.bf16.gmra.mrb[0].mxu0 %v2418
      %v2528 = vpop.f32.mrb[0].mxu0
      %v2529 = vadd.f32 0.0, %v2528
      %v2530 = vpop.f32.mrb[0].mxu0
      %v2531 = vpop.f32.mrb[0].mxu0
      %v2532 = vadd.f32 0.0, %v2531
      %v2533 = vpop.f32.mrb[0].mxu0
      %2534 = vmatprep.mubr.bf16.mxu0 0
      %2535 = vmatmul.mubr.bf16.gmra.mrb[0].mxu0 %v2419
      %v2536 = vpop.f32.mrb[0].mxu0
      %v2537 = vadd.f32 0.0, %v2536
      %v2538 = vpop.f32.mrb[0].mxu0
      %v2539 = vpop.f32.mrb[0].mxu0
      %v2540 = vadd.f32 0.0, %v2539
      %v2541 = vpop.f32.mrb[0].mxu0
      %2542 = vmatprep.mubr.bf16.mxu0 0
      %2543 = vmatmul.mubr.bf16.gmra.mrb[0].mxu0 %v2420
      %v2544 = vpop.f32.mrb[0].mxu0
      %v2545 = vadd.f32 0.0, %v2544
      %v2546 = vpop.f32.mrb[0].mxu0
      %v2547 = vpop.f32.mrb[0].mxu0
      %v2548 = vadd.f32 0.0, %v2547
      %v2549 = vpop.f32.mrb[0].mxu0
      %2550 = vdwg.mxu0
      %v2551 = vadd.f32 %v2400, %v2521
      %v2552 = vadd.f32 %v2401, %v2524
      %v2553 = vadd.f32 %v2402, %v2529
      %v2554 = vadd.f32 %v2403, %v2532
      %v2555 = vadd.f32 %v2404, %v2537
      %v2556 = vadd.f32 %v2405, %v2540
      %v2557 = vadd.f32 %v2406, %v2545
      %v2558 = vadd.f32 %v2407, %v2548
      %v2559 = vld [vmem:[%s2408 + $0x1] sm:$0xff]
      %v2560 = vld [vmem:[%s2408 + $0x11] sm:$0xff]
      %v2561 = vld [vmem:[%s2408 + $0x21] sm:$0xff]
      %v2562 = vld [vmem:[%s2408 + $0x31] sm:$0xff]
      %v2563 = vld [vmem:[%s2408 + $0x41] sm:$0xff]
      %v2564 = vld [vmem:[%s2408 + $0x51] sm:$0xff]
      %v2565 = vld [vmem:[%s2408 + $0x61] sm:$0xff]
      %v2566 = vld [vmem:[%s2408 + $0x71] sm:$0xff]
      %v2567 = vpack.c.bf16 %v2560, %v2559
      %v2568 = vpack.c.bf16 %v2562, %v2561
      %v2569 = vpack.c.bf16 %v2564, %v2563
      %v2570 = vpack.c.bf16 %v2566, %v2565
      %s2571 = scalar_lea.vmem %s1, 1024
      %v2572 = vld [vmem:[%s2571] sm:$0xf]
      %v2573 = vld [vmem:[%s2571 + $0x4] sm:$0xf]
      %v2574 = vld [vmem:[%s2571 + $0x8] sm:$0xf]
      %v2575 = vld [vmem:[%s2571 + $0xc] sm:$0xf]
      %v2576 = vld [vmem:[%s2571 + $0x10] sm:$0xf]
      %v2577 = vld [vmem:[%s2571 + $0x14] sm:$0xf]
      %v2578 = vld [vmem:[%s2571 + $0x18] sm:$0xf]
      %v2579 = vld [vmem:[%s2571 + $0x1c] sm:$0xf]
      %v2580 = vld [vmem:[%s2571 + $0x20] sm:$0xf]
      %v2581 = vld [vmem:[%s2571 + $0x24] sm:$0xf]
      %v2582 = vld [vmem:[%s2571 + $0x28] sm:$0xf]
      %v2583 = vld [vmem:[%s2571 + $0x2c] sm:$0xf]
      %v2584 = vld [vmem:[%s2571 + $0x30] sm:$0xf]
      %v2585 = vld [vmem:[%s2571 + $0x34] sm:$0xf]
      %v2586 = vld [vmem:[%s2571 + $0x38] sm:$0xf]
      %v2587 = vld [vmem:[%s2571 + $0x3c] sm:$0xf]
      %v2604 = vunpack.c.l.b16 %v2572
      %v2605 = vunpack.c.l.b16 %v2573
      %v2606 = vunpack.c.l.b16 %v2574
      %v2607 = vunpack.c.l.b16 %v2575
      %v2608 = vunpack.c.l.b16 %v2576
      %v2609 = vunpack.c.l.b16 %v2577
      %v2610 = vunpack.c.l.b16 %v2578
      %v2611 = vunpack.c.l.b16 %v2579
      %v2612 = vunpack.c.l.b16 %v2580
      %v2613 = vunpack.c.l.b16 %v2581
      %v2614 = vunpack.c.l.b16 %v2582
      %v2615 = vunpack.c.l.b16 %v2583
      %v2616 = vunpack.c.l.b16 %v2584
      %v2617 = vunpack.c.l.b16 %v2585
      %v2618 = vunpack.c.l.b16 %v2586
      %v2619 = vunpack.c.l.b16 %v2587
      %v2620 = vpack.c.b16 %v2605, %v2604
      %v2621 = vpack.c.b16 %v2607, %v2606
      %v2622 = vpack.c.b16 %v2609, %v2608
      %v2623 = vpack.c.b16 %v2611, %v2610
      %v2624 = vpack.c.b16 %v2613, %v2612
      %v2625 = vpack.c.b16 %v2615, %v2614
      %v2626 = vpack.c.b16 %v2617, %v2616
      %v2627 = vpack.c.b16 %v2619, %v2618
      %2636 = vmatprep.subr.bf16.mxu0 0
      %2637 = vmatpush1.bf16.msra.mxu0 %v2620
      %2638 = vmatprep.subr.bf16.mxu0 0
      %2639 = vmatpush1.bf16.msra.mxu0 %v2621
      %2640 = vmatprep.subr.bf16.mxu0 0
      %2641 = vmatpush1.bf16.msra.mxu0 %v2622
      %2642 = vmatprep.subr.bf16.mxu0 0
      %2643 = vmatpush1.bf16.msra.mxu0 %v2623
      %2644 = vmatprep.subr.bf16.mxu0 0
      %2645 = vmatpush1.bf16.msra.mxu0 %v2624
      %2646 = vmatprep.subr.bf16.mxu0 0
      %2647 = vmatpush1.bf16.msra.mxu0 %v2625
      %2648 = vmatprep.subr.bf16.mxu0 0
      %2649 = vmatpush1.bf16.msra.mxu0 %v2626
      %2650 = vmatprep.subr.bf16.mxu0 0
      %2651 = vmatpush1.bf16.msra.mxu0 %v2627
      %2652 = vmatprep.subr.bf16.mxu0 0
      %2653 = vmatpush1.bf16.msra.mxu0 0
      %2654 = vmatprep.subr.bf16.mxu0 0
      %2655 = vmatpush1.bf16.msra.mxu0 0
      %2656 = vmatprep.subr.bf16.mxu0 0
      %2657 = vmatpush1.bf16.msra.mxu0 0
      %2658 = vmatprep.subr.bf16.mxu0 0
      %2659 = vmatpush1.bf16.msra.mxu0 0
      %2660 = vmatprep.subr.bf16.mxu0 0
      %2661 = vmatpush1.bf16.msra.mxu0 0
      %2662 = vmatprep.subr.bf16.mxu0 0
      %2663 = vmatpush1.bf16.msra.mxu0 0
      %2664 = vmatprep.subr.bf16.mxu0 0
      %2665 = vmatpush1.bf16.msra.mxu0 0
      %2666 = vmatprep.subr.bf16.mxu0 0
      %2667 = vmatpush1.bf16.msra.mxu0 0
      %2668 = vmatprep.mubr.bf16.mxu0 0
      %2669 = vmatmul.mubr.bf16.gmra.mrb[0].mxu0 %v2567
      %v2670 = vpop.f32.mrb[0].mxu0
      %v2671 = vadd.f32 0.0, %v2670
      %v2672 = vpop.f32.mrb[0].mxu0
      %v2673 = vpop.f32.mrb[0].mxu0
      %v2674 = vadd.f32 0.0, %v2673
      %v2675 = vpop.f32.mrb[0].mxu0
      %2676 = vmatprep.mubr.bf16.mxu0 0
      %2677 = vmatmul.mubr.bf16.gmra.mrb[0].mxu0 %v2568
      %v2678 = vpop.f32.mrb[0].mxu0
      %v2679 = vadd.f32 0.0, %v2678
      %v2680 = vpop.f32.mrb[0].mxu0
      %v2681 = vpop.f32.mrb[0].mxu0
      %v2682 = vadd.f32 0.0, %v2681
      %v2683 = vpop.f32.mrb[0].mxu0
      %2684 = vmatprep.mubr.bf16.mxu0 0
      %2685 = vmatmul.mubr.bf16.gmra.mrb[0].mxu0 %v2569
      %v2686 = vpop.f32.mrb[0].mxu0
      %v2687 = vadd.f32 0.0, %v2686
      %v2688 = vpop.f32.mrb[0].mxu0
      %v2689 = vpop.f32.mrb[0].mxu0
      %v2690 = vadd.f32 0.0, %v2689
      %v2691 = vpop.f32.mrb[0].mxu0
      %2692 = vmatprep.mubr.bf16.mxu0 0
      %2693 = vmatmul.mubr.bf16.gmra.mrb[0].mxu0 %v2570
      %v2694 = vpop.f32.mrb[0].mxu0
      %v2695 = vadd.f32 0.0, %v2694
      %v2696 = vpop.f32.mrb[0].mxu0
      %v2697 = vpop.f32.mrb[0].mxu0
      %v2698 = vadd.f32 0.0, %v2697
      %v2699 = vpop.f32.mrb[0].mxu0
      %2700 = vdwg.mxu0
      %v2701 = vadd.f32 %v2551, %v2671
      %v2702 = vadd.f32 %v2552, %v2674
      %v2703 = vadd.f32 %v2553, %v2679
      %v2704 = vadd.f32 %v2554, %v2682
      %v2705 = vadd.f32 %v2555, %v2687
      %v2706 = vadd.f32 %v2556, %v2690
      %v2707 = vadd.f32 %v2557, %v2695
      %v2708 = vadd.f32 %v2558, %v2698
      %v2709 = vld [vmem:[%s2408 + $0x2] sm:$0xff]
      %v2710 = vld [vmem:[%s2408 + $0x12] sm:$0xff]
      %v2711 = vld [vmem:[%s2408 + $0x22] sm:$0xff]
      %v2712 = vld [vmem:[%s2408 + $0x32] sm:$0xff]
      %v2713 = vld [vmem:[%s2408 + $0x42] sm:$0xff]
      %v2714 = vld [vmem:[%s2408 + $0x52] sm:$0xff]
      %v2715 = vld [vmem:[%s2408 + $0x62] sm:$0xff]
      %v2716 = vld [vmem:[%s2408 + $0x72] sm:$0xff]
      %v2717 = vpack.c.bf16 %v2710, %v2709
      %v2718 = vpack.c.bf16 %v2712, %v2711
      %v2719 = vpack.c.bf16 %v2714, %v2713
      %v2720 = vpack.c.bf16 %v2716, %v2715
      %s2721 = scalar_lea.vmem %s1, 1088
      %v2722 = vld [vmem:[%s2721] sm:$0xf]
      %v2723 = vld [vmem:[%s2721 + $0x4] sm:$0xf]
      %v2724 = vld [vmem:[%s2721 + $0x8] sm:$0xf]
      %v2725 = vld [vmem:[%s2721 + $0xc] sm:$0xf]
      %v2726 = vld [vmem:[%s2721 + $0x10] sm:$0xf]
      %v2727 = vld [vmem:[%s2721 + $0x14] sm:$0xf]
      %v2728 = vld [vmem:[%s2721 + $0x18] sm:$0xf]
      %v2729 = vld [vmem:[%s2721 + $0x1c] sm:$0xf]
      %v2730 = vld [vmem:[%s2721 + $0x20] sm:$0xf]
      %v2731 = vld [vmem:[%s2721 + $0x24] sm:$0xf]
      %v2732 = vld [vmem:[%s2721 + $0x28] sm:$0xf]
      %v2733 = vld [vmem:[%s2721 + $0x2c] sm:$0xf]
      %v2734 = vld [vmem:[%s2721 + $0x30] sm:$0xf]
      %v2735 = vld [vmem:[%s2721 + $0x34] sm:$0xf]
      %v2736 = vld [vmem:[%s2721 + $0x38] sm:$0xf]
      %v2737 = vld [vmem:[%s2721 + $0x3c] sm:$0xf]
      %v2754 = vunpack.c.l.b16 %v2722
      %v2755 = vunpack.c.l.b16 %v2723
      %v2756 = vunpack.c.l.b16 %v2724
      %v2757 = vunpack.c.l.b16 %v2725
      %v2758 = vunpack.c.l.b16 %v2726
      %v2759 = vunpack.c.l.b16 %v2727
      %v2760 = vunpack.c.l.b16 %v2728
      %v2761 = vunpack.c.l.b16 %v2729
      %v2762 = vunpack.c.l.b16 %v2730
      %v2763 = vunpack.c.l.b16 %v2731
      %v2764 = vunpack.c.l.b16 %v2732
      %v2765 = vunpack.c.l.b16 %v2733
      %v2766 = vunpack.c.l.b16 %v2734
      %v2767 = vunpack.c.l.b16 %v2735
      %v2768 = vunpack.c.l.b16 %v2736
      %v2769 = vunpack.c.l.b16 %v2737
      %v2770 = vpack.c.b16 %v2755, %v2754
      %v2771 = vpack.c.b16 %v2757, %v2756
      %v2772 = vpack.c.b16 %v2759, %v2758
      %v2773 = vpack.c.b16 %v2761, %v2760
      %v2774 = vpack.c.b16 %v2763, %v2762
      %v2775 = vpack.c.b16 %v2765, %v2764
      %v2776 = vpack.c.b16 %v2767, %v2766
      %v2777 = vpack.c.b16 %v2769, %v2768
      %2786 = vmatprep.subr.bf16.mxu0 0
      %2787 = vmatpush1.bf16.msra.mxu0 %v2770
      %2788 = vmatprep.subr.bf16.mxu0 0
      %2789 = vmatpush1.bf16.msra.mxu0 %v2771
      %2790 = vmatprep.subr.bf16.mxu0 0
      %2791 = vmatpush1.bf16.msra.mxu0 %v2772
      %2792 = vmatprep.subr.bf16.mxu0 0
      %2793 = vmatpush1.bf16.msra.mxu0 %v2773
      %2794 = vmatprep.subr.bf16.mxu0 0
      %2795 = vmatpush1.bf16.msra.mxu0 %v2774
      %2796 = vmatprep.subr.bf16.mxu0 0
      %2797 = vmatpush1.bf16.msra.mxu0 %v2775
      %2798 = vmatprep.subr.bf16.mxu0 0
      %2799 = vmatpush1.bf16.msra.mxu0 %v2776
      %2800 = vmatprep.subr.bf16.mxu0 0
      %2801 = vmatpush1.bf16.msra.mxu0 %v2777
      %2802 = vmatprep.subr.bf16.mxu0 0
      %2803 = vmatpush1.bf16.msra.mxu0 0
      %2804 = vmatprep.subr.bf16.mxu0 0
      %2805 = vmatpush1.bf16.msra.mxu0 0
      %2806 = vmatprep.subr.bf16.mxu0 0
      %2807 = vmatpush1.bf16.msra.mxu0 0
      %2808 = vmatprep.subr.bf16.mxu0 0
      %2809 = vmatpush1.bf16.msra.mxu0 0
      %2810 = vmatprep.subr.bf16.mxu0 0
      %2811 = vmatpush1.bf16.msra.mxu0 0
      %2812 = vmatprep.subr.bf16.mxu0 0
      %2813 = vmatpush1.bf16.msra.mxu0 0
      %2814 = vmatprep.subr.bf16.mxu0 0
      %2815 = vmatpush1.bf16.msra.mxu0 0
      %2816 = vmatprep.subr.bf16.mxu0 0
      %2817 = vmatpush1.bf16.msra.mxu0 0
      %2818 = vmatprep.mubr.bf16.mxu0 0
      %2819 = vmatmul.mubr.bf16.gmra.mrb[0].mxu0 %v2717
      %v2820 = vpop.f32.mrb[0].mxu0
      %v2821 = vadd.f32 0.0, %v2820
      %v2822 = vpop.f32.mrb[0].mxu0
      %v2823 = vpop.f32.mrb[0].mxu0
      %v2824 = vadd.f32 0.0, %v2823
      %v2825 = vpop.f32.mrb[0].mxu0
      %2826 = vmatprep.mubr.bf16.mxu0 0
      %2827 = vmatmul.mubr.bf16.gmra.mrb[0].mxu0 %v2718
      %v2828 = vpop.f32.mrb[0].mxu0
      %v2829 = vadd.f32 0.0, %v2828
      %v2830 = vpop.f32.mrb[0].mxu0
      %v2831 = vpop.f32.mrb[0].mxu0
      %v2832 = vadd.f32 0.0, %v2831
      %v2833 = vpop.f32.mrb[0].mxu0
      %2834 = vmatprep.mubr.bf16.mxu0 0
      %2835 = vmatmul.mubr.bf16.gmra.mrb[0].mxu0 %v2719
      %v2836 = vpop.f32.mrb[0].mxu0
      %v2837 = vadd.f32 0.0, %v2836
      %v2838 = vpop.f32.mrb[0].mxu0
      %v2839 = vpop.f32.mrb[0].mxu0
      %v2840 = vadd.f32 0.0, %v2839
      %v2841 = vpop.f32.mrb[0].mxu0
      %2842 = vmatprep.mubr.bf16.mxu0 0
      %2843 = vmatmul.mubr.bf16.gmra.mrb[0].mxu0 %v2720
      %v2844 = vpop.f32.mrb[0].mxu0
      %v2845 = vadd.f32 0.0, %v2844
      %v2846 = vpop.f32.mrb[0].mxu0
      %v2847 = vpop.f32.mrb[0].mxu0
      %v2848 = vadd.f32 0.0, %v2847
      %v2849 = vpop.f32.mrb[0].mxu0
      %2850 = vdwg.mxu0
      %v2851 = vadd.f32 %v2701, %v2821
      %v2852 = vadd.f32 %v2702, %v2824
      %v2853 = vadd.f32 %v2703, %v2829
      %v2854 = vadd.f32 %v2704, %v2832
      %v2855 = vadd.f32 %v2705, %v2837
      %v2856 = vadd.f32 %v2706, %v2840
      %v2857 = vadd.f32 %v2707, %v2845
      %v2858 = vadd.f32 %v2708, %v2848
      %v2859 = vld [vmem:[%s2408 + $0x3] sm:$0xff]
      %v2860 = vld [vmem:[%s2408 + $0x13] sm:$0xff]
      %v2861 = vld [vmem:[%s2408 + $0x23] sm:$0xff]
      %v2862 = vld [vmem:[%s2408 + $0x33] sm:$0xff]
      %v2863 = vld [vmem:[%s2408 + $0x43] sm:$0xff]
      %v2864 = vld [vmem:[%s2408 + $0x53] sm:$0xff]
      %v2865 = vld [vmem:[%s2408 + $0x63] sm:$0xff]
      %v2866 = vld [vmem:[%s2408 + $0x73] sm:$0xff]
      %v2867 = vpack.c.bf16 %v2860, %v2859
      %v2868 = vpack.c.bf16 %v2862, %v2861
      %v2869 = vpack.c.bf16 %v2864, %v2863
      %v2870 = vpack.c.bf16 %v2866, %v2865
      %s2871 = scalar_lea.vmem %s1, 1152
      %v2872 = vld [vmem:[%s2871] sm:$0xf]
      %v2873 = vld [vmem:[%s2871 + $0x4] sm:$0xf]
      %v2874 = vld [vmem:[%s2871 + $0x8] sm:$0xf]
      %v2875 = vld [vmem:[%s2871 + $0xc] sm:$0xf]
      %v2876 = vld [vmem:[%s2871 + $0x10] sm:$0xf]
      %v2877 = vld [vmem:[%s2871 + $0x14] sm:$0xf]
      %v2878 = vld [vmem:[%s2871 + $0x18] sm:$0xf]
      %v2879 = vld [vmem:[%s2871 + $0x1c] sm:$0xf]
      %v2880 = vld [vmem:[%s2871 + $0x20] sm:$0xf]
      %v2881 = vld [vmem:[%s2871 + $0x24] sm:$0xf]
      %v2882 = vld [vmem:[%s2871 + $0x28] sm:$0xf]
      %v2883 = vld [vmem:[%s2871 + $0x2c] sm:$0xf]
      %v2884 = vld [vmem:[%s2871 + $0x30] sm:$0xf]
      %v2885 = vld [vmem:[%s2871 + $0x34] sm:$0xf]
      %v2886 = vld [vmem:[%s2871 + $0x38] sm:$0xf]
      %v2887 = vld [vmem:[%s2871 + $0x3c] sm:$0xf]
      %v2904 = vunpack.c.l.b16 %v2872
      %v2905 = vunpack.c.l.b16 %v2873
      %v2906 = vunpack.c.l.b16 %v2874
      %v2907 = vunpack.c.l.b16 %v2875
      %v2908 = vunpack.c.l.b16 %v2876
      %v2909 = vunpack.c.l.b16 %v2877
      %v2910 = vunpack.c.l.b16 %v2878
      %v2911 = vunpack.c.l.b16 %v2879
      %v2912 = vunpack.c.l.b16 %v2880
      %v2913 = vunpack.c.l.b16 %v2881
      %v2914 = vunpack.c.l.b16 %v2882
      %v2915 = vunpack.c.l.b16 %v2883
      %v2916 = vunpack.c.l.b16 %v2884
      %v2917 = vunpack.c.l.b16 %v2885
      %v2918 = vunpack.c.l.b16 %v2886
      %v2919 = vunpack.c.l.b16 %v2887
      %v2920 = vpack.c.b16 %v2905, %v2904
      %v2921 = vpack.c.b16 %v2907, %v2906
      %v2922 = vpack.c.b16 %v2909, %v2908
      %v2923 = vpack.c.b16 %v2911, %v2910
      %v2924 = vpack.c.b16 %v2913, %v2912
      %v2925 = vpack.c.b16 %v2915, %v2914
      %v2926 = vpack.c.b16 %v2917, %v2916
      %v2927 = vpack.c.b16 %v2919, %v2918
      %2936 = vmatprep.subr.bf16.mxu0 0
      %2937 = vmatpush1.bf16.msra.mxu0 %v2920
      %2938 = vmatprep.subr.bf16.mxu0 0
      %2939 = vmatpush1.bf16.msra.mxu0 %v2921
      %2940 = vmatprep.subr.bf16.mxu0 0
      %2941 = vmatpush1.bf16.msra.mxu0 %v2922
      %2942 = vmatprep.subr.bf16.mxu0 0
      %2943 = vmatpush1.bf16.msra.mxu0 %v2923
      %2944 = vmatprep.subr.bf16.mxu0 0
      %2945 = vmatpush1.bf16.msra.mxu0 %v2924
      %2946 = vmatprep.subr.bf16.mxu0 0
      %2947 = vmatpush1.bf16.msra.mxu0 %v2925
      %2948 = vmatprep.subr.bf16.mxu0 0
      %2949 = vmatpush1.bf16.msra.mxu0 %v2926
      %2950 = vmatprep.subr.bf16.mxu0 0
      %2951 = vmatpush1.bf16.msra.mxu0 %v2927
      %2952 = vmatprep.subr.bf16.mxu0 0
      %2953 = vmatpush1.bf16.msra.mxu0 0
      %2954 = vmatprep.subr.bf16.mxu0 0
      %2955 = vmatpush1.bf16.msra.mxu0 0
      %2956 = vmatprep.subr.bf16.mxu0 0
      %2957 = vmatpush1.bf16.msra.mxu0 0
      %2958 = vmatprep.subr.bf16.mxu0 0
      %2959 = vmatpush1.bf16.msra.mxu0 0
      %2960 = vmatprep.subr.bf16.mxu0 0
      %2961 = vmatpush1.bf16.msra.mxu0 0
      %2962 = vmatprep.subr.bf16.mxu0 0
      %2963 = vmatpush1.bf16.msra.mxu0 0
      %2964 = vmatprep.subr.bf16.mxu0 0
      %2965 = vmatpush1.bf16.msra.mxu0 0
      %2966 = vmatprep.subr.bf16.mxu0 0
      %2967 = vmatpush1.bf16.msra.mxu0 0
      %2968 = vmatprep.mubr.bf16.mxu0 0
      %2969 = vmatmul.mubr.bf16.gmra.mrb[0].mxu0 %v2867
      %v2970 = vpop.f32.mrb[0].mxu0
      %v2971 = vadd.f32 0.0, %v2970
      %v2972 = vpop.f32.mrb[0].mxu0
      %v2973 = vpop.f32.mrb[0].mxu0
      %v2974 = vadd.f32 0.0, %v2973
      %v2975 = vpop.f32.mrb[0].mxu0
      %2976 = vmatprep.mubr.bf16.mxu0 0
      %2977 = vmatmul.mubr.bf16.gmra.mrb[0].mxu0 %v2868
      %v2978 = vpop.f32.mrb[0].mxu0
      %v2979 = vadd.f32 0.0, %v2978
      %v2980 = vpop.f32.mrb[0].mxu0
      %v2981 = vpop.f32.mrb[0].mxu0
      %v2982 = vadd.f32 0.0, %v2981
      %v2983 = vpop.f32.mrb[0].mxu0
      %2984 = vmatprep.mubr.bf16.mxu0 0
      %2985 = vmatmul.mubr.bf16.gmra.mrb[0].mxu0 %v2869
      %v2986 = vpop.f32.mrb[0].mxu0
      %v2987 = vadd.f32 0.0, %v2986
      %v2988 = vpop.f32.mrb[0].mxu0
      %v2989 = vpop.f32.mrb[0].mxu0
      %v2990 = vadd.f32 0.0, %v2989
      %v2991 = vpop.f32.mrb[0].mxu0
      %2992 = vmatprep.mubr.bf16.mxu0 0
      %2993 = vmatmul.mubr.bf16.gmra.mrb[0].mxu0 %v2870
      %v2994 = vpop.f32.mrb[0].mxu0
      %v2995 = vadd.f32 0.0, %v2994
      %v2996 = vpop.f32.mrb[0].mxu0
      %v2997 = vpop.f32.mrb[0].mxu0
      %v2998 = vadd.f32 0.0, %v2997
      %v2999 = vpop.f32.mrb[0].mxu0
      %3000 = vdwg.mxu0
      %v3001 = vadd.f32 %v2851, %v2971
      %v3002 = vadd.f32 %v2852, %v2974
      %v3003 = vadd.f32 %v2853, %v2979
      %v3004 = vadd.f32 %v2854, %v2982
      %v3005 = vadd.f32 %v2855, %v2987
      %v3006 = vadd.f32 %v2856, %v2990
      %v3007 = vadd.f32 %v2857, %v2995
      %v3008 = vadd.f32 %v2858, %v2998
      %v3009 = vld [vmem:[%s2408 + $0x4] sm:$0xff]
      %v3010 = vld [vmem:[%s2408 + $0x14] sm:$0xff]
      %v3011 = vld [vmem:[%s2408 + $0x24] sm:$0xff]
      %v3012 = vld [vmem:[%s2408 + $0x34] sm:$0xff]
      %v3013 = vld [vmem:[%s2408 + $0x44] sm:$0xff]
      %v3014 = vld [vmem:[%s2408 + $0x54] sm:$0xff]
      %v3015 = vld [vmem:[%s2408 + $0x64] sm:$0xff]
      %v3016 = vld [vmem:[%s2408 + $0x74] sm:$0xff]
      %v3017 = vpack.c.bf16 %v3010, %v3009
      %v3018 = vpack.c.bf16 %v3012, %v3011
      %v3019 = vpack.c.bf16 %v3014, %v3013
      %v3020 = vpack.c.bf16 %v3016, %v3015
      %s3021 = scalar_lea.vmem %s1, 1216
      %v3022 = vld [vmem:[%s3021] sm:$0xf]
      %v3023 = vld [vmem:[%s3021 + $0x4] sm:$0xf]
      %v3024 = vld [vmem:[%s3021 + $0x8] sm:$0xf]
      %v3025 = vld [vmem:[%s3021 + $0xc] sm:$0xf]
      %v3026 = vld [vmem:[%s3021 + $0x10] sm:$0xf]
      %v3027 = vld [vmem:[%s3021 + $0x14] sm:$0xf]
      %v3028 = vld [vmem:[%s3021 + $0x18] sm:$0xf]
      %v3029 = vld [vmem:[%s3021 + $0x1c] sm:$0xf]
      %v3030 = vld [vmem:[%s3021 + $0x20] sm:$0xf]
      %v3031 = vld [vmem:[%s3021 + $0x24] sm:$0xf]
      %v3032 = vld [vmem:[%s3021 + $0x28] sm:$0xf]
      %v3033 = vld [vmem:[%s3021 + $0x2c] sm:$0xf]
      %v3034 = vld [vmem:[%s3021 + $0x30] sm:$0xf]
      %v3035 = vld [vmem:[%s3021 + $0x34] sm:$0xf]
      %v3036 = vld [vmem:[%s3021 + $0x38] sm:$0xf]
      %v3037 = vld [vmem:[%s3021 + $0x3c] sm:$0xf]
      %v3054 = vunpack.c.l.b16 %v3022
      %v3055 = vunpack.c.l.b16 %v3023
      %v3056 = vunpack.c.l.b16 %v3024
      %v3057 = vunpack.c.l.b16 %v3025
      %v3058 = vunpack.c.l.b16 %v3026
      %v3059 = vunpack.c.l.b16 %v3027
      %v3060 = vunpack.c.l.b16 %v3028
      %v3061 = vunpack.c.l.b16 %v3029
      %v3062 = vunpack.c.l.b16 %v3030
      %v3063 = vunpack.c.l.b16 %v3031
      %v3064 = vunpack.c.l.b16 %v3032
      %v3065 = vunpack.c.l.b16 %v3033
      %v3066 = vunpack.c.l.b16 %v3034
      %v3067 = vunpack.c.l.b16 %v3035
      %v3068 = vunpack.c.l.b16 %v3036
      %v3069 = vunpack.c.l.b16 %v3037
      %v3070 = vpack.c.b16 %v3055, %v3054
      %v3071 = vpack.c.b16 %v3057, %v3056
      %v3072 = vpack.c.b16 %v3059, %v3058
      %v3073 = vpack.c.b16 %v3061, %v3060
      %v3074 = vpack.c.b16 %v3063, %v3062
      %v3075 = vpack.c.b16 %v3065, %v3064
      %v3076 = vpack.c.b16 %v3067, %v3066
      %v3077 = vpack.c.b16 %v3069, %v3068
      %3086 = vmatprep.subr.bf16.mxu0 0
      %3087 = vmatpush1.bf16.msra.mxu0 %v3070
      %3088 = vmatprep.subr.bf16.mxu0 0
      %3089 = vmatpush1.bf16.msra.mxu0 %v3071
      %3090 = vmatprep.subr.bf16.mxu0 0
      %3091 = vmatpush1.bf16.msra.mxu0 %v3072
      %3092 = vmatprep.subr.bf16.mxu0 0
      %3093 = vmatpush1.bf16.msra.mxu0 %v3073
      %3094 = vmatprep.subr.bf16.mxu0 0
      %3095 = vmatpush1.bf16.msra.mxu0 %v3074
      %3096 = vmatprep.subr.bf16.mxu0 0
      %3097 = vmatpush1.bf16.msra.mxu0 %v3075
      %3098 = vmatprep.subr.bf16.mxu0 0
      %3099 = vmatpush1.bf16.msra.mxu0 %v3076
      %3100 = vmatprep.subr.bf16.mxu0 0
      %3101 = vmatpush1.bf16.msra.mxu0 %v3077
      %3102 = vmatprep.subr.bf16.mxu0 0
      %3103 = vmatpush1.bf16.msra.mxu0 0
      %3104 = vmatprep.subr.bf16.mxu0 0
      %3105 = vmatpush1.bf16.msra.mxu0 0
      %3106 = vmatprep.subr.bf16.mxu0 0
      %3107 = vmatpush1.bf16.msra.mxu0 0
      %3108 = vmatprep.subr.bf16.mxu0 0
      %3109 = vmatpush1.bf16.msra.mxu0 0
      %3110 = vmatprep.subr.bf16.mxu0 0
      %3111 = vmatpush1.bf16.msra.mxu0 0
      %3112 = vmatprep.subr.bf16.mxu0 0
      %3113 = vmatpush1.bf16.msra.mxu0 0
      %3114 = vmatprep.subr.bf16.mxu0 0
      %3115 = vmatpush1.bf16.msra.mxu0 0
      %3116 = vmatprep.subr.bf16.mxu0 0
      %3117 = vmatpush1.bf16.msra.mxu0 0
      %3118 = vmatprep.mubr.bf16.mxu0 0
      %3119 = vmatmul.mubr.bf16.gmra.mrb[0].mxu0 %v3017
      %v3120 = vpop.f32.mrb[0].mxu0
      %v3121 = vadd.f32 0.0, %v3120
      %v3122 = vpop.f32.mrb[0].mxu0
      %v3123 = vpop.f32.mrb[0].mxu0
      %v3124 = vadd.f32 0.0, %v3123
      %v3125 = vpop.f32.mrb[0].mxu0
      %3126 = vmatprep.mubr.bf16.mxu0 0
      %3127 = vmatmul.mubr.bf16.gmra.mrb[0].mxu0 %v3018
      %v3128 = vpop.f32.mrb[0].mxu0
      %v3129 = vadd.f32 0.0, %v3128
      %v3130 = vpop.f32.mrb[0].mxu0
      %v3131 = vpop.f32.mrb[0].mxu0
      %v3132 = vadd.f32 0.0, %v3131
      %v3133 = vpop.f32.mrb[0].mxu0
      %3134 = vmatprep.mubr.bf16.mxu0 0
      %3135 = vmatmul.mubr.bf16.gmra.mrb[0].mxu0 %v3019
      %v3136 = vpop.f32.mrb[0].mxu0
      %v3137 = vadd.f32 0.0, %v3136
      %v3138 = vpop.f32.mrb[0].mxu0
      %v3139 = vpop.f32.mrb[0].mxu0
      %v3140 = vadd.f32 0.0, %v3139
      %v3141 = vpop.f32.mrb[0].mxu0
      %3142 = vmatprep.mubr.bf16.mxu0 0
      %3143 = vmatmul.mubr.bf16.gmra.mrb[0].mxu0 %v3020
      %v3144 = vpop.f32.mrb[0].mxu0
      %v3145 = vadd.f32 0.0, %v3144
      %v3146 = vpop.f32.mrb[0].mxu0
      %v3147 = vpop.f32.mrb[0].mxu0
      %v3148 = vadd.f32 0.0, %v3147
      %v3149 = vpop.f32.mrb[0].mxu0
      %3150 = vdwg.mxu0
      %v3151 = vadd.f32 %v3001, %v3121
      %v3152 = vadd.f32 %v3002, %v3124
      %v3153 = vadd.f32 %v3003, %v3129
      %v3154 = vadd.f32 %v3004, %v3132
      %v3155 = vadd.f32 %v3005, %v3137
      %v3156 = vadd.f32 %v3006, %v3140
      %v3157 = vadd.f32 %v3007, %v3145
      %v3158 = vadd.f32 %v3008, %v3148
      %s3159 = scalar_lea.vmem %s165, 64
      %v3160 = vld [vmem:[%s3159] sm:$0xff]
      %v3161 = vld [vmem:[%s3159 + $0x10] sm:$0xff]
      %v3162 = vld [vmem:[%s3159 + $0x20] sm:$0xff]
      %v3163 = vld [vmem:[%s3159 + $0x30] sm:$0xff]
      %v3164 = vld [vmem:[%s3159 + $0x40] sm:$0xff]
      %v3165 = vld [vmem:[%s3159 + $0x50] sm:$0xff]
      %v3166 = vld [vmem:[%s3159 + $0x60] sm:$0xff]
      %v3167 = vld [vmem:[%s3159 + $0x70] sm:$0xff]
      %v3168 = vpack.c.bf16 %v3161, %v3160
      %v3169 = vpack.c.bf16 %v3163, %v3162
      %v3170 = vpack.c.bf16 %v3165, %v3164
      %v3171 = vpack.c.bf16 %v3167, %v3166
      %s3172 = scalar_lea.vmem %s1, 1280
      %v3173 = vld [vmem:[%s3172] sm:$0xf]
      %v3174 = vld [vmem:[%s3172 + $0x4] sm:$0xf]
      %v3175 = vld [vmem:[%s3172 + $0x8] sm:$0xf]
      %v3176 = vld [vmem:[%s3172 + $0xc] sm:$0xf]
      %v3177 = vld [vmem:[%s3172 + $0x10] sm:$0xf]
      %v3178 = vld [vmem:[%s3172 + $0x14] sm:$0xf]
      %v3179 = vld [vmem:[%s3172 + $0x18] sm:$0xf]
      %v3180 = vld [vmem:[%s3172 + $0x1c] sm:$0xf]
      %v3181 = vld [vmem:[%s3172 + $0x20] sm:$0xf]
      %v3182 = vld [vmem:[%s3172 + $0x24] sm:$0xf]
      %v3183 = vld [vmem:[%s3172 + $0x28] sm:$0xf]
      %v3184 = vld [vmem:[%s3172 + $0x2c] sm:$0xf]
      %v3185 = vld [vmem:[%s3172 + $0x30] sm:$0xf]
      %v3186 = vld [vmem:[%s3172 + $0x34] sm:$0xf]
      %v3187 = vld [vmem:[%s3172 + $0x38] sm:$0xf]
      %v3188 = vld [vmem:[%s3172 + $0x3c] sm:$0xf]
      %v3205 = vunpack.c.l.b16 %v3173
      %v3206 = vunpack.c.l.b16 %v3174
      %v3207 = vunpack.c.l.b16 %v3175
      %v3208 = vunpack.c.l.b16 %v3176
      %v3209 = vunpack.c.l.b16 %v3177
      %v3210 = vunpack.c.l.b16 %v3178
      %v3211 = vunpack.c.l.b16 %v3179
      %v3212 = vunpack.c.l.b16 %v3180
      %v3213 = vunpack.c.l.b16 %v3181
      %v3214 = vunpack.c.l.b16 %v3182
      %v3215 = vunpack.c.l.b16 %v3183
      %v3216 = vunpack.c.l.b16 %v3184
      %v3217 = vunpack.c.l.b16 %v3185
      %v3218 = vunpack.c.l.b16 %v3186
      %v3219 = vunpack.c.l.b16 %v3187
      %v3220 = vunpack.c.l.b16 %v3188
      %v3221 = vpack.c.b16 %v3206, %v3205
      %v3222 = vpack.c.b16 %v3208, %v3207
      %v3223 = vpack.c.b16 %v3210, %v3209
      %v3224 = vpack.c.b16 %v3212, %v3211
      %v3225 = vpack.c.b16 %v3214, %v3213
      %v3226 = vpack.c.b16 %v3216, %v3215
      %v3227 = vpack.c.b16 %v3218, %v3217
      %v3228 = vpack.c.b16 %v3220, %v3219
      %3237 = vmatprep.subr.bf16.mxu0 0
      %3238 = vmatpush1.bf16.msra.mxu0 %v3221
      %3239 = vmatprep.subr.bf16.mxu0 0
      %3240 = vmatpush1.bf16.msra.mxu0 %v3222
      %3241 = vmatprep.subr.bf16.mxu0 0
      %3242 = vmatpush1.bf16.msra.mxu0 %v3223
      %3243 = vmatprep.subr.bf16.mxu0 0
      %3244 = vmatpush1.bf16.msra.mxu0 %v3224
      %3245 = vmatprep.subr.bf16.mxu0 0
      %3246 = vmatpush1.bf16.msra.mxu0 %v3225
      %3247 = vmatprep.subr.bf16.mxu0 0
      %3248 = vmatpush1.bf16.msra.mxu0 %v3226
      %3249 = vmatprep.subr.bf16.mxu0 0
      %3250 = vmatpush1.bf16.msra.mxu0 %v3227
      %3251 = vmatprep.subr.bf16.mxu0 0
      %3252 = vmatpush1.bf16.msra.mxu0 %v3228
      %3253 = vmatprep.subr.bf16.mxu0 0
      %3254 = vmatpush1.bf16.msra.mxu0 0
      %3255 = vmatprep.subr.bf16.mxu0 0
      %3256 = vmatpush1.bf16.msra.mxu0 0
      %3257 = vmatprep.subr.bf16.mxu0 0
      %3258 = vmatpush1.bf16.msra.mxu0 0
      %3259 = vmatprep.subr.bf16.mxu0 0
      %3260 = vmatpush1.bf16.msra.mxu0 0
      %3261 = vmatprep.subr.bf16.mxu0 0
      %3262 = vmatpush1.bf16.msra.mxu0 0
      %3263 = vmatprep.subr.bf16.mxu0 0
      %3264 = vmatpush1.bf16.msra.mxu0 0
      %3265 = vmatprep.subr.bf16.mxu0 0
      %3266 = vmatpush1.bf16.msra.mxu0 0
      %3267 = vmatprep.subr.bf16.mxu0 0
      %3268 = vmatpush1.bf16.msra.mxu0 0
      %3269 = vmatprep.mubr.bf16.mxu0 0
      %3270 = vmatmul.mubr.bf16.gmra.mrb[0].mxu0 %v3168
      %v3271 = vpop.f32.mrb[0].mxu0
      %v3272 = vadd.f32 0.0, %v3271
      %v3273 = vpop.f32.mrb[0].mxu0
      %v3274 = vpop.f32.mrb[0].mxu0
      %v3275 = vadd.f32 0.0, %v3274
      %v3276 = vpop.f32.mrb[0].mxu0
      %3277 = vmatprep.mubr.bf16.mxu0 0
      %3278 = vmatmul.mubr.bf16.gmra.mrb[0].mxu0 %v3169
      %v3279 = vpop.f32.mrb[0].mxu0
      %v3280 = vadd.f32 0.0, %v3279
      %v3281 = vpop.f32.mrb[0].mxu0
      %v3282 = vpop.f32.mrb[0].mxu0
      %v3283 = vadd.f32 0.0, %v3282
      %v3284 = vpop.f32.mrb[0].mxu0
      %3285 = vmatprep.mubr.bf16.mxu0 0
      %3286 = vmatmul.mubr.bf16.gmra.mrb[0].mxu0 %v3170
      %v3287 = vpop.f32.mrb[0].mxu0
      %v3288 = vadd.f32 0.0, %v3287
      %v3289 = vpop.f32.mrb[0].mxu0
      %v3290 = vpop.f32.mrb[0].mxu0
      %v3291 = vadd.f32 0.0, %v3290
      %v3292 = vpop.f32.mrb[0].mxu0
      %3293 = vmatprep.mubr.bf16.mxu0 0
      %3294 = vmatmul.mubr.bf16.gmra.mrb[0].mxu0 %v3171
      %v3295 = vpop.f32.mrb[0].mxu0
      %v3296 = vadd.f32 0.0, %v3295
      %v3297 = vpop.f32.mrb[0].mxu0
      %v3298 = vpop.f32.mrb[0].mxu0
      %v3299 = vadd.f32 0.0, %v3298
      %v3300 = vpop.f32.mrb[0].mxu0
      %3301 = vdwg.mxu0
      %v3302 = vadd.f32 %v3151, %v3272
      %v3303 = vadd.f32 %v3152, %v3275
      %v3304 = vadd.f32 %v3153, %v3280
      %v3305 = vadd.f32 %v3154, %v3283
      %v3306 = vadd.f32 %v3155, %v3288
      %v3307 = vadd.f32 %v3156, %v3291
      %v3308 = vadd.f32 %v3157, %v3296
      %v3309 = vadd.f32 %v3158, %v3299
      %v3310 = vld [vmem:[%s3159 + $0x1] sm:$0xff]
      %v3311 = vld [vmem:[%s3159 + $0x11] sm:$0xff]
      %v3312 = vld [vmem:[%s3159 + $0x21] sm:$0xff]
      %v3313 = vld [vmem:[%s3159 + $0x31] sm:$0xff]
      %v3314 = vld [vmem:[%s3159 + $0x41] sm:$0xff]
      %v3315 = vld [vmem:[%s3159 + $0x51] sm:$0xff]
      %v3316 = vld [vmem:[%s3159 + $0x61] sm:$0xff]
      %v3317 = vld [vmem:[%s3159 + $0x71] sm:$0xff]
      %v3318 = vpack.c.bf16 %v3311, %v3310
      %v3319 = vpack.c.bf16 %v3313, %v3312
      %v3320 = vpack.c.bf16 %v3315, %v3314
      %v3321 = vpack.c.bf16 %v3317, %v3316
      %s3322 = scalar_lea.vmem %s1, 1344
      %v3323 = vld [vmem:[%s3322] sm:$0xf]
      %v3324 = vld [vmem:[%s3322 + $0x4] sm:$0xf]
      %v3325 = vld [vmem:[%s3322 + $0x8] sm:$0xf]
      %v3326 = vld [vmem:[%s3322 + $0xc] sm:$0xf]
      %v3327 = vld [vmem:[%s3322 + $0x10] sm:$0xf]
      %v3328 = vld [vmem:[%s3322 + $0x14] sm:$0xf]
      %v3329 = vld [vmem:[%s3322 + $0x18] sm:$0xf]
      %v3330 = vld [vmem:[%s3322 + $0x1c] sm:$0xf]
      %v3331 = vld [vmem:[%s3322 + $0x20] sm:$0xf]
      %v3332 = vld [vmem:[%s3322 + $0x24] sm:$0xf]
      %v3333 = vld [vmem:[%s3322 + $0x28] sm:$0xf]
      %v3334 = vld [vmem:[%s3322 + $0x2c] sm:$0xf]
      %v3335 = vld [vmem:[%s3322 + $0x30] sm:$0xf]
      %v3336 = vld [vmem:[%s3322 + $0x34] sm:$0xf]
      %v3337 = vld [vmem:[%s3322 + $0x38] sm:$0xf]
      %v3338 = vld [vmem:[%s3322 + $0x3c] sm:$0xf]
      %v3355 = vunpack.c.l.b16 %v3323
      %v3356 = vunpack.c.l.b16 %v3324
      %v3357 = vunpack.c.l.b16 %v3325
      %v3358 = vunpack.c.l.b16 %v3326
      %v3359 = vunpack.c.l.b16 %v3327
      %v3360 = vunpack.c.l.b16 %v3328
      %v3361 = vunpack.c.l.b16 %v3329
      %v3362 = vunpack.c.l.b16 %v3330
      %v3363 = vunpack.c.l.b16 %v3331
      %v3364 = vunpack.c.l.b16 %v3332
      %v3365 = vunpack.c.l.b16 %v3333
      %v3366 = vunpack.c.l.b16 %v3334
      %v3367 = vunpack.c.l.b16 %v3335
      %v3368 = vunpack.c.l.b16 %v3336
      %v3369 = vunpack.c.l.b16 %v3337
      %v3370 = vunpack.c.l.b16 %v3338
      %v3371 = vpack.c.b16 %v3356, %v3355
      %v3372 = vpack.c.b16 %v3358, %v3357
      %v3373 = vpack.c.b16 %v3360, %v3359
      %v3374 = vpack.c.b16 %v3362, %v3361
      %v3375 = vpack.c.b16 %v3364, %v3363
      %v3376 = vpack.c.b16 %v3366, %v3365
      %v3377 = vpack.c.b16 %v3368, %v3367
      %v3378 = vpack.c.b16 %v3370, %v3369
      %3387 = vmatprep.subr.bf16.mxu0 0
      %3388 = vmatpush1.bf16.msra.mxu0 %v3371
      %3389 = vmatprep.subr.bf16.mxu0 0
      %3390 = vmatpush1.bf16.msra.mxu0 %v3372
      %3391 = vmatprep.subr.bf16.mxu0 0
      %3392 = vmatpush1.bf16.msra.mxu0 %v3373
      %3393 = vmatprep.subr.bf16.mxu0 0
      %3394 = vmatpush1.bf16.msra.mxu0 %v3374
      %3395 = vmatprep.subr.bf16.mxu0 0
      %3396 = vmatpush1.bf16.msra.mxu0 %v3375
      %3397 = vmatprep.subr.bf16.mxu0 0
      %3398 = vmatpush1.bf16.msra.mxu0 %v3376
      %3399 = vmatprep.subr.bf16.mxu0 0
      %3400 = vmatpush1.bf16.msra.mxu0 %v3377
      %3401 = vmatprep.subr.bf16.mxu0 0
      %3402 = vmatpush1.bf16.msra.mxu0 %v3378
      %3403 = vmatprep.subr.bf16.mxu0 0
      %3404 = vmatpush1.bf16.msra.mxu0 0
      %3405 = vmatprep.subr.bf16.mxu0 0
      %3406 = vmatpush1.bf16.msra.mxu0 0
      %3407 = vmatprep.subr.bf16.mxu0 0
      %3408 = vmatpush1.bf16.msra.mxu0 0
      %3409 = vmatprep.subr.bf16.mxu0 0
      %3410 = vmatpush1.bf16.msra.mxu0 0
      %3411 = vmatprep.subr.bf16.mxu0 0
      %3412 = vmatpush1.bf16.msra.mxu0 0
      %3413 = vmatprep.subr.bf16.mxu0 0
      %3414 = vmatpush1.bf16.msra.mxu0 0
      %3415 = vmatprep.subr.bf16.mxu0 0
      %3416 = vmatpush1.bf16.msra.mxu0 0
      %3417 = vmatprep.subr.bf16.mxu0 0
      %3418 = vmatpush1.bf16.msra.mxu0 0
      %3419 = vmatprep.mubr.bf16.mxu0 0
      %3420 = vmatmul.mubr.bf16.gmra.mrb[0].mxu0 %v3318
      %v3421 = vpop.f32.mrb[0].mxu0
      %v3422 = vadd.f32 0.0, %v3421
      %v3423 = vpop.f32.mrb[0].mxu0
      %v3424 = vpop.f32.mrb[0].mxu0
      %v3425 = vadd.f32 0.0, %v3424
      %v3426 = vpop.f32.mrb[0].mxu0
      %3427 = vmatprep.mubr.bf16.mxu0 0
      %3428 = vmatmul.mubr.bf16.gmra.mrb[0].mxu0 %v3319
      %v3429 = vpop.f32.mrb[0].mxu0
      %v3430 = vadd.f32 0.0, %v3429
      %v3431 = vpop.f32.mrb[0].mxu0
      %v3432 = vpop.f32.mrb[0].mxu0
      %v3433 = vadd.f32 0.0, %v3432
      %v3434 = vpop.f32.mrb[0].mxu0
      %3435 = vmatprep.mubr.bf16.mxu0 0
      %3436 = vmatmul.mubr.bf16.gmra.mrb[0].mxu0 %v3320
      %v3437 = vpop.f32.mrb[0].mxu0
      %v3438 = vadd.f32 0.0, %v3437
      %v3439 = vpop.f32.mrb[0].mxu0
      %v3440 = vpop.f32.mrb[0].mxu0
      %v3441 = vadd.f32 0.0, %v3440
      %v3442 = vpop.f32.mrb[0].mxu0
      %3443 = vmatprep.mubr.bf16.mxu0 0
      %3444 = vmatmul.mubr.bf16.gmra.mrb[0].mxu0 %v3321
      %v3445 = vpop.f32.mrb[0].mxu0
      %v3446 = vadd.f32 0.0, %v3445
      %v3447 = vpop.f32.mrb[0].mxu0
      %v3448 = vpop.f32.mrb[0].mxu0
      %v3449 = vadd.f32 0.0, %v3448
      %v3450 = vpop.f32.mrb[0].mxu0
      %3451 = vdwg.mxu0
      %v3452 = vadd.f32 %v3302, %v3422
      %v3453 = vadd.f32 %v3303, %v3425
      %v3454 = vadd.f32 %v3304, %v3430
      %v3455 = vadd.f32 %v3305, %v3433
      %v3456 = vadd.f32 %v3306, %v3438
      %v3457 = vadd.f32 %v3307, %v3441
      %v3458 = vadd.f32 %v3308, %v3446
      %v3459 = vadd.f32 %v3309, %v3449
      %v3460 = vld [vmem:[%s3159 + $0x2] sm:$0xff]
      %v3461 = vld [vmem:[%s3159 + $0x12] sm:$0xff]
      %v3462 = vld [vmem:[%s3159 + $0x22] sm:$0xff]
      %v3463 = vld [vmem:[%s3159 + $0x32] sm:$0xff]
      %v3464 = vld [vmem:[%s3159 + $0x42] sm:$0xff]
      %v3465 = vld [vmem:[%s3159 + $0x52] sm:$0xff]
      %v3466 = vld [vmem:[%s3159 + $0x62] sm:$0xff]
      %v3467 = vld [vmem:[%s3159 + $0x72] sm:$0xff]
      %v3468 = vpack.c.bf16 %v3461, %v3460
      %v3469 = vpack.c.bf16 %v3463, %v3462
      %v3470 = vpack.c.bf16 %v3465, %v3464
      %v3471 = vpack.c.bf16 %v3467, %v3466
      %s3472 = scalar_lea.vmem %s1, 1408
      %v3473 = vld [vmem:[%s3472] sm:$0xf]
      %v3474 = vld [vmem:[%s3472 + $0x4] sm:$0xf]
      %v3475 = vld [vmem:[%s3472 + $0x8] sm:$0xf]
      %v3476 = vld [vmem:[%s3472 + $0xc] sm:$0xf]
      %v3477 = vld [vmem:[%s3472 + $0x10] sm:$0xf]
      %v3478 = vld [vmem:[%s3472 + $0x14] sm:$0xf]
      %v3479 = vld [vmem:[%s3472 + $0x18] sm:$0xf]
      %v3480 = vld [vmem:[%s3472 + $0x1c] sm:$0xf]
      %v3481 = vld [vmem:[%s3472 + $0x20] sm:$0xf]
      %v3482 = vld [vmem:[%s3472 + $0x24] sm:$0xf]
      %v3483 = vld [vmem:[%s3472 + $0x28] sm:$0xf]
      %v3484 = vld [vmem:[%s3472 + $0x2c] sm:$0xf]
      %v3485 = vld [vmem:[%s3472 + $0x30] sm:$0xf]
      %v3486 = vld [vmem:[%s3472 + $0x34] sm:$0xf]
      %v3487 = vld [vmem:[%s3472 + $0x38] sm:$0xf]
      %v3488 = vld [vmem:[%s3472 + $0x3c] sm:$0xf]
      %v3505 = vunpack.c.l.b16 %v3473
      %v3506 = vunpack.c.l.b16 %v3474
      %v3507 = vunpack.c.l.b16 %v3475
      %v3508 = vunpack.c.l.b16 %v3476
      %v3509 = vunpack.c.l.b16 %v3477
      %v3510 = vunpack.c.l.b16 %v3478
      %v3511 = vunpack.c.l.b16 %v3479
      %v3512 = vunpack.c.l.b16 %v3480
      %v3513 = vunpack.c.l.b16 %v3481
      %v3514 = vunpack.c.l.b16 %v3482
      %v3515 = vunpack.c.l.b16 %v3483
      %v3516 = vunpack.c.l.b16 %v3484
      %v3517 = vunpack.c.l.b16 %v3485
      %v3518 = vunpack.c.l.b16 %v3486
      %v3519 = vunpack.c.l.b16 %v3487
      %v3520 = vunpack.c.l.b16 %v3488
      %v3521 = vpack.c.b16 %v3506, %v3505
      %v3522 = vpack.c.b16 %v3508, %v3507
      %v3523 = vpack.c.b16 %v3510, %v3509
      %v3524 = vpack.c.b16 %v3512, %v3511
      %v3525 = vpack.c.b16 %v3514, %v3513
      %v3526 = vpack.c.b16 %v3516, %v3515
      %v3527 = vpack.c.b16 %v3518, %v3517
      %v3528 = vpack.c.b16 %v3520, %v3519
      %3537 = vmatprep.subr.bf16.mxu0 0
      %3538 = vmatpush1.bf16.msra.mxu0 %v3521
      %3539 = vmatprep.subr.bf16.mxu0 0
      %3540 = vmatpush1.bf16.msra.mxu0 %v3522
      %3541 = vmatprep.subr.bf16.mxu0 0
      %3542 = vmatpush1.bf16.msra.mxu0 %v3523
      %3543 = vmatprep.subr.bf16.mxu0 0
      %3544 = vmatpush1.bf16.msra.mxu0 %v3524
      %3545 = vmatprep.subr.bf16.mxu0 0
      %3546 = vmatpush1.bf16.msra.mxu0 %v3525
      %3547 = vmatprep.subr.bf16.mxu0 0
      %3548 = vmatpush1.bf16.msra.mxu0 %v3526
      %3549 = vmatprep.subr.bf16.mxu0 0
      %3550 = vmatpush1.bf16.msra.mxu0 %v3527
      %3551 = vmatprep.subr.bf16.mxu0 0
      %3552 = vmatpush1.bf16.msra.mxu0 %v3528
      %3553 = vmatprep.subr.bf16.mxu0 0
      %3554 = vmatpush1.bf16.msra.mxu0 0
      %3555 = vmatprep.subr.bf16.mxu0 0
      %3556 = vmatpush1.bf16.msra.mxu0 0
      %3557 = vmatprep.subr.bf16.mxu0 0
      %3558 = vmatpush1.bf16.msra.mxu0 0
      %3559 = vmatprep.subr.bf16.mxu0 0
      %3560 = vmatpush1.bf16.msra.mxu0 0
      %3561 = vmatprep.subr.bf16.mxu0 0
      %3562 = vmatpush1.bf16.msra.mxu0 0
      %3563 = vmatprep.subr.bf16.mxu0 0
      %3564 = vmatpush1.bf16.msra.mxu0 0
      %3565 = vmatprep.subr.bf16.mxu0 0
      %3566 = vmatpush1.bf16.msra.mxu0 0
      %3567 = vmatprep.subr.bf16.mxu0 0
      %3568 = vmatpush1.bf16.msra.mxu0 0
      %3569 = vmatprep.mubr.bf16.mxu0 0
      %3570 = vmatmul.mubr.bf16.gmra.mrb[0].mxu0 %v3468
      %v3571 = vpop.f32.mrb[0].mxu0
      %v3572 = vadd.f32 0.0, %v3571
      %v3573 = vpop.f32.mrb[0].mxu0
      %v3574 = vpop.f32.mrb[0].mxu0
      %v3575 = vadd.f32 0.0, %v3574
      %v3576 = vpop.f32.mrb[0].mxu0
      %3577 = vmatprep.mubr.bf16.mxu0 0
      %3578 = vmatmul.mubr.bf16.gmra.mrb[0].mxu0 %v3469
      %v3579 = vpop.f32.mrb[0].mxu0
      %v3580 = vadd.f32 0.0, %v3579
      %v3581 = vpop.f32.mrb[0].mxu0
      %v3582 = vpop.f32.mrb[0].mxu0
      %v3583 = vadd.f32 0.0, %v3582
      %v3584 = vpop.f32.mrb[0].mxu0
      %3585 = vmatprep.mubr.bf16.mxu0 0
      %3586 = vmatmul.mubr.bf16.gmra.mrb[0].mxu0 %v3470
      %v3587 = vpop.f32.mrb[0].mxu0
      %v3588 = vadd.f32 0.0, %v3587
      %v3589 = vpop.f32.mrb[0].mxu0
      %v3590 = vpop.f32.mrb[0].mxu0
      %v3591 = vadd.f32 0.0, %v3590
      %v3592 = vpop.f32.mrb[0].mxu0
      %3593 = vmatprep.mubr.bf16.mxu0 0
      %3594 = vmatmul.mubr.bf16.gmra.mrb[0].mxu0 %v3471
      %v3595 = vpop.f32.mrb[0].mxu0
      %v3596 = vadd.f32 0.0, %v3595
      %v3597 = vpop.f32.mrb[0].mxu0
      %v3598 = vpop.f32.mrb[0].mxu0
      %v3599 = vadd.f32 0.0, %v3598
      %v3600 = vpop.f32.mrb[0].mxu0
      %3601 = vdwg.mxu0
      %v3602 = vadd.f32 %v3452, %v3572
      %v3603 = vadd.f32 %v3453, %v3575
      %v3604 = vadd.f32 %v3454, %v3580
      %v3605 = vadd.f32 %v3455, %v3583
      %v3606 = vadd.f32 %v3456, %v3588
      %v3607 = vadd.f32 %v3457, %v3591
      %v3608 = vadd.f32 %v3458, %v3596
      %v3609 = vadd.f32 %v3459, %v3599
      %v3610 = vld [vmem:[%s3159 + $0x3] sm:$0xff]
      %v3611 = vld [vmem:[%s3159 + $0x13] sm:$0xff]
      %v3612 = vld [vmem:[%s3159 + $0x23] sm:$0xff]
      %v3613 = vld [vmem:[%s3159 + $0x33] sm:$0xff]
      %v3614 = vld [vmem:[%s3159 + $0x43] sm:$0xff]
      %v3615 = vld [vmem:[%s3159 + $0x53] sm:$0xff]
      %v3616 = vld [vmem:[%s3159 + $0x63] sm:$0xff]
      %v3617 = vld [vmem:[%s3159 + $0x73] sm:$0xff]
      %v3618 = vpack.c.bf16 %v3611, %v3610
      %v3619 = vpack.c.bf16 %v3613, %v3612
      %v3620 = vpack.c.bf16 %v3615, %v3614
      %v3621 = vpack.c.bf16 %v3617, %v3616
      %s3622 = scalar_lea.vmem %s1, 1472
      %v3623 = vld [vmem:[%s3622] sm:$0xf]
      %v3624 = vld [vmem:[%s3622 + $0x4] sm:$0xf]
      %v3625 = vld [vmem:[%s3622 + $0x8] sm:$0xf]
      %v3626 = vld [vmem:[%s3622 + $0xc] sm:$0xf]
      %v3627 = vld [vmem:[%s3622 + $0x10] sm:$0xf]
      %v3628 = vld [vmem:[%s3622 + $0x14] sm:$0xf]
      %v3629 = vld [vmem:[%s3622 + $0x18] sm:$0xf]
      %v3630 = vld [vmem:[%s3622 + $0x1c] sm:$0xf]
      %v3631 = vld [vmem:[%s3622 + $0x20] sm:$0xf]
      %v3632 = vld [vmem:[%s3622 + $0x24] sm:$0xf]
      %v3633 = vld [vmem:[%s3622 + $0x28] sm:$0xf]
      %v3634 = vld [vmem:[%s3622 + $0x2c] sm:$0xf]
      %v3635 = vld [vmem:[%s3622 + $0x30] sm:$0xf]
      %v3636 = vld [vmem:[%s3622 + $0x34] sm:$0xf]
      %v3637 = vld [vmem:[%s3622 + $0x38] sm:$0xf]
      %v3638 = vld [vmem:[%s3622 + $0x3c] sm:$0xf]
      %v3655 = vunpack.c.l.b16 %v3623
      %v3656 = vunpack.c.l.b16 %v3624
      %v3657 = vunpack.c.l.b16 %v3625
      %v3658 = vunpack.c.l.b16 %v3626
      %v3659 = vunpack.c.l.b16 %v3627
      %v3660 = vunpack.c.l.b16 %v3628
      %v3661 = vunpack.c.l.b16 %v3629
      %v3662 = vunpack.c.l.b16 %v3630
      %v3663 = vunpack.c.l.b16 %v3631
      %v3664 = vunpack.c.l.b16 %v3632
      %v3665 = vunpack.c.l.b16 %v3633
      %v3666 = vunpack.c.l.b16 %v3634
      %v3667 = vunpack.c.l.b16 %v3635
      %v3668 = vunpack.c.l.b16 %v3636
      %v3669 = vunpack.c.l.b16 %v3637
      %v3670 = vunpack.c.l.b16 %v3638
      %v3671 = vpack.c.b16 %v3656, %v3655
      %v3672 = vpack.c.b16 %v3658, %v3657
      %v3673 = vpack.c.b16 %v3660, %v3659
      %v3674 = vpack.c.b16 %v3662, %v3661
      %v3675 = vpack.c.b16 %v3664, %v3663
      %v3676 = vpack.c.b16 %v3666, %v3665
      %v3677 = vpack.c.b16 %v3668, %v3667
      %v3678 = vpack.c.b16 %v3670, %v3669
      %3687 = vmatprep.subr.bf16.mxu0 0
      %3688 = vmatpush1.bf16.msra.mxu0 %v3671
      %3689 = vmatprep.subr.bf16.mxu0 0
      %3690 = vmatpush1.bf16.msra.mxu0 %v3672
      %3691 = vmatprep.subr.bf16.mxu0 0
      %3692 = vmatpush1.bf16.msra.mxu0 %v3673
      %3693 = vmatprep.subr.bf16.mxu0 0
      %3694 = vmatpush1.bf16.msra.mxu0 %v3674
      %3695 = vmatprep.subr.bf16.mxu0 0
      %3696 = vmatpush1.bf16.msra.mxu0 %v3675
      %3697 = vmatprep.subr.bf16.mxu0 0
      %3698 = vmatpush1.bf16.msra.mxu0 %v3676
      %3699 = vmatprep.subr.bf16.mxu0 0
      %3700 = vmatpush1.bf16.msra.mxu0 %v3677
      %3701 = vmatprep.subr.bf16.mxu0 0
      %3702 = vmatpush1.bf16.msra.mxu0 %v3678
      %3703 = vmatprep.subr.bf16.mxu0 0
      %3704 = vmatpush1.bf16.msra.mxu0 0
      %3705 = vmatprep.subr.bf16.mxu0 0
      %3706 = vmatpush1.bf16.msra.mxu0 0
      %3707 = vmatprep.subr.bf16.mxu0 0
      %3708 = vmatpush1.bf16.msra.mxu0 0
      %3709 = vmatprep.subr.bf16.mxu0 0
      %3710 = vmatpush1.bf16.msra.mxu0 0
      %3711 = vmatprep.subr.bf16.mxu0 0
      %3712 = vmatpush1.bf16.msra.mxu0 0
      %3713 = vmatprep.subr.bf16.mxu0 0
      %3714 = vmatpush1.bf16.msra.mxu0 0
      %3715 = vmatprep.subr.bf16.mxu0 0
      %3716 = vmatpush1.bf16.msra.mxu0 0
      %3717 = vmatprep.subr.bf16.mxu0 0
      %3718 = vmatpush1.bf16.msra.mxu0 0
      %3719 = vmatprep.mubr.bf16.mxu0 0
      %3720 = vmatmul.mubr.bf16.gmra.mrb[0].mxu0 %v3618
      %v3721 = vpop.f32.mrb[0].mxu0
      %v3722 = vadd.f32 0.0, %v3721
      %v3723 = vpop.f32.mrb[0].mxu0
      %v3724 = vpop.f32.mrb[0].mxu0
      %v3725 = vadd.f32 0.0, %v3724
      %v3726 = vpop.f32.mrb[0].mxu0
      %3727 = vmatprep.mubr.bf16.mxu0 0
      %3728 = vmatmul.mubr.bf16.gmra.mrb[0].mxu0 %v3619
      %v3729 = vpop.f32.mrb[0].mxu0
      %v3730 = vadd.f32 0.0, %v3729
      %v3731 = vpop.f32.mrb[0].mxu0
      %v3732 = vpop.f32.mrb[0].mxu0
      %v3733 = vadd.f32 0.0, %v3732
      %v3734 = vpop.f32.mrb[0].mxu0
      %3735 = vmatprep.mubr.bf16.mxu0 0
      %3736 = vmatmul.mubr.bf16.gmra.mrb[0].mxu0 %v3620
      %v3737 = vpop.f32.mrb[0].mxu0
      %v3738 = vadd.f32 0.0, %v3737
      %v3739 = vpop.f32.mrb[0].mxu0
      %v3740 = vpop.f32.mrb[0].mxu0
      %v3741 = vadd.f32 0.0, %v3740
      %v3742 = vpop.f32.mrb[0].mxu0
      %3743 = vmatprep.mubr.bf16.mxu0 0
      %3744 = vmatmul.mubr.bf16.gmra.mrb[0].mxu0 %v3621
      %v3745 = vpop.f32.mrb[0].mxu0
      %v3746 = vadd.f32 0.0, %v3745
      %v3747 = vpop.f32.mrb[0].mxu0
      %v3748 = vpop.f32.mrb[0].mxu0
      %v3749 = vadd.f32 0.0, %v3748
      %v3750 = vpop.f32.mrb[0].mxu0
      %3751 = vdwg.mxu0
      %v3752 = vadd.f32 %v3602, %v3722
      %v3753 = vadd.f32 %v3603, %v3725
      %v3754 = vadd.f32 %v3604, %v3730
      %v3755 = vadd.f32 %v3605, %v3733
      %v3756 = vadd.f32 %v3606, %v3738
      %v3757 = vadd.f32 %v3607, %v3741
      %v3758 = vadd.f32 %v3608, %v3746
      %v3759 = vadd.f32 %v3609, %v3749
      %v3760 = vld [vmem:[%s3159 + $0x4] sm:$0xff]
      %v3761 = vld [vmem:[%s3159 + $0x14] sm:$0xff]
      %v3762 = vld [vmem:[%s3159 + $0x24] sm:$0xff]
      %v3763 = vld [vmem:[%s3159 + $0x34] sm:$0xff]
      %v3764 = vld [vmem:[%s3159 + $0x44] sm:$0xff]
      %v3765 = vld [vmem:[%s3159 + $0x54] sm:$0xff]
      %v3766 = vld [vmem:[%s3159 + $0x64] sm:$0xff]
      %v3767 = vld [vmem:[%s3159 + $0x74] sm:$0xff]
      %v3768 = vpack.c.bf16 %v3761, %v3760
      %v3769 = vpack.c.bf16 %v3763, %v3762
      %v3770 = vpack.c.bf16 %v3765, %v3764
      %v3771 = vpack.c.bf16 %v3767, %v3766
      %s3772 = scalar_lea.vmem %s1, 1536
      %v3773 = vld [vmem:[%s3772] sm:$0xf]
      %v3774 = vld [vmem:[%s3772 + $0x4] sm:$0xf]
      %v3775 = vld [vmem:[%s3772 + $0x8] sm:$0xf]
      %v3776 = vld [vmem:[%s3772 + $0xc] sm:$0xf]
      %v3777 = vld [vmem:[%s3772 + $0x10] sm:$0xf]
      %v3778 = vld [vmem:[%s3772 + $0x14] sm:$0xf]
      %v3779 = vld [vmem:[%s3772 + $0x18] sm:$0xf]
      %v3780 = vld [vmem:[%s3772 + $0x1c] sm:$0xf]
      %v3781 = vld [vmem:[%s3772 + $0x20] sm:$0xf]
      %v3782 = vld [vmem:[%s3772 + $0x24] sm:$0xf]
      %v3783 = vld [vmem:[%s3772 + $0x28] sm:$0xf]
      %v3784 = vld [vmem:[%s3772 + $0x2c] sm:$0xf]
      %v3785 = vld [vmem:[%s3772 + $0x30] sm:$0xf]
      %v3786 = vld [vmem:[%s3772 + $0x34] sm:$0xf]
      %v3787 = vld [vmem:[%s3772 + $0x38] sm:$0xf]
      %v3788 = vld [vmem:[%s3772 + $0x3c] sm:$0xf]
      %v3805 = vunpack.c.l.b16 %v3773
      %v3806 = vunpack.c.l.b16 %v3774
      %v3807 = vunpack.c.l.b16 %v3775
      %v3808 = vunpack.c.l.b16 %v3776
      %v3809 = vunpack.c.l.b16 %v3777
      %v3810 = vunpack.c.l.b16 %v3778
      %v3811 = vunpack.c.l.b16 %v3779
      %v3812 = vunpack.c.l.b16 %v3780
      %v3813 = vunpack.c.l.b16 %v3781
      %v3814 = vunpack.c.l.b16 %v3782
      %v3815 = vunpack.c.l.b16 %v3783
      %v3816 = vunpack.c.l.b16 %v3784
      %v3817 = vunpack.c.l.b16 %v3785
      %v3818 = vunpack.c.l.b16 %v3786
      %v3819 = vunpack.c.l.b16 %v3787
      %v3820 = vunpack.c.l.b16 %v3788
      %v3821 = vpack.c.b16 %v3806, %v3805
      %v3822 = vpack.c.b16 %v3808, %v3807
      %v3823 = vpack.c.b16 %v3810, %v3809
      %v3824 = vpack.c.b16 %v3812, %v3811
      %v3825 = vpack.c.b16 %v3814, %v3813
      %v3826 = vpack.c.b16 %v3816, %v3815
      %v3827 = vpack.c.b16 %v3818, %v3817
      %v3828 = vpack.c.b16 %v3820, %v3819
      %3837 = vmatprep.subr.bf16.mxu0 0
      %3838 = vmatpush1.bf16.msra.mxu0 %v3821
      %3839 = vmatprep.subr.bf16.mxu0 0
      %3840 = vmatpush1.bf16.msra.mxu0 %v3822
      %3841 = vmatprep.subr.bf16.mxu0 0
      %3842 = vmatpush1.bf16.msra.mxu0 %v3823
      %3843 = vmatprep.subr.bf16.mxu0 0
      %3844 = vmatpush1.bf16.msra.mxu0 %v3824
      %3845 = vmatprep.subr.bf16.mxu0 0
      %3846 = vmatpush1.bf16.msra.mxu0 %v3825
      %3847 = vmatprep.subr.bf16.mxu0 0
      %3848 = vmatpush1.bf16.msra.mxu0 %v3826
      %3849 = vmatprep.subr.bf16.mxu0 0
      %3850 = vmatpush1.bf16.msra.mxu0 %v3827
      %3851 = vmatprep.subr.bf16.mxu0 0
      %3852 = vmatpush1.bf16.msra.mxu0 %v3828
      %3853 = vmatprep.subr.bf16.mxu0 0
      %3854 = vmatpush1.bf16.msra.mxu0 0
      %3855 = vmatprep.subr.bf16.mxu0 0
      %3856 = vmatpush1.bf16.msra.mxu0 0
      %3857 = vmatprep.subr.bf16.mxu0 0
      %3858 = vmatpush1.bf16.msra.mxu0 0
      %3859 = vmatprep.subr.bf16.mxu0 0
      %3860 = vmatpush1.bf16.msra.mxu0 0
      %3861 = vmatprep.subr.bf16.mxu0 0
      %3862 = vmatpush1.bf16.msra.mxu0 0
      %3863 = vmatprep.subr.bf16.mxu0 0
      %3864 = vmatpush1.bf16.msra.mxu0 0
      %3865 = vmatprep.subr.bf16.mxu0 0
      %3866 = vmatpush1.bf16.msra.mxu0 0
      %3867 = vmatprep.subr.bf16.mxu0 0
      %3868 = vmatpush1.bf16.msra.mxu0 0
      %3869 = vmatprep.mubr.bf16.mxu0 0
      %3870 = vmatmul.mubr.bf16.gmra.mrb[0].mxu0 %v3768
      %v3871 = vpop.f32.mrb[0].mxu0
      %v3872 = vadd.f32 0.0, %v3871
      %v3873 = vpop.f32.mrb[0].mxu0
      %v3874 = vpop.f32.mrb[0].mxu0
      %v3875 = vadd.f32 0.0, %v3874
      %v3876 = vpop.f32.mrb[0].mxu0
      %3877 = vmatprep.mubr.bf16.mxu0 0
      %3878 = vmatmul.mubr.bf16.gmra.mrb[0].mxu0 %v3769
      %v3879 = vpop.f32.mrb[0].mxu0
      %v3880 = vadd.f32 0.0, %v3879
      %v3881 = vpop.f32.mrb[0].mxu0
      %v3882 = vpop.f32.mrb[0].mxu0
      %v3883 = vadd.f32 0.0, %v3882
      %v3884 = vpop.f32.mrb[0].mxu0
      %3885 = vmatprep.mubr.bf16.mxu0 0
      %3886 = vmatmul.mubr.bf16.gmra.mrb[0].mxu0 %v3770
      %v3887 = vpop.f32.mrb[0].mxu0
      %v3888 = vadd.f32 0.0, %v3887
      %v3889 = vpop.f32.mrb[0].mxu0
      %v3890 = vpop.f32.mrb[0].mxu0
      %v3891 = vadd.f32 0.0, %v3890
      %v3892 = vpop.f32.mrb[0].mxu0
      %3893 = vmatprep.mubr.bf16.mxu0 0
      %3894 = vmatmul.mubr.bf16.gmra.mrb[0].mxu0 %v3771
      %v3895 = vpop.f32.mrb[0].mxu0
      %v3896 = vadd.f32 0.0, %v3895
      %v3897 = vpop.f32.mrb[0].mxu0
      %v3898 = vpop.f32.mrb[0].mxu0
      %v3899 = vadd.f32 0.0, %v3898
      %v3900 = vpop.f32.mrb[0].mxu0
      %3901 = vdwg.mxu0
      %v3902 = vadd.f32 %v3752, %v3872
      %v3903 = vadd.f32 %v3753, %v3875
      %v3904 = vadd.f32 %v3754, %v3880
      %v3905 = vadd.f32 %v3755, %v3883
      %v3906 = vadd.f32 %v3756, %v3888
      %v3907 = vadd.f32 %v3757, %v3891
      %v3908 = vadd.f32 %v3758, %v3896
      %v3909 = vadd.f32 %v3759, %v3899
      %v3910 = vld [vmem:[%s2] sm:$0x1]
      %v3912 = vlaneseq
      %v3913 = vshrl.u32 %v3912, 7
      %v3914 = vsub.s32 0, %v3913
      %v3915 = vrot.slane %v3910, %v3914
      %v3917 = vadd.f32 %v3902, %v3915
      %v3918 = vadd.f32 %v3903, %v3915
      %v3919 = vadd.f32 %v3904, %v3915
      %v3920 = vadd.f32 %v3905, %v3915
      %v3921 = vadd.f32 %v3906, %v3915
      %v3922 = vadd.f32 %v3907, %v3915
      %v3923 = vadd.f32 %v3908, %v3915
      %v3924 = vadd.f32 %v3909, %v3915
      %v3925 = vmax.f32 %v3917, 0.0
      %v3926 = vmax.f32 %v3918, 0.0
      %v3927 = vmax.f32 %v3919, 0.0
      %v3928 = vmax.f32 %v3920, 0.0
      %v3929 = vmax.f32 %v3921, 0.0
      %v3930 = vmax.f32 %v3922, 0.0
      %v3931 = vmax.f32 %v3923, 0.0
      %v3932 = vmax.f32 %v3924, 0.0
      %3933 = vst [vmem:[%s170] sm:$0xff] %v3925
      %3934 = vst [vmem:[%s170 + $0x8] sm:$0xff] %v3926
      %3935 = vst [vmem:[%s170 + $0x10] sm:$0xff] %v3927
      %3936 = vst [vmem:[%s170 + $0x18] sm:$0xff] %v3928
      %3937 = vst [vmem:[%s170 + $0x20] sm:$0xff] %v3929
      %3938 = vst [vmem:[%s170 + $0x28] sm:$0xff] %v3930
      %3939 = vst [vmem:[%s170 + $0x30] sm:$0xff] %v3931
      %3940 = vst [vmem:[%s170 + $0x38] sm:$0xff] %v3932
      %s3941 = smul.u32 8, %s14
      %p3942 = scmp.lt.s32.totalorder %s3941, 15
      %s3943 = scalar_select %p3942, %s3941, 15
      %s3944 = smul.addr %s3943, 8
      %s3945 = scalar_lea.vmem %s3, %s3944
      // Predicated region
      $region33: #{cnn_mnist_forward.4} parent=31 // pred_check
        %p3946 = pneg %p100
      $region34: #{cnn_mnist_forward.4} parent=31 // pred_check_branch
        %3948 = sbr.rel (%p3946) target = $region36
      $region35: #{cnn_mnist_forward.4} parent=31 // pred_region
        %s3949 = smul.u32 8, %s14
      $region36: #{cnn_mnist_forward.4} parent=31 // pred_fallthru
        _
    $region32: #{cnn_mnist_forward.4} parent=5 // pred_fallthru
      _
    %p3950 = scmp.le.s32.totalorder 2, %s9
    // Predicated region
    $region37: #{cnn_mnist_forward.4} parent=5 // pred_check
      %p3951 = pneg %p3950
    $region38: #{cnn_mnist_forward.4} parent=5 // pred_check_branch
      %3953 = sbr.rel (%p3951) target = $region40
    $region39: #{cnn_mnist_forward.4} parent=5 // pred_region
      %s3954 = ssub.s32 %s9, 2
      // Predicated region
      $region41: #{cnn_mnist_forward.4} parent=39 // pred_check
        %p3955 = pneg %p106
      $region42: #{cnn_mnist_forward.4} parent=39 // pred_check_branch
        %3957 = sbr.rel (%p3955) target = $region44
      $region43: #{cnn_mnist_forward.4} parent=39 // pred_region
        %s3958 = smul.u32 8, %s15
        %p3959 = scmp.lt.s32.totalorder %s3958, 15
        %s3960 = scalar_select %p3959, %s3958, 15
        %s3961 = smul.addr %s3960, 8
        %s3962 = scalar_lea.vmem %s3, %s3961
      $region44: #{cnn_mnist_forward.4} parent=39 // pred_fallthru
        _
    $region40: #{cnn_mnist_forward.4} parent=5 // pred_fallthru
      _
  $region6: #{cnn_mnist_forward.4} parent=0 // loop_footer
    %s13 = sadd.s32 1, %s9
  $region7: #{cnn_mnist_forward.4} parent=0 // loop_footer_branch
    %8 = sbr.rel target = $region3
  $region8: #{cnn_mnist_forward.4} parent=0 // loop_exit
    _

// kernel: cnn_mnist_forward.5
$region0: #{cnn_mnist_forward.5}
  #allocation0 [shape = 'u32[]', space=smem, size = 0x4, offset = 0x4, fixed_abs, tag = 'smem constant byte address 0x4 - core index']
  #allocation1 [shape = 'u32[144,128]{1,0:T(1,128)}', space=vmem, size = 0x12000, scoped, tag = 'internal scratch']
  %s0 = inlined_call_operand.vmem [shape: bf16[2,2048], index: 0, kind: input, shape index: {}]
  %s1 = inlined_call_operand.vmem [shape: bf16[2048,512], index: 1, kind: input, shape index: {}]
  %s2 = inlined_call_operand.vmem [shape: f32[1,512], index: 2, kind: input, shape index: {}]
  %s3 = inlined_call_operand.vmem [shape: bf16[512,128], index: 3, kind: input, shape index: {}]
  %s4 = inlined_call_operand.vmem [shape: f32[1,128], index: 4, kind: input, shape index: {}]
  %s5 = inlined_call_operand.hbm [shape: f32[2,128], index: 5, kind: output, shape index: {}]
  %s6 = sld [smem:[#allocation0]]
  $region30: #{cnn_mnist_forward.5} parent=0
    _
  %s8 = ssub.s32 1, %s6
  %s9 = scalar_select 0, %s8, %s6
  $region1: #{cnn_mnist_forward.5} parent=0
    #allocation2 [shape = 'u8[1024]{0}', space=vmem, size = 0x400, scoped, tag = 'output window, operand 0, single buffered']
    #allocation3 [shape = 's32[1]{0}', space=sflag, size = 0x4, scoped, tag = 'scoped memory for cnn_mnist_forward.5']
    %10 = vsyncpa [#allocation3], 0
    // Predicated region
    $region2: #{cnn_mnist_forward.5} parent=1 // pred_check
      _
    $region3: #{cnn_mnist_forward.5} parent=1 // pred_check_branch
      %12 = sbr.rel (0) target = $region5
    $region4: #{cnn_mnist_forward.5} parent=1 // pred_region
      _
    $region5: #{cnn_mnist_forward.5} parent=1 // pred_fallthru
      _
    // Predicated region
    $region6: #{cnn_mnist_forward.5} parent=1 // pred_check
      _
    $region7: #{cnn_mnist_forward.5} parent=1 // pred_check_branch
      %14 = sbr.rel (0) target = $region9
    $region8: #{cnn_mnist_forward.5} parent=1 // pred_region
      _
    $region9: #{cnn_mnist_forward.5} parent=1 // pred_fallthru
      _
    // Predicated region
    $region10: #{cnn_mnist_forward.5} parent=1 // pred_check
      _
    $region11: #{cnn_mnist_forward.5} parent=1 // pred_check_branch
      %16 = sbr.rel (0) target = $region13
    $region12: #{cnn_mnist_forward.5} parent=1 // pred_region
      _
    $region13: #{cnn_mnist_forward.5} parent=1 // pred_fallthru
      _
    // Predicated region
    $region14: #{cnn_mnist_forward.5} parent=1 // pred_check
      _
    $region15: #{cnn_mnist_forward.5} parent=1 // pred_check_branch
      %18 = sbr.rel (0) target = $region17
    $region16: #{cnn_mnist_forward.5} parent=1 // pred_region
      _
    $region17: #{cnn_mnist_forward.5} parent=1 // pred_fallthru
      _
    // Predicated region
    $region18: #{cnn_mnist_forward.5} parent=1 // pred_check
      _
    $region19: #{cnn_mnist_forward.5} parent=1 // pred_check_branch
      %20 = sbr.rel (0) target = $region21
    $region20: #{cnn_mnist_forward.5} parent=1 // pred_region
      _
    $region21: #{cnn_mnist_forward.5} parent=1 // pred_fallthru
      _
    %v22 = vld [vmem:[%s0] sm:$0xff]
    %v23 = vld [vmem:[%s0 + $0x8] sm:$0xff]
    %v24 = vld [vmem:[%s1] sm:$0xff]
    %v25 = vld [vmem:[%s1 + $0x8] sm:$0xff]
    %v26 = vld [vmem:[%s1 + $0x10] sm:$0xff]
    %v27 = vld [vmem:[%s1 + $0x18] sm:$0xff]
    %v28 = vld [vmem:[%s1 + $0x20] sm:$0xff]
    %v29 = vld [vmem:[%s1 + $0x28] sm:$0xff]
    %v30 = vld [vmem:[%s1 + $0x30] sm:$0xff]
    %v31 = vld [vmem:[%s1 + $0x38] sm:$0xff]
    %v32 = vld [vmem:[%s1 + $0x40] sm:$0xff]
    %v33 = vld [vmem:[%s1 + $0x48] sm:$0xff]
    %v34 = vld [vmem:[%s1 + $0x50] sm:$0xff]
    %v35 = vld [vmem:[%s1 + $0x58] sm:$0xff]
    %v36 = vld [vmem:[%s1 + $0x60] sm:$0xff]
    %v37 = vld [vmem:[%s1 + $0x68] sm:$0xff]
    %v38 = vld [vmem:[%s1 + $0x70] sm:$0xff]
    %v39 = vld [vmem:[%s1 + $0x78] sm:$0xff]
    %v40 = vld [vmem:[%s1 + $0x80] sm:$0xff]
    %v41 = vld [vmem:[%s1 + $0x88] sm:$0xff]
    %v42 = vld [vmem:[%s1 + $0x90] sm:$0xff]
    %v43 = vld [vmem:[%s1 + $0x98] sm:$0xff]
    %v44 = vld [vmem:[%s1 + $0xa0] sm:$0xff]
    %v45 = vld [vmem:[%s1 + $0xa8] sm:$0xff]
    %v46 = vld [vmem:[%s1 + $0xb0] sm:$0xff]
    %v47 = vld [vmem:[%s1 + $0xb8] sm:$0xff]
    %v48 = vld [vmem:[%s1 + $0xc0] sm:$0xff]
    %v49 = vld [vmem:[%s1 + $0xc8] sm:$0xff]
    %v50 = vld [vmem:[%s1 + $0xd0] sm:$0xff]
    %v51 = vld [vmem:[%s1 + $0xd8] sm:$0xff]
    %v52 = vld [vmem:[%s1 + $0xe0] sm:$0xff]
    %v53 = vld [vmem:[%s1 + $0xe8] sm:$0xff]
    %v54 = vld [vmem:[%s1 + $0xf0] sm:$0xff]
    %v55 = vld [vmem:[%s1 + $0xf8] sm:$0xff]
    %v56 = vld [vmem:[%s1 + $0x100] sm:$0xff]
    %v57 = vld [vmem:[%s1 + $0x108] sm:$0xff]
    %v58 = vld [vmem:[%s1 + $0x110] sm:$0xff]
    %v59 = vld [vmem:[%s1 + $0x118] sm:$0xff]
    %v60 = vld [vmem:[%s1 + $0x120] sm:$0xff]
    %v61 = vld [vmem:[%s1 + $0x128] sm:$0xff]
    %v62 = vld [vmem:[%s1 + $0x130] sm:$0xff]
    %v63 = vld [vmem:[%s1 + $0x138] sm:$0xff]
    %v64 = vld [vmem:[%s1 + $0x140] sm:$0xff]
    %v65 = vld [vmem:[%s1 + $0x148] sm:$0xff]
    %v66 = vld [vmem:[%s1 + $0x150] sm:$0xff]
    %v67 = vld [vmem:[%s1 + $0x158] sm:$0xff]
    %v68 = vld [vmem:[%s1 + $0x160] sm:$0xff]
    %v69 = vld [vmem:[%s1 + $0x168] sm:$0xff]
    %v70 = vld [vmem:[%s1 + $0x170] sm:$0xff]
    %v71 = vld [vmem:[%s1 + $0x178] sm:$0xff]
    %v72 = vld [vmem:[%s1 + $0x180] sm:$0xff]
    %v73 = vld [vmem:[%s1 + $0x188] sm:$0xff]
    %v74 = vld [vmem:[%s1 + $0x190] sm:$0xff]
    %v75 = vld [vmem:[%s1 + $0x198] sm:$0xff]
    %v76 = vld [vmem:[%s1 + $0x1a0] sm:$0xff]
    %v77 = vld [vmem:[%s1 + $0x1a8] sm:$0xff]
    %v78 = vld [vmem:[%s1 + $0x1b0] sm:$0xff]
    %v79 = vld [vmem:[%s1 + $0x1b8] sm:$0xff]
    %v80 = vld [vmem:[%s1 + $0x1c0] sm:$0xff]
    %v81 = vld [vmem:[%s1 + $0x1c8] sm:$0xff]
    %v82 = vld [vmem:[%s1 + $0x1d0] sm:$0xff]
    %v83 = vld [vmem:[%s1 + $0x1d8] sm:$0xff]
    %v84 = vld [vmem:[%s1 + $0x1e0] sm:$0xff]
    %v85 = vld [vmem:[%s1 + $0x1e8] sm:$0xff]
    %v86 = vld [vmem:[%s1 + $0x1f0] sm:$0xff]
    %v87 = vld [vmem:[%s1 + $0x1f8] sm:$0xff]
    %v88 = vld [vmem:[%s1 + $0x200] sm:$0xff]
    %v89 = vld [vmem:[%s1 + $0x208] sm:$0xff]
    %v90 = vld [vmem:[%s1 + $0x210] sm:$0xff]
    %v91 = vld [vmem:[%s1 + $0x218] sm:$0xff]
    %v92 = vld [vmem:[%s1 + $0x220] sm:$0xff]
    %v93 = vld [vmem:[%s1 + $0x228] sm:$0xff]
    %v94 = vld [vmem:[%s1 + $0x230] sm:$0xff]
    %v95 = vld [vmem:[%s1 + $0x238] sm:$0xff]
    %v96 = vld [vmem:[%s1 + $0x240] sm:$0xff]
    %v97 = vld [vmem:[%s1 + $0x248] sm:$0xff]
    %v98 = vld [vmem:[%s1 + $0x250] sm:$0xff]
    %v99 = vld [vmem:[%s1 + $0x258] sm:$0xff]
    %v100 = vld [vmem:[%s1 + $0x260] sm:$0xff]
    %v101 = vld [vmem:[%s1 + $0x268] sm:$0xff]
    %v102 = vld [vmem:[%s1 + $0x270] sm:$0xff]
    %v103 = vld [vmem:[%s1 + $0x278] sm:$0xff]
    %v104 = vld [vmem:[%s1 + $0x280] sm:$0xff]
    %v105 = vld [vmem:[%s1 + $0x288] sm:$0xff]
    %v106 = vld [vmem:[%s1 + $0x290] sm:$0xff]
    %v107 = vld [vmem:[%s1 + $0x298] sm:$0xff]
    %v108 = vld [vmem:[%s1 + $0x2a0] sm:$0xff]
    %v109 = vld [vmem:[%s1 + $0x2a8] sm:$0xff]
    %v110 = vld [vmem:[%s1 + $0x2b0] sm:$0xff]
    %v111 = vld [vmem:[%s1 + $0x2b8] sm:$0xff]
    %v112 = vld [vmem:[%s1 + $0x2c0] sm:$0xff]
    %v113 = vld [vmem:[%s1 + $0x2c8] sm:$0xff]
    %v114 = vld [vmem:[%s1 + $0x2d0] sm:$0xff]
    %v115 = vld [vmem:[%s1 + $0x2d8] sm:$0xff]
    %v116 = vld [vmem:[%s1 + $0x2e0] sm:$0xff]
    %v117 = vld [vmem:[%s1 + $0x2e8] sm:$0xff]
    %v118 = vld [vmem:[%s1 + $0x2f0] sm:$0xff]
    %v119 = vld [vmem:[%s1 + $0x2f8] sm:$0xff]
    %v120 = vld [vmem:[%s1 + $0x300] sm:$0xff]
    %v121 = vld [vmem:[%s1 + $0x308] sm:$0xff]
    %v122 = vld [vmem:[%s1 + $0x310] sm:$0xff]
    %v123 = vld [vmem:[%s1 + $0x318] sm:$0xff]
    %v124 = vld [vmem:[%s1 + $0x320] sm:$0xff]
    %v125 = vld [vmem:[%s1 + $0x328] sm:$0xff]
    %v126 = vld [vmem:[%s1 + $0x330] sm:$0xff]
    %v127 = vld [vmem:[%s1 + $0x338] sm:$0xff]
    %v128 = vld [vmem:[%s1 + $0x340] sm:$0xff]
    %v129 = vld [vmem:[%s1 + $0x348] sm:$0xff]
    %v130 = vld [vmem:[%s1 + $0x350] sm:$0xff]
    %v131 = vld [vmem:[%s1 + $0x358] sm:$0xff]
    %v132 = vld [vmem:[%s1 + $0x360] sm:$0xff]
    %v133 = vld [vmem:[%s1 + $0x368] sm:$0xff]
    %v134 = vld [vmem:[%s1 + $0x370] sm:$0xff]
    %v135 = vld [vmem:[%s1 + $0x378] sm:$0xff]
    %v136 = vld [vmem:[%s1 + $0x380] sm:$0xff]
    %v137 = vld [vmem:[%s1 + $0x388] sm:$0xff]
    %v138 = vld [vmem:[%s1 + $0x390] sm:$0xff]
    %v139 = vld [vmem:[%s1 + $0x398] sm:$0xff]
    %v140 = vld [vmem:[%s1 + $0x3a0] sm:$0xff]
    %v141 = vld [vmem:[%s1 + $0x3a8] sm:$0xff]
    %v142 = vld [vmem:[%s1 + $0x3b0] sm:$0xff]
    %v143 = vld [vmem:[%s1 + $0x3b8] sm:$0xff]
    %v144 = vld [vmem:[%s1 + $0x3c0] sm:$0xff]
    %v145 = vld [vmem:[%s1 + $0x3c8] sm:$0xff]
    %v146 = vld [vmem:[%s1 + $0x3d0] sm:$0xff]
    %v147 = vld [vmem:[%s1 + $0x3d8] sm:$0xff]
    %v148 = vld [vmem:[%s1 + $0x3e0] sm:$0xff]
    %v149 = vld [vmem:[%s1 + $0x3e8] sm:$0xff]
    %v150 = vld [vmem:[%s1 + $0x3f0] sm:$0xff]
    %v151 = vld [vmem:[%s1 + $0x3f8] sm:$0xff]
    %v152 = vld [vmem:[%s1 + $0x400] sm:$0xff]
    %v153 = vld [vmem:[%s1 + $0x408] sm:$0xff]
    %v154 = vld [vmem:[%s1 + $0x410] sm:$0xff]
    %v155 = vld [vmem:[%s1 + $0x418] sm:$0xff]
    %v156 = vld [vmem:[%s1 + $0x420] sm:$0xff]
    %v157 = vld [vmem:[%s1 + $0x428] sm:$0xff]
    %v158 = vld [vmem:[%s1 + $0x430] sm:$0xff]
    %v159 = vld [vmem:[%s1 + $0x438] sm:$0xff]
    %v160 = vld [vmem:[%s1 + $0x440] sm:$0xff]
    %v161 = vld [vmem:[%s1 + $0x448] sm:$0xff]
    %v162 = vld [vmem:[%s1 + $0x450] sm:$0xff]
    %v163 = vld [vmem:[%s1 + $0x458] sm:$0xff]
    %v164 = vld [vmem:[%s1 + $0x460] sm:$0xff]
    %v165 = vld [vmem:[%s1 + $0x468] sm:$0xff]
    %v166 = vld [vmem:[%s1 + $0x470] sm:$0xff]
    %v167 = vld [vmem:[%s1 + $0x478] sm:$0xff]
    %v168 = vld [vmem:[%s1 + $0x480] sm:$0xff]
    %v169 = vld [vmem:[%s1 + $0x488] sm:$0xff]
    %v170 = vld [vmem:[%s1 + $0x490] sm:$0xff]
    %v171 = vld [vmem:[%s1 + $0x498] sm:$0xff]
    %v172 = vld [vmem:[%s1 + $0x4a0] sm:$0xff]
    %v173 = vld [vmem:[%s1 + $0x4a8] sm:$0xff]
    %v174 = vld [vmem:[%s1 + $0x4b0] sm:$0xff]
    %v175 = vld [vmem:[%s1 + $0x4b8] sm:$0xff]
    %v176 = vld [vmem:[%s1 + $0x4c0] sm:$0xff]
    %v177 = vld [vmem:[%s1 + $0x4c8] sm:$0xff]
    %v178 = vld [vmem:[%s1 + $0x4d0] sm:$0xff]
    %v179 = vld [vmem:[%s1 + $0x4d8] sm:$0xff]
    %v180 = vld [vmem:[%s1 + $0x4e0] sm:$0xff]
    %v181 = vld [vmem:[%s1 + $0x4e8] sm:$0xff]
    %v182 = vld [vmem:[%s1 + $0x4f0] sm:$0xff]
    %v183 = vld [vmem:[%s1 + $0x4f8] sm:$0xff]
    %v184 = vld [vmem:[%s1 + $0x500] sm:$0xff]
    %v185 = vld [vmem:[%s1 + $0x508] sm:$0xff]
    %v186 = vld [vmem:[%s1 + $0x510] sm:$0xff]
    %v187 = vld [vmem:[%s1 + $0x518] sm:$0xff]
    %v188 = vld [vmem:[%s1 + $0x520] sm:$0xff]
    %v189 = vld [vmem:[%s1 + $0x528] sm:$0xff]
    %v190 = vld [vmem:[%s1 + $0x530] sm:$0xff]
    %v191 = vld [vmem:[%s1 + $0x538] sm:$0xff]
    %v192 = vld [vmem:[%s1 + $0x540] sm:$0xff]
    %v193 = vld [vmem:[%s1 + $0x548] sm:$0xff]
    %v194 = vld [vmem:[%s1 + $0x550] sm:$0xff]
    %v195 = vld [vmem:[%s1 + $0x558] sm:$0xff]
    %v196 = vld [vmem:[%s1 + $0x560] sm:$0xff]
    %v197 = vld [vmem:[%s1 + $0x568] sm:$0xff]
    %v198 = vld [vmem:[%s1 + $0x570] sm:$0xff]
    %v199 = vld [vmem:[%s1 + $0x578] sm:$0xff]
    %v200 = vld [vmem:[%s1 + $0x580] sm:$0xff]
    %v201 = vld [vmem:[%s1 + $0x588] sm:$0xff]
    %v202 = vld [vmem:[%s1 + $0x590] sm:$0xff]
    %v203 = vld [vmem:[%s1 + $0x598] sm:$0xff]
    %v204 = vld [vmem:[%s1 + $0x5a0] sm:$0xff]
    %v205 = vld [vmem:[%s1 + $0x5a8] sm:$0xff]
    %v206 = vld [vmem:[%s1 + $0x5b0] sm:$0xff]
    %v207 = vld [vmem:[%s1 + $0x5b8] sm:$0xff]
    %v208 = vld [vmem:[%s1 + $0x5c0] sm:$0xff]
    %v209 = vld [vmem:[%s1 + $0x5c8] sm:$0xff]
    %v210 = vld [vmem:[%s1 + $0x5d0] sm:$0xff]
    %v211 = vld [vmem:[%s1 + $0x5d8] sm:$0xff]
    %v212 = vld [vmem:[%s1 + $0x5e0] sm:$0xff]
    %v213 = vld [vmem:[%s1 + $0x5e8] sm:$0xff]
    %v214 = vld [vmem:[%s1 + $0x5f0] sm:$0xff]
    %v215 = vld [vmem:[%s1 + $0x5f8] sm:$0xff]
    %v216 = vld [vmem:[%s1 + $0x600] sm:$0xff]
    %v217 = vld [vmem:[%s1 + $0x608] sm:$0xff]
    %v218 = vld [vmem:[%s1 + $0x610] sm:$0xff]
    %v219 = vld [vmem:[%s1 + $0x618] sm:$0xff]
    %v220 = vld [vmem:[%s1 + $0x620] sm:$0xff]
    %v221 = vld [vmem:[%s1 + $0x628] sm:$0xff]
    %v222 = vld [vmem:[%s1 + $0x630] sm:$0xff]
    %v223 = vld [vmem:[%s1 + $0x638] sm:$0xff]
    %v224 = vld [vmem:[%s1 + $0x640] sm:$0xff]
    %v225 = vld [vmem:[%s1 + $0x648] sm:$0xff]
    %v226 = vld [vmem:[%s1 + $0x650] sm:$0xff]
    %v227 = vld [vmem:[%s1 + $0x658] sm:$0xff]
    %v228 = vld [vmem:[%s1 + $0x660] sm:$0xff]
    %v229 = vld [vmem:[%s1 + $0x668] sm:$0xff]
    %v230 = vld [vmem:[%s1 + $0x670] sm:$0xff]
    %v231 = vld [vmem:[%s1 + $0x678] sm:$0xff]
    %v232 = vld [vmem:[%s1 + $0x680] sm:$0xff]
    %v233 = vld [vmem:[%s1 + $0x688] sm:$0xff]
    %v234 = vld [vmem:[%s1 + $0x690] sm:$0xff]
    %v235 = vld [vmem:[%s1 + $0x698] sm:$0xff]
    %v236 = vld [vmem:[%s1 + $0x6a0] sm:$0xff]
    %v237 = vld [vmem:[%s1 + $0x6a8] sm:$0xff]
    %v238 = vld [vmem:[%s1 + $0x6b0] sm:$0xff]
    %v239 = vld [vmem:[%s1 + $0x6b8] sm:$0xff]
    %v240 = vld [vmem:[%s1 + $0x6c0] sm:$0xff]
    %v241 = vld [vmem:[%s1 + $0x6c8] sm:$0xff]
    %v242 = vld [vmem:[%s1 + $0x6d0] sm:$0xff]
    %v243 = vld [vmem:[%s1 + $0x6d8] sm:$0xff]
    %v244 = vld [vmem:[%s1 + $0x6e0] sm:$0xff]
    %v245 = vld [vmem:[%s1 + $0x6e8] sm:$0xff]
    %v246 = vld [vmem:[%s1 + $0x6f0] sm:$0xff]
    %v247 = vld [vmem:[%s1 + $0x6f8] sm:$0xff]
    %v248 = vld [vmem:[%s1 + $0x700] sm:$0xff]
    %v249 = vld [vmem:[%s1 + $0x708] sm:$0xff]
    %v250 = vld [vmem:[%s1 + $0x710] sm:$0xff]
    %v251 = vld [vmem:[%s1 + $0x718] sm:$0xff]
    %v252 = vld [vmem:[%s1 + $0x720] sm:$0xff]
    %v253 = vld [vmem:[%s1 + $0x728] sm:$0xff]
    %v254 = vld [vmem:[%s1 + $0x730] sm:$0xff]
    %v255 = vld [vmem:[%s1 + $0x738] sm:$0xff]
    %v256 = vld [vmem:[%s1 + $0x740] sm:$0xff]
    %v257 = vld [vmem:[%s1 + $0x748] sm:$0xff]
    %v258 = vld [vmem:[%s1 + $0x750] sm:$0xff]
    %v259 = vld [vmem:[%s1 + $0x758] sm:$0xff]
    %v260 = vld [vmem:[%s1 + $0x760] sm:$0xff]
    %v261 = vld [vmem:[%s1 + $0x768] sm:$0xff]
    %v262 = vld [vmem:[%s1 + $0x770] sm:$0xff]
    %v263 = vld [vmem:[%s1 + $0x778] sm:$0xff]
    %v264 = vld [vmem:[%s1 + $0x780] sm:$0xff]
    %v265 = vld [vmem:[%s1 + $0x788] sm:$0xff]
    %v266 = vld [vmem:[%s1 + $0x790] sm:$0xff]
    %v267 = vld [vmem:[%s1 + $0x798] sm:$0xff]
    %v268 = vld [vmem:[%s1 + $0x7a0] sm:$0xff]
    %v269 = vld [vmem:[%s1 + $0x7a8] sm:$0xff]
    %v270 = vld [vmem:[%s1 + $0x7b0] sm:$0xff]
    %v271 = vld [vmem:[%s1 + $0x7b8] sm:$0xff]
    %v272 = vld [vmem:[%s1 + $0x7c0] sm:$0xff]
    %v273 = vld [vmem:[%s1 + $0x7c8] sm:$0xff]
    %v274 = vld [vmem:[%s1 + $0x7d0] sm:$0xff]
    %v275 = vld [vmem:[%s1 + $0x7d8] sm:$0xff]
    %v276 = vld [vmem:[%s1 + $0x7e0] sm:$0xff]
    %v277 = vld [vmem:[%s1 + $0x7e8] sm:$0xff]
    %v278 = vld [vmem:[%s1 + $0x7f0] sm:$0xff]
    %v279 = vld [vmem:[%s1 + $0x7f8] sm:$0xff]
    %v280 = vld [vmem:[%s1 + $0x800] sm:$0xff]
    %v281 = vld [vmem:[%s1 + $0x808] sm:$0xff]
    %v282 = vld [vmem:[%s1 + $0x810] sm:$0xff]
    %v283 = vld [vmem:[%s1 + $0x818] sm:$0xff]
    %v284 = vld [vmem:[%s1 + $0x820] sm:$0xff]
    %v285 = vld [vmem:[%s1 + $0x828] sm:$0xff]
    %v286 = vld [vmem:[%s1 + $0x830] sm:$0xff]
    %v287 = vld [vmem:[%s1 + $0x838] sm:$0xff]
    %v288 = vld [vmem:[%s1 + $0x840] sm:$0xff]
    %v289 = vld [vmem:[%s1 + $0x848] sm:$0xff]
    %v290 = vld [vmem:[%s1 + $0x850] sm:$0xff]
    %v291 = vld [vmem:[%s1 + $0x858] sm:$0xff]
    %v292 = vld [vmem:[%s1 + $0x860] sm:$0xff]
    %v293 = vld [vmem:[%s1 + $0x868] sm:$0xff]
    %v294 = vld [vmem:[%s1 + $0x870] sm:$0xff]
    %v295 = vld [vmem:[%s1 + $0x878] sm:$0xff]
    %v296 = vld [vmem:[%s1 + $0x880] sm:$0xff]
    %v297 = vld [vmem:[%s1 + $0x888] sm:$0xff]
    %v298 = vld [vmem:[%s1 + $0x890] sm:$0xff]
    %v299 = vld [vmem:[%s1 + $0x898] sm:$0xff]
    %v300 = vld [vmem:[%s1 + $0x8a0] sm:$0xff]
    %v301 = vld [vmem:[%s1 + $0x8a8] sm:$0xff]
    %v302 = vld [vmem:[%s1 + $0x8b0] sm:$0xff]
    %v303 = vld [vmem:[%s1 + $0x8b8] sm:$0xff]
    %v304 = vld [vmem:[%s1 + $0x8c0] sm:$0xff]
    %v305 = vld [vmem:[%s1 + $0x8c8] sm:$0xff]
    %v306 = vld [vmem:[%s1 + $0x8d0] sm:$0xff]
    %v307 = vld [vmem:[%s1 + $0x8d8] sm:$0xff]
    %v308 = vld [vmem:[%s1 + $0x8e0] sm:$0xff]
    %v309 = vld [vmem:[%s1 + $0x8e8] sm:$0xff]
    %v310 = vld [vmem:[%s1 + $0x8f0] sm:$0xff]
    %v311 = vld [vmem:[%s1 + $0x8f8] sm:$0xff]
    %v312 = vld [vmem:[%s1 + $0x900] sm:$0xff]
    %v313 = vld [vmem:[%s1 + $0x908] sm:$0xff]
    %v314 = vld [vmem:[%s1 + $0x910] sm:$0xff]
    %v315 = vld [vmem:[%s1 + $0x918] sm:$0xff]
    %v316 = vld [vmem:[%s1 + $0x920] sm:$0xff]
    %v317 = vld [vmem:[%s1 + $0x928] sm:$0xff]
    %v318 = vld [vmem:[%s1 + $0x930] sm:$0xff]
    %v319 = vld [vmem:[%s1 + $0x938] sm:$0xff]
    %v320 = vld [vmem:[%s1 + $0x940] sm:$0xff]
    %v321 = vld [vmem:[%s1 + $0x948] sm:$0xff]
    %v322 = vld [vmem:[%s1 + $0x950] sm:$0xff]
    %v323 = vld [vmem:[%s1 + $0x958] sm:$0xff]
    %v324 = vld [vmem:[%s1 + $0x960] sm:$0xff]
    %v325 = vld [vmem:[%s1 + $0x968] sm:$0xff]
    %v326 = vld [vmem:[%s1 + $0x970] sm:$0xff]
    %v327 = vld [vmem:[%s1 + $0x978] sm:$0xff]
    %v328 = vld [vmem:[%s1 + $0x980] sm:$0xff]
    %v329 = vld [vmem:[%s1 + $0x988] sm:$0xff]
    %v330 = vld [vmem:[%s1 + $0x990] sm:$0xff]
    %v331 = vld [vmem:[%s1 + $0x998] sm:$0xff]
    %v332 = vld [vmem:[%s1 + $0x9a0] sm:$0xff]
    %v333 = vld [vmem:[%s1 + $0x9a8] sm:$0xff]
    %v334 = vld [vmem:[%s1 + $0x9b0] sm:$0xff]
    %v335 = vld [vmem:[%s1 + $0x9b8] sm:$0xff]
    %v336 = vld [vmem:[%s1 + $0x9c0] sm:$0xff]
    %v337 = vld [vmem:[%s1 + $0x9c8] sm:$0xff]
    %v338 = vld [vmem:[%s1 + $0x9d0] sm:$0xff]
    %v339 = vld [vmem:[%s1 + $0x9d8] sm:$0xff]
    %v340 = vld [vmem:[%s1 + $0x9e0] sm:$0xff]
    %v341 = vld [vmem:[%s1 + $0x9e8] sm:$0xff]
    %v342 = vld [vmem:[%s1 + $0x9f0] sm:$0xff]
    %v343 = vld [vmem:[%s1 + $0x9f8] sm:$0xff]
    %v344 = vld [vmem:[%s1 + $0xa00] sm:$0xff]
    %v345 = vld [vmem:[%s1 + $0xa08] sm:$0xff]
    %v346 = vld [vmem:[%s1 + $0xa10] sm:$0xff]
    %v347 = vld [vmem:[%s1 + $0xa18] sm:$0xff]
    %v348 = vld [vmem:[%s1 + $0xa20] sm:$0xff]
    %v349 = vld [vmem:[%s1 + $0xa28] sm:$0xff]
    %v350 = vld [vmem:[%s1 + $0xa30] sm:$0xff]
    %v351 = vld [vmem:[%s1 + $0xa38] sm:$0xff]
    %v352 = vld [vmem:[%s1 + $0xa40] sm:$0xff]
    %v353 = vld [vmem:[%s1 + $0xa48] sm:$0xff]
    %v354 = vld [vmem:[%s1 + $0xa50] sm:$0xff]
    %v355 = vld [vmem:[%s1 + $0xa58] sm:$0xff]
    %v356 = vld [vmem:[%s1 + $0xa60] sm:$0xff]
    %v357 = vld [vmem:[%s1 + $0xa68] sm:$0xff]
    %v358 = vld [vmem:[%s1 + $0xa70] sm:$0xff]
    %v359 = vld [vmem:[%s1 + $0xa78] sm:$0xff]
    %v360 = vld [vmem:[%s1 + $0xa80] sm:$0xff]
    %v361 = vld [vmem:[%s1 + $0xa88] sm:$0xff]
    %v362 = vld [vmem:[%s1 + $0xa90] sm:$0xff]
    %v363 = vld [vmem:[%s1 + $0xa98] sm:$0xff]
    %v364 = vld [vmem:[%s1 + $0xaa0] sm:$0xff]
    %v365 = vld [vmem:[%s1 + $0xaa8] sm:$0xff]
    %v366 = vld [vmem:[%s1 + $0xab0] sm:$0xff]
    %v367 = vld [vmem:[%s1 + $0xab8] sm:$0xff]
    %v368 = vld [vmem:[%s1 + $0xac0] sm:$0xff]
    %v369 = vld [vmem:[%s1 + $0xac8] sm:$0xff]
    %v370 = vld [vmem:[%s1 + $0xad0] sm:$0xff]
    %v371 = vld [vmem:[%s1 + $0xad8] sm:$0xff]
    %v372 = vld [vmem:[%s1 + $0xae0] sm:$0xff]
    %v373 = vld [vmem:[%s1 + $0xae8] sm:$0xff]
    %v374 = vld [vmem:[%s1 + $0xaf0] sm:$0xff]
    %v375 = vld [vmem:[%s1 + $0xaf8] sm:$0xff]
    %v376 = vld [vmem:[%s1 + $0xb00] sm:$0xff]
    %v377 = vld [vmem:[%s1 + $0xb08] sm:$0xff]
    %v378 = vld [vmem:[%s1 + $0xb10] sm:$0xff]
    %v379 = vld [vmem:[%s1 + $0xb18] sm:$0xff]
    %v380 = vld [vmem:[%s1 + $0xb20] sm:$0xff]
    %v381 = vld [vmem:[%s1 + $0xb28] sm:$0xff]
    %v382 = vld [vmem:[%s1 + $0xb30] sm:$0xff]
    %v383 = vld [vmem:[%s1 + $0xb38] sm:$0xff]
    %v384 = vld [vmem:[%s1 + $0xb40] sm:$0xff]
    %v385 = vld [vmem:[%s1 + $0xb48] sm:$0xff]
    %v386 = vld [vmem:[%s1 + $0xb50] sm:$0xff]
    %v387 = vld [vmem:[%s1 + $0xb58] sm:$0xff]
    %v388 = vld [vmem:[%s1 + $0xb60] sm:$0xff]
    %v389 = vld [vmem:[%s1 + $0xb68] sm:$0xff]
    %v390 = vld [vmem:[%s1 + $0xb70] sm:$0xff]
    %v391 = vld [vmem:[%s1 + $0xb78] sm:$0xff]
    %v392 = vld [vmem:[%s1 + $0xb80] sm:$0xff]
    %v393 = vld [vmem:[%s1 + $0xb88] sm:$0xff]
    %v394 = vld [vmem:[%s1 + $0xb90] sm:$0xff]
    %v395 = vld [vmem:[%s1 + $0xb98] sm:$0xff]
    %v396 = vld [vmem:[%s1 + $0xba0] sm:$0xff]
    %v397 = vld [vmem:[%s1 + $0xba8] sm:$0xff]
    %v398 = vld [vmem:[%s1 + $0xbb0] sm:$0xff]
    %v399 = vld [vmem:[%s1 + $0xbb8] sm:$0xff]
    %v400 = vld [vmem:[%s1 + $0xbc0] sm:$0xff]
    %v401 = vld [vmem:[%s1 + $0xbc8] sm:$0xff]
    %v402 = vld [vmem:[%s1 + $0xbd0] sm:$0xff]
    %v403 = vld [vmem:[%s1 + $0xbd8] sm:$0xff]
    %v404 = vld [vmem:[%s1 + $0xbe0] sm:$0xff]
    %v405 = vld [vmem:[%s1 + $0xbe8] sm:$0xff]
    %v406 = vld [vmem:[%s1 + $0xbf0] sm:$0xff]
    %v407 = vld [vmem:[%s1 + $0xbf8] sm:$0xff]
    %v408 = vld [vmem:[%s1 + $0xc00] sm:$0xff]
    %v409 = vld [vmem:[%s1 + $0xc08] sm:$0xff]
    %v410 = vld [vmem:[%s1 + $0xc10] sm:$0xff]
    %v411 = vld [vmem:[%s1 + $0xc18] sm:$0xff]
    %v412 = vld [vmem:[%s1 + $0xc20] sm:$0xff]
    %v413 = vld [vmem:[%s1 + $0xc28] sm:$0xff]
    %v414 = vld [vmem:[%s1 + $0xc30] sm:$0xff]
    %v415 = vld [vmem:[%s1 + $0xc38] sm:$0xff]
    %v416 = vld [vmem:[%s1 + $0xc40] sm:$0xff]
    %v417 = vld [vmem:[%s1 + $0xc48] sm:$0xff]
    %v418 = vld [vmem:[%s1 + $0xc50] sm:$0xff]
    %v419 = vld [vmem:[%s1 + $0xc58] sm:$0xff]
    %v420 = vld [vmem:[%s1 + $0xc60] sm:$0xff]
    %v421 = vld [vmem:[%s1 + $0xc68] sm:$0xff]
    %v422 = vld [vmem:[%s1 + $0xc70] sm:$0xff]
    %v423 = vld [vmem:[%s1 + $0xc78] sm:$0xff]
    %v424 = vld [vmem:[%s1 + $0xc80] sm:$0xff]
    %v425 = vld [vmem:[%s1 + $0xc88] sm:$0xff]
    %v426 = vld [vmem:[%s1 + $0xc90] sm:$0xff]
    %v427 = vld [vmem:[%s1 + $0xc98] sm:$0xff]
    %v428 = vld [vmem:[%s1 + $0xca0] sm:$0xff]
    %v429 = vld [vmem:[%s1 + $0xca8] sm:$0xff]
    %v430 = vld [vmem:[%s1 + $0xcb0] sm:$0xff]
    %v431 = vld [vmem:[%s1 + $0xcb8] sm:$0xff]
    %v432 = vld [vmem:[%s1 + $0xcc0] sm:$0xff]
    %v433 = vld [vmem:[%s1 + $0xcc8] sm:$0xff]
    %v434 = vld [vmem:[%s1 + $0xcd0] sm:$0xff]
    %v435 = vld [vmem:[%s1 + $0xcd8] sm:$0xff]
    %v436 = vld [vmem:[%s1 + $0xce0] sm:$0xff]
    %v437 = vld [vmem:[%s1 + $0xce8] sm:$0xff]
    %v438 = vld [vmem:[%s1 + $0xcf0] sm:$0xff]
    %v439 = vld [vmem:[%s1 + $0xcf8] sm:$0xff]
    %v440 = vld [vmem:[%s1 + $0xd00] sm:$0xff]
    %v441 = vld [vmem:[%s1 + $0xd08] sm:$0xff]
    %v442 = vld [vmem:[%s1 + $0xd10] sm:$0xff]
    %v443 = vld [vmem:[%s1 + $0xd18] sm:$0xff]
    %v444 = vld [vmem:[%s1 + $0xd20] sm:$0xff]
    %v445 = vld [vmem:[%s1 + $0xd28] sm:$0xff]
    %v446 = vld [vmem:[%s1 + $0xd30] sm:$0xff]
    %v447 = vld [vmem:[%s1 + $0xd38] sm:$0xff]
    %v448 = vld [vmem:[%s1 + $0xd40] sm:$0xff]
    %v449 = vld [vmem:[%s1 + $0xd48] sm:$0xff]
    %v450 = vld [vmem:[%s1 + $0xd50] sm:$0xff]
    %v451 = vld [vmem:[%s1 + $0xd58] sm:$0xff]
    %v452 = vld [vmem:[%s1 + $0xd60] sm:$0xff]
    %v453 = vld [vmem:[%s1 + $0xd68] sm:$0xff]
    %v454 = vld [vmem:[%s1 + $0xd70] sm:$0xff]
    %v455 = vld [vmem:[%s1 + $0xd78] sm:$0xff]
    %v456 = vld [vmem:[%s1 + $0xd80] sm:$0xff]
    %v457 = vld [vmem:[%s1 + $0xd88] sm:$0xff]
    %v458 = vld [vmem:[%s1 + $0xd90] sm:$0xff]
    %v459 = vld [vmem:[%s1 + $0xd98] sm:$0xff]
    %v460 = vld [vmem:[%s1 + $0xda0] sm:$0xff]
    %v461 = vld [vmem:[%s1 + $0xda8] sm:$0xff]
    %v462 = vld [vmem:[%s1 + $0xdb0] sm:$0xff]
    %v463 = vld [vmem:[%s1 + $0xdb8] sm:$0xff]
    %v464 = vld [vmem:[%s1 + $0xdc0] sm:$0xff]
    %v465 = vld [vmem:[%s1 + $0xdc8] sm:$0xff]
    %v466 = vld [vmem:[%s1 + $0xdd0] sm:$0xff]
    %v467 = vld [vmem:[%s1 + $0xdd8] sm:$0xff]
    %v468 = vld [vmem:[%s1 + $0xde0] sm:$0xff]
    %v469 = vld [vmem:[%s1 + $0xde8] sm:$0xff]
    %v470 = vld [vmem:[%s1 + $0xdf0] sm:$0xff]
    %v471 = vld [vmem:[%s1 + $0xdf8] sm:$0xff]
    %v472 = vld [vmem:[%s1 + $0xe00] sm:$0xff]
    %v473 = vld [vmem:[%s1 + $0xe08] sm:$0xff]
    %v474 = vld [vmem:[%s1 + $0xe10] sm:$0xff]
    %v475 = vld [vmem:[%s1 + $0xe18] sm:$0xff]
    %v476 = vld [vmem:[%s1 + $0xe20] sm:$0xff]
    %v477 = vld [vmem:[%s1 + $0xe28] sm:$0xff]
    %v478 = vld [vmem:[%s1 + $0xe30] sm:$0xff]
    %v479 = vld [vmem:[%s1 + $0xe38] sm:$0xff]
    %v480 = vld [vmem:[%s1 + $0xe40] sm:$0xff]
    %v481 = vld [vmem:[%s1 + $0xe48] sm:$0xff]
    %v482 = vld [vmem:[%s1 + $0xe50] sm:$0xff]
    %v483 = vld [vmem:[%s1 + $0xe58] sm:$0xff]
    %v484 = vld [vmem:[%s1 + $0xe60] sm:$0xff]
    %v485 = vld [vmem:[%s1 + $0xe68] sm:$0xff]
    %v486 = vld [vmem:[%s1 + $0xe70] sm:$0xff]
    %v487 = vld [vmem:[%s1 + $0xe78] sm:$0xff]
    %v488 = vld [vmem:[%s1 + $0xe80] sm:$0xff]
    %v489 = vld [vmem:[%s1 + $0xe88] sm:$0xff]
    %v490 = vld [vmem:[%s1 + $0xe90] sm:$0xff]
    %v491 = vld [vmem:[%s1 + $0xe98] sm:$0xff]
    %v492 = vld [vmem:[%s1 + $0xea0] sm:$0xff]
    %v493 = vld [vmem:[%s1 + $0xea8] sm:$0xff]
    %v494 = vld [vmem:[%s1 + $0xeb0] sm:$0xff]
    %v495 = vld [vmem:[%s1 + $0xeb8] sm:$0xff]
    %v496 = vld [vmem:[%s1 + $0xec0] sm:$0xff]
    %v497 = vld [vmem:[%s1 + $0xec8] sm:$0xff]
    %v498 = vld [vmem:[%s1 + $0xed0] sm:$0xff]
    %v499 = vld [vmem:[%s1 + $0xed8] sm:$0xff]
    %v500 = vld [vmem:[%s1 + $0xee0] sm:$0xff]
    %v501 = vld [vmem:[%s1 + $0xee8] sm:$0xff]
    %v502 = vld [vmem:[%s1 + $0xef0] sm:$0xff]
    %v503 = vld [vmem:[%s1 + $0xef8] sm:$0xff]
    %v504 = vld [vmem:[%s1 + $0xf00] sm:$0xff]
    %v505 = vld [vmem:[%s1 + $0xf08] sm:$0xff]
    %v506 = vld [vmem:[%s1 + $0xf10] sm:$0xff]
    %v507 = vld [vmem:[%s1 + $0xf18] sm:$0xff]
    %v508 = vld [vmem:[%s1 + $0xf20] sm:$0xff]
    %v509 = vld [vmem:[%s1 + $0xf28] sm:$0xff]
    %v510 = vld [vmem:[%s1 + $0xf30] sm:$0xff]
    %v511 = vld [vmem:[%s1 + $0xf38] sm:$0xff]
    %v512 = vld [vmem:[%s1 + $0xf40] sm:$0xff]
    %v513 = vld [vmem:[%s1 + $0xf48] sm:$0xff]
    %v514 = vld [vmem:[%s1 + $0xf50] sm:$0xff]
    %v515 = vld [vmem:[%s1 + $0xf58] sm:$0xff]
    %v516 = vld [vmem:[%s1 + $0xf60] sm:$0xff]
    %v517 = vld [vmem:[%s1 + $0xf68] sm:$0xff]
    %v518 = vld [vmem:[%s1 + $0xf70] sm:$0xff]
    %v519 = vld [vmem:[%s1 + $0xf78] sm:$0xff]
    %v520 = vld [vmem:[%s1 + $0xf80] sm:$0xff]
    %v521 = vld [vmem:[%s1 + $0xf88] sm:$0xff]
    %v522 = vld [vmem:[%s1 + $0xf90] sm:$0xff]
    %v523 = vld [vmem:[%s1 + $0xf98] sm:$0xff]
    %v524 = vld [vmem:[%s1 + $0xfa0] sm:$0xff]
    %v525 = vld [vmem:[%s1 + $0xfa8] sm:$0xff]
    %v526 = vld [vmem:[%s1 + $0xfb0] sm:$0xff]
    %v527 = vld [vmem:[%s1 + $0xfb8] sm:$0xff]
    %v528 = vld [vmem:[%s1 + $0xfc0] sm:$0xff]
    %v529 = vld [vmem:[%s1 + $0xfc8] sm:$0xff]
    %v530 = vld [vmem:[%s1 + $0xfd0] sm:$0xff]
    %v531 = vld [vmem:[%s1 + $0xfd8] sm:$0xff]
    %v532 = vld [vmem:[%s1 + $0xfe0] sm:$0xff]
    %v533 = vld [vmem:[%s1 + $0xfe8] sm:$0xff]
    %v534 = vld [vmem:[%s1 + $0xff0] sm:$0xff]
    %v535 = vld [vmem:[%s1 + $0xff8] sm:$0xff]
    %v536 = vld [vmem:[%s2] sm:$0xf]
    %v538 = vlaneseq
    %v539 = vshrl.u32 %v538, 7
    %v540 = vsub.s32 0, %v539
    %v541 = vrot.slane %v536, %v540
    %v542 = vlaneseq
    %v543 = vshrl.u32 %v542, 7
    %v544 = vsub.s32 1, %v543
    %v545 = vrot.slane %v536, %v544
    %v546 = vlaneseq
    %v547 = vshrl.u32 %v546, 7
    %v548 = vsub.s32 2, %v547
    %v549 = vrot.slane %v536, %v548
    %v550 = vlaneseq
    %v551 = vshrl.u32 %v550, 7
    %v552 = vsub.s32 3, %v551
    %v553 = vrot.slane %v536, %v552
    %v560 = vcombine.high %v22, %v22
    %v562 = vunpack.c.l.s4 1966171168
    %v563 = vunpack.c.0.s8 %v562
    %v564 = vlaneseq
    %v565 = vshrl.u32 %v564, 7
    %v566 = vsub.s32 %v563, %v565
    %v567 = vrot.slane %v22, %v566
    %v569 = vunpack.c.l.s4 1966171168
    %v570 = vunpack.c.0.s8 %v569
    %v571 = vlaneseq
    %v572 = vshrl.u32 %v571, 7
    %v573 = vsub.s32 %v570, %v572
    %v574 = vrot.slane %v560, %v573
    %v575 = vcombine.high %v567, %v567
    %v576 = vcombine.high %v574, %v574
    %v578 = vunpack.c.l.s4 1966171168
    %v579 = vunpack.c.0.s8 %v578
    %v580 = vlaneseq
    %v581 = vshrl.u32 %v580, 7
    %v582 = vsub.s32 %v579, %v581
    %v583 = vrot.slane %v567, %v582
    %v585 = vunpack.c.l.s4 1966171168
    %v586 = vunpack.c.0.s8 %v585
    %v587 = vlaneseq
    %v588 = vshrl.u32 %v587, 7
    %v589 = vsub.s32 %v586, %v588
    %v590 = vrot.slane %v574, %v589
    %v592 = vunpack.c.l.s4 1966171168
    %v593 = vunpack.c.0.s8 %v592
    %v594 = vlaneseq
    %v595 = vshrl.u32 %v594, 7
    %v596 = vsub.s32 %v593, %v595
    %v597 = vrot.slane %v575, %v596
    %v599 = vunpack.c.l.s4 1966171168
    %v600 = vunpack.c.0.s8 %v599
    %v601 = vlaneseq
    %v602 = vshrl.u32 %v601, 7
    %v603 = vsub.s32 %v600, %v602
    %v604 = vrot.slane %v576, %v603
    %v605 = vcombine.high %v583, %v583
    %v606 = vcombine.high %v590, %v590
    %v607 = vcombine.high %v597, %v597
    %v608 = vcombine.high %v604, %v604
    %v609 = vcombine.high %v23, %v23
    %v611 = vunpack.c.l.s4 1966171168
    %v612 = vunpack.c.0.s8 %v611
    %v613 = vlaneseq
    %v614 = vshrl.u32 %v613, 7
    %v615 = vsub.s32 %v612, %v614
    %v616 = vrot.slane %v23, %v615
    %v618 = vunpack.c.l.s4 1966171168
    %v619 = vunpack.c.0.s8 %v618
    %v620 = vlaneseq
    %v621 = vshrl.u32 %v620, 7
    %v622 = vsub.s32 %v619, %v621
    %v623 = vrot.slane %v609, %v622
    %v624 = vcombine.high %v616, %v616
    %v625 = vcombine.high %v623, %v623
    %v627 = vunpack.c.l.s4 1966171168
    %v628 = vunpack.c.0.s8 %v627
    %v629 = vlaneseq
    %v630 = vshrl.u32 %v629, 7
    %v631 = vsub.s32 %v628, %v630
    %v632 = vrot.slane %v616, %v631
    %v634 = vunpack.c.l.s4 1966171168
    %v635 = vunpack.c.0.s8 %v634
    %v636 = vlaneseq
    %v637 = vshrl.u32 %v636, 7
    %v638 = vsub.s32 %v635, %v637
    %v639 = vrot.slane %v623, %v638
    %v641 = vunpack.c.l.s4 1966171168
    %v642 = vunpack.c.0.s8 %v641
    %v643 = vlaneseq
    %v644 = vshrl.u32 %v643, 7
    %v645 = vsub.s32 %v642, %v644
    %v646 = vrot.slane %v624, %v645
    %v648 = vunpack.c.l.s4 1966171168
    %v649 = vunpack.c.0.s8 %v648
    %v650 = vlaneseq
    %v651 = vshrl.u32 %v650, 7
    %v652 = vsub.s32 %v649, %v651
    %v653 = vrot.slane %v625, %v652
    %v654 = vcombine.high %v632, %v632
    %v655 = vcombine.high %v639, %v639
    %v656 = vcombine.high %v646, %v646
    %v657 = vcombine.high %v653, %v653
    %v1186 = vunpack.c.l.b16 %v24
    %v1187 = vunpack.c.h.b16 %v24
    %v1188 = vunpack.c.l.b16 %v25
    %v1189 = vunpack.c.h.b16 %v25
    %v1190 = vunpack.c.l.b16 %v26
    %v1191 = vunpack.c.h.b16 %v26
    %v1192 = vunpack.c.l.b16 %v27
    %v1193 = vunpack.c.h.b16 %v27
    %v1194 = vunpack.c.l.b16 %v28
    %v1195 = vunpack.c.h.b16 %v28
    %v1196 = vunpack.c.l.b16 %v29
    %v1197 = vunpack.c.h.b16 %v29
    %v1198 = vunpack.c.l.b16 %v30
    %v1199 = vunpack.c.h.b16 %v30
    %v1200 = vunpack.c.l.b16 %v31
    %v1201 = vunpack.c.h.b16 %v31
    %v1202 = vunpack.c.l.b16 %v32
    %v1203 = vunpack.c.h.b16 %v32
    %v1204 = vunpack.c.l.b16 %v33
    %v1205 = vunpack.c.h.b16 %v33
    %v1206 = vunpack.c.l.b16 %v34
    %v1207 = vunpack.c.h.b16 %v34
    %v1208 = vunpack.c.l.b16 %v35
    %v1209 = vunpack.c.h.b16 %v35
    %v1210 = vunpack.c.l.b16 %v36
    %v1211 = vunpack.c.h.b16 %v36
    %v1212 = vunpack.c.l.b16 %v37
    %v1213 = vunpack.c.h.b16 %v37
    %v1214 = vunpack.c.l.b16 %v38
    %v1215 = vunpack.c.h.b16 %v38
    %v1216 = vunpack.c.l.b16 %v39
    %v1217 = vunpack.c.h.b16 %v39
    %v1218 = vunpack.c.l.b16 %v40
    %v1219 = vunpack.c.h.b16 %v40
    %v1220 = vunpack.c.l.b16 %v41
    %v1221 = vunpack.c.h.b16 %v41
    %v1222 = vunpack.c.l.b16 %v42
    %v1223 = vunpack.c.h.b16 %v42
    %v1224 = vunpack.c.l.b16 %v43
    %v1225 = vunpack.c.h.b16 %v43
    %v1226 = vunpack.c.l.b16 %v44
    %v1227 = vunpack.c.h.b16 %v44
    %v1228 = vunpack.c.l.b16 %v45
    %v1229 = vunpack.c.h.b16 %v45
    %v1230 = vunpack.c.l.b16 %v46
    %v1231 = vunpack.c.h.b16 %v46
    %v1232 = vunpack.c.l.b16 %v47
    %v1233 = vunpack.c.h.b16 %v47
    %v1234 = vunpack.c.l.b16 %v48
    %v1235 = vunpack.c.h.b16 %v48
    %v1236 = vunpack.c.l.b16 %v49
    %v1237 = vunpack.c.h.b16 %v49
    %v1238 = vunpack.c.l.b16 %v50
    %v1239 = vunpack.c.h.b16 %v50
    %v1240 = vunpack.c.l.b16 %v51
    %v1241 = vunpack.c.h.b16 %v51
    %v1242 = vunpack.c.l.b16 %v52
    %v1243 = vunpack.c.h.b16 %v52
    %v1244 = vunpack.c.l.b16 %v53
    %v1245 = vunpack.c.h.b16 %v53
    %v1246 = vunpack.c.l.b16 %v54
    %v1247 = vunpack.c.h.b16 %v54
    %v1248 = vunpack.c.l.b16 %v55
    %v1249 = vunpack.c.h.b16 %v55
    %v1250 = vunpack.c.l.b16 %v56
    %v1251 = vunpack.c.h.b16 %v56
    %v1252 = vunpack.c.l.b16 %v57
    %v1253 = vunpack.c.h.b16 %v57
    %v1254 = vunpack.c.l.b16 %v58
    %v1255 = vunpack.c.h.b16 %v58
    %v1256 = vunpack.c.l.b16 %v59
    %v1257 = vunpack.c.h.b16 %v59
    %v1258 = vunpack.c.l.b16 %v60
    %v1259 = vunpack.c.h.b16 %v60
    %v1260 = vunpack.c.l.b16 %v61
    %v1261 = vunpack.c.h.b16 %v61
    %v1262 = vunpack.c.l.b16 %v62
    %v1263 = vunpack.c.h.b16 %v62
    %v1264 = vunpack.c.l.b16 %v63
    %v1265 = vunpack.c.h.b16 %v63
    %v1266 = vunpack.c.l.b16 %v64
    %v1267 = vunpack.c.h.b16 %v64
    %v1268 = vunpack.c.l.b16 %v65
    %v1269 = vunpack.c.h.b16 %v65
    %v1270 = vunpack.c.l.b16 %v66
    %v1271 = vunpack.c.h.b16 %v66
    %v1272 = vunpack.c.l.b16 %v67
    %v1273 = vunpack.c.h.b16 %v67
    %v1274 = vunpack.c.l.b16 %v68
    %v1275 = vunpack.c.h.b16 %v68
    %v1276 = vunpack.c.l.b16 %v69
    %v1277 = vunpack.c.h.b16 %v69
    %v1278 = vunpack.c.l.b16 %v70
    %v1279 = vunpack.c.h.b16 %v70
    %v1280 = vunpack.c.l.b16 %v71
    %v1281 = vunpack.c.h.b16 %v71
    %v1282 = vunpack.c.l.b16 %v72
    %v1283 = vunpack.c.h.b16 %v72
    %v1284 = vunpack.c.l.b16 %v73
    %v1285 = vunpack.c.h.b16 %v73
    %v1286 = vunpack.c.l.b16 %v74
    %v1287 = vunpack.c.h.b16 %v74
    %v1288 = vunpack.c.l.b16 %v75
    %v1289 = vunpack.c.h.b16 %v75
    %v1290 = vunpack.c.l.b16 %v76
    %v1291 = vunpack.c.h.b16 %v76
    %v1292 = vunpack.c.l.b16 %v77
    %v1293 = vunpack.c.h.b16 %v77
    %v1294 = vunpack.c.l.b16 %v78
    %v1295 = vunpack.c.h.b16 %v78
    %v1296 = vunpack.c.l.b16 %v79
    %v1297 = vunpack.c.h.b16 %v79
    %v1298 = vunpack.c.l.b16 %v80
    %v1299 = vunpack.c.h.b16 %v80
    %v1300 = vunpack.c.l.b16 %v81
    %v1301 = vunpack.c.h.b16 %v81
    %v1302 = vunpack.c.l.b16 %v82
    %v1303 = vunpack.c.h.b16 %v82
    %v1304 = vunpack.c.l.b16 %v83
    %v1305 = vunpack.c.h.b16 %v83
    %v1306 = vunpack.c.l.b16 %v84
    %v1307 = vunpack.c.h.b16 %v84
    %v1308 = vunpack.c.l.b16 %v85
    %v1309 = vunpack.c.h.b16 %v85
    %v1310 = vunpack.c.l.b16 %v86
    %v1311 = vunpack.c.h.b16 %v86
    %v1312 = vunpack.c.l.b16 %v87
    %v1313 = vunpack.c.h.b16 %v87
    %v1314 = vunpack.c.l.b16 %v88
    %v1315 = vunpack.c.h.b16 %v88
    %v1316 = vunpack.c.l.b16 %v89
    %v1317 = vunpack.c.h.b16 %v89
    %v1318 = vunpack.c.l.b16 %v90
    %v1319 = vunpack.c.h.b16 %v90
    %v1320 = vunpack.c.l.b16 %v91
    %v1321 = vunpack.c.h.b16 %v91
    %v1322 = vunpack.c.l.b16 %v92
    %v1323 = vunpack.c.h.b16 %v92
    %v1324 = vunpack.c.l.b16 %v93
    %v1325 = vunpack.c.h.b16 %v93
    %v1326 = vunpack.c.l.b16 %v94
    %v1327 = vunpack.c.h.b16 %v94
    %v1328 = vunpack.c.l.b16 %v95
    %v1329 = vunpack.c.h.b16 %v95
    %v1330 = vunpack.c.l.b16 %v96
    %v1331 = vunpack.c.h.b16 %v96
    %v1332 = vunpack.c.l.b16 %v97
    %v1333 = vunpack.c.h.b16 %v97
    %v1334 = vunpack.c.l.b16 %v98
    %v1335 = vunpack.c.h.b16 %v98
    %v1336 = vunpack.c.l.b16 %v99
    %v1337 = vunpack.c.h.b16 %v99
    %v1338 = vunpack.c.l.b16 %v100
    %v1339 = vunpack.c.h.b16 %v100
    %v1340 = vunpack.c.l.b16 %v101
    %v1341 = vunpack.c.h.b16 %v101
    %v1342 = vunpack.c.l.b16 %v102
    %v1343 = vunpack.c.h.b16 %v102
    %v1344 = vunpack.c.l.b16 %v103
    %v1345 = vunpack.c.h.b16 %v103
    %v1346 = vunpack.c.l.b16 %v104
    %v1347 = vunpack.c.h.b16 %v104
    %v1348 = vunpack.c.l.b16 %v105
    %v1349 = vunpack.c.h.b16 %v105
    %v1350 = vunpack.c.l.b16 %v106
    %v1351 = vunpack.c.h.b16 %v106
    %v1352 = vunpack.c.l.b16 %v107
    %v1353 = vunpack.c.h.b16 %v107
    %v1354 = vunpack.c.l.b16 %v108
    %v1355 = vunpack.c.h.b16 %v108
    %v1356 = vunpack.c.l.b16 %v109
    %v1357 = vunpack.c.h.b16 %v109
    %v1358 = vunpack.c.l.b16 %v110
    %v1359 = vunpack.c.h.b16 %v110
    %v1360 = vunpack.c.l.b16 %v111
    %v1361 = vunpack.c.h.b16 %v111
    %v1362 = vunpack.c.l.b16 %v112
    %v1363 = vunpack.c.h.b16 %v112
    %v1364 = vunpack.c.l.b16 %v113
    %v1365 = vunpack.c.h.b16 %v113
    %v1366 = vunpack.c.l.b16 %v114
    %v1367 = vunpack.c.h.b16 %v114
    %v1368 = vunpack.c.l.b16 %v115
    %v1369 = vunpack.c.h.b16 %v115
    %v1370 = vunpack.c.l.b16 %v116
    %v1371 = vunpack.c.h.b16 %v116
    %v1372 = vunpack.c.l.b16 %v117
    %v1373 = vunpack.c.h.b16 %v117
    %v1374 = vunpack.c.l.b16 %v118
    %v1375 = vunpack.c.h.b16 %v118
    %v1376 = vunpack.c.l.b16 %v119
    %v1377 = vunpack.c.h.b16 %v119
    %v1378 = vunpack.c.l.b16 %v120
    %v1379 = vunpack.c.h.b16 %v120
    %v1380 = vunpack.c.l.b16 %v121
    %v1381 = vunpack.c.h.b16 %v121
    %v1382 = vunpack.c.l.b16 %v122
    %v1383 = vunpack.c.h.b16 %v122
    %v1384 = vunpack.c.l.b16 %v123
    %v1385 = vunpack.c.h.b16 %v123
    %v1386 = vunpack.c.l.b16 %v124
    %v1387 = vunpack.c.h.b16 %v124
    %v1388 = vunpack.c.l.b16 %v125
    %v1389 = vunpack.c.h.b16 %v125
    %v1390 = vunpack.c.l.b16 %v126
    %v1391 = vunpack.c.h.b16 %v126
    %v1392 = vunpack.c.l.b16 %v127
    %v1393 = vunpack.c.h.b16 %v127
    %v1394 = vunpack.c.l.b16 %v128
    %v1395 = vunpack.c.h.b16 %v128
    %v1396 = vunpack.c.l.b16 %v129
    %v1397 = vunpack.c.h.b16 %v129
    %v1398 = vunpack.c.l.b16 %v130
    %v1399 = vunpack.c.h.b16 %v130
    %v1400 = vunpack.c.l.b16 %v131
    %v1401 = vunpack.c.h.b16 %v131
    %v1402 = vunpack.c.l.b16 %v132
    %v1403 = vunpack.c.h.b16 %v132
    %v1404 = vunpack.c.l.b16 %v133
    %v1405 = vunpack.c.h.b16 %v133
    %v1406 = vunpack.c.l.b16 %v134
    %v1407 = vunpack.c.h.b16 %v134
    %v1408 = vunpack.c.l.b16 %v135
    %v1409 = vunpack.c.h.b16 %v135
    %v1410 = vunpack.c.l.b16 %v136
    %v1411 = vunpack.c.h.b16 %v136
    %v1412 = vunpack.c.l.b16 %v137
    %v1413 = vunpack.c.h.b16 %v137
    %v1414 = vunpack.c.l.b16 %v138
    %v1415 = vunpack.c.h.b16 %v138
    %v1416 = vunpack.c.l.b16 %v139
    %v1417 = vunpack.c.h.b16 %v139
    %v1418 = vunpack.c.l.b16 %v140
    %v1419 = vunpack.c.h.b16 %v140
    %v1420 = vunpack.c.l.b16 %v141
    %v1421 = vunpack.c.h.b16 %v141
    %v1422 = vunpack.c.l.b16 %v142
    %v1423 = vunpack.c.h.b16 %v142
    %v1424 = vunpack.c.l.b16 %v143
    %v1425 = vunpack.c.h.b16 %v143
    %v1426 = vunpack.c.l.b16 %v144
    %v1427 = vunpack.c.h.b16 %v144
    %v1428 = vunpack.c.l.b16 %v145
    %v1429 = vunpack.c.h.b16 %v145
    %v1430 = vunpack.c.l.b16 %v146
    %v1431 = vunpack.c.h.b16 %v146
    %v1432 = vunpack.c.l.b16 %v147
    %v1433 = vunpack.c.h.b16 %v147
    %v1434 = vunpack.c.l.b16 %v148
    %v1435 = vunpack.c.h.b16 %v148
    %v1436 = vunpack.c.l.b16 %v149
    %v1437 = vunpack.c.h.b16 %v149
    %v1438 = vunpack.c.l.b16 %v150
    %v1439 = vunpack.c.h.b16 %v150
    %v1440 = vunpack.c.l.b16 %v151
    %v1441 = vunpack.c.h.b16 %v151
    %v1442 = vunpack.c.l.b16 %v152
    %v1443 = vunpack.c.h.b16 %v152
    %v1444 = vunpack.c.l.b16 %v153
    %v1445 = vunpack.c.h.b16 %v153
    %v1446 = vunpack.c.l.b16 %v154
    %v1447 = vunpack.c.h.b16 %v154
    %v1448 = vunpack.c.l.b16 %v155
    %v1449 = vunpack.c.h.b16 %v155
    %v1450 = vunpack.c.l.b16 %v156
    %v1451 = vunpack.c.h.b16 %v156
    %v1452 = vunpack.c.l.b16 %v157
    %v1453 = vunpack.c.h.b16 %v157
    %v1454 = vunpack.c.l.b16 %v158
    %v1455 = vunpack.c.h.b16 %v158
    %v1456 = vunpack.c.l.b16 %v159
    %v1457 = vunpack.c.h.b16 %v159
    %v1458 = vunpack.c.l.b16 %v160
    %v1459 = vunpack.c.h.b16 %v160
    %v1460 = vunpack.c.l.b16 %v161
    %v1461 = vunpack.c.h.b16 %v161
    %v1462 = vunpack.c.l.b16 %v162
    %v1463 = vunpack.c.h.b16 %v162
    %v1464 = vunpack.c.l.b16 %v163
    %v1465 = vunpack.c.h.b16 %v163
    %v1466 = vunpack.c.l.b16 %v164
    %v1467 = vunpack.c.h.b16 %v164
    %v1468 = vunpack.c.l.b16 %v165
    %v1469 = vunpack.c.h.b16 %v165
    %v1470 = vunpack.c.l.b16 %v166
    %v1471 = vunpack.c.h.b16 %v166
    %v1472 = vunpack.c.l.b16 %v167
    %v1473 = vunpack.c.h.b16 %v167
    %v1474 = vunpack.c.l.b16 %v168
    %v1475 = vunpack.c.h.b16 %v168
    %v1476 = vunpack.c.l.b16 %v169
    %v1477 = vunpack.c.h.b16 %v169
    %v1478 = vunpack.c.l.b16 %v170
    %v1479 = vunpack.c.h.b16 %v170
    %v1480 = vunpack.c.l.b16 %v171
    %v1481 = vunpack.c.h.b16 %v171
    %v1482 = vunpack.c.l.b16 %v172
    %v1483 = vunpack.c.h.b16 %v172
    %v1484 = vunpack.c.l.b16 %v173
    %v1485 = vunpack.c.h.b16 %v173
    %v1486 = vunpack.c.l.b16 %v174
    %v1487 = vunpack.c.h.b16 %v174
    %v1488 = vunpack.c.l.b16 %v175
    %v1489 = vunpack.c.h.b16 %v175
    %v1490 = vunpack.c.l.b16 %v176
    %v1491 = vunpack.c.h.b16 %v176
    %v1492 = vunpack.c.l.b16 %v177
    %v1493 = vunpack.c.h.b16 %v177
    %v1494 = vunpack.c.l.b16 %v178
    %v1495 = vunpack.c.h.b16 %v178
    %v1496 = vunpack.c.l.b16 %v179
    %v1497 = vunpack.c.h.b16 %v179
    %v1498 = vunpack.c.l.b16 %v180
    %v1499 = vunpack.c.h.b16 %v180
    %v1500 = vunpack.c.l.b16 %v181
    %v1501 = vunpack.c.h.b16 %v181
    %v1502 = vunpack.c.l.b16 %v182
    %v1503 = vunpack.c.h.b16 %v182
    %v1504 = vunpack.c.l.b16 %v183
    %v1505 = vunpack.c.h.b16 %v183
    %v1506 = vunpack.c.l.b16 %v184
    %v1507 = vunpack.c.h.b16 %v184
    %v1508 = vunpack.c.l.b16 %v185
    %v1509 = vunpack.c.h.b16 %v185
    %v1510 = vunpack.c.l.b16 %v186
    %v1511 = vunpack.c.h.b16 %v186
    %v1512 = vunpack.c.l.b16 %v187
    %v1513 = vunpack.c.h.b16 %v187
    %v1514 = vunpack.c.l.b16 %v188
    %v1515 = vunpack.c.h.b16 %v188
    %v1516 = vunpack.c.l.b16 %v189
    %v1517 = vunpack.c.h.b16 %v189
    %v1518 = vunpack.c.l.b16 %v190
    %v1519 = vunpack.c.h.b16 %v190
    %v1520 = vunpack.c.l.b16 %v191
    %v1521 = vunpack.c.h.b16 %v191
    %v1522 = vunpack.c.l.b16 %v192
    %v1523 = vunpack.c.h.b16 %v192
    %v1524 = vunpack.c.l.b16 %v193
    %v1525 = vunpack.c.h.b16 %v193
    %v1526 = vunpack.c.l.b16 %v194
    %v1527 = vunpack.c.h.b16 %v194
    %v1528 = vunpack.c.l.b16 %v195
    %v1529 = vunpack.c.h.b16 %v195
    %v1530 = vunpack.c.l.b16 %v196
    %v1531 = vunpack.c.h.b16 %v196
    %v1532 = vunpack.c.l.b16 %v197
    %v1533 = vunpack.c.h.b16 %v197
    %v1534 = vunpack.c.l.b16 %v198
    %v1535 = vunpack.c.h.b16 %v198
    %v1536 = vunpack.c.l.b16 %v199
    %v1537 = vunpack.c.h.b16 %v199
    %v1538 = vunpack.c.l.b16 %v200
    %v1539 = vunpack.c.h.b16 %v200
    %v1540 = vunpack.c.l.b16 %v201
    %v1541 = vunpack.c.h.b16 %v201
    %v1542 = vunpack.c.l.b16 %v202
    %v1543 = vunpack.c.h.b16 %v202
    %v1544 = vunpack.c.l.b16 %v203
    %v1545 = vunpack.c.h.b16 %v203
    %v1546 = vunpack.c.l.b16 %v204
    %v1547 = vunpack.c.h.b16 %v204
    %v1548 = vunpack.c.l.b16 %v205
    %v1549 = vunpack.c.h.b16 %v205
    %v1550 = vunpack.c.l.b16 %v206
    %v1551 = vunpack.c.h.b16 %v206
    %v1552 = vunpack.c.l.b16 %v207
    %v1553 = vunpack.c.h.b16 %v207
    %v1554 = vunpack.c.l.b16 %v208
    %v1555 = vunpack.c.h.b16 %v208
    %v1556 = vunpack.c.l.b16 %v209
    %v1557 = vunpack.c.h.b16 %v209
    %v1558 = vunpack.c.l.b16 %v210
    %v1559 = vunpack.c.h.b16 %v210
    %v1560 = vunpack.c.l.b16 %v211
    %v1561 = vunpack.c.h.b16 %v211
    %v1562 = vunpack.c.l.b16 %v212
    %v1563 = vunpack.c.h.b16 %v212
    %v1564 = vunpack.c.l.b16 %v213
    %v1565 = vunpack.c.h.b16 %v213
    %v1566 = vunpack.c.l.b16 %v214
    %v1567 = vunpack.c.h.b16 %v214
    %v1568 = vunpack.c.l.b16 %v215
    %v1569 = vunpack.c.h.b16 %v215
    %v1570 = vunpack.c.l.b16 %v216
    %v1571 = vunpack.c.h.b16 %v216
    %v1572 = vunpack.c.l.b16 %v217
    %v1573 = vunpack.c.h.b16 %v217
    %v1574 = vunpack.c.l.b16 %v218
    %v1575 = vunpack.c.h.b16 %v218
    %v1576 = vunpack.c.l.b16 %v219
    %v1577 = vunpack.c.h.b16 %v219
    %v1578 = vunpack.c.l.b16 %v220
    %v1579 = vunpack.c.h.b16 %v220
    %v1580 = vunpack.c.l.b16 %v221
    %v1581 = vunpack.c.h.b16 %v221
    %v1582 = vunpack.c.l.b16 %v222
    %v1583 = vunpack.c.h.b16 %v222
    %v1584 = vunpack.c.l.b16 %v223
    %v1585 = vunpack.c.h.b16 %v223
    %v1586 = vunpack.c.l.b16 %v224
    %v1587 = vunpack.c.h.b16 %v224
    %v1588 = vunpack.c.l.b16 %v225
    %v1589 = vunpack.c.h.b16 %v225
    %v1590 = vunpack.c.l.b16 %v226
    %v1591 = vunpack.c.h.b16 %v226
    %v1592 = vunpack.c.l.b16 %v227
    %v1593 = vunpack.c.h.b16 %v227
    %v1594 = vunpack.c.l.b16 %v228
    %v1595 = vunpack.c.h.b16 %v228
    %v1596 = vunpack.c.l.b16 %v229
    %v1597 = vunpack.c.h.b16 %v229
    %v1598 = vunpack.c.l.b16 %v230
    %v1599 = vunpack.c.h.b16 %v230
    %v1600 = vunpack.c.l.b16 %v231
    %v1601 = vunpack.c.h.b16 %v231
    %v1602 = vunpack.c.l.b16 %v232
    %v1603 = vunpack.c.h.b16 %v232
    %v1604 = vunpack.c.l.b16 %v233
    %v1605 = vunpack.c.h.b16 %v233
    %v1606 = vunpack.c.l.b16 %v234
    %v1607 = vunpack.c.h.b16 %v234
    %v1608 = vunpack.c.l.b16 %v235
    %v1609 = vunpack.c.h.b16 %v235
    %v1610 = vunpack.c.l.b16 %v236
    %v1611 = vunpack.c.h.b16 %v236
    %v1612 = vunpack.c.l.b16 %v237
    %v1613 = vunpack.c.h.b16 %v237
    %v1614 = vunpack.c.l.b16 %v238
    %v1615 = vunpack.c.h.b16 %v238
    %v1616 = vunpack.c.l.b16 %v239
    %v1617 = vunpack.c.h.b16 %v239
    %v1618 = vunpack.c.l.b16 %v240
    %v1619 = vunpack.c.h.b16 %v240
    %v1620 = vunpack.c.l.b16 %v241
    %v1621 = vunpack.c.h.b16 %v241
    %v1622 = vunpack.c.l.b16 %v242
    %v1623 = vunpack.c.h.b16 %v242
    %v1624 = vunpack.c.l.b16 %v243
    %v1625 = vunpack.c.h.b16 %v243
    %v1626 = vunpack.c.l.b16 %v244
    %v1627 = vunpack.c.h.b16 %v244
    %v1628 = vunpack.c.l.b16 %v245
    %v1629 = vunpack.c.h.b16 %v245
    %v1630 = vunpack.c.l.b16 %v246
    %v1631 = vunpack.c.h.b16 %v246
    %v1632 = vunpack.c.l.b16 %v247
    %v1633 = vunpack.c.h.b16 %v247
    %v1634 = vunpack.c.l.b16 %v248
    %v1635 = vunpack.c.h.b16 %v248
    %v1636 = vunpack.c.l.b16 %v249
    %v1637 = vunpack.c.h.b16 %v249
    %v1638 = vunpack.c.l.b16 %v250
    %v1639 = vunpack.c.h.b16 %v250
    %v1640 = vunpack.c.l.b16 %v251
    %v1641 = vunpack.c.h.b16 %v251
    %v1642 = vunpack.c.l.b16 %v252
    %v1643 = vunpack.c.h.b16 %v252
    %v1644 = vunpack.c.l.b16 %v253
    %v1645 = vunpack.c.h.b16 %v253
    %v1646 = vunpack.c.l.b16 %v254
    %v1647 = vunpack.c.h.b16 %v254
    %v1648 = vunpack.c.l.b16 %v255
    %v1649 = vunpack.c.h.b16 %v255
    %v1650 = vunpack.c.l.b16 %v256
    %v1651 = vunpack.c.h.b16 %v256
    %v1652 = vunpack.c.l.b16 %v257
    %v1653 = vunpack.c.h.b16 %v257
    %v1654 = vunpack.c.l.b16 %v258
    %v1655 = vunpack.c.h.b16 %v258
    %v1656 = vunpack.c.l.b16 %v259
    %v1657 = vunpack.c.h.b16 %v259
    %v1658 = vunpack.c.l.b16 %v260
    %v1659 = vunpack.c.h.b16 %v260
    %v1660 = vunpack.c.l.b16 %v261
    %v1661 = vunpack.c.h.b16 %v261
    %v1662 = vunpack.c.l.b16 %v262
    %v1663 = vunpack.c.h.b16 %v262
    %v1664 = vunpack.c.l.b16 %v263
    %v1665 = vunpack.c.h.b16 %v263
    %v1666 = vunpack.c.l.b16 %v264
    %v1667 = vunpack.c.h.b16 %v264
    %v1668 = vunpack.c.l.b16 %v265
    %v1669 = vunpack.c.h.b16 %v265
    %v1670 = vunpack.c.l.b16 %v266
    %v1671 = vunpack.c.h.b16 %v266
    %v1672 = vunpack.c.l.b16 %v267
    %v1673 = vunpack.c.h.b16 %v267
    %v1674 = vunpack.c.l.b16 %v268
    %v1675 = vunpack.c.h.b16 %v268
    %v1676 = vunpack.c.l.b16 %v269
    %v1677 = vunpack.c.h.b16 %v269
    %v1678 = vunpack.c.l.b16 %v270
    %v1679 = vunpack.c.h.b16 %v270
    %v1680 = vunpack.c.l.b16 %v271
    %v1681 = vunpack.c.h.b16 %v271
    %v1682 = vunpack.c.l.b16 %v272
    %v1683 = vunpack.c.h.b16 %v272
    %v1684 = vunpack.c.l.b16 %v273
    %v1685 = vunpack.c.h.b16 %v273
    %v1686 = vunpack.c.l.b16 %v274
    %v1687 = vunpack.c.h.b16 %v274
    %v1688 = vunpack.c.l.b16 %v275
    %v1689 = vunpack.c.h.b16 %v275
    %v1690 = vunpack.c.l.b16 %v276
    %v1691 = vunpack.c.h.b16 %v276
    %v1692 = vunpack.c.l.b16 %v277
    %v1693 = vunpack.c.h.b16 %v277
    %v1694 = vunpack.c.l.b16 %v278
    %v1695 = vunpack.c.h.b16 %v278
    %v1696 = vunpack.c.l.b16 %v279
    %v1697 = vunpack.c.h.b16 %v279
    %v1698 = vunpack.c.l.b16 %v280
    %v1699 = vunpack.c.h.b16 %v280
    %v1700 = vunpack.c.l.b16 %v281
    %v1701 = vunpack.c.h.b16 %v281
    %v1702 = vunpack.c.l.b16 %v282
    %v1703 = vunpack.c.h.b16 %v282
    %v1704 = vunpack.c.l.b16 %v283
    %v1705 = vunpack.c.h.b16 %v283
    %v1706 = vunpack.c.l.b16 %v284
    %v1707 = vunpack.c.h.b16 %v284
    %v1708 = vunpack.c.l.b16 %v285
    %v1709 = vunpack.c.h.b16 %v285
    %v1710 = vunpack.c.l.b16 %v286
    %v1711 = vunpack.c.h.b16 %v286
    %v1712 = vunpack.c.l.b16 %v287
    %v1713 = vunpack.c.h.b16 %v287
    %v1714 = vunpack.c.l.b16 %v288
    %v1715 = vunpack.c.h.b16 %v288
    %v1716 = vunpack.c.l.b16 %v289
    %v1717 = vunpack.c.h.b16 %v289
    %v1718 = vunpack.c.l.b16 %v290
    %v1719 = vunpack.c.h.b16 %v290
    %v1720 = vunpack.c.l.b16 %v291
    %v1721 = vunpack.c.h.b16 %v291
    %v1722 = vunpack.c.l.b16 %v292
    %v1723 = vunpack.c.h.b16 %v292
    %v1724 = vunpack.c.l.b16 %v293
    %v1725 = vunpack.c.h.b16 %v293
    %v1726 = vunpack.c.l.b16 %v294
    %v1727 = vunpack.c.h.b16 %v294
    %v1728 = vunpack.c.l.b16 %v295
    %v1729 = vunpack.c.h.b16 %v295
    %v1730 = vunpack.c.l.b16 %v296
    %v1731 = vunpack.c.h.b16 %v296
    %v1732 = vunpack.c.l.b16 %v297
    %v1733 = vunpack.c.h.b16 %v297
    %v1734 = vunpack.c.l.b16 %v298
    %v1735 = vunpack.c.h.b16 %v298
    %v1736 = vunpack.c.l.b16 %v299
    %v1737 = vunpack.c.h.b16 %v299
    %v1738 = vunpack.c.l.b16 %v300
    %v1739 = vunpack.c.h.b16 %v300
    %v1740 = vunpack.c.l.b16 %v301
    %v1741 = vunpack.c.h.b16 %v301
    %v1742 = vunpack.c.l.b16 %v302
    %v1743 = vunpack.c.h.b16 %v302
    %v1744 = vunpack.c.l.b16 %v303
    %v1745 = vunpack.c.h.b16 %v303
    %v1746 = vunpack.c.l.b16 %v304
    %v1747 = vunpack.c.h.b16 %v304
    %v1748 = vunpack.c.l.b16 %v305
    %v1749 = vunpack.c.h.b16 %v305
    %v1750 = vunpack.c.l.b16 %v306
    %v1751 = vunpack.c.h.b16 %v306
    %v1752 = vunpack.c.l.b16 %v307
    %v1753 = vunpack.c.h.b16 %v307
    %v1754 = vunpack.c.l.b16 %v308
    %v1755 = vunpack.c.h.b16 %v308
    %v1756 = vunpack.c.l.b16 %v309
    %v1757 = vunpack.c.h.b16 %v309
    %v1758 = vunpack.c.l.b16 %v310
    %v1759 = vunpack.c.h.b16 %v310
    %v1760 = vunpack.c.l.b16 %v311
    %v1761 = vunpack.c.h.b16 %v311
    %v1762 = vunpack.c.l.b16 %v312
    %v1763 = vunpack.c.h.b16 %v312
    %v1764 = vunpack.c.l.b16 %v313
    %v1765 = vunpack.c.h.b16 %v313
    %v1766 = vunpack.c.l.b16 %v314
    %v1767 = vunpack.c.h.b16 %v314
    %v1768 = vunpack.c.l.b16 %v315
    %v1769 = vunpack.c.h.b16 %v315
    %v1770 = vunpack.c.l.b16 %v316
    %v1771 = vunpack.c.h.b16 %v316
    %v1772 = vunpack.c.l.b16 %v317
    %v1773 = vunpack.c.h.b16 %v317
    %v1774 = vunpack.c.l.b16 %v318
    %v1775 = vunpack.c.h.b16 %v318
    %v1776 = vunpack.c.l.b16 %v319
    %v1777 = vunpack.c.h.b16 %v319
    %v1778 = vunpack.c.l.b16 %v320
    %v1779 = vunpack.c.h.b16 %v320
    %v1780 = vunpack.c.l.b16 %v321
    %v1781 = vunpack.c.h.b16 %v321
    %v1782 = vunpack.c.l.b16 %v322
    %v1783 = vunpack.c.h.b16 %v322
    %v1784 = vunpack.c.l.b16 %v323
    %v1785 = vunpack.c.h.b16 %v323
    %v1786 = vunpack.c.l.b16 %v324
    %v1787 = vunpack.c.h.b16 %v324
    %v1788 = vunpack.c.l.b16 %v325
    %v1789 = vunpack.c.h.b16 %v325
    %v1790 = vunpack.c.l.b16 %v326
    %v1791 = vunpack.c.h.b16 %v326
    %v1792 = vunpack.c.l.b16 %v327
    %v1793 = vunpack.c.h.b16 %v327
    %v1794 = vunpack.c.l.b16 %v328
    %v1795 = vunpack.c.h.b16 %v328
    %v1796 = vunpack.c.l.b16 %v329
    %v1797 = vunpack.c.h.b16 %v329
    %v1798 = vunpack.c.l.b16 %v330
    %v1799 = vunpack.c.h.b16 %v330
    %v1800 = vunpack.c.l.b16 %v331
    %v1801 = vunpack.c.h.b16 %v331
    %v1802 = vunpack.c.l.b16 %v332
    %v1803 = vunpack.c.h.b16 %v332
    %v1804 = vunpack.c.l.b16 %v333
    %v1805 = vunpack.c.h.b16 %v333
    %v1806 = vunpack.c.l.b16 %v334
    %v1807 = vunpack.c.h.b16 %v334
    %v1808 = vunpack.c.l.b16 %v335
    %v1809 = vunpack.c.h.b16 %v335
    %v1810 = vunpack.c.l.b16 %v336
    %v1811 = vunpack.c.h.b16 %v336
    %v1812 = vunpack.c.l.b16 %v337
    %v1813 = vunpack.c.h.b16 %v337
    %v1814 = vunpack.c.l.b16 %v338
    %v1815 = vunpack.c.h.b16 %v338
    %v1816 = vunpack.c.l.b16 %v339
    %v1817 = vunpack.c.h.b16 %v339
    %v1818 = vunpack.c.l.b16 %v340
    %v1819 = vunpack.c.h.b16 %v340
    %v1820 = vunpack.c.l.b16 %v341
    %v1821 = vunpack.c.h.b16 %v341
    %v1822 = vunpack.c.l.b16 %v342
    %v1823 = vunpack.c.h.b16 %v342
    %v1824 = vunpack.c.l.b16 %v343
    %v1825 = vunpack.c.h.b16 %v343
    %v1826 = vunpack.c.l.b16 %v344
    %v1827 = vunpack.c.h.b16 %v344
    %v1828 = vunpack.c.l.b16 %v345
    %v1829 = vunpack.c.h.b16 %v345
    %v1830 = vunpack.c.l.b16 %v346
    %v1831 = vunpack.c.h.b16 %v346
    %v1832 = vunpack.c.l.b16 %v347
    %v1833 = vunpack.c.h.b16 %v347
    %v1834 = vunpack.c.l.b16 %v348
    %v1835 = vunpack.c.h.b16 %v348
    %v1836 = vunpack.c.l.b16 %v349
    %v1837 = vunpack.c.h.b16 %v349
    %v1838 = vunpack.c.l.b16 %v350
    %v1839 = vunpack.c.h.b16 %v350
    %v1840 = vunpack.c.l.b16 %v351
    %v1841 = vunpack.c.h.b16 %v351
    %v1842 = vunpack.c.l.b16 %v352
    %v1843 = vunpack.c.h.b16 %v352
    %v1844 = vunpack.c.l.b16 %v353
    %v1845 = vunpack.c.h.b16 %v353
    %v1846 = vunpack.c.l.b16 %v354
    %v1847 = vunpack.c.h.b16 %v354
    %v1848 = vunpack.c.l.b16 %v355
    %v1849 = vunpack.c.h.b16 %v355
    %v1850 = vunpack.c.l.b16 %v356
    %v1851 = vunpack.c.h.b16 %v356
    %v1852 = vunpack.c.l.b16 %v357
    %v1853 = vunpack.c.h.b16 %v357
    %v1854 = vunpack.c.l.b16 %v358
    %v1855 = vunpack.c.h.b16 %v358
    %v1856 = vunpack.c.l.b16 %v359
    %v1857 = vunpack.c.h.b16 %v359
    %v1858 = vunpack.c.l.b16 %v360
    %v1859 = vunpack.c.h.b16 %v360
    %v1860 = vunpack.c.l.b16 %v361
    %v1861 = vunpack.c.h.b16 %v361
    %v1862 = vunpack.c.l.b16 %v362
    %v1863 = vunpack.c.h.b16 %v362
    %v1864 = vunpack.c.l.b16 %v363
    %v1865 = vunpack.c.h.b16 %v363
    %v1866 = vunpack.c.l.b16 %v364
    %v1867 = vunpack.c.h.b16 %v364
    %v1868 = vunpack.c.l.b16 %v365
    %v1869 = vunpack.c.h.b16 %v365
    %v1870 = vunpack.c.l.b16 %v366
    %v1871 = vunpack.c.h.b16 %v366
    %v1872 = vunpack.c.l.b16 %v367
    %v1873 = vunpack.c.h.b16 %v367
    %v1874 = vunpack.c.l.b16 %v368
    %v1875 = vunpack.c.h.b16 %v368
    %v1876 = vunpack.c.l.b16 %v369
    %v1877 = vunpack.c.h.b16 %v369
    %v1878 = vunpack.c.l.b16 %v370
    %v1879 = vunpack.c.h.b16 %v370
    %v1880 = vunpack.c.l.b16 %v371
    %v1881 = vunpack.c.h.b16 %v371
    %v1882 = vunpack.c.l.b16 %v372
    %v1883 = vunpack.c.h.b16 %v372
    %v1884 = vunpack.c.l.b16 %v373
    %v1885 = vunpack.c.h.b16 %v373
    %v1886 = vunpack.c.l.b16 %v374
    %v1887 = vunpack.c.h.b16 %v374
    %v1888 = vunpack.c.l.b16 %v375
    %v1889 = vunpack.c.h.b16 %v375
    %v1890 = vunpack.c.l.b16 %v376
    %v1891 = vunpack.c.h.b16 %v376
    %v1892 = vunpack.c.l.b16 %v377
    %v1893 = vunpack.c.h.b16 %v377
    %v1894 = vunpack.c.l.b16 %v378
    %v1895 = vunpack.c.h.b16 %v378
    %v1896 = vunpack.c.l.b16 %v379
    %v1897 = vunpack.c.h.b16 %v379
    %v1898 = vunpack.c.l.b16 %v380
    %v1899 = vunpack.c.h.b16 %v380
    %v1900 = vunpack.c.l.b16 %v381
    %v1901 = vunpack.c.h.b16 %v381
    %v1902 = vunpack.c.l.b16 %v382
    %v1903 = vunpack.c.h.b16 %v382
    %v1904 = vunpack.c.l.b16 %v383
    %v1905 = vunpack.c.h.b16 %v383
    %v1906 = vunpack.c.l.b16 %v384
    %v1907 = vunpack.c.h.b16 %v384
    %v1908 = vunpack.c.l.b16 %v385
    %v1909 = vunpack.c.h.b16 %v385
    %v1910 = vunpack.c.l.b16 %v386
    %v1911 = vunpack.c.h.b16 %v386
    %v1912 = vunpack.c.l.b16 %v387
    %v1913 = vunpack.c.h.b16 %v387
    %v1914 = vunpack.c.l.b16 %v388
    %v1915 = vunpack.c.h.b16 %v388
    %v1916 = vunpack.c.l.b16 %v389
    %v1917 = vunpack.c.h.b16 %v389
    %v1918 = vunpack.c.l.b16 %v390
    %v1919 = vunpack.c.h.b16 %v390
    %v1920 = vunpack.c.l.b16 %v391
    %v1921 = vunpack.c.h.b16 %v391
    %v1922 = vunpack.c.l.b16 %v392
    %v1923 = vunpack.c.h.b16 %v392
    %v1924 = vunpack.c.l.b16 %v393
    %v1925 = vunpack.c.h.b16 %v393
    %v1926 = vunpack.c.l.b16 %v394
    %v1927 = vunpack.c.h.b16 %v394
    %v1928 = vunpack.c.l.b16 %v395
    %v1929 = vunpack.c.h.b16 %v395
    %v1930 = vunpack.c.l.b16 %v396
    %v1931 = vunpack.c.h.b16 %v396
    %v1932 = vunpack.c.l.b16 %v397
    %v1933 = vunpack.c.h.b16 %v397
    %v1934 = vunpack.c.l.b16 %v398
    %v1935 = vunpack.c.h.b16 %v398
    %v1936 = vunpack.c.l.b16 %v399
    %v1937 = vunpack.c.h.b16 %v399
    %v1938 = vunpack.c.l.b16 %v400
    %v1939 = vunpack.c.h.b16 %v400
    %v1940 = vunpack.c.l.b16 %v401
    %v1941 = vunpack.c.h.b16 %v401
    %v1942 = vunpack.c.l.b16 %v402
    %v1943 = vunpack.c.h.b16 %v402
    %v1944 = vunpack.c.l.b16 %v403
    %v1945 = vunpack.c.h.b16 %v403
    %v1946 = vunpack.c.l.b16 %v404
    %v1947 = vunpack.c.h.b16 %v404
    %v1948 = vunpack.c.l.b16 %v405
    %v1949 = vunpack.c.h.b16 %v405
    %v1950 = vunpack.c.l.b16 %v406
    %v1951 = vunpack.c.h.b16 %v406
    %v1952 = vunpack.c.l.b16 %v407
    %v1953 = vunpack.c.h.b16 %v407
    %v1954 = vunpack.c.l.b16 %v408
    %v1955 = vunpack.c.h.b16 %v408
    %v1956 = vunpack.c.l.b16 %v409
    %v1957 = vunpack.c.h.b16 %v409
    %v1958 = vunpack.c.l.b16 %v410
    %v1959 = vunpack.c.h.b16 %v410
    %v1960 = vunpack.c.l.b16 %v411
    %v1961 = vunpack.c.h.b16 %v411
    %v1962 = vunpack.c.l.b16 %v412
    %v1963 = vunpack.c.h.b16 %v412
    %v1964 = vunpack.c.l.b16 %v413
    %v1965 = vunpack.c.h.b16 %v413
    %v1966 = vunpack.c.l.b16 %v414
    %v1967 = vunpack.c.h.b16 %v414
    %v1968 = vunpack.c.l.b16 %v415
    %v1969 = vunpack.c.h.b16 %v415
    %v1970 = vunpack.c.l.b16 %v416
    %v1971 = vunpack.c.h.b16 %v416
    %v1972 = vunpack.c.l.b16 %v417
    %v1973 = vunpack.c.h.b16 %v417
    %v1974 = vunpack.c.l.b16 %v418
    %v1975 = vunpack.c.h.b16 %v418
    %v1976 = vunpack.c.l.b16 %v419
    %v1977 = vunpack.c.h.b16 %v419
    %v1978 = vunpack.c.l.b16 %v420
    %v1979 = vunpack.c.h.b16 %v420
    %v1980 = vunpack.c.l.b16 %v421
    %v1981 = vunpack.c.h.b16 %v421
    %v1982 = vunpack.c.l.b16 %v422
    %v1983 = vunpack.c.h.b16 %v422
    %v1984 = vunpack.c.l.b16 %v423
    %v1985 = vunpack.c.h.b16 %v423
    %v1986 = vunpack.c.l.b16 %v424
    %v1987 = vunpack.c.h.b16 %v424
    %v1988 = vunpack.c.l.b16 %v425
    %v1989 = vunpack.c.h.b16 %v425
    %v1990 = vunpack.c.l.b16 %v426
    %v1991 = vunpack.c.h.b16 %v426
    %v1992 = vunpack.c.l.b16 %v427
    %v1993 = vunpack.c.h.b16 %v427
    %v1994 = vunpack.c.l.b16 %v428
    %v1995 = vunpack.c.h.b16 %v428
    %v1996 = vunpack.c.l.b16 %v429
    %v1997 = vunpack.c.h.b16 %v429
    %v1998 = vunpack.c.l.b16 %v430
    %v1999 = vunpack.c.h.b16 %v430
    %v2000 = vunpack.c.l.b16 %v431
    %v2001 = vunpack.c.h.b16 %v431
    %v2002 = vunpack.c.l.b16 %v432
    %v2003 = vunpack.c.h.b16 %v432
    %v2004 = vunpack.c.l.b16 %v433
    %v2005 = vunpack.c.h.b16 %v433
    %v2006 = vunpack.c.l.b16 %v434
    %v2007 = vunpack.c.h.b16 %v434
    %v2008 = vunpack.c.l.b16 %v435
    %v2009 = vunpack.c.h.b16 %v435
    %v2010 = vunpack.c.l.b16 %v436
    %v2011 = vunpack.c.h.b16 %v436
    %v2012 = vunpack.c.l.b16 %v437
    %v2013 = vunpack.c.h.b16 %v437
    %v2014 = vunpack.c.l.b16 %v438
    %v2015 = vunpack.c.h.b16 %v438
    %v2016 = vunpack.c.l.b16 %v439
    %v2017 = vunpack.c.h.b16 %v439
    %v2018 = vunpack.c.l.b16 %v440
    %v2019 = vunpack.c.h.b16 %v440
    %v2020 = vunpack.c.l.b16 %v441
    %v2021 = vunpack.c.h.b16 %v441
    %v2022 = vunpack.c.l.b16 %v442
    %v2023 = vunpack.c.h.b16 %v442
    %v2024 = vunpack.c.l.b16 %v443
    %v2025 = vunpack.c.h.b16 %v443
    %v2026 = vunpack.c.l.b16 %v444
    %v2027 = vunpack.c.h.b16 %v444
    %v2028 = vunpack.c.l.b16 %v445
    %v2029 = vunpack.c.h.b16 %v445
    %v2030 = vunpack.c.l.b16 %v446
    %v2031 = vunpack.c.h.b16 %v446
    %v2032 = vunpack.c.l.b16 %v447
    %v2033 = vunpack.c.h.b16 %v447
    %v2034 = vunpack.c.l.b16 %v448
    %v2035 = vunpack.c.h.b16 %v448
    %v2036 = vunpack.c.l.b16 %v449
    %v2037 = vunpack.c.h.b16 %v449
    %v2038 = vunpack.c.l.b16 %v450
    %v2039 = vunpack.c.h.b16 %v450
    %v2040 = vunpack.c.l.b16 %v451
    %v2041 = vunpack.c.h.b16 %v451
    %v2042 = vunpack.c.l.b16 %v452
    %v2043 = vunpack.c.h.b16 %v452
    %v2044 = vunpack.c.l.b16 %v453
    %v2045 = vunpack.c.h.b16 %v453
    %v2046 = vunpack.c.l.b16 %v454
    %v2047 = vunpack.c.h.b16 %v454
    %v2048 = vunpack.c.l.b16 %v455
    %v2049 = vunpack.c.h.b16 %v455
    %v2050 = vunpack.c.l.b16 %v456
    %v2051 = vunpack.c.h.b16 %v456
    %v2052 = vunpack.c.l.b16 %v457
    %v2053 = vunpack.c.h.b16 %v457
    %v2054 = vunpack.c.l.b16 %v458
    %v2055 = vunpack.c.h.b16 %v458
    %v2056 = vunpack.c.l.b16 %v459
    %v2057 = vunpack.c.h.b16 %v459
    %v2058 = vunpack.c.l.b16 %v460
    %v2059 = vunpack.c.h.b16 %v460
    %v2060 = vunpack.c.l.b16 %v461
    %v2061 = vunpack.c.h.b16 %v461
    %v2062 = vunpack.c.l.b16 %v462
    %v2063 = vunpack.c.h.b16 %v462
    %v2064 = vunpack.c.l.b16 %v463
    %v2065 = vunpack.c.h.b16 %v463
    %v2066 = vunpack.c.l.b16 %v464
    %v2067 = vunpack.c.h.b16 %v464
    %v2068 = vunpack.c.l.b16 %v465
    %v2069 = vunpack.c.h.b16 %v465
    %v2070 = vunpack.c.l.b16 %v466
    %v2071 = vunpack.c.h.b16 %v466
    %v2072 = vunpack.c.l.b16 %v467
    %v2073 = vunpack.c.h.b16 %v467
    %v2074 = vunpack.c.l.b16 %v468
    %v2075 = vunpack.c.h.b16 %v468
    %v2076 = vunpack.c.l.b16 %v469
    %v2077 = vunpack.c.h.b16 %v469
    %v2078 = vunpack.c.l.b16 %v470
    %v2079 = vunpack.c.h.b16 %v470
    %v2080 = vunpack.c.l.b16 %v471
    %v2081 = vunpack.c.h.b16 %v471
    %v2082 = vunpack.c.l.b16 %v472
    %v2083 = vunpack.c.h.b16 %v472
    %v2084 = vunpack.c.l.b16 %v473
    %v2085 = vunpack.c.h.b16 %v473
    %v2086 = vunpack.c.l.b16 %v474
    %v2087 = vunpack.c.h.b16 %v474
    %v2088 = vunpack.c.l.b16 %v475
    %v2089 = vunpack.c.h.b16 %v475
    %v2090 = vunpack.c.l.b16 %v476
    %v2091 = vunpack.c.h.b16 %v476
    %v2092 = vunpack.c.l.b16 %v477
    %v2093 = vunpack.c.h.b16 %v477
    %v2094 = vunpack.c.l.b16 %v478
    %v2095 = vunpack.c.h.b16 %v478
    %v2096 = vunpack.c.l.b16 %v479
    %v2097 = vunpack.c.h.b16 %v479
    %v2098 = vunpack.c.l.b16 %v480
    %v2099 = vunpack.c.h.b16 %v480
    %v2100 = vunpack.c.l.b16 %v481
    %v2101 = vunpack.c.h.b16 %v481
    %v2102 = vunpack.c.l.b16 %v482
    %v2103 = vunpack.c.h.b16 %v482
    %v2104 = vunpack.c.l.b16 %v483
    %v2105 = vunpack.c.h.b16 %v483
    %v2106 = vunpack.c.l.b16 %v484
    %v2107 = vunpack.c.h.b16 %v484
    %v2108 = vunpack.c.l.b16 %v485
    %v2109 = vunpack.c.h.b16 %v485
    %v2110 = vunpack.c.l.b16 %v486
    %v2111 = vunpack.c.h.b16 %v486
    %v2112 = vunpack.c.l.b16 %v487
    %v2113 = vunpack.c.h.b16 %v487
    %v2114 = vunpack.c.l.b16 %v488
    %v2115 = vunpack.c.h.b16 %v488
    %v2116 = vunpack.c.l.b16 %v489
    %v2117 = vunpack.c.h.b16 %v489
    %v2118 = vunpack.c.l.b16 %v490
    %v2119 = vunpack.c.h.b16 %v490
    %v2120 = vunpack.c.l.b16 %v491
    %v2121 = vunpack.c.h.b16 %v491
    %v2122 = vunpack.c.l.b16 %v492
    %v2123 = vunpack.c.h.b16 %v492
    %v2124 = vunpack.c.l.b16 %v493
    %v2125 = vunpack.c.h.b16 %v493
    %v2126 = vunpack.c.l.b16 %v494
    %v2127 = vunpack.c.h.b16 %v494
    %v2128 = vunpack.c.l.b16 %v495
    %v2129 = vunpack.c.h.b16 %v495
    %v2130 = vunpack.c.l.b16 %v496
    %v2131 = vunpack.c.h.b16 %v496
    %v2132 = vunpack.c.l.b16 %v497
    %v2133 = vunpack.c.h.b16 %v497
    %v2134 = vunpack.c.l.b16 %v498
    %v2135 = vunpack.c.h.b16 %v498
    %v2136 = vunpack.c.l.b16 %v499
    %v2137 = vunpack.c.h.b16 %v499
    %v2138 = vunpack.c.l.b16 %v500
    %v2139 = vunpack.c.h.b16 %v500
    %v2140 = vunpack.c.l.b16 %v501
    %v2141 = vunpack.c.h.b16 %v501
    %v2142 = vunpack.c.l.b16 %v502
    %v2143 = vunpack.c.h.b16 %v502
    %v2144 = vunpack.c.l.b16 %v503
    %v2145 = vunpack.c.h.b16 %v503
    %v2146 = vunpack.c.l.b16 %v504
    %v2147 = vunpack.c.h.b16 %v504
    %v2148 = vunpack.c.l.b16 %v505
    %v2149 = vunpack.c.h.b16 %v505
    %v2150 = vunpack.c.l.b16 %v506
    %v2151 = vunpack.c.h.b16 %v506
    %v2152 = vunpack.c.l.b16 %v507
    %v2153 = vunpack.c.h.b16 %v507
    %v2154 = vunpack.c.l.b16 %v508
    %v2155 = vunpack.c.h.b16 %v508
    %v2156 = vunpack.c.l.b16 %v509
    %v2157 = vunpack.c.h.b16 %v509
    %v2158 = vunpack.c.l.b16 %v510
    %v2159 = vunpack.c.h.b16 %v510
    %v2160 = vunpack.c.l.b16 %v511
    %v2161 = vunpack.c.h.b16 %v511
    %v2162 = vunpack.c.l.b16 %v512
    %v2163 = vunpack.c.h.b16 %v512
    %v2164 = vunpack.c.l.b16 %v513
    %v2165 = vunpack.c.h.b16 %v513
    %v2166 = vunpack.c.l.b16 %v514
    %v2167 = vunpack.c.h.b16 %v514
    %v2168 = vunpack.c.l.b16 %v515
    %v2169 = vunpack.c.h.b16 %v515
    %v2170 = vunpack.c.l.b16 %v516
    %v2171 = vunpack.c.h.b16 %v516
    %v2172 = vunpack.c.l.b16 %v517
    %v2173 = vunpack.c.h.b16 %v517
    %v2174 = vunpack.c.l.b16 %v518
    %v2175 = vunpack.c.h.b16 %v518
    %v2176 = vunpack.c.l.b16 %v519
    %v2177 = vunpack.c.h.b16 %v519
    %v2178 = vunpack.c.l.b16 %v520
    %v2179 = vunpack.c.h.b16 %v520
    %v2180 = vunpack.c.l.b16 %v521
    %v2181 = vunpack.c.h.b16 %v521
    %v2182 = vunpack.c.l.b16 %v522
    %v2183 = vunpack.c.h.b16 %v522
    %v2184 = vunpack.c.l.b16 %v523
    %v2185 = vunpack.c.h.b16 %v523
    %v2186 = vunpack.c.l.b16 %v524
    %v2187 = vunpack.c.h.b16 %v524
    %v2188 = vunpack.c.l.b16 %v525
    %v2189 = vunpack.c.h.b16 %v525
    %v2190 = vunpack.c.l.b16 %v526
    %v2191 = vunpack.c.h.b16 %v526
    %v2192 = vunpack.c.l.b16 %v527
    %v2193 = vunpack.c.h.b16 %v527
    %v2194 = vunpack.c.l.b16 %v528
    %v2195 = vunpack.c.h.b16 %v528
    %v2196 = vunpack.c.l.b16 %v529
    %v2197 = vunpack.c.h.b16 %v529
    %v2198 = vunpack.c.l.b16 %v530
    %v2199 = vunpack.c.h.b16 %v530
    %v2200 = vunpack.c.l.b16 %v531
    %v2201 = vunpack.c.h.b16 %v531
    %v2202 = vunpack.c.l.b16 %v532
    %v2203 = vunpack.c.h.b16 %v532
    %v2204 = vunpack.c.l.b16 %v533
    %v2205 = vunpack.c.h.b16 %v533
    %v2206 = vunpack.c.l.b16 %v534
    %v2207 = vunpack.c.h.b16 %v534
    %v2208 = vunpack.c.l.b16 %v535
    %v2209 = vunpack.c.h.b16 %v535
    %v2210 = vpack.c.b16 %v1190, %v1186
    %v2211 = vpack.c.b16 %v1191, %v1187
    %v2212 = vpack.c.b16 %v1192, %v1188
    %v2213 = vpack.c.b16 %v1193, %v1189
    %v2214 = vpack.c.b16 %v1198, %v1194
    %v2215 = vpack.c.b16 %v1199, %v1195
    %v2216 = vpack.c.b16 %v1200, %v1196
    %v2217 = vpack.c.b16 %v1201, %v1197
    %v2218 = vpack.c.b16 %v1206, %v1202
    %v2219 = vpack.c.b16 %v1207, %v1203
    %v2220 = vpack.c.b16 %v1208, %v1204
    %v2221 = vpack.c.b16 %v1209, %v1205
    %v2222 = vpack.c.b16 %v1214, %v1210
    %v2223 = vpack.c.b16 %v1215, %v1211
    %v2224 = vpack.c.b16 %v1216, %v1212
    %v2225 = vpack.c.b16 %v1217, %v1213
    %v2226 = vpack.c.b16 %v1222, %v1218
    %v2227 = vpack.c.b16 %v1223, %v1219
    %v2228 = vpack.c.b16 %v1224, %v1220
    %v2229 = vpack.c.b16 %v1225, %v1221
    %v2230 = vpack.c.b16 %v1230, %v1226
    %v2231 = vpack.c.b16 %v1231, %v1227
    %v2232 = vpack.c.b16 %v1232, %v1228
    %v2233 = vpack.c.b16 %v1233, %v1229
    %v2234 = vpack.c.b16 %v1238, %v1234
    %v2235 = vpack.c.b16 %v1239, %v1235
    %v2236 = vpack.c.b16 %v1240, %v1236
    %v2237 = vpack.c.b16 %v1241, %v1237
    %v2238 = vpack.c.b16 %v1246, %v1242
    %v2239 = vpack.c.b16 %v1247, %v1243
    %v2240 = vpack.c.b16 %v1248, %v1244
    %v2241 = vpack.c.b16 %v1249, %v1245
    %v2242 = vpack.c.b16 %v1254, %v1250
    %v2243 = vpack.c.b16 %v1255, %v1251
    %v2244 = vpack.c.b16 %v1256, %v1252
    %v2245 = vpack.c.b16 %v1257, %v1253
    %v2246 = vpack.c.b16 %v1262, %v1258
    %v2247 = vpack.c.b16 %v1263, %v1259
    %v2248 = vpack.c.b16 %v1264, %v1260
    %v2249 = vpack.c.b16 %v1265, %v1261
    %v2250 = vpack.c.b16 %v1270, %v1266
    %v2251 = vpack.c.b16 %v1271, %v1267
    %v2252 = vpack.c.b16 %v1272, %v1268
    %v2253 = vpack.c.b16 %v1273, %v1269
    %v2254 = vpack.c.b16 %v1278, %v1274
    %v2255 = vpack.c.b16 %v1279, %v1275
    %v2256 = vpack.c.b16 %v1280, %v1276
    %v2257 = vpack.c.b16 %v1281, %v1277
    %v2258 = vpack.c.b16 %v1286, %v1282
    %v2259 = vpack.c.b16 %v1287, %v1283
    %v2260 = vpack.c.b16 %v1288, %v1284
    %v2261 = vpack.c.b16 %v1289, %v1285
    %v2262 = vpack.c.b16 %v1294, %v1290
    %v2263 = vpack.c.b16 %v1295, %v1291
    %v2264 = vpack.c.b16 %v1296, %v1292
    %v2265 = vpack.c.b16 %v1297, %v1293
    %v2266 = vpack.c.b16 %v1302, %v1298
    %v2267 = vpack.c.b16 %v1303, %v1299
    %v2268 = vpack.c.b16 %v1304, %v1300
    %v2269 = vpack.c.b16 %v1305, %v1301
    %v2270 = vpack.c.b16 %v1310, %v1306
    %v2271 = vpack.c.b16 %v1311, %v1307
    %v2272 = vpack.c.b16 %v1312, %v1308
    %v2273 = vpack.c.b16 %v1313, %v1309
    %v2274 = vpack.c.b16 %v1318, %v1314
    %v2275 = vpack.c.b16 %v1319, %v1315
    %v2276 = vpack.c.b16 %v1320, %v1316
    %v2277 = vpack.c.b16 %v1321, %v1317
    %v2278 = vpack.c.b16 %v1326, %v1322
    %v2279 = vpack.c.b16 %v1327, %v1323
    %v2280 = vpack.c.b16 %v1328, %v1324
    %v2281 = vpack.c.b16 %v1329, %v1325
    %v2282 = vpack.c.b16 %v1334, %v1330
    %v2283 = vpack.c.b16 %v1335, %v1331
    %v2284 = vpack.c.b16 %v1336, %v1332
    %v2285 = vpack.c.b16 %v1337, %v1333
    %v2286 = vpack.c.b16 %v1342, %v1338
    %v2287 = vpack.c.b16 %v1343, %v1339
    %v2288 = vpack.c.b16 %v1344, %v1340
    %v2289 = vpack.c.b16 %v1345, %v1341
    %v2290 = vpack.c.b16 %v1350, %v1346
    %v2291 = vpack.c.b16 %v1351, %v1347
    %v2292 = vpack.c.b16 %v1352, %v1348
    %v2293 = vpack.c.b16 %v1353, %v1349
    %v2294 = vpack.c.b16 %v1358, %v1354
    %v2295 = vpack.c.b16 %v1359, %v1355
    %v2296 = vpack.c.b16 %v1360, %v1356
    %v2297 = vpack.c.b16 %v1361, %v1357
    %v2298 = vpack.c.b16 %v1366, %v1362
    %v2299 = vpack.c.b16 %v1367, %v1363
    %v2300 = vpack.c.b16 %v1368, %v1364
    %v2301 = vpack.c.b16 %v1369, %v1365
    %v2302 = vpack.c.b16 %v1374, %v1370
    %v2303 = vpack.c.b16 %v1375, %v1371
    %v2304 = vpack.c.b16 %v1376, %v1372
    %v2305 = vpack.c.b16 %v1377, %v1373
    %v2306 = vpack.c.b16 %v1382, %v1378
    %v2307 = vpack.c.b16 %v1383, %v1379
    %v2308 = vpack.c.b16 %v1384, %v1380
    %v2309 = vpack.c.b16 %v1385, %v1381
    %v2310 = vpack.c.b16 %v1390, %v1386
    %v2311 = vpack.c.b16 %v1391, %v1387
    %v2312 = vpack.c.b16 %v1392, %v1388
    %v2313 = vpack.c.b16 %v1393, %v1389
    %v2314 = vpack.c.b16 %v1398, %v1394
    %v2315 = vpack.c.b16 %v1399, %v1395
    %v2316 = vpack.c.b16 %v1400, %v1396
    %v2317 = vpack.c.b16 %v1401, %v1397
    %v2318 = vpack.c.b16 %v1406, %v1402
    %v2319 = vpack.c.b16 %v1407, %v1403
    %v2320 = vpack.c.b16 %v1408, %v1404
    %v2321 = vpack.c.b16 %v1409, %v1405
    %v2322 = vpack.c.b16 %v1414, %v1410
    %v2323 = vpack.c.b16 %v1415, %v1411
    %v2324 = vpack.c.b16 %v1416, %v1412
    %v2325 = vpack.c.b16 %v1417, %v1413
    %v2326 = vpack.c.b16 %v1422, %v1418
    %v2327 = vpack.c.b16 %v1423, %v1419
    %v2328 = vpack.c.b16 %v1424, %v1420
    %v2329 = vpack.c.b16 %v1425, %v1421
    %v2330 = vpack.c.b16 %v1430, %v1426
    %v2331 = vpack.c.b16 %v1431, %v1427
    %v2332 = vpack.c.b16 %v1432, %v1428
    %v2333 = vpack.c.b16 %v1433, %v1429
    %v2334 = vpack.c.b16 %v1438, %v1434
    %v2335 = vpack.c.b16 %v1439, %v1435
    %v2336 = vpack.c.b16 %v1440, %v1436
    %v2337 = vpack.c.b16 %v1441, %v1437
    %v2338 = vpack.c.b16 %v1446, %v1442
    %v2339 = vpack.c.b16 %v1447, %v1443
    %v2340 = vpack.c.b16 %v1448, %v1444
    %v2341 = vpack.c.b16 %v1449, %v1445
    %v2342 = vpack.c.b16 %v1454, %v1450
    %v2343 = vpack.c.b16 %v1455, %v1451
    %v2344 = vpack.c.b16 %v1456, %v1452
    %v2345 = vpack.c.b16 %v1457, %v1453
    %v2346 = vpack.c.b16 %v1462, %v1458
    %v2347 = vpack.c.b16 %v1463, %v1459
    %v2348 = vpack.c.b16 %v1464, %v1460
    %v2349 = vpack.c.b16 %v1465, %v1461
    %v2350 = vpack.c.b16 %v1470, %v1466
    %v2351 = vpack.c.b16 %v1471, %v1467
    %v2352 = vpack.c.b16 %v1472, %v1468
    %v2353 = vpack.c.b16 %v1473, %v1469
    %v2354 = vpack.c.b16 %v1478, %v1474
    %v2355 = vpack.c.b16 %v1479, %v1475
    %v2356 = vpack.c.b16 %v1480, %v1476
    %v2357 = vpack.c.b16 %v1481, %v1477
    %v2358 = vpack.c.b16 %v1486, %v1482
    %v2359 = vpack.c.b16 %v1487, %v1483
    %v2360 = vpack.c.b16 %v1488, %v1484
    %v2361 = vpack.c.b16 %v1489, %v1485
    %v2362 = vpack.c.b16 %v1494, %v1490
    %v2363 = vpack.c.b16 %v1495, %v1491
    %v2364 = vpack.c.b16 %v1496, %v1492
    %v2365 = vpack.c.b16 %v1497, %v1493
    %v2366 = vpack.c.b16 %v1502, %v1498
    %v2367 = vpack.c.b16 %v1503, %v1499
    %v2368 = vpack.c.b16 %v1504, %v1500
    %v2369 = vpack.c.b16 %v1505, %v1501
    %v2370 = vpack.c.b16 %v1510, %v1506
    %v2371 = vpack.c.b16 %v1511, %v1507
    %v2372 = vpack.c.b16 %v1512, %v1508
    %v2373 = vpack.c.b16 %v1513, %v1509
    %v2374 = vpack.c.b16 %v1518, %v1514
    %v2375 = vpack.c.b16 %v1519, %v1515
    %v2376 = vpack.c.b16 %v1520, %v1516
    %v2377 = vpack.c.b16 %v1521, %v1517
    %v2378 = vpack.c.b16 %v1526, %v1522
    %v2379 = vpack.c.b16 %v1527, %v1523
    %v2380 = vpack.c.b16 %v1528, %v1524
    %v2381 = vpack.c.b16 %v1529, %v1525
    %v2382 = vpack.c.b16 %v1534, %v1530
    %v2383 = vpack.c.b16 %v1535, %v1531
    %v2384 = vpack.c.b16 %v1536, %v1532
    %v2385 = vpack.c.b16 %v1537, %v1533
    %v2386 = vpack.c.b16 %v1542, %v1538
    %v2387 = vpack.c.b16 %v1543, %v1539
    %v2388 = vpack.c.b16 %v1544, %v1540
    %v2389 = vpack.c.b16 %v1545, %v1541
    %v2390 = vpack.c.b16 %v1550, %v1546
    %v2391 = vpack.c.b16 %v1551, %v1547
    %v2392 = vpack.c.b16 %v1552, %v1548
    %v2393 = vpack.c.b16 %v1553, %v1549
    %v2394 = vpack.c.b16 %v1558, %v1554
    %v2395 = vpack.c.b16 %v1559, %v1555
    %v2396 = vpack.c.b16 %v1560, %v1556
    %v2397 = vpack.c.b16 %v1561, %v1557
    %v2398 = vpack.c.b16 %v1566, %v1562
    %v2399 = vpack.c.b16 %v1567, %v1563
    %v2400 = vpack.c.b16 %v1568, %v1564
    %v2401 = vpack.c.b16 %v1569, %v1565
    %v2402 = vpack.c.b16 %v1574, %v1570
    %v2403 = vpack.c.b16 %v1575, %v1571
    %v2404 = vpack.c.b16 %v1576, %v1572
    %v2405 = vpack.c.b16 %v1577, %v1573
    %v2406 = vpack.c.b16 %v1582, %v1578
    %v2407 = vpack.c.b16 %v1583, %v1579
    %v2408 = vpack.c.b16 %v1584, %v1580
    %v2409 = vpack.c.b16 %v1585, %v1581
    %v2410 = vpack.c.b16 %v1590, %v1586
    %v2411 = vpack.c.b16 %v1591, %v1587
    %v2412 = vpack.c.b16 %v1592, %v1588
    %v2413 = vpack.c.b16 %v1593, %v1589
    %v2414 = vpack.c.b16 %v1598, %v1594
    %v2415 = vpack.c.b16 %v1599, %v1595
    %v2416 = vpack.c.b16 %v1600, %v1596
    %v2417 = vpack.c.b16 %v1601, %v1597
    %v2418 = vpack.c.b16 %v1606, %v1602
    %v2419 = vpack.c.b16 %v1607, %v1603
    %v2420 = vpack.c.b16 %v1608, %v1604
    %v2421 = vpack.c.b16 %v1609, %v1605
    %v2422 = vpack.c.b16 %v1614, %v1610
    %v2423 = vpack.c.b16 %v1615, %v1611
    %v2424 = vpack.c.b16 %v1616, %v1612
    %v2425 = vpack.c.b16 %v1617, %v1613
    %v2426 = vpack.c.b16 %v1622, %v1618
    %v2427 = vpack.c.b16 %v1623, %v1619
    %v2428 = vpack.c.b16 %v1624, %v1620
    %v2429 = vpack.c.b16 %v1625, %v1621
    %v2430 = vpack.c.b16 %v1630, %v1626
    %v2431 = vpack.c.b16 %v1631, %v1627
    %v2432 = vpack.c.b16 %v1632, %v1628
    %v2433 = vpack.c.b16 %v1633, %v1629
    %v2434 = vpack.c.b16 %v1638, %v1634
    %v2435 = vpack.c.b16 %v1639, %v1635
    %v2436 = vpack.c.b16 %v1640, %v1636
    %v2437 = vpack.c.b16 %v1641, %v1637
    %v2438 = vpack.c.b16 %v1646, %v1642
    %v2439 = vpack.c.b16 %v1647, %v1643
    %v2440 = vpack.c.b16 %v1648, %v1644
    %v2441 = vpack.c.b16 %v1649, %v1645
    %v2442 = vpack.c.b16 %v1654, %v1650
    %v2443 = vpack.c.b16 %v1655, %v1651
    %v2444 = vpack.c.b16 %v1656, %v1652
    %v2445 = vpack.c.b16 %v1657, %v1653
    %v2446 = vpack.c.b16 %v1662, %v1658
    %v2447 = vpack.c.b16 %v1663, %v1659
    %v2448 = vpack.c.b16 %v1664, %v1660
    %v2449 = vpack.c.b16 %v1665, %v1661
    %v2450 = vpack.c.b16 %v1670, %v1666
    %v2451 = vpack.c.b16 %v1671, %v1667
    %v2452 = vpack.c.b16 %v1672, %v1668
    %v2453 = vpack.c.b16 %v1673, %v1669
    %v2454 = vpack.c.b16 %v1678, %v1674
    %v2455 = vpack.c.b16 %v1679, %v1675
    %v2456 = vpack.c.b16 %v1680, %v1676
    %v2457 = vpack.c.b16 %v1681, %v1677
    %v2458 = vpack.c.b16 %v1686, %v1682
    %v2459 = vpack.c.b16 %v1687, %v1683
    %v2460 = vpack.c.b16 %v1688, %v1684
    %v2461 = vpack.c.b16 %v1689, %v1685
    %v2462 = vpack.c.b16 %v1694, %v1690
    %v2463 = vpack.c.b16 %v1695, %v1691
    %v2464 = vpack.c.b16 %v1696, %v1692
    %v2465 = vpack.c.b16 %v1697, %v1693
    %v2466 = vpack.c.b16 %v1702, %v1698
    %v2467 = vpack.c.b16 %v1703, %v1699
    %v2468 = vpack.c.b16 %v1704, %v1700
    %v2469 = vpack.c.b16 %v1705, %v1701
    %v2470 = vpack.c.b16 %v1710, %v1706
    %v2471 = vpack.c.b16 %v1711, %v1707
    %v2472 = vpack.c.b16 %v1712, %v1708
    %v2473 = vpack.c.b16 %v1713, %v1709
    %v2474 = vpack.c.b16 %v1718, %v1714
    %v2475 = vpack.c.b16 %v1719, %v1715
    %v2476 = vpack.c.b16 %v1720, %v1716
    %v2477 = vpack.c.b16 %v1721, %v1717
    %v2478 = vpack.c.b16 %v1726, %v1722
    %v2479 = vpack.c.b16 %v1727, %v1723
    %v2480 = vpack.c.b16 %v1728, %v1724
    %v2481 = vpack.c.b16 %v1729, %v1725
    %v2482 = vpack.c.b16 %v1734, %v1730
    %v2483 = vpack.c.b16 %v1735, %v1731
    %v2484 = vpack.c.b16 %v1736, %v1732
    %v2485 = vpack.c.b16 %v1737, %v1733
    %v2486 = vpack.c.b16 %v1742, %v1738
    %v2487 = vpack.c.b16 %v1743, %v1739
    %v2488 = vpack.c.b16 %v1744, %v1740
    %v2489 = vpack.c.b16 %v1745, %v1741
    %v2490 = vpack.c.b16 %v1750, %v1746
    %v2491 = vpack.c.b16 %v1751, %v1747
    %v2492 = vpack.c.b16 %v1752, %v1748
    %v2493 = vpack.c.b16 %v1753, %v1749
    %v2494 = vpack.c.b16 %v1758, %v1754
    %v2495 = vpack.c.b16 %v1759, %v1755
    %v2496 = vpack.c.b16 %v1760, %v1756
    %v2497 = vpack.c.b16 %v1761, %v1757
    %v2498 = vpack.c.b16 %v1766, %v1762
    %v2499 = vpack.c.b16 %v1767, %v1763
    %v2500 = vpack.c.b16 %v1768, %v1764
    %v2501 = vpack.c.b16 %v1769, %v1765
    %v2502 = vpack.c.b16 %v1774, %v1770
    %v2503 = vpack.c.b16 %v1775, %v1771
    %v2504 = vpack.c.b16 %v1776, %v1772
    %v2505 = vpack.c.b16 %v1777, %v1773
    %v2506 = vpack.c.b16 %v1782, %v1778
    %v2507 = vpack.c.b16 %v1783, %v1779
    %v2508 = vpack.c.b16 %v1784, %v1780
    %v2509 = vpack.c.b16 %v1785, %v1781
    %v2510 = vpack.c.b16 %v1790, %v1786
    %v2511 = vpack.c.b16 %v1791, %v1787
    %v2512 = vpack.c.b16 %v1792, %v1788
    %v2513 = vpack.c.b16 %v1793, %v1789
    %v2514 = vpack.c.b16 %v1798, %v1794
    %v2515 = vpack.c.b16 %v1799, %v1795
    %v2516 = vpack.c.b16 %v1800, %v1796
    %v2517 = vpack.c.b16 %v1801, %v1797
    %v2518 = vpack.c.b16 %v1806, %v1802
    %v2519 = vpack.c.b16 %v1807, %v1803
    %v2520 = vpack.c.b16 %v1808, %v1804
    %v2521 = vpack.c.b16 %v1809, %v1805
    %v2522 = vpack.c.b16 %v1814, %v1810
    %v2523 = vpack.c.b16 %v1815, %v1811
    %v2524 = vpack.c.b16 %v1816, %v1812
    %v2525 = vpack.c.b16 %v1817, %v1813
    %v2526 = vpack.c.b16 %v1822, %v1818
    %v2527 = vpack.c.b16 %v1823, %v1819
    %v2528 = vpack.c.b16 %v1824, %v1820
    %v2529 = vpack.c.b16 %v1825, %v1821
    %v2530 = vpack.c.b16 %v1830, %v1826
    %v2531 = vpack.c.b16 %v1831, %v1827
    %v2532 = vpack.c.b16 %v1832, %v1828
    %v2533 = vpack.c.b16 %v1833, %v1829
    %v2534 = vpack.c.b16 %v1838, %v1834
    %v2535 = vpack.c.b16 %v1839, %v1835
    %v2536 = vpack.c.b16 %v1840, %v1836
    %v2537 = vpack.c.b16 %v1841, %v1837
    %v2538 = vpack.c.b16 %v1846, %v1842
    %v2539 = vpack.c.b16 %v1847, %v1843
    %v2540 = vpack.c.b16 %v1848, %v1844
    %v2541 = vpack.c.b16 %v1849, %v1845
    %v2542 = vpack.c.b16 %v1854, %v1850
    %v2543 = vpack.c.b16 %v1855, %v1851
    %v2544 = vpack.c.b16 %v1856, %v1852
    %v2545 = vpack.c.b16 %v1857, %v1853
    %v2546 = vpack.c.b16 %v1862, %v1858
    %v2547 = vpack.c.b16 %v1863, %v1859
    %v2548 = vpack.c.b16 %v1864, %v1860
    %v2549 = vpack.c.b16 %v1865, %v1861
    %v2550 = vpack.c.b16 %v1870, %v1866
    %v2551 = vpack.c.b16 %v1871, %v1867
    %v2552 = vpack.c.b16 %v1872, %v1868
    %v2553 = vpack.c.b16 %v1873, %v1869
    %v2554 = vpack.c.b16 %v1878, %v1874
    %v2555 = vpack.c.b16 %v1879, %v1875
    %v2556 = vpack.c.b16 %v1880, %v1876
    %v2557 = vpack.c.b16 %v1881, %v1877
    %v2558 = vpack.c.b16 %v1886, %v1882
    %v2559 = vpack.c.b16 %v1887, %v1883
    %v2560 = vpack.c.b16 %v1888, %v1884
    %v2561 = vpack.c.b16 %v1889, %v1885
    %v2562 = vpack.c.b16 %v1894, %v1890
    %v2563 = vpack.c.b16 %v1895, %v1891
    %v2564 = vpack.c.b16 %v1896, %v1892
    %v2565 = vpack.c.b16 %v1897, %v1893
    %v2566 = vpack.c.b16 %v1902, %v1898
    %v2567 = vpack.c.b16 %v1903, %v1899
    %v2568 = vpack.c.b16 %v1904, %v1900
    %v2569 = vpack.c.b16 %v1905, %v1901
    %v2570 = vpack.c.b16 %v1910, %v1906
    %v2571 = vpack.c.b16 %v1911, %v1907
    %v2572 = vpack.c.b16 %v1912, %v1908
    %v2573 = vpack.c.b16 %v1913, %v1909
    %v2574 = vpack.c.b16 %v1918, %v1914
    %v2575 = vpack.c.b16 %v1919, %v1915
    %v2576 = vpack.c.b16 %v1920, %v1916
    %v2577 = vpack.c.b16 %v1921, %v1917
    %v2578 = vpack.c.b16 %v1926, %v1922
    %v2579 = vpack.c.b16 %v1927, %v1923
    %v2580 = vpack.c.b16 %v1928, %v1924
    %v2581 = vpack.c.b16 %v1929, %v1925
    %v2582 = vpack.c.b16 %v1934, %v1930
    %v2583 = vpack.c.b16 %v1935, %v1931
    %v2584 = vpack.c.b16 %v1936, %v1932
    %v2585 = vpack.c.b16 %v1937, %v1933
    %v2586 = vpack.c.b16 %v1942, %v1938
    %v2587 = vpack.c.b16 %v1943, %v1939
    %v2588 = vpack.c.b16 %v1944, %v1940
    %v2589 = vpack.c.b16 %v1945, %v1941
    %v2590 = vpack.c.b16 %v1950, %v1946
    %v2591 = vpack.c.b16 %v1951, %v1947
    %v2592 = vpack.c.b16 %v1952, %v1948
    %v2593 = vpack.c.b16 %v1953, %v1949
    %v2594 = vpack.c.b16 %v1958, %v1954
    %v2595 = vpack.c.b16 %v1959, %v1955
    %v2596 = vpack.c.b16 %v1960, %v1956
    %v2597 = vpack.c.b16 %v1961, %v1957
    %v2598 = vpack.c.b16 %v1966, %v1962
    %v2599 = vpack.c.b16 %v1967, %v1963
    %v2600 = vpack.c.b16 %v1968, %v1964
    %v2601 = vpack.c.b16 %v1969, %v1965
    %v2602 = vpack.c.b16 %v1974, %v1970
    %v2603 = vpack.c.b16 %v1975, %v1971
    %v2604 = vpack.c.b16 %v1976, %v1972
    %v2605 = vpack.c.b16 %v1977, %v1973
    %v2606 = vpack.c.b16 %v1982, %v1978
    %v2607 = vpack.c.b16 %v1983, %v1979
    %v2608 = vpack.c.b16 %v1984, %v1980
    %v2609 = vpack.c.b16 %v1985, %v1981
    %v2610 = vpack.c.b16 %v1990, %v1986
    %v2611 = vpack.c.b16 %v1991, %v1987
    %v2612 = vpack.c.b16 %v1992, %v1988
    %v2613 = vpack.c.b16 %v1993, %v1989
    %v2614 = vpack.c.b16 %v1998, %v1994
    %v2615 = vpack.c.b16 %v1999, %v1995
    %v2616 = vpack.c.b16 %v2000, %v1996
    %v2617 = vpack.c.b16 %v2001, %v1997
    %v2618 = vpack.c.b16 %v2006, %v2002
    %v2619 = vpack.c.b16 %v2007, %v2003
    %v2620 = vpack.c.b16 %v2008, %v2004
    %v2621 = vpack.c.b16 %v2009, %v2005
    %v2622 = vpack.c.b16 %v2014, %v2010
    %v2623 = vpack.c.b16 %v2015, %v2011
    %v2624 = vpack.c.b16 %v2016, %v2012
    %v2625 = vpack.c.b16 %v2017, %v2013
    %v2626 = vpack.c.b16 %v2022, %v2018
    %v2627 = vpack.c.b16 %v2023, %v2019
    %v2628 = vpack.c.b16 %v2024, %v2020
    %v2629 = vpack.c.b16 %v2025, %v2021
    %v2630 = vpack.c.b16 %v2030, %v2026
    %v2631 = vpack.c.b16 %v2031, %v2027
    %v2632 = vpack.c.b16 %v2032, %v2028
    %v2633 = vpack.c.b16 %v2033, %v2029
    %v2634 = vpack.c.b16 %v2038, %v2034
    %v2635 = vpack.c.b16 %v2039, %v2035
    %v2636 = vpack.c.b16 %v2040, %v2036
    %v2637 = vpack.c.b16 %v2041, %v2037
    %v2638 = vpack.c.b16 %v2046, %v2042
    %v2639 = vpack.c.b16 %v2047, %v2043
    %v2640 = vpack.c.b16 %v2048, %v2044
    %v2641 = vpack.c.b16 %v2049, %v2045
    %v2642 = vpack.c.b16 %v2054, %v2050
    %v2643 = vpack.c.b16 %v2055, %v2051
    %v2644 = vpack.c.b16 %v2056, %v2052
    %v2645 = vpack.c.b16 %v2057, %v2053
    %v2646 = vpack.c.b16 %v2062, %v2058
    %v2647 = vpack.c.b16 %v2063, %v2059
    %v2648 = vpack.c.b16 %v2064, %v2060
    %v2649 = vpack.c.b16 %v2065, %v2061
    %v2650 = vpack.c.b16 %v2070, %v2066
    %v2651 = vpack.c.b16 %v2071, %v2067
    %v2652 = vpack.c.b16 %v2072, %v2068
    %v2653 = vpack.c.b16 %v2073, %v2069
    %v2654 = vpack.c.b16 %v2078, %v2074
    %v2655 = vpack.c.b16 %v2079, %v2075
    %v2656 = vpack.c.b16 %v2080, %v2076
    %v2657 = vpack.c.b16 %v2081, %v2077
    %v2658 = vpack.c.b16 %v2086, %v2082
    %v2659 = vpack.c.b16 %v2087, %v2083
    %v2660 = vpack.c.b16 %v2088, %v2084
    %v2661 = vpack.c.b16 %v2089, %v2085
    %v2662 = vpack.c.b16 %v2094, %v2090
    %v2663 = vpack.c.b16 %v2095, %v2091
    %v2664 = vpack.c.b16 %v2096, %v2092
    %v2665 = vpack.c.b16 %v2097, %v2093
    %v2666 = vpack.c.b16 %v2102, %v2098
    %v2667 = vpack.c.b16 %v2103, %v2099
    %v2668 = vpack.c.b16 %v2104, %v2100
    %v2669 = vpack.c.b16 %v2105, %v2101
    %v2670 = vpack.c.b16 %v2110, %v2106
    %v2671 = vpack.c.b16 %v2111, %v2107
    %v2672 = vpack.c.b16 %v2112, %v2108
    %v2673 = vpack.c.b16 %v2113, %v2109
    %v2674 = vpack.c.b16 %v2118, %v2114
    %v2675 = vpack.c.b16 %v2119, %v2115
    %v2676 = vpack.c.b16 %v2120, %v2116
    %v2677 = vpack.c.b16 %v2121, %v2117
    %v2678 = vpack.c.b16 %v2126, %v2122
    %v2679 = vpack.c.b16 %v2127, %v2123
    %v2680 = vpack.c.b16 %v2128, %v2124
    %v2681 = vpack.c.b16 %v2129, %v2125
    %v2682 = vpack.c.b16 %v2134, %v2130
    %v2683 = vpack.c.b16 %v2135, %v2131
    %v2684 = vpack.c.b16 %v2136, %v2132
    %v2685 = vpack.c.b16 %v2137, %v2133
    %v2686 = vpack.c.b16 %v2142, %v2138
    %v2687 = vpack.c.b16 %v2143, %v2139
    %v2688 = vpack.c.b16 %v2144, %v2140
    %v2689 = vpack.c.b16 %v2145, %v2141
    %v2690 = vpack.c.b16 %v2150, %v2146
    %v2691 = vpack.c.b16 %v2151, %v2147
    %v2692 = vpack.c.b16 %v2152, %v2148
    %v2693 = vpack.c.b16 %v2153, %v2149
    %v2694 = vpack.c.b16 %v2158, %v2154
    %v2695 = vpack.c.b16 %v2159, %v2155
    %v2696 = vpack.c.b16 %v2160, %v2156
    %v2697 = vpack.c.b16 %v2161, %v2157
    %v2698 = vpack.c.b16 %v2166, %v2162
    %v2699 = vpack.c.b16 %v2167, %v2163
    %v2700 = vpack.c.b16 %v2168, %v2164
    %v2701 = vpack.c.b16 %v2169, %v2165
    %v2702 = vpack.c.b16 %v2174, %v2170
    %v2703 = vpack.c.b16 %v2175, %v2171
    %v2704 = vpack.c.b16 %v2176, %v2172
    %v2705 = vpack.c.b16 %v2177, %v2173
    %v2706 = vpack.c.b16 %v2182, %v2178
    %v2707 = vpack.c.b16 %v2183, %v2179
    %v2708 = vpack.c.b16 %v2184, %v2180
    %v2709 = vpack.c.b16 %v2185, %v2181
    %v2710 = vpack.c.b16 %v2190, %v2186
    %v2711 = vpack.c.b16 %v2191, %v2187
    %v2712 = vpack.c.b16 %v2192, %v2188
    %v2713 = vpack.c.b16 %v2193, %v2189
    %v2714 = vpack.c.b16 %v2198, %v2194
    %v2715 = vpack.c.b16 %v2199, %v2195
    %v2716 = vpack.c.b16 %v2200, %v2196
    %v2717 = vpack.c.b16 %v2201, %v2197
    %v2718 = vpack.c.b16 %v2206, %v2202
    %v2719 = vpack.c.b16 %v2207, %v2203
    %v2720 = vpack.c.b16 %v2208, %v2204
    %v2721 = vpack.c.b16 %v2209, %v2205
    %3234 = vmatprep.subr.bf16.mxu0 %v2211
    %3235 = vmatpush1.bf16.msra.mxu0 %v2210
    %3236 = vmatprep.subr.bf16.mxu0 %v2215
    %3237 = vmatpush1.bf16.msra.mxu0 %v2214
    %3238 = vmatprep.subr.bf16.mxu0 %v2219
    %3239 = vmatpush1.bf16.msra.mxu0 %v2218
    %3240 = vmatprep.subr.bf16.mxu0 %v2223
    %3241 = vmatpush1.bf16.msra.mxu0 %v2222
    %3242 = vmatprep.subr.bf16.mxu0 %v2227
    %3243 = vmatpush1.bf16.msra.mxu0 %v2226
    %3244 = vmatprep.subr.bf16.mxu0 %v2231
    %3245 = vmatpush1.bf16.msra.mxu0 %v2230
    %3246 = vmatprep.subr.bf16.mxu0 %v2235
    %3247 = vmatpush1.bf16.msra.mxu0 %v2234
    %3248 = vmatprep.subr.bf16.mxu0 %v2239
    %3249 = vmatpush1.bf16.msra.mxu0 %v2238
    %3250 = vmatprep.subr.bf16.mxu0 %v2243
    %3251 = vmatpush1.bf16.msra.mxu0 %v2242
    %3252 = vmatprep.subr.bf16.mxu0 %v2247
    %3253 = vmatpush1.bf16.msra.mxu0 %v2246
    %3254 = vmatprep.subr.bf16.mxu0 %v2251
    %3255 = vmatpush1.bf16.msra.mxu0 %v2250
    %3256 = vmatprep.subr.bf16.mxu0 %v2255
    %3257 = vmatpush1.bf16.msra.mxu0 %v2254
    %3258 = vmatprep.subr.bf16.mxu0 %v2259
    %3259 = vmatpush1.bf16.msra.mxu0 %v2258
    %3260 = vmatprep.subr.bf16.mxu0 %v2263
    %3261 = vmatpush1.bf16.msra.mxu0 %v2262
    %3262 = vmatprep.subr.bf16.mxu0 %v2267
    %3263 = vmatpush1.bf16.msra.mxu0 %v2266
    %3264 = vmatprep.subr.bf16.mxu0 %v2271
    %3265 = vmatpush1.bf16.msra.mxu0 %v2270
    %3266 = vmatprep.mubr.bf16.mxu0 %v597
    %3267 = vmatmul.mubr.bf16.gmra.mrb[0].mxu0 %v583
    %v3268 = vpop.f32.mrb[0].mxu0
    %v3269 = vadd.f32 %v541, %v3268
    %v3270 = vpop.f32.mrb[0].mxu0
    %v3271 = vadd.f32 %v545, %v3270
    %v3272 = vpop.f32.mrb[0].mxu0
    %v3273 = vpop.f32.mrb[0].mxu0
    %3274 = vdwg.mxu0
    %3275 = vmatprep.subr.bf16.mxu0 %v2275
    %3276 = vmatpush1.bf16.msra.mxu0 %v2274
    %3277 = vmatprep.subr.bf16.mxu0 %v2279
    %3278 = vmatpush1.bf16.msra.mxu0 %v2278
    %3279 = vmatprep.subr.bf16.mxu0 %v2283
    %3280 = vmatpush1.bf16.msra.mxu0 %v2282
    %3281 = vmatprep.subr.bf16.mxu0 %v2287
    %3282 = vmatpush1.bf16.msra.mxu0 %v2286
    %3283 = vmatprep.subr.bf16.mxu0 %v2291
    %3284 = vmatpush1.bf16.msra.mxu0 %v2290
    %3285 = vmatprep.subr.bf16.mxu0 %v2295
    %3286 = vmatpush1.bf16.msra.mxu0 %v2294
    %3287 = vmatprep.subr.bf16.mxu0 %v2299
    %3288 = vmatpush1.bf16.msra.mxu0 %v2298
    %3289 = vmatprep.subr.bf16.mxu0 %v2303
    %3290 = vmatpush1.bf16.msra.mxu0 %v2302
    %3291 = vmatprep.subr.bf16.mxu0 %v2307
    %3292 = vmatpush1.bf16.msra.mxu0 %v2306
    %3293 = vmatprep.subr.bf16.mxu0 %v2311
    %3294 = vmatpush1.bf16.msra.mxu0 %v2310
    %3295 = vmatprep.subr.bf16.mxu0 %v2315
    %3296 = vmatpush1.bf16.msra.mxu0 %v2314
    %3297 = vmatprep.subr.bf16.mxu0 %v2319
    %3298 = vmatpush1.bf16.msra.mxu0 %v2318
    %3299 = vmatprep.subr.bf16.mxu0 %v2323
    %3300 = vmatpush1.bf16.msra.mxu0 %v2322
    %3301 = vmatprep.subr.bf16.mxu0 %v2327
    %3302 = vmatpush1.bf16.msra.mxu0 %v2326
    %3303 = vmatprep.subr.bf16.mxu0 %v2331
    %3304 = vmatpush1.bf16.msra.mxu0 %v2330
    %3305 = vmatprep.subr.bf16.mxu0 %v2335
    %3306 = vmatpush1.bf16.msra.mxu0 %v2334
    %3307 = vmatprep.mubr.bf16.mxu0 %v607
    %3308 = vmatmul.mubr.bf16.gmra.mrb[0].mxu0 %v605
    %v3309 = vpop.f32.mrb[0].mxu0
    %v3310 = vadd.f32 %v3269, %v3309
    %v3311 = vpop.f32.mrb[0].mxu0
    %v3312 = vadd.f32 %v3271, %v3311
    %v3313 = vpop.f32.mrb[0].mxu0
    %v3314 = vpop.f32.mrb[0].mxu0
    %3315 = vdwg.mxu0
    %3316 = vmatprep.subr.bf16.mxu0 %v2339
    %3317 = vmatpush1.bf16.msra.mxu0 %v2338
    %3318 = vmatprep.subr.bf16.mxu0 %v2343
    %3319 = vmatpush1.bf16.msra.mxu0 %v2342
    %3320 = vmatprep.subr.bf16.mxu0 %v2347
    %3321 = vmatpush1.bf16.msra.mxu0 %v2346
    %3322 = vmatprep.subr.bf16.mxu0 %v2351
    %3323 = vmatpush1.bf16.msra.mxu0 %v2350
    %3324 = vmatprep.subr.bf16.mxu0 %v2355
    %3325 = vmatpush1.bf16.msra.mxu0 %v2354
    %3326 = vmatprep.subr.bf16.mxu0 %v2359
    %3327 = vmatpush1.bf16.msra.mxu0 %v2358
    %3328 = vmatprep.subr.bf16.mxu0 %v2363
    %3329 = vmatpush1.bf16.msra.mxu0 %v2362
    %3330 = vmatprep.subr.bf16.mxu0 %v2367
    %3331 = vmatpush1.bf16.msra.mxu0 %v2366
    %3332 = vmatprep.subr.bf16.mxu0 %v2371
    %3333 = vmatpush1.bf16.msra.mxu0 %v2370
    %3334 = vmatprep.subr.bf16.mxu0 %v2375
    %3335 = vmatpush1.bf16.msra.mxu0 %v2374
    %3336 = vmatprep.subr.bf16.mxu0 %v2379
    %3337 = vmatpush1.bf16.msra.mxu0 %v2378
    %3338 = vmatprep.subr.bf16.mxu0 %v2383
    %3339 = vmatpush1.bf16.msra.mxu0 %v2382
    %3340 = vmatprep.subr.bf16.mxu0 %v2387
    %3341 = vmatpush1.bf16.msra.mxu0 %v2386
    %3342 = vmatprep.subr.bf16.mxu0 %v2391
    %3343 = vmatpush1.bf16.msra.mxu0 %v2390
    %3344 = vmatprep.subr.bf16.mxu0 %v2395
    %3345 = vmatpush1.bf16.msra.mxu0 %v2394
    %3346 = vmatprep.subr.bf16.mxu0 %v2399
    %3347 = vmatpush1.bf16.msra.mxu0 %v2398
    %3348 = vmatprep.mubr.bf16.mxu0 %v604
    %3349 = vmatmul.mubr.bf16.gmra.mrb[0].mxu0 %v590
    %v3350 = vpop.f32.mrb[0].mxu0
    %v3351 = vadd.f32 %v3310, %v3350
    %v3352 = vpop.f32.mrb[0].mxu0
    %v3353 = vadd.f32 %v3312, %v3352
    %v3354 = vpop.f32.mrb[0].mxu0
    %v3355 = vpop.f32.mrb[0].mxu0
    %3356 = vdwg.mxu0
    %3357 = vmatprep.subr.bf16.mxu0 %v2403
    %3358 = vmatpush1.bf16.msra.mxu0 %v2402
    %3359 = vmatprep.subr.bf16.mxu0 %v2407
    %3360 = vmatpush1.bf16.msra.mxu0 %v2406
    %3361 = vmatprep.subr.bf16.mxu0 %v2411
    %3362 = vmatpush1.bf16.msra.mxu0 %v2410
    %3363 = vmatprep.subr.bf16.mxu0 %v2415
    %3364 = vmatpush1.bf16.msra.mxu0 %v2414
    %3365 = vmatprep.subr.bf16.mxu0 %v2419
    %3366 = vmatpush1.bf16.msra.mxu0 %v2418
    %3367 = vmatprep.subr.bf16.mxu0 %v2423
    %3368 = vmatpush1.bf16.msra.mxu0 %v2422
    %3369 = vmatprep.subr.bf16.mxu0 %v2427
    %3370 = vmatpush1.bf16.msra.mxu0 %v2426
    %3371 = vmatprep.subr.bf16.mxu0 %v2431
    %3372 = vmatpush1.bf16.msra.mxu0 %v2430
    %3373 = vmatprep.subr.bf16.mxu0 %v2435
    %3374 = vmatpush1.bf16.msra.mxu0 %v2434
    %3375 = vmatprep.subr.bf16.mxu0 %v2439
    %3376 = vmatpush1.bf16.msra.mxu0 %v2438
    %3377 = vmatprep.subr.bf16.mxu0 %v2443
    %3378 = vmatpush1.bf16.msra.mxu0 %v2442
    %3379 = vmatprep.subr.bf16.mxu0 %v2447
    %3380 = vmatpush1.bf16.msra.mxu0 %v2446
    %3381 = vmatprep.subr.bf16.mxu0 %v2451
    %3382 = vmatpush1.bf16.msra.mxu0 %v2450
    %3383 = vmatprep.subr.bf16.mxu0 %v2455
    %3384 = vmatpush1.bf16.msra.mxu0 %v2454
    %3385 = vmatprep.subr.bf16.mxu0 %v2459
    %3386 = vmatpush1.bf16.msra.mxu0 %v2458
    %3387 = vmatprep.subr.bf16.mxu0 %v2463
    %3388 = vmatpush1.bf16.msra.mxu0 %v2462
    %3389 = vmatprep.mubr.bf16.mxu0 %v608
    %3390 = vmatmul.mubr.bf16.gmra.mrb[0].mxu0 %v606
    %v3391 = vpop.f32.mrb[0].mxu0
    %v3392 = vadd.f32 %v3351, %v3391
    %v3393 = vpop.f32.mrb[0].mxu0
    %v3394 = vadd.f32 %v3353, %v3393
    %v3395 = vpop.f32.mrb[0].mxu0
    %v3396 = vpop.f32.mrb[0].mxu0
    %3397 = vdwg.mxu0
    %3398 = vmatprep.subr.bf16.mxu0 %v2467
    %3399 = vmatpush1.bf16.msra.mxu0 %v2466
    %3400 = vmatprep.subr.bf16.mxu0 %v2471
    %3401 = vmatpush1.bf16.msra.mxu0 %v2470
    %3402 = vmatprep.subr.bf16.mxu0 %v2475
    %3403 = vmatpush1.bf16.msra.mxu0 %v2474
    %3404 = vmatprep.subr.bf16.mxu0 %v2479
    %3405 = vmatpush1.bf16.msra.mxu0 %v2478
    %3406 = vmatprep.subr.bf16.mxu0 %v2483
    %3407 = vmatpush1.bf16.msra.mxu0 %v2482
    %3408 = vmatprep.subr.bf16.mxu0 %v2487
    %3409 = vmatpush1.bf16.msra.mxu0 %v2486
    %3410 = vmatprep.subr.bf16.mxu0 %v2491
    %3411 = vmatpush1.bf16.msra.mxu0 %v2490
    %3412 = vmatprep.subr.bf16.mxu0 %v2495
    %3413 = vmatpush1.bf16.msra.mxu0 %v2494
    %3414 = vmatprep.subr.bf16.mxu0 %v2499
    %3415 = vmatpush1.bf16.msra.mxu0 %v2498
    %3416 = vmatprep.subr.bf16.mxu0 %v2503
    %3417 = vmatpush1.bf16.msra.mxu0 %v2502
    %3418 = vmatprep.subr.bf16.mxu0 %v2507
    %3419 = vmatpush1.bf16.msra.mxu0 %v2506
    %3420 = vmatprep.subr.bf16.mxu0 %v2511
    %3421 = vmatpush1.bf16.msra.mxu0 %v2510
    %3422 = vmatprep.subr.bf16.mxu0 %v2515
    %3423 = vmatpush1.bf16.msra.mxu0 %v2514
    %3424 = vmatprep.subr.bf16.mxu0 %v2519
    %3425 = vmatpush1.bf16.msra.mxu0 %v2518
    %3426 = vmatprep.subr.bf16.mxu0 %v2523
    %3427 = vmatpush1.bf16.msra.mxu0 %v2522
    %3428 = vmatprep.subr.bf16.mxu0 %v2527
    %3429 = vmatpush1.bf16.msra.mxu0 %v2526
    %3430 = vmatprep.mubr.bf16.mxu0 %v646
    %3431 = vmatmul.mubr.bf16.gmra.mrb[0].mxu0 %v632
    %v3432 = vpop.f32.mrb[0].mxu0
    %v3433 = vadd.f32 %v3392, %v3432
    %v3434 = vpop.f32.mrb[0].mxu0
    %v3435 = vadd.f32 %v3394, %v3434
    %v3436 = vpop.f32.mrb[0].mxu0
    %v3437 = vpop.f32.mrb[0].mxu0
    %3438 = vdwg.mxu0
    %3439 = vmatprep.subr.bf16.mxu0 %v2531
    %3440 = vmatpush1.bf16.msra.mxu0 %v2530
    %3441 = vmatprep.subr.bf16.mxu0 %v2535
    %3442 = vmatpush1.bf16.msra.mxu0 %v2534
    %3443 = vmatprep.subr.bf16.mxu0 %v2539
    %3444 = vmatpush1.bf16.msra.mxu0 %v2538
    %3445 = vmatprep.subr.bf16.mxu0 %v2543
    %3446 = vmatpush1.bf16.msra.mxu0 %v2542
    %3447 = vmatprep.subr.bf16.mxu0 %v2547
    %3448 = vmatpush1.bf16.msra.mxu0 %v2546
    %3449 = vmatprep.subr.bf16.mxu0 %v2551
    %3450 = vmatpush1.bf16.msra.mxu0 %v2550
    %3451 = vmatprep.subr.bf16.mxu0 %v2555
    %3452 = vmatpush1.bf16.msra.mxu0 %v2554
    %3453 = vmatprep.subr.bf16.mxu0 %v2559
    %3454 = vmatpush1.bf16.msra.mxu0 %v2558
    %3455 = vmatprep.subr.bf16.mxu0 %v2563
    %3456 = vmatpush1.bf16.msra.mxu0 %v2562
    %3457 = vmatprep.subr.bf16.mxu0 %v2567
    %3458 = vmatpush1.bf16.msra.mxu0 %v2566
    %3459 = vmatprep.subr.bf16.mxu0 %v2571
    %3460 = vmatpush1.bf16.msra.mxu0 %v2570
    %3461 = vmatprep.subr.bf16.mxu0 %v2575
    %3462 = vmatpush1.bf16.msra.mxu0 %v2574
    %3463 = vmatprep.subr.bf16.mxu0 %v2579
    %3464 = vmatpush1.bf16.msra.mxu0 %v2578
    %3465 = vmatprep.subr.bf16.mxu0 %v2583
    %3466 = vmatpush1.bf16.msra.mxu0 %v2582
    %3467 = vmatprep.subr.bf16.mxu0 %v2587
    %3468 = vmatpush1.bf16.msra.mxu0 %v2586
    %3469 = vmatprep.subr.bf16.mxu0 %v2591
    %3470 = vmatpush1.bf16.msra.mxu0 %v2590
    %3471 = vmatprep.mubr.bf16.mxu0 %v656
    %3472 = vmatmul.mubr.bf16.gmra.mrb[0].mxu0 %v654
    %v3473 = vpop.f32.mrb[0].mxu0
    %v3474 = vadd.f32 %v3433, %v3473
    %v3475 = vpop.f32.mrb[0].mxu0
    %v3476 = vadd.f32 %v3435, %v3475
    %v3477 = vpop.f32.mrb[0].mxu0
    %v3478 = vpop.f32.mrb[0].mxu0
    %3479 = vdwg.mxu0
    %3480 = vmatprep.subr.bf16.mxu0 %v2595
    %3481 = vmatpush1.bf16.msra.mxu0 %v2594
    %3482 = vmatprep.subr.bf16.mxu0 %v2599
    %3483 = vmatpush1.bf16.msra.mxu0 %v2598
    %3484 = vmatprep.subr.bf16.mxu0 %v2603
    %3485 = vmatpush1.bf16.msra.mxu0 %v2602
    %3486 = vmatprep.subr.bf16.mxu0 %v2607
    %3487 = vmatpush1.bf16.msra.mxu0 %v2606
    %3488 = vmatprep.subr.bf16.mxu0 %v2611
    %3489 = vmatpush1.bf16.msra.mxu0 %v2610
    %3490 = vmatprep.subr.bf16.mxu0 %v2615
    %3491 = vmatpush1.bf16.msra.mxu0 %v2614
    %3492 = vmatprep.subr.bf16.mxu0 %v2619
    %3493 = vmatpush1.bf16.msra.mxu0 %v2618
    %3494 = vmatprep.subr.bf16.mxu0 %v2623
    %3495 = vmatpush1.bf16.msra.mxu0 %v2622
    %3496 = vmatprep.subr.bf16.mxu0 %v2627
    %3497 = vmatpush1.bf16.msra.mxu0 %v2626
    %3498 = vmatprep.subr.bf16.mxu0 %v2631
    %3499 = vmatpush1.bf16.msra.mxu0 %v2630
    %3500 = vmatprep.subr.bf16.mxu0 %v2635
    %3501 = vmatpush1.bf16.msra.mxu0 %v2634
    %3502 = vmatprep.subr.bf16.mxu0 %v2639
    %3503 = vmatpush1.bf16.msra.mxu0 %v2638
    %3504 = vmatprep.subr.bf16.mxu0 %v2643
    %3505 = vmatpush1.bf16.msra.mxu0 %v2642
    %3506 = vmatprep.subr.bf16.mxu0 %v2647
    %3507 = vmatpush1.bf16.msra.mxu0 %v2646
    %3508 = vmatprep.subr.bf16.mxu0 %v2651
    %3509 = vmatpush1.bf16.msra.mxu0 %v2650
    %3510 = vmatprep.subr.bf16.mxu0 %v2655
    %3511 = vmatpush1.bf16.msra.mxu0 %v2654
    %3512 = vmatprep.mubr.bf16.mxu0 %v653
    %3513 = vmatmul.mubr.bf16.gmra.mrb[0].mxu0 %v639
    %v3514 = vpop.f32.mrb[0].mxu0
    %v3515 = vadd.f32 %v3474, %v3514
    %v3516 = vpop.f32.mrb[0].mxu0
    %v3517 = vadd.f32 %v3476, %v3516
    %v3518 = vpop.f32.mrb[0].mxu0
    %v3519 = vpop.f32.mrb[0].mxu0
    %3520 = vdwg.mxu0
    %3521 = vmatprep.subr.bf16.mxu0 %v2659
    %3522 = vmatpush1.bf16.msra.mxu0 %v2658
    %3523 = vmatprep.subr.bf16.mxu0 %v2663
    %3524 = vmatpush1.bf16.msra.mxu0 %v2662
    %3525 = vmatprep.subr.bf16.mxu0 %v2667
    %3526 = vmatpush1.bf16.msra.mxu0 %v2666
    %3527 = vmatprep.subr.bf16.mxu0 %v2671
    %3528 = vmatpush1.bf16.msra.mxu0 %v2670
    %3529 = vmatprep.subr.bf16.mxu0 %v2675
    %3530 = vmatpush1.bf16.msra.mxu0 %v2674
    %3531 = vmatprep.subr.bf16.mxu0 %v2679
    %3532 = vmatpush1.bf16.msra.mxu0 %v2678
    %3533 = vmatprep.subr.bf16.mxu0 %v2683
    %3534 = vmatpush1.bf16.msra.mxu0 %v2682
    %3535 = vmatprep.subr.bf16.mxu0 %v2687
    %3536 = vmatpush1.bf16.msra.mxu0 %v2686
    %3537 = vmatprep.subr.bf16.mxu0 %v2691
    %3538 = vmatpush1.bf16.msra.mxu0 %v2690
    %3539 = vmatprep.subr.bf16.mxu0 %v2695
    %3540 = vmatpush1.bf16.msra.mxu0 %v2694
    %3541 = vmatprep.subr.bf16.mxu0 %v2699
    %3542 = vmatpush1.bf16.msra.mxu0 %v2698
    %3543 = vmatprep.subr.bf16.mxu0 %v2703
    %3544 = vmatpush1.bf16.msra.mxu0 %v2702
    %3545 = vmatprep.subr.bf16.mxu0 %v2707
    %3546 = vmatpush1.bf16.msra.mxu0 %v2706
    %3547 = vmatprep.subr.bf16.mxu0 %v2711
    %3548 = vmatpush1.bf16.msra.mxu0 %v2710
    %3549 = vmatprep.subr.bf16.mxu0 %v2715
    %3550 = vmatpush1.bf16.msra.mxu0 %v2714
    %3551 = vmatprep.subr.bf16.mxu0 %v2719
    %3552 = vmatpush1.bf16.msra.mxu0 %v2718
    %3553 = vmatprep.mubr.bf16.mxu0 %v657
    %3554 = vmatmul.mubr.bf16.gmra.mrb[0].mxu0 %v655
    %v3555 = vpop.f32.mrb[0].mxu0
    %v3556 = vadd.f32 %v3515, %v3555
    %v3557 = vpop.f32.mrb[0].mxu0
    %v3558 = vadd.f32 %v3517, %v3557
    %v3559 = vpop.f32.mrb[0].mxu0
    %v3560 = vpop.f32.mrb[0].mxu0
    %3561 = vdwg.mxu0
    %3562 = vmatprep.subr.bf16.mxu0 %v2213
    %3563 = vmatpush1.bf16.msra.mxu0 %v2212
    %3564 = vmatprep.subr.bf16.mxu0 %v2217
    %3565 = vmatpush1.bf16.msra.mxu0 %v2216
    %3566 = vmatprep.subr.bf16.mxu0 %v2221
    %3567 = vmatpush1.bf16.msra.mxu0 %v2220
    %3568 = vmatprep.subr.bf16.mxu0 %v2225
    %3569 = vmatpush1.bf16.msra.mxu0 %v2224
    %3570 = vmatprep.subr.bf16.mxu0 %v2229
    %3571 = vmatpush1.bf16.msra.mxu0 %v2228
    %3572 = vmatprep.subr.bf16.mxu0 %v2233
    %3573 = vmatpush1.bf16.msra.mxu0 %v2232
    %3574 = vmatprep.subr.bf16.mxu0 %v2237
    %3575 = vmatpush1.bf16.msra.mxu0 %v2236
    %3576 = vmatprep.subr.bf16.mxu0 %v2241
    %3577 = vmatpush1.bf16.msra.mxu0 %v2240
    %3578 = vmatprep.subr.bf16.mxu0 %v2245
    %3579 = vmatpush1.bf16.msra.mxu0 %v2244
    %3580 = vmatprep.subr.bf16.mxu0 %v2249
    %3581 = vmatpush1.bf16.msra.mxu0 %v2248
    %3582 = vmatprep.subr.bf16.mxu0 %v2253
    %3583 = vmatpush1.bf16.msra.mxu0 %v2252
    %3584 = vmatprep.subr.bf16.mxu0 %v2257
    %3585 = vmatpush1.bf16.msra.mxu0 %v2256
    %3586 = vmatprep.subr.bf16.mxu0 %v2261
    %3587 = vmatpush1.bf16.msra.mxu0 %v2260
    %3588 = vmatprep.subr.bf16.mxu0 %v2265
    %3589 = vmatpush1.bf16.msra.mxu0 %v2264
    %3590 = vmatprep.subr.bf16.mxu0 %v2269
    %3591 = vmatpush1.bf16.msra.mxu0 %v2268
    %3592 = vmatprep.subr.bf16.mxu0 %v2273
    %3593 = vmatpush1.bf16.msra.mxu0 %v2272
    %3594 = vmatprep.mubr.bf16.mxu0 %v597
    %3595 = vmatmul.mubr.bf16.gmra.mrb[0].mxu0 %v583
    %v3596 = vpop.f32.mrb[0].mxu0
    %v3597 = vadd.f32 %v549, %v3596
    %v3598 = vpop.f32.mrb[0].mxu0
    %v3599 = vadd.f32 %v553, %v3598
    %v3600 = vpop.f32.mrb[0].mxu0
    %v3601 = vpop.f32.mrb[0].mxu0
    %3602 = vdwg.mxu0
    %3603 = vmatprep.subr.bf16.mxu0 %v2277
    %3604 = vmatpush1.bf16.msra.mxu0 %v2276
    %3605 = vmatprep.subr.bf16.mxu0 %v2281
    %3606 = vmatpush1.bf16.msra.mxu0 %v2280
    %3607 = vmatprep.subr.bf16.mxu0 %v2285
    %3608 = vmatpush1.bf16.msra.mxu0 %v2284
    %3609 = vmatprep.subr.bf16.mxu0 %v2289
    %3610 = vmatpush1.bf16.msra.mxu0 %v2288
    %3611 = vmatprep.subr.bf16.mxu0 %v2293
    %3612 = vmatpush1.bf16.msra.mxu0 %v2292
    %3613 = vmatprep.subr.bf16.mxu0 %v2297
    %3614 = vmatpush1.bf16.msra.mxu0 %v2296
    %3615 = vmatprep.subr.bf16.mxu0 %v2301
    %3616 = vmatpush1.bf16.msra.mxu0 %v2300
    %3617 = vmatprep.subr.bf16.mxu0 %v2305
    %3618 = vmatpush1.bf16.msra.mxu0 %v2304
    %3619 = vmatprep.subr.bf16.mxu0 %v2309
    %3620 = vmatpush1.bf16.msra.mxu0 %v2308
    %3621 = vmatprep.subr.bf16.mxu0 %v2313
    %3622 = vmatpush1.bf16.msra.mxu0 %v2312
    %3623 = vmatprep.subr.bf16.mxu0 %v2317
    %3624 = vmatpush1.bf16.msra.mxu0 %v2316
    %3625 = vmatprep.subr.bf16.mxu0 %v2321
    %3626 = vmatpush1.bf16.msra.mxu0 %v2320
    %3627 = vmatprep.subr.bf16.mxu0 %v2325
    %3628 = vmatpush1.bf16.msra.mxu0 %v2324
    %3629 = vmatprep.subr.bf16.mxu0 %v2329
    %3630 = vmatpush1.bf16.msra.mxu0 %v2328
    %3631 = vmatprep.subr.bf16.mxu0 %v2333
    %3632 = vmatpush1.bf16.msra.mxu0 %v2332
    %3633 = vmatprep.subr.bf16.mxu0 %v2337
    %3634 = vmatpush1.bf16.msra.mxu0 %v2336
    %3635 = vmatprep.mubr.bf16.mxu0 %v607
    %3636 = vmatmul.mubr.bf16.gmra.mrb[0].mxu0 %v605
    %v3637 = vpop.f32.mrb[0].mxu0
    %v3638 = vadd.f32 %v3597, %v3637
    %v3639 = vpop.f32.mrb[0].mxu0
    %v3640 = vadd.f32 %v3599, %v3639
    %v3641 = vpop.f32.mrb[0].mxu0
    %v3642 = vpop.f32.mrb[0].mxu0
    %3643 = vdwg.mxu0
    %3644 = vmatprep.subr.bf16.mxu0 %v2341
    %3645 = vmatpush1.bf16.msra.mxu0 %v2340
    %3646 = vmatprep.subr.bf16.mxu0 %v2345
    %3647 = vmatpush1.bf16.msra.mxu0 %v2344
    %3648 = vmatprep.subr.bf16.mxu0 %v2349
    %3649 = vmatpush1.bf16.msra.mxu0 %v2348
    %3650 = vmatprep.subr.bf16.mxu0 %v2353
    %3651 = vmatpush1.bf16.msra.mxu0 %v2352
    %3652 = vmatprep.subr.bf16.mxu0 %v2357
    %3653 = vmatpush1.bf16.msra.mxu0 %v2356
    %3654 = vmatprep.subr.bf16.mxu0 %v2361
    %3655 = vmatpush1.bf16.msra.mxu0 %v2360
    %3656 = vmatprep.subr.bf16.mxu0 %v2365
    %3657 = vmatpush1.bf16.msra.mxu0 %v2364
    %3658 = vmatprep.subr.bf16.mxu0 %v2369
    %3659 = vmatpush1.bf16.msra.mxu0 %v2368
    %3660 = vmatprep.subr.bf16.mxu0 %v2373
    %3661 = vmatpush1.bf16.msra.mxu0 %v2372
    %3662 = vmatprep.subr.bf16.mxu0 %v2377
    %3663 = vmatpush1.bf16.msra.mxu0 %v2376
    %3664 = vmatprep.subr.bf16.mxu0 %v2381
    %3665 = vmatpush1.bf16.msra.mxu0 %v2380
    %3666 = vmatprep.subr.bf16.mxu0 %v2385
    %3667 = vmatpush1.bf16.msra.mxu0 %v2384
    %3668 = vmatprep.subr.bf16.mxu0 %v2389
    %3669 = vmatpush1.bf16.msra.mxu0 %v2388
    %3670 = vmatprep.subr.bf16.mxu0 %v2393
    %3671 = vmatpush1.bf16.msra.mxu0 %v2392
    %3672 = vmatprep.subr.bf16.mxu0 %v2397
    %3673 = vmatpush1.bf16.msra.mxu0 %v2396
    %3674 = vmatprep.subr.bf16.mxu0 %v2401
    %3675 = vmatpush1.bf16.msra.mxu0 %v2400
    %3676 = vmatprep.mubr.bf16.mxu0 %v604
    %3677 = vmatmul.mubr.bf16.gmra.mrb[0].mxu0 %v590
    %v3678 = vpop.f32.mrb[0].mxu0
    %v3679 = vadd.f32 %v3638, %v3678
    %v3680 = vpop.f32.mrb[0].mxu0
    %v3681 = vadd.f32 %v3640, %v3680
    %v3682 = vpop.f32.mrb[0].mxu0
    %v3683 = vpop.f32.mrb[0].mxu0
    %3684 = vdwg.mxu0
    %3685 = vmatprep.subr.bf16.mxu0 %v2405
    %3686 = vmatpush1.bf16.msra.mxu0 %v2404
    %3687 = vmatprep.subr.bf16.mxu0 %v2409
    %3688 = vmatpush1.bf16.msra.mxu0 %v2408
    %3689 = vmatprep.subr.bf16.mxu0 %v2413
    %3690 = vmatpush1.bf16.msra.mxu0 %v2412
    %3691 = vmatprep.subr.bf16.mxu0 %v2417
    %3692 = vmatpush1.bf16.msra.mxu0 %v2416
    %3693 = vmatprep.subr.bf16.mxu0 %v2421
    %3694 = vmatpush1.bf16.msra.mxu0 %v2420
    %3695 = vmatprep.subr.bf16.mxu0 %v2425
    %3696 = vmatpush1.bf16.msra.mxu0 %v2424
    %3697 = vmatprep.subr.bf16.mxu0 %v2429
    %3698 = vmatpush1.bf16.msra.mxu0 %v2428
    %3699 = vmatprep.subr.bf16.mxu0 %v2433
    %3700 = vmatpush1.bf16.msra.mxu0 %v2432
    %3701 = vmatprep.subr.bf16.mxu0 %v2437
    %3702 = vmatpush1.bf16.msra.mxu0 %v2436
    %3703 = vmatprep.subr.bf16.mxu0 %v2441
    %3704 = vmatpush1.bf16.msra.mxu0 %v2440
    %3705 = vmatprep.subr.bf16.mxu0 %v2445
    %3706 = vmatpush1.bf16.msra.mxu0 %v2444
    %3707 = vmatprep.subr.bf16.mxu0 %v2449
    %3708 = vmatpush1.bf16.msra.mxu0 %v2448
    %3709 = vmatprep.subr.bf16.mxu0 %v2453
    %3710 = vmatpush1.bf16.msra.mxu0 %v2452
    %3711 = vmatprep.subr.bf16.mxu0 %v2457
    %3712 = vmatpush1.bf16.msra.mxu0 %v2456
    %3713 = vmatprep.subr.bf16.mxu0 %v2461
    %3714 = vmatpush1.bf16.msra.mxu0 %v2460
    %3715 = vmatprep.subr.bf16.mxu0 %v2465
    %3716 = vmatpush1.bf16.msra.mxu0 %v2464
    %3717 = vmatprep.mubr.bf16.mxu0 %v608
    %3718 = vmatmul.mubr.bf16.gmra.mrb[0].mxu0 %v606
    %v3719 = vpop.f32.mrb[0].mxu0
    %v3720 = vadd.f32 %v3679, %v3719
    %v3721 = vpop.f32.mrb[0].mxu0
    %v3722 = vadd.f32 %v3681, %v3721
    %v3723 = vpop.f32.mrb[0].mxu0
    %v3724 = vpop.f32.mrb[0].mxu0
    %3725 = vdwg.mxu0
    %3726 = vmatprep.subr.bf16.mxu0 %v2469
    %3727 = vmatpush1.bf16.msra.mxu0 %v2468
    %3728 = vmatprep.subr.bf16.mxu0 %v2473
    %3729 = vmatpush1.bf16.msra.mxu0 %v2472
    %3730 = vmatprep.subr.bf16.mxu0 %v2477
    %3731 = vmatpush1.bf16.msra.mxu0 %v2476
    %3732 = vmatprep.subr.bf16.mxu0 %v2481
    %3733 = vmatpush1.bf16.msra.mxu0 %v2480
    %3734 = vmatprep.subr.bf16.mxu0 %v2485
    %3735 = vmatpush1.bf16.msra.mxu0 %v2484
    %3736 = vmatprep.subr.bf16.mxu0 %v2489
    %3737 = vmatpush1.bf16.msra.mxu0 %v2488
    %3738 = vmatprep.subr.bf16.mxu0 %v2493
    %3739 = vmatpush1.bf16.msra.mxu0 %v2492
    %3740 = vmatprep.subr.bf16.mxu0 %v2497
    %3741 = vmatpush1.bf16.msra.mxu0 %v2496
    %3742 = vmatprep.subr.bf16.mxu0 %v2501
    %3743 = vmatpush1.bf16.msra.mxu0 %v2500
    %3744 = vmatprep.subr.bf16.mxu0 %v2505
    %3745 = vmatpush1.bf16.msra.mxu0 %v2504
    %3746 = vmatprep.subr.bf16.mxu0 %v2509
    %3747 = vmatpush1.bf16.msra.mxu0 %v2508
    %3748 = vmatprep.subr.bf16.mxu0 %v2513
    %3749 = vmatpush1.bf16.msra.mxu0 %v2512
    %3750 = vmatprep.subr.bf16.mxu0 %v2517
    %3751 = vmatpush1.bf16.msra.mxu0 %v2516
    %3752 = vmatprep.subr.bf16.mxu0 %v2521
    %3753 = vmatpush1.bf16.msra.mxu0 %v2520
    %3754 = vmatprep.subr.bf16.mxu0 %v2525
    %3755 = vmatpush1.bf16.msra.mxu0 %v2524
    %3756 = vmatprep.subr.bf16.mxu0 %v2529
    %3757 = vmatpush1.bf16.msra.mxu0 %v2528
    %3758 = vmatprep.mubr.bf16.mxu0 %v646
    %3759 = vmatmul.mubr.bf16.gmra.mrb[0].mxu0 %v632
    %v3760 = vpop.f32.mrb[0].mxu0
    %v3761 = vadd.f32 %v3720, %v3760
    %v3762 = vpop.f32.mrb[0].mxu0
    %v3763 = vadd.f32 %v3722, %v3762
    %v3764 = vpop.f32.mrb[0].mxu0
    %v3765 = vpop.f32.mrb[0].mxu0
    %3766 = vdwg.mxu0
    %3767 = vmatprep.subr.bf16.mxu0 %v2533
    %3768 = vmatpush1.bf16.msra.mxu0 %v2532
    %3769 = vmatprep.subr.bf16.mxu0 %v2537
    %3770 = vmatpush1.bf16.msra.mxu0 %v2536
    %3771 = vmatprep.subr.bf16.mxu0 %v2541
    %3772 = vmatpush1.bf16.msra.mxu0 %v2540
    %3773 = vmatprep.subr.bf16.mxu0 %v2545
    %3774 = vmatpush1.bf16.msra.mxu0 %v2544
    %3775 = vmatprep.subr.bf16.mxu0 %v2549
    %3776 = vmatpush1.bf16.msra.mxu0 %v2548
    %3777 = vmatprep.subr.bf16.mxu0 %v2553
    %3778 = vmatpush1.bf16.msra.mxu0 %v2552
    %3779 = vmatprep.subr.bf16.mxu0 %v2557
    %3780 = vmatpush1.bf16.msra.mxu0 %v2556
    %3781 = vmatprep.subr.bf16.mxu0 %v2561
    %3782 = vmatpush1.bf16.msra.mxu0 %v2560
    %3783 = vmatprep.subr.bf16.mxu0 %v2565
    %3784 = vmatpush1.bf16.msra.mxu0 %v2564
    %3785 = vmatprep.subr.bf16.mxu0 %v2569
    %3786 = vmatpush1.bf16.msra.mxu0 %v2568
    %3787 = vmatprep.subr.bf16.mxu0 %v2573
    %3788 = vmatpush1.bf16.msra.mxu0 %v2572
    %3789 = vmatprep.subr.bf16.mxu0 %v2577
    %3790 = vmatpush1.bf16.msra.mxu0 %v2576
    %3791 = vmatprep.subr.bf16.mxu0 %v2581
    %3792 = vmatpush1.bf16.msra.mxu0 %v2580
    %3793 = vmatprep.subr.bf16.mxu0 %v2585
    %3794 = vmatpush1.bf16.msra.mxu0 %v2584
    %3795 = vmatprep.subr.bf16.mxu0 %v2589
    %3796 = vmatpush1.bf16.msra.mxu0 %v2588
    %3797 = vmatprep.subr.bf16.mxu0 %v2593
    %3798 = vmatpush1.bf16.msra.mxu0 %v2592
    %3799 = vmatprep.mubr.bf16.mxu0 %v656
    %3800 = vmatmul.mubr.bf16.gmra.mrb[0].mxu0 %v654
    %v3801 = vpop.f32.mrb[0].mxu0
    %v3802 = vadd.f32 %v3761, %v3801
    %v3803 = vpop.f32.mrb[0].mxu0
    %v3804 = vadd.f32 %v3763, %v3803
    %v3805 = vpop.f32.mrb[0].mxu0
    %v3806 = vpop.f32.mrb[0].mxu0
    %3807 = vdwg.mxu0
    %3808 = vmatprep.subr.bf16.mxu0 %v2597
    %3809 = vmatpush1.bf16.msra.mxu0 %v2596
    %3810 = vmatprep.subr.bf16.mxu0 %v2601
    %3811 = vmatpush1.bf16.msra.mxu0 %v2600
    %3812 = vmatprep.subr.bf16.mxu0 %v2605
    %3813 = vmatpush1.bf16.msra.mxu0 %v2604
    %3814 = vmatprep.subr.bf16.mxu0 %v2609
    %3815 = vmatpush1.bf16.msra.mxu0 %v2608
    %3816 = vmatprep.subr.bf16.mxu0 %v2613
    %3817 = vmatpush1.bf16.msra.mxu0 %v2612
    %3818 = vmatprep.subr.bf16.mxu0 %v2617
    %3819 = vmatpush1.bf16.msra.mxu0 %v2616
    %3820 = vmatprep.subr.bf16.mxu0 %v2621
    %3821 = vmatpush1.bf16.msra.mxu0 %v2620
    %3822 = vmatprep.subr.bf16.mxu0 %v2625
    %3823 = vmatpush1.bf16.msra.mxu0 %v2624
    %3824 = vmatprep.subr.bf16.mxu0 %v2629
    %3825 = vmatpush1.bf16.msra.mxu0 %v2628
    %3826 = vmatprep.subr.bf16.mxu0 %v2633
    %3827 = vmatpush1.bf16.msra.mxu0 %v2632
    %3828 = vmatprep.subr.bf16.mxu0 %v2637
    %3829 = vmatpush1.bf16.msra.mxu0 %v2636
    %3830 = vmatprep.subr.bf16.mxu0 %v2641
    %3831 = vmatpush1.bf16.msra.mxu0 %v2640
    %3832 = vmatprep.subr.bf16.mxu0 %v2645
    %3833 = vmatpush1.bf16.msra.mxu0 %v2644
    %3834 = vmatprep.subr.bf16.mxu0 %v2649
    %3835 = vmatpush1.bf16.msra.mxu0 %v2648
    %3836 = vmatprep.subr.bf16.mxu0 %v2653
    %3837 = vmatpush1.bf16.msra.mxu0 %v2652
    %3838 = vmatprep.subr.bf16.mxu0 %v2657
    %3839 = vmatpush1.bf16.msra.mxu0 %v2656
    %3840 = vmatprep.mubr.bf16.mxu0 %v653
    %3841 = vmatmul.mubr.bf16.gmra.mrb[0].mxu0 %v639
    %v3842 = vpop.f32.mrb[0].mxu0
    %v3843 = vadd.f32 %v3802, %v3842
    %v3844 = vpop.f32.mrb[0].mxu0
    %v3845 = vadd.f32 %v3804, %v3844
    %v3846 = vpop.f32.mrb[0].mxu0
    %v3847 = vpop.f32.mrb[0].mxu0
    %3848 = vdwg.mxu0
    %3849 = vmatprep.subr.bf16.mxu0 %v2661
    %3850 = vmatpush1.bf16.msra.mxu0 %v2660
    %3851 = vmatprep.subr.bf16.mxu0 %v2665
    %3852 = vmatpush1.bf16.msra.mxu0 %v2664
    %3853 = vmatprep.subr.bf16.mxu0 %v2669
    %3854 = vmatpush1.bf16.msra.mxu0 %v2668
    %3855 = vmatprep.subr.bf16.mxu0 %v2673
    %3856 = vmatpush1.bf16.msra.mxu0 %v2672
    %3857 = vmatprep.subr.bf16.mxu0 %v2677
    %3858 = vmatpush1.bf16.msra.mxu0 %v2676
    %3859 = vmatprep.subr.bf16.mxu0 %v2681
    %3860 = vmatpush1.bf16.msra.mxu0 %v2680
    %3861 = vmatprep.subr.bf16.mxu0 %v2685
    %3862 = vmatpush1.bf16.msra.mxu0 %v2684
    %3863 = vmatprep.subr.bf16.mxu0 %v2689
    %3864 = vmatpush1.bf16.msra.mxu0 %v2688
    %3865 = vmatprep.subr.bf16.mxu0 %v2693
    %3866 = vmatpush1.bf16.msra.mxu0 %v2692
    %3867 = vmatprep.subr.bf16.mxu0 %v2697
    %3868 = vmatpush1.bf16.msra.mxu0 %v2696
    %3869 = vmatprep.subr.bf16.mxu0 %v2701
    %3870 = vmatpush1.bf16.msra.mxu0 %v2700
    %3871 = vmatprep.subr.bf16.mxu0 %v2705
    %3872 = vmatpush1.bf16.msra.mxu0 %v2704
    %3873 = vmatprep.subr.bf16.mxu0 %v2709
    %3874 = vmatpush1.bf16.msra.mxu0 %v2708
    %3875 = vmatprep.subr.bf16.mxu0 %v2713
    %3876 = vmatpush1.bf16.msra.mxu0 %v2712
    %3877 = vmatprep.subr.bf16.mxu0 %v2717
    %3878 = vmatpush1.bf16.msra.mxu0 %v2716
    %3879 = vmatprep.subr.bf16.mxu0 %v2721
    %3880 = vmatpush1.bf16.msra.mxu0 %v2720
    %3881 = vmatprep.mubr.bf16.mxu0 %v657
    %3882 = vmatmul.mubr.bf16.gmra.mrb[0].mxu0 %v655
    %v3883 = vpop.f32.mrb[0].mxu0
    %v3884 = vadd.f32 %v3843, %v3883
    %v3885 = vpop.f32.mrb[0].mxu0
    %v3886 = vadd.f32 %v3845, %v3885
    %v3887 = vpop.f32.mrb[0].mxu0
    %v3888 = vpop.f32.mrb[0].mxu0
    %3889 = vdwg.mxu0
    %v3890 = vmax.f32 %v3556, 0.0
    %v3891 = vmax.f32 %v3558, 0.0
    %v3892 = vmax.f32 %v3884, 0.0
    %v3893 = vmax.f32 %v3886, 0.0
    %v3894 = vpack.c.bf16 %v3890, %v3890
    %v3895 = vpack.c.bf16 %v3891, %v3891
    %v3896 = vpack.c.bf16 %v3892, %v3892
    %v3897 = vpack.c.bf16 %v3893, %v3893
    %v3898 = vld [vmem:[%s3] sm:$0xf]
    %v3899 = vld [vmem:[%s3 + $0x4] sm:$0xf]
    %v3900 = vld [vmem:[%s3 + $0x8] sm:$0xf]
    %v3901 = vld [vmem:[%s3 + $0xc] sm:$0xf]
    %v3902 = vld [vmem:[%s3 + $0x10] sm:$0xf]
    %v3903 = vld [vmem:[%s3 + $0x14] sm:$0xf]
    %v3904 = vld [vmem:[%s3 + $0x18] sm:$0xf]
    %v3905 = vld [vmem:[%s3 + $0x1c] sm:$0xf]
    %v3906 = vld [vmem:[%s3 + $0x20] sm:$0xf]
    %v3907 = vld [vmem:[%s3 + $0x24] sm:$0xf]
    %v3908 = vld [vmem:[%s3 + $0x28] sm:$0xf]
    %v3909 = vld [vmem:[%s3 + $0x2c] sm:$0xf]
    %v3910 = vld [vmem:[%s3 + $0x30] sm:$0xf]
    %v3911 = vld [vmem:[%s3 + $0x34] sm:$0xf]
    %v3912 = vld [vmem:[%s3 + $0x38] sm:$0xf]
    %v3913 = vld [vmem:[%s3 + $0x3c] sm:$0xf]
    %v3914 = vld [vmem:[%s3 + $0x40] sm:$0xf]
    %v3915 = vld [vmem:[%s3 + $0x44] sm:$0xf]
    %v3916 = vld [vmem:[%s3 + $0x48] sm:$0xf]
    %v3917 = vld [vmem:[%s3 + $0x4c] sm:$0xf]
    %v3918 = vld [vmem:[%s3 + $0x50] sm:$0xf]
    %v3919 = vld [vmem:[%s3 + $0x54] sm:$0xf]
    %v3920 = vld [vmem:[%s3 + $0x58] sm:$0xf]
    %v3921 = vld [vmem:[%s3 + $0x5c] sm:$0xf]
    %v3922 = vld [vmem:[%s3 + $0x60] sm:$0xf]
    %v3923 = vld [vmem:[%s3 + $0x64] sm:$0xf]
    %v3924 = vld [vmem:[%s3 + $0x68] sm:$0xf]
    %v3925 = vld [vmem:[%s3 + $0x6c] sm:$0xf]
    %v3926 = vld [vmem:[%s3 + $0x70] sm:$0xf]
    %v3927 = vld [vmem:[%s3 + $0x74] sm:$0xf]
    %v3928 = vld [vmem:[%s3 + $0x78] sm:$0xf]
    %v3929 = vld [vmem:[%s3 + $0x7c] sm:$0xf]
    %v3930 = vld [vmem:[%s3 + $0x80] sm:$0xf]
    %v3931 = vld [vmem:[%s3 + $0x84] sm:$0xf]
    %v3932 = vld [vmem:[%s3 + $0x88] sm:$0xf]
    %v3933 = vld [vmem:[%s3 + $0x8c] sm:$0xf]
    %v3934 = vld [vmem:[%s3 + $0x90] sm:$0xf]
    %v3935 = vld [vmem:[%s3 + $0x94] sm:$0xf]
    %v3936 = vld [vmem:[%s3 + $0x98] sm:$0xf]
    %v3937 = vld [vmem:[%s3 + $0x9c] sm:$0xf]
    %v3938 = vld [vmem:[%s3 + $0xa0] sm:$0xf]
    %v3939 = vld [vmem:[%s3 + $0xa4] sm:$0xf]
    %v3940 = vld [vmem:[%s3 + $0xa8] sm:$0xf]
    %v3941 = vld [vmem:[%s3 + $0xac] sm:$0xf]
    %v3942 = vld [vmem:[%s3 + $0xb0] sm:$0xf]
    %v3943 = vld [vmem:[%s3 + $0xb4] sm:$0xf]
    %v3944 = vld [vmem:[%s3 + $0xb8] sm:$0xf]
    %v3945 = vld [vmem:[%s3 + $0xbc] sm:$0xf]
    %v3946 = vld [vmem:[%s3 + $0xc0] sm:$0xf]
    %v3947 = vld [vmem:[%s3 + $0xc4] sm:$0xf]
    %v3948 = vld [vmem:[%s3 + $0xc8] sm:$0xf]
    %v3949 = vld [vmem:[%s3 + $0xcc] sm:$0xf]
    %v3950 = vld [vmem:[%s3 + $0xd0] sm:$0xf]
    %v3951 = vld [vmem:[%s3 + $0xd4] sm:$0xf]
    %v3952 = vld [vmem:[%s3 + $0xd8] sm:$0xf]
    %v3953 = vld [vmem:[%s3 + $0xdc] sm:$0xf]
    %v3954 = vld [vmem:[%s3 + $0xe0] sm:$0xf]
    %v3955 = vld [vmem:[%s3 + $0xe4] sm:$0xf]
    %v3956 = vld [vmem:[%s3 + $0xe8] sm:$0xf]
    %v3957 = vld [vmem:[%s3 + $0xec] sm:$0xf]
    %v3958 = vld [vmem:[%s3 + $0xf0] sm:$0xf]
    %v3959 = vld [vmem:[%s3 + $0xf4] sm:$0xf]
    %v3960 = vld [vmem:[%s3 + $0xf8] sm:$0xf]
    %v3961 = vld [vmem:[%s3 + $0xfc] sm:$0xf]
    %v3962 = vld [vmem:[%s4] sm:$0x1]
    %v3964 = vlaneseq
    %v3965 = vshrl.u32 %v3964, 7
    %v3966 = vsub.s32 0, %v3965
    %v3967 = vrot.slane %v3962, %v3966
    %v4033 = vunpack.c.l.b16 %v3898
    %v4034 = vunpack.c.l.b16 %v3899
    %v4035 = vunpack.c.l.b16 %v3900
    %v4036 = vunpack.c.l.b16 %v3901
    %v4037 = vunpack.c.l.b16 %v3902
    %v4038 = vunpack.c.l.b16 %v3903
    %v4039 = vunpack.c.l.b16 %v3904
    %v4040 = vunpack.c.l.b16 %v3905
    %v4041 = vunpack.c.l.b16 %v3906
    %v4042 = vunpack.c.l.b16 %v3907
    %v4043 = vunpack.c.l.b16 %v3908
    %v4044 = vunpack.c.l.b16 %v3909
    %v4045 = vunpack.c.l.b16 %v3910
    %v4046 = vunpack.c.l.b16 %v3911
    %v4047 = vunpack.c.l.b16 %v3912
    %v4048 = vunpack.c.l.b16 %v3913
    %v4049 = vunpack.c.l.b16 %v3914
    %v4050 = vunpack.c.l.b16 %v3915
    %v4051 = vunpack.c.l.b16 %v3916
    %v4052 = vunpack.c.l.b16 %v3917
    %v4053 = vunpack.c.l.b16 %v3918
    %v4054 = vunpack.c.l.b16 %v3919
    %v4055 = vunpack.c.l.b16 %v3920
    %v4056 = vunpack.c.l.b16 %v3921
    %v4057 = vunpack.c.l.b16 %v3922
    %v4058 = vunpack.c.l.b16 %v3923
    %v4059 = vunpack.c.l.b16 %v3924
    %v4060 = vunpack.c.l.b16 %v3925
    %v4061 = vunpack.c.l.b16 %v3926
    %v4062 = vunpack.c.l.b16 %v3927
    %v4063 = vunpack.c.l.b16 %v3928
    %v4064 = vunpack.c.l.b16 %v3929
    %v4065 = vunpack.c.l.b16 %v3930
    %v4066 = vunpack.c.l.b16 %v3931
    %v4067 = vunpack.c.l.b16 %v3932
    %v4068 = vunpack.c.l.b16 %v3933
    %v4069 = vunpack.c.l.b16 %v3934
    %v4070 = vunpack.c.l.b16 %v3935
    %v4071 = vunpack.c.l.b16 %v3936
    %v4072 = vunpack.c.l.b16 %v3937
    %v4073 = vunpack.c.l.b16 %v3938
    %v4074 = vunpack.c.l.b16 %v3939
    %v4075 = vunpack.c.l.b16 %v3940
    %v4076 = vunpack.c.l.b16 %v3941
    %v4077 = vunpack.c.l.b16 %v3942
    %v4078 = vunpack.c.l.b16 %v3943
    %v4079 = vunpack.c.l.b16 %v3944
    %v4080 = vunpack.c.l.b16 %v3945
    %v4081 = vunpack.c.l.b16 %v3946
    %v4082 = vunpack.c.l.b16 %v3947
    %v4083 = vunpack.c.l.b16 %v3948
    %v4084 = vunpack.c.l.b16 %v3949
    %v4085 = vunpack.c.l.b16 %v3950
    %v4086 = vunpack.c.l.b16 %v3951
    %v4087 = vunpack.c.l.b16 %v3952
    %v4088 = vunpack.c.l.b16 %v3953
    %v4089 = vunpack.c.l.b16 %v3954
    %v4090 = vunpack.c.l.b16 %v3955
    %v4091 = vunpack.c.l.b16 %v3956
    %v4092 = vunpack.c.l.b16 %v3957
    %v4093 = vunpack.c.l.b16 %v3958
    %v4094 = vunpack.c.l.b16 %v3959
    %v4095 = vunpack.c.l.b16 %v3960
    %v4096 = vunpack.c.l.b16 %v3961
    %v4097 = vpack.c.b16 %v4034, %v4033
    %v4098 = vpack.c.b16 %v4036, %v4035
    %v4099 = vpack.c.b16 %v4038, %v4037
    %v4100 = vpack.c.b16 %v4040, %v4039
    %v4101 = vpack.c.b16 %v4042, %v4041
    %v4102 = vpack.c.b16 %v4044, %v4043
    %v4103 = vpack.c.b16 %v4046, %v4045
    %v4104 = vpack.c.b16 %v4048, %v4047
    %v4105 = vpack.c.b16 %v4050, %v4049
    %v4106 = vpack.c.b16 %v4052, %v4051
    %v4107 = vpack.c.b16 %v4054, %v4053
    %v4108 = vpack.c.b16 %v4056, %v4055
    %v4109 = vpack.c.b16 %v4058, %v4057
    %v4110 = vpack.c.b16 %v4060, %v4059
    %v4111 = vpack.c.b16 %v4062, %v4061
    %v4112 = vpack.c.b16 %v4064, %v4063
    %v4113 = vpack.c.b16 %v4066, %v4065
    %v4114 = vpack.c.b16 %v4068, %v4067
    %v4115 = vpack.c.b16 %v4070, %v4069
    %v4116 = vpack.c.b16 %v4072, %v4071
    %v4117 = vpack.c.b16 %v4074, %v4073
    %v4118 = vpack.c.b16 %v4076, %v4075
    %v4119 = vpack.c.b16 %v4078, %v4077
    %v4120 = vpack.c.b16 %v4080, %v4079
    %v4121 = vpack.c.b16 %v4082, %v4081
    %v4122 = vpack.c.b16 %v4084, %v4083
    %v4123 = vpack.c.b16 %v4086, %v4085
    %v4124 = vpack.c.b16 %v4088, %v4087
    %v4125 = vpack.c.b16 %v4090, %v4089
    %v4126 = vpack.c.b16 %v4092, %v4091
    %v4127 = vpack.c.b16 %v4094, %v4093
    %v4128 = vpack.c.b16 %v4096, %v4095
    %4161 = vmatprep.subr.bf16.mxu0 0
    %4162 = vmatpush1.bf16.msra.mxu0 %v4097
    %4163 = vmatprep.subr.bf16.mxu0 0
    %4164 = vmatpush1.bf16.msra.mxu0 %v4098
    %4165 = vmatprep.subr.bf16.mxu0 0
    %4166 = vmatpush1.bf16.msra.mxu0 %v4099
    %4167 = vmatprep.subr.bf16.mxu0 0
    %4168 = vmatpush1.bf16.msra.mxu0 %v4100
    %4169 = vmatprep.subr.bf16.mxu0 0
    %4170 = vmatpush1.bf16.msra.mxu0 %v4101
    %4171 = vmatprep.subr.bf16.mxu0 0
    %4172 = vmatpush1.bf16.msra.mxu0 %v4102
    %4173 = vmatprep.subr.bf16.mxu0 0
    %4174 = vmatpush1.bf16.msra.mxu0 %v4103
    %4175 = vmatprep.subr.bf16.mxu0 0
    %4176 = vmatpush1.bf16.msra.mxu0 %v4104
    %4177 = vmatprep.subr.bf16.mxu0 0
    %4178 = vmatpush1.bf16.msra.mxu0 %v4105
    %4179 = vmatprep.subr.bf16.mxu0 0
    %4180 = vmatpush1.bf16.msra.mxu0 %v4106
    %4181 = vmatprep.subr.bf16.mxu0 0
    %4182 = vmatpush1.bf16.msra.mxu0 %v4107
    %4183 = vmatprep.subr.bf16.mxu0 0
    %4184 = vmatpush1.bf16.msra.mxu0 %v4108
    %4185 = vmatprep.subr.bf16.mxu0 0
    %4186 = vmatpush1.bf16.msra.mxu0 %v4109
    %4187 = vmatprep.subr.bf16.mxu0 0
    %4188 = vmatpush1.bf16.msra.mxu0 %v4110
    %4189 = vmatprep.subr.bf16.mxu0 0
    %4190 = vmatpush1.bf16.msra.mxu0 %v4111
    %4191 = vmatprep.subr.bf16.mxu0 0
    %4192 = vmatpush1.bf16.msra.mxu0 %v4112
    %4193 = vmatprep.mubr.bf16.mxu0 %v3895
    %4194 = vmatmul.mubr.bf16.gmra.mrb[0].mxu0 %v3894
    %v4195 = vpop.f32.mrb[0].mxu0
    %v4196 = vadd.f32 %v3967, %v4195
    %v4197 = vpop.f32.mrb[0].mxu0
    %v4198 = vpop.f32.mrb[0].mxu0
    %v4199 = vpop.f32.mrb[0].mxu0
    %4200 = vdwg.mxu0
    %4201 = vmatprep.subr.bf16.mxu0 0
    %4202 = vmatpush1.bf16.msra.mxu0 %v4113
    %4203 = vmatprep.subr.bf16.mxu0 0
    %4204 = vmatpush1.bf16.msra.mxu0 %v4114
    %4205 = vmatprep.subr.bf16.mxu0 0
    %4206 = vmatpush1.bf16.msra.mxu0 %v4115
    %4207 = vmatprep.subr.bf16.mxu0 0
    %4208 = vmatpush1.bf16.msra.mxu0 %v4116
    %4209 = vmatprep.subr.bf16.mxu0 0
    %4210 = vmatpush1.bf16.msra.mxu0 %v4117
    %4211 = vmatprep.subr.bf16.mxu0 0
    %4212 = vmatpush1.bf16.msra.mxu0 %v4118
    %4213 = vmatprep.subr.bf16.mxu0 0
    %4214 = vmatpush1.bf16.msra.mxu0 %v4119
    %4215 = vmatprep.subr.bf16.mxu0 0
    %4216 = vmatpush1.bf16.msra.mxu0 %v4120
    %4217 = vmatprep.subr.bf16.mxu0 0
    %4218 = vmatpush1.bf16.msra.mxu0 %v4121
    %4219 = vmatprep.subr.bf16.mxu0 0
    %4220 = vmatpush1.bf16.msra.mxu0 %v4122
    %4221 = vmatprep.subr.bf16.mxu0 0
    %4222 = vmatpush1.bf16.msra.mxu0 %v4123
    %4223 = vmatprep.subr.bf16.mxu0 0
    %4224 = vmatpush1.bf16.msra.mxu0 %v4124
    %4225 = vmatprep.subr.bf16.mxu0 0
    %4226 = vmatpush1.bf16.msra.mxu0 %v4125
    %4227 = vmatprep.subr.bf16.mxu0 0
    %4228 = vmatpush1.bf16.msra.mxu0 %v4126
    %4229 = vmatprep.subr.bf16.mxu0 0
    %4230 = vmatpush1.bf16.msra.mxu0 %v4127
    %4231 = vmatprep.subr.bf16.mxu0 0
    %4232 = vmatpush1.bf16.msra.mxu0 %v4128
    %4233 = vmatprep.mubr.bf16.mxu0 %v3897
    %4234 = vmatmul.mubr.bf16.gmra.mrb[0].mxu0 %v3896
    %v4235 = vpop.f32.mrb[0].mxu0
    %v4236 = vadd.f32 %v4196, %v4235
    %v4237 = vpop.f32.mrb[0].mxu0
    %v4238 = vpop.f32.mrb[0].mxu0
    %v4239 = vpop.f32.mrb[0].mxu0
    %4240 = vdwg.mxu0
    %v4241 = vlaneseq
    %v4242 = vand.u32 %v4241, 127
    %vm4243 = vcmp.lt.s32.totalorder %v4242, 10
    %v4244 = vsel %vm4243, %v4236, -1e+30
    %vm4245 = vcmask 1041408
    %v4246 = vsel %vm4245, %v4244, -inf
    %4247 = vmax.xlane.f32.xlu0 %v4246
    %v4248 = vpop.xlane.xlu0 %4247
    %v4249 = vsub.f32 %v4244, %v4248
    %v4250 = vmul.f32 %v4249, 1.442695
    %v4251 = vpow.pop %v4250
    %v4252 = vsel %vm4245, %v4251, 0.0
    %4253 = vadd.xlane.f32.xlu0 %v4252
    %v4254 = vpop.xlane.xlu0 %4253
    %v4255 = vlog2.pop %v4254
    %v4256 = vmul.f32 %v4255, 0.6931472
    %v4257 = vsub.f32 %v4249, %v4256
    %4258 = vst [vmem:[#allocation2] sm:$0x3] %v4257
    // Predicated region
    $region22: #{cnn_mnist_forward.5} parent=1 // pred_check
      _
    $region23: #{cnn_mnist_forward.5} parent=1 // pred_check_branch
      %4260 = sbr.rel (0) target = $region25
    $region24: #{cnn_mnist_forward.5} parent=1 // pred_region
      %s4262 = ssub.s32 32, 32
      %4263 = vsyncadd [#allocation3], %s4262
      %s4265 = sshll.u32 [#allocation2], 4
      %s4266 = int_to_ptr.vmem [resolvable:$true] %s4265
      %4268 = dma.vmem_to_hbm [thread:$0]  %s4266, 32, %s5, [#allocation3]
    $region25: #{cnn_mnist_forward.5} parent=1 // pred_fallthru
      _
    // Predicated region
    $region26: #{cnn_mnist_forward.5} parent=1 // pred_check
      _
    $region27: #{cnn_mnist_forward.5} parent=1 // pred_check_branch
      %4270 = sbr.rel (0) target = $region29
    $region28: #{cnn_mnist_forward.5} parent=1 // pred_region
      %4271 = dma.done [#allocation3], 32
    $region29: #{cnn_mnist_forward.5} parent=1 // pred_fallthru
      _
    %4272 = vsyncpa [#allocation3], 1

</llo_original>
